<compile_context>
chip_gen: v7x
topology: tpu7x:2x2x1
jax: 0.10.0
libtpu: 0.0.40
codegen_flags: <defaults>
</compile_context>

<pallas_src>
import functools

import numpy as np
import jax
import jax.numpy as jnp
from jax import lax
from jax.experimental import pallas as pl
from jax.experimental.pallas import tpu as pltpu

F32 = jnp.float32
_EPS_BN = 1e-5
_EPS_LN = 1e-5
_EPS_NORM = 1e-12

VMEM_SPEC = pl.BlockSpec(memory_space=pltpu.MemorySpace.VMEM)


# ------------------------------ fused kernel --------------------------------

def _build_kernel(static, Bp, T, out_w, l128):
    """Builds the single fused kernel, closing over static python ints."""
    E = static['E']
    H = static['H']
    NC = static['NC']
    Hh = E // 2
    G = 4 * H
    lay_wl = static['lay_wl']
    lay_ws = static['lay_ws']

    def kernel(boxes_ref, tok_ref, mavg_ref, pooled_ref, wl_ref, ws_ref,
               out_ref, l1_ref):
        # ---- static-offset views into the two packed weight slabs ----
        def wsl(name):
            off, r, c = lay_ws[name]
            return ws_ref[off:off + r, 0:c]

        def wll(name):
            off, r, c = lay_wl[name]
            return wl_ref[off:off + r, 0:c]

        # ---- math helpers (weights packed as (Din+1, Dout), bias last row) ----
        def linear(x, wb):
            d = wb.shape[0] - 1
            return jnp.dot(x, wb[:d], preferred_element_type=F32) + wb[d:d + 1]

        def bn(x, b4):       # rows: gamma, beta, running_mean, running_var
            return (x - b4[2:3]) * lax.rsqrt(b4[3:4] + _EPS_BN) * b4[0:1] + b4[1:2]

        def ln(x, gamma, beta):
            mu = jnp.mean(x, axis=-1, keepdims=True)
            xc = x - mu
            var = jnp.mean(xc * xc, axis=-1, keepdims=True)
            return xc * lax.rsqrt(var + _EPS_LN) * gamma + beta

        def l2n(x):          # == F.normalize(x, p=2, eps=1e-12)
            ssq = jnp.sum(x * x, axis=-1, keepdims=True)
            return x * lax.rsqrt(jnp.maximum(ssq, _EPS_NORM * _EPS_NORM))

        # ================= 1. 2-layer BiLSTM over box points =================
        # One merged fwd/bwd recurrent matmul per step: hfb (Bp,2H) x whh_bd
        # (2H,8H) -> [fwd gates | bwd gates].  Gate order i, f, g, o (PyTorch);
        # b_ih + b_hh are folded into one bias at fuse time.
        def run_layer(xp, whh_bd, store_l1):
            hf = jnp.zeros((Bp, H), F32)
            cf = jnp.zeros((Bp, H), F32)
            hb = jnp.zeros((Bp, H), F32)
            cb = jnp.zeros((Bp, H), F32)
            hfb = jnp.concatenate([hf, hb], axis=-1)
            h0f = None
            for s in range(T):                       # fully unrolled (T static)
                tb = T - 1 - s                       # backward dir time index
                xs = jnp.concatenate(
                    [xp[s * Bp:(s + 1) * Bp, 0:G],
                     xp[tb * Bp:(tb + 1) * Bp, G:2 * G]], axis=-1)
                gates = xs + jnp.dot(hfb, whh_bd, preferred_element_type=F32)
                sg = jax.nn.sigmoid(gates)           # full-width sigmoid (EUP)
                gtf = jnp.tanh(gates[:, 2 * H:3 * H])
                gtb = jnp.tanh(gates[:, G + 2 * H:G + 3 * H])
                cf = sg[:, H:2 * H] * cf + sg[:, 0:H] * gtf
                cb = sg[:, G + H:G + 2 * H] * cb + sg[:, G:G + H] * gtb
                hf = sg[:, 3 * H:4 * H] * jnp.tanh(cf)
                hb = sg[:, G + 3 * H:G + 4 * H] * jnp.tanh(cb)
                hfb = jnp.concatenate([hf, hb], axis=-1)
                if store_l1:                         # layer-1 seq output -> scratch
                    l1_ref[s * Bp:(s + 1) * Bp, 0:H] = hf
                    l1_ref[tb * Bp:(tb + 1) * Bp, H:2 * H] = hb
                if s == 0:
                    h0f = hf
            # bidirectional output at time 0: fwd h after step 0, bwd h after last
            return jnp.concatenate([h0f, hb], axis=-1)

        xp1 = linear(boxes_ref[...], wll('wih1'))          # hoisted input proj, layer 1
        run_layer(xp1, wll('whh1'), store_l1=True)
        # TODO(synk): nn.LSTM inter-layer Dropout(0.1) is a no-op in eval mode.
        xp2 = linear(l1_ref[...], wll('wih2'))             # hoisted input proj, layer 2
        out0 = run_layer(xp2, wll('whh2'), store_l1=False)  # (Bp, 2H)
        box_embeds = linear(out0, wsl('w_box'))             # domian_vis_fc_boxes

        # ====================== 2. language branch ==========================
        # TODO(synk): pretrained BERT replaced by embedding lookup (XLA gather
        # outside) + per-token tanh projection stub; attention mask is folded
        # into the fixed-denominator group-mean matrix (mavg).
        hid = jnp.tanh(linear(tok_ref[...], wsl('bert_proj')))            # (Ntokp, E)
        means = jnp.dot(mavg_ref[...], hid, preferred_element_type=F32)   # (3Bp, E)

        lfc_ln = wsl('lfc_ln')
        lnx = jnp.concatenate(
            [ln(means[g * Bp:(g + 1) * Bp, :],
                lfc_ln[2 * g:2 * g + 1], lfc_ln[2 * g + 1:2 * g + 2])
             for g in range(3)], axis=-1)                                  # (Bp, 3E)
        hfc = jnp.maximum(linear(lnx, wsl('lfc_w1')), 0.0)
        lang_cat = linear(hfc, wsl('lfc_w2'))        # (Bp,3E) = [lang | motion | main]

        # heads (wiring matches the PyTorch forward: motion_fc(lang),
        # boxes_fc(lang_motion), car_fc(lang_main))
        lhd_ln = wsl('lhd_ln')
        hn = jnp.concatenate(
            [jnp.maximum(ln(lang_cat[:, g * E:(g + 1) * E],
                            lhd_ln[2 * g:2 * g + 1], lhd_ln[2 * g + 1:2 * g + 2]), 0.0)
             for g in range(3)], axis=-1)
        heads = linear(hn, wsl('lhd_w'))             # (Bp, 3Hh) = [mo | boxes | car]

        # domian_lang_fc_merge on [lang, main, motion]; permutation folded into
        # lmg_w1 input rows at fuse time, so lang_cat feeds it directly.
        lm = jnp.maximum(bn(linear(lang_cat, wsl('lmg_w1')), wsl('lmg_bn')), 0.0)
        lang_merge = linear(lm, wsl('lmg_w2'))       # (Bp, E) raw

        # ======================= 3. vision branch ===========================
        # TODO(synk): SE-ResNeXt50 backbones replaced by global-average-pool +
        # linear stubs; bb->domian_vis_fc Linears folded into vbb_w at fuse time.
        vm_embeds = linear(pooled_ref[...], wsl('vbb_w'))   # (Bp, 2E) = [visual|motion]
        x3 = jnp.concatenate([vm_embeds, box_embeds], axis=-1)  # (Bp, 3E)

        vh = linear(jnp.maximum(bn(x3, wsl('vh_bn')), 0.0), wsl('vh_w'))  # [car|mo|box]

        # domian_vis_fc_merge on [mo, car, box]; permutation folded into vm_w1.
        vm = jnp.maximum(bn(linear(vh, wsl('vm_w1')), wsl('vm_bn')), 0.0)
        visual_merge = linear(vm, wsl('vm_w2'))      # (Bp, E) raw

        # id_cls / id_cls2 / id_cls3 stacked block-diagonally on x3.
        ic = jnp.maximum(bn(linear(x3, wsl('ic_w1')), wsl('ic_bn')), 0.0)
        cls123 = linear(ic, wsl('ic_w2'))            # (Bp, 3NC)

        # id_cls_share on [lang_merge ; visual_merge] stacked along M.
        sh_in = jnp.concatenate([lang_merge, visual_merge], axis=0)   # (2Bp, E)
        sh = jnp.maximum(bn(linear(sh_in, wsl('sh_w1')), wsl('sh_bn')), 0.0)
        sh_out = linear(sh, wsl('sh_w2'))            # (2Bp, NC)

        # ================== 4. one lane-dense output slab ====================
        parts = [l2n(heads[:, 0:Hh]), l2n(heads[:, Hh:2 * Hh]),
                 l2n(heads[:, 2 * Hh:3 * Hh]), l2n(lang_merge)]
        lpad = l128 - (3 * Hh + E)
        if lpad:
            parts.append(jnp.zeros((Bp, lpad), F32))
        parts += [l2n(vh[:, 0:Hh]), l2n(vh[:, Hh:2 * Hh]), l2n(vh[:, 2 * Hh:3 * Hh]),
                  l2n(visual_merge), cls123, sh_out[0:Bp, :], sh_out[Bp:2 * Bp, :]]
        vpad = out_w - l128 - (3 * Hh + E + 5 * NC)
        if vpad:
            parts.append(jnp.zeros((Bp, vpad), F32))
        out_ref[...] = jnp.concatenate(parts, axis=-1)

    return kernel


# ------------------------------ parameters ----------------------------------

def init_params(key, embed_dim=32, num_class=8, vocab=50, img_in_dim=2048,
                lstm_hidden=64):
    keys = list(jax.random.split(key, 256))
    it = iter(keys)

    def nk():
        return next(it)

    def lin(din, dout, scale=0.05):
        return {'w': scale * jax.random.normal(nk(), (din, dout), F32),
                'b': scale * jax.random.normal(nk(), (1, dout), F32)}

    def mk_ln(d):
        return {'gamma': 1.0 + 0.1 * jax.random.normal(nk(), (1, d), F32),
                'beta': 0.1 * jax.random.normal(nk(), (1, d), F32)}

    def mk_bn(d):
        return {'gamma': 1.0 + 0.1 * jax.random.normal(nk(), (1, d), F32),
                'beta': 0.1 * jax.random.normal(nk(), (1, d), F32),
                'rmean': 0.1 * jax.random.normal(nk(), (1, d), F32),
                'rvar': 1.0 + 0.1 * jnp.abs(jax.random.normal(nk(), (1, d), F32))}

    def lstm_dir(din):
        H = lstm_hidden
        return {'w_ih': 0.1 * jax.random.normal(nk(), (din, 4 * H), F32),
                'w_hh': 0.1 * jax.random.normal(nk(), (H, 4 * H), F32),
                # TODO(synk): PyTorch's b_ih + b_hh must be summed when loading
                # real weights; a single folded bias is used here.
                'b': 0.1 * jax.random.normal(nk(), (1, 4 * H), F32)}

    def head_ln(d):
        return {'ln': mk_ln(d), 'lin': lin(d, d // 2)}

    def head_bn(d):
        return {'bn': mk_bn(d), 'lin': lin(d, d // 2)}

    def mlp_ln(d):
        return {'ln': mk_ln(d), 'lin1': lin(d, d), 'lin2': lin(d, d)}

    def mlp_id(d, dout):
        return {'lin1': lin(d, d), 'bn': mk_bn(d), 'lin2': lin(d, dout)}

    H2 = 2 * lstm_hidden
    return {
        'bert': {'emb': 0.5 * jax.random.normal(nk(), (vocab, embed_dim), F32),
                 'proj': lin(embed_dim, embed_dim, 0.2)},
        'vis_backbone': lin(3, img_in_dim, 0.2),
        'vis_backbone_bk': lin(3, img_in_dim, 0.2),
        'domian_vis_fc': lin(img_in_dim, embed_dim, 0.02),
        'domian_vis_fc_bk': lin(img_in_dim, embed_dim, 0.02),
        'domian_vis_fc_boxes': lin(H2, embed_dim),
        'lstm': [{'fwd': lstm_dir(2), 'bwd': lstm_dir(2)},
                 {'fwd': lstm_dir(H2), 'bwd': lstm_dir(H2)}],
        'domian_lang_fc': mlp_ln(embed_dim),
        'domian_lang_motion_fc': mlp_ln(embed_dim),
        'domian_lang_main_fc': mlp_ln(embed_dim),
        'vis_car_fc': head_bn(embed_dim),
        'vis_motion_fc': head_bn(embed_dim),
        'vis_boxes_fc': head_bn(embed_dim),
        'lang_car_fc': head_ln(embed_dim),
        'lang_motion_fc': head_ln(embed_dim),
        'lang_boxes_fc': head_ln(embed_dim),
        'domian_vis_fc_merge': {'lin1': lin(embed_dim * 3 // 2, embed_dim),
                                'bn': mk_bn(embed_dim),
                                'lin2': lin(embed_dim, embed_dim)},
        'domian_lang_fc_merge': {'lin1': lin(embed_dim * 3, embed_dim),
                                 'bn': mk_bn(embed_dim),
                                 'lin2': lin(embed_dim, embed_dim)},
        'id_cls': mlp_id(embed_dim, num_class),
        'id_cls2': mlp_id(embed_dim, num_class),
        'id_cls3': mlp_id(embed_dim, num_class),
        'id_cls_share': mlp_id(embed_dim, num_class),
        'logit_scale': jnp.ones((), F32),
    }


def _block_diag(*mats):
    r = sum(m.shape[0] for m in mats)
    c = sum(m.shape[1] for m in mats)
    out = jnp.zeros((r, c), F32)
    i = j = 0
    for m in mats:
        out = out.at[i:i + m.shape[0], j:j + m.shape[1]].set(m)
        i += m.shape[0]
        j += m.shape[1]
    return out


def fuse_params(p):
    """One-time weight packing: bb->fc folding, block-diagonal head stacking,
    merge input-row permutation, (Din+1, Dout) bias packing, BN/LN stat packing
    and BiLSTM block-diagonal recurrent weights -> TWO lane-dense slabs."""
    E = p['domian_vis_fc']['w'].shape[1]
    H = p['lstm'][0]['fwd']['w_hh'].shape[0]
    NC = p['id_cls']['lin2']['w'].shape[1]
    Hh = E // 2

    def pack_wb(l):
        return jnp.concatenate([l['w'], l['b']], axis=0)

    def pack_bn(b):
        return jnp.concatenate([b['gamma'], b['beta'], b['rmean'], b['rvar']], axis=0)

    def pack_bn_cat(bns):
        return jnp.concatenate([pack_bn(b) for b in bns], axis=1)

    def pack_ln_stack(lns):
        rows = []
        for l in lns:
            rows += [l['gamma'], l['beta']]
        return jnp.concatenate(rows, axis=0)

    def bd_wb(lins):
        w = _block_diag(*[l['w'] for l in lins])
        b = jnp.concatenate([l['b'] for l in lins], axis=1)
        return jnp.concatenate([w, b], axis=0)

    # Fold backbone-stub Linear into domian_vis_fc (exact: no nonlinearity between).
    # TODO(synk): this fold does not apply once a real SE-ResNeXt backbone is used.
    def fold(bb, fc):
        return {'w': jnp.dot(bb['w'], fc['w']),
                'b': jnp.dot(bb['b'], fc['w']) + fc['b']}

    vbb = bd_wb([fold(p['vis_backbone'], p['domian_vis_fc']),
                 fold(p['vis_backbone_bk'], p['domian_vis_fc_bk'])])    # (7, 2E)

    # Permute merge first-linear INPUT rows so the in-kernel activations
    # ([lang|motion|main] and [car|mo|box]) feed them without re-concatenation.
    def permute_rows_wb(l, order, block):
        w = jnp.concatenate([l['w'][i * block:(i + 1) * block] for i in order], axis=0)
        return {'w': w, 'b': l['b']}

    lmg1 = permute_rows_wb(p['domian_lang_fc_merge']['lin1'], (0, 2, 1), E)
    vmg1 = permute_rows_wb(p['domian_vis_fc_merge']['lin1'], (1, 0, 2), Hh)

    # BiLSTM packing: input proj [fwd|bwd] cols + folded bias row; recurrent
    # weights block-diagonal so one matmul per step drives both directions.
    def lstm_pack(layer):
        f, b = layer['fwd'], layer['bwd']
        wih = jnp.concatenate([f['w_ih'], b['w_ih']], axis=1)
        bias = jnp.concatenate([f['b'], b['b']], axis=1)
        return (jnp.concatenate([wih, bias], axis=0),
                _block_diag(f['w_hh'], b['w_hh']))

    wih1, whh1 = lstm_pack(p['lstm'][0])
    wih2, whh2 = lstm_pack(p['lstm'][1])

    def pack_slab(entries, width):
        lay = {}
        parts = []
        off = 0
        for name, arr in entries:
            r, c = int(arr.shape[0]), int(arr.shape[1])
            lay[name] = (off, r, c)
            pad_r = (-r) % 8                      # keep every offset sublane-aligned
            parts.append(jnp.pad(arr, ((0, pad_r), (0, width - c))))
            off += r + pad_r
        return jnp.concatenate(parts, axis=0), lay

    wl, lay_wl = pack_slab([('wih1', wih1), ('whh1', whh1),
                            ('wih2', wih2), ('whh2', whh2)], 8 * H)

    ws_entries = [
        ('w_box', pack_wb(p['domian_vis_fc_boxes'])),
        ('bert_proj', pack_wb(p['bert']['proj'])),
        ('lfc_ln', pack_ln_stack([p['domian_lang_fc']['ln'],
                                  p['domian_lang_motion_fc']['ln'],
                                  p['domian_lang_main_fc']['ln']])),
        ('lfc_w1', bd_wb([p['domian_lang_fc']['lin1'],
                          p['domian_lang_motion_fc']['lin1'],
                          p['domian_lang_main_fc']['lin1']])),
        ('lfc_w2', bd_wb([p['domian_lang_fc']['lin2'],
                          p['domian_lang_motion_fc']['lin2'],
                          p['domian_lang_main_fc']['lin2']])),
        ('lhd_ln', pack_ln_stack([p['lang_motion_fc']['ln'],
                                  p['lang_boxes_fc']['ln'],
                                  p['lang_car_fc']['ln']])),
        ('lhd_w', bd_wb([p['lang_motion_fc']['lin'],
                         p['lang_boxes_fc']['lin'],
                         p['lang_car_fc']['lin']])),
        ('lmg_w1', pack_wb(lmg1)),
        ('lmg_bn', pack_bn(p['domian_lang_fc_merge']['bn'])),
        ('lmg_w2', pack_wb(p['domian_lang_fc_merge']['lin2'])),
        ('vbb_w', vbb),
        ('vh_bn', pack_bn_cat([p['vis_car_fc']['bn'],
                               p['vis_motion_fc']['bn'],
                               p['vis_boxes_fc']['bn']])),
        ('vh_w', bd_wb([p['vis_car_fc']['lin'],
                        p['vis_motion_fc']['lin'],
                        p['vis_boxes_fc']['lin']])),
        ('vm_w1', pack_wb(vmg1)),
        ('vm_bn', pack_bn(p['domian_vis_fc_merge']['bn'])),
        ('vm_w2', pack_wb(p['domian_vis_fc_merge']['lin2'])),
        ('ic_w1', bd_wb([p['id_cls']['lin1'], p['id_cls2']['lin1'],
                         p['id_cls3']['lin1']])),
        ('ic_bn', pack_bn_cat([p['id_cls']['bn'], p['id_cls2']['bn'],
                               p['id_cls3']['bn']])),
        ('ic_w2', bd_wb([p['id_cls']['lin2'], p['id_cls2']['lin2'],
                         p['id_cls3']['lin2']])),
        ('sh_w1', pack_wb(p['id_cls_share']['lin1'])),
        ('sh_bn', pack_bn(p['id_cls_share']['bn'])),
        ('sh_w2', pack_wb(p['id_cls_share']['lin2'])),
    ]
    ws_width = ((max(int(a.shape[1]) for _, a in ws_entries) + 127) // 128) * 128
    ws, lay_ws = pack_slab(ws_entries, ws_width)

    slabs = {'wl': wl, 'ws': ws, 'bert_emb': p['bert']['emb'],
             'logit_scale': p['logit_scale']}
    static = {'E': E, 'H': H, 'NC': NC, 'lay_wl': lay_wl, 'lay_ws': lay_ws}
    return slabs, static


def _mean_matrix_np(B, Bp, L, Ntokp):
    """Compile-time group-mean matrix.  Rows [g*Bp + b] average the token rows of
    text-group g / batch b with the reference's fixed denominators (3L, L, L);
    the runtime attention mask is folded in by scaling the columns."""
    m = np.zeros((3 * Bp, Ntokp), np.float32)
    for b in range(B):
        m[b, b * 3 * L:(b + 1) * 3 * L] = 1.0 / (3 * L)
        m[Bp + b, B * 3 * L + b * L: B * 3 * L + (b + 1) * L] = 1.0 / L
        m[2 * Bp + b, B * 4 * L + b * L: B * 4 * L + (b + 1) * L] = 1.0 / L
    return m


# --------------------------------- forward ----------------------------------

def forward(static, slabs,
            nl_input_ids, nl_attention_mask,
            nl_motion_input_ids, nl_motion_attention_mask,
            nl_main_input_ids, nl_main_attention_mask,
            crops, motion, boxes_points):
    E = static['E']
    H = static['H']
    NC = static['NC']
    Hh = E // 2

    B = crops.shape[0]
    T = boxes_points.shape[1]
    L = nl_input_ids.shape[-1]
    Bp = max(8, ((B + 7) // 8) * 8)                       # pad batch to a sublane tile
    Ntok = B * 5 * L
    Ntokp = ((Ntok + 7) // 8) * 8
    LANG_W = 3 * Hh + E
    VIS_W = 3 * Hh + E + 5 * NC
    L128 = ((LANG_W + 127) // 128) * 128
    OUT_W = L128 + ((VIS_W + 127) // 128) * 128

    # ---- language inputs (embedding gather stays in XLA) ----
    # TODO(synk): pretrained BERT is replaced by an embedding-lookup + tanh stub.
    ids_all = jnp.concatenate([nl_input_ids.reshape(-1),
                               nl_motion_input_ids.reshape(-1),
                               nl_main_input_ids.reshape(-1)], axis=0)
    mask_all = jnp.concatenate([nl_attention_mask.reshape(-1),
                                nl_motion_attention_mask.reshape(-1),
                                nl_main_attention_mask.reshape(-1)],
                               axis=0).astype(F32)
    ids_p = jnp.pad(ids_all, (0, Ntokp - Ntok))
    mask_p = jnp.pad(mask_all, (0, Ntokp - Ntok))
    tok = jnp.take(slabs['bert_emb'], ids_p, axis=0)                      # (Ntokp, E)
    mavg = jnp.asarray(_mean_matrix_np(B, Bp, L, Ntokp)) * mask_p[None, :]

    # ---- vision stub inputs: global-average pool, batch pad ----
    pooled = jnp.concatenate(
        [jnp.mean(crops.reshape(B, crops.shape[1], -1), axis=-1),
         jnp.mean(motion.reshape(B, motion.shape[1], -1), axis=-1)], axis=-1)
    pooled = jnp.pad(pooled, ((0, Bp - B), (0, 0)))                       # (Bp, 6)

    # ---- box points: batch pad, time-major, flat (no in-kernel gathers) ----
    boxes_p = jnp.pad(boxes_points, ((0, Bp - B), (0, 0), (0, 0)))
    boxes_tm = jnp.transpose(boxes_p, (1, 0, 2)).reshape(T * Bp,
                                                         boxes_points.shape[-1])

    kernel = _build_kernel(static, Bp, T, OUT_W, L128)
    slab = pl.pallas_call(
        kernel,
        in_specs=[VMEM_SPEC] * 6,
        out_specs=VMEM_SPEC,
        out_shape=jax.ShapeDtypeStruct((Bp, OUT_W), F32),
        scratch_shapes=[pltpu.VMEM((T * Bp, 2 * H), F32)],   # layer-1 BiLSTM outputs
    )(boxes_tm, tok, mavg, pooled, slabs['wl'], slabs['ws'])

    # ---- unpack the lane-dense output slab ----
    lang_mo = slab[0:B, 0:Hh]
    lang_boxes = slab[0:B, Hh:2 * Hh]
    lang_car = slab[0:B, 2 * Hh:3 * Hh]
    lang_merge = slab[0:B, 3 * Hh:3 * Hh + E]
    v0 = L128
    vis_car = slab[0:B, v0:v0 + Hh]
    vis_mo = slab[0:B, v0 + Hh:v0 + 2 * Hh]
    vis_box = slab[0:B, v0 + 2 * Hh:v0 + 3 * Hh]
    vis_merge = slab[0:B, v0 + 3 * Hh:v0 + 3 * Hh + E]
    base = v0 + 3 * Hh + E
    cls_logits_results = [slab[0:B, base + k * NC: base + (k + 1) * NC]
                          for k in range(5)]

    pairs = [(vis_box, lang_boxes), (vis_car, lang_car),
             (vis_mo, lang_mo), (vis_merge, lang_merge)]
    return pairs, slabs['logit_scale'], cls_logits_results


# ----------------------------------- main ------------------------------------

if __name__ == "__main__":
    EMBED_DIM = 32       # == BERT-stub hidden size
    NUM_CLASS = 8
    VOCAB = 50
    BSZ, L, T = 2, 6, 8
    HC = WC = 16

    key = jax.random.PRNGKey(0)
    kp, k1, k2, k3, k4, k5, k6 = jax.random.split(key, 7)

    params = init_params(kp, embed_dim=EMBED_DIM, num_class=NUM_CLASS, vocab=VOCAB)
    slabs, static = fuse_params(params)

    nl_input_ids = jax.random.randint(k1, (BSZ, 3, L), 0, VOCAB, dtype=jnp.int32)
    nl_attention_mask = jnp.ones((BSZ, 3, L), F32)
    nl_motion_input_ids = jax.random.randint(k2, (BSZ, L), 0, VOCAB, dtype=jnp.int32)
    nl_motion_attention_mask = jnp.ones((BSZ, L), F32)
    nl_main_input_ids = jax.random.randint(k3, (BSZ, L), 0, VOCAB, dtype=jnp.int32)
    nl_main_attention_mask = jnp.ones((BSZ, L), F32)
    crops = jax.random.normal(k4, (BSZ, 3, HC, WC), F32)        # NCHW
    motion = jax.random.normal(k5, (BSZ, 3, HC, WC), F32)       # NCHW
    boxes_points = jax.random.normal(k6, (BSZ, T, 2), F32)

    fwd = jax.jit(functools.partial(forward, static))
    out = fwd(slabs,
              nl_input_ids, nl_attention_mask,
              nl_motion_input_ids, nl_motion_attention_mask,
              nl_main_input_ids, nl_main_attention_mask,
              crops, motion, boxes_points)

    jax.tree_util.tree_map(lambda a: jax.block_until_ready(a), out)
    print("KERNEL_OK")
</pallas_src>

<mosaic_0001>
module attributes {stable_mosaic.version = 11 : i64} {
  func.func @kernel(%arg0: memref<64x2xf32, #tpu.memory_space<vmem>>, %arg1: memref<64x32xf32, #tpu.memory_space<vmem>>, %arg2: memref<24x64xf32, #tpu.memory_space<vmem>>, %arg3: memref<8x6xf32, #tpu.memory_space<vmem>>, %arg4: memref<400x512xf32, #tpu.memory_space<vmem>>, %arg5: memref<1184x128xf32, #tpu.memory_space<vmem>>, %arg6: memref<8x256xf32, #tpu.memory_space<vmem>>, %arg7: memref<64x128xf32, #tpu.memory_space<vmem>>) attributes {dimension_semantics = [], scalar_prefetch = 0 : i64, scratch_operands = 1 : i64, tpu.core_type = #tpu.core_type<tc>} {
    %c0 = arith.constant 0 : index
    %c0_0 = arith.constant 0 : index
    %0 = vector.load %arg0[%c0, %c0_0] : memref<64x2xf32, #tpu.memory_space<vmem>>, vector<64x2xf32>
    %c0_1 = arith.constant 0 : index
    %c0_2 = arith.constant 0 : index
    %1 = vector.load %arg4[%c0_1, %c0_2] : memref<400x512xf32, #tpu.memory_space<vmem>>, vector<3x512xf32>
    %2 = vector.extract_strided_slice %1 {offsets = [0, 0], sizes = [2, 512], strides = [1, 1]} : vector<3x512xf32> to vector<2x512xf32>
    %cst = arith.constant dense<0.000000e+00> : vector<64x512xf32>
    %3 = tpu.matmul %0, %2, %cst {dimension_numbers = #tpu.dot_dimension_numbers<[1], [0], [0], [1], [0, 0, 1, 1], [], []>} : vector<64x2xf32>, vector<2x512xf32>, vector<64x512xf32> -> vector<64x512xf32>
    %4 = vector.extract_strided_slice %1 {offsets = [2, 0], sizes = [1, 512], strides = [1, 1]} : vector<3x512xf32> to vector<1x512xf32>
    %5 = vector.broadcast %4 : vector<1x512xf32> to vector<64x512xf32>
    %6 = arith.addf %3, %5 : vector<64x512xf32>
    %c8 = arith.constant 8 : index
    %c0_3 = arith.constant 0 : index
    %7 = vector.load %arg4[%c8, %c0_3] : memref<400x512xf32, #tpu.memory_space<vmem>>, vector<128x512xf32>
    %cst_4 = arith.constant 0.000000e+00 : f32
    %8 = vector.broadcast %cst_4 : f32 to vector<8x64xf32>
    %cst_5 = arith.constant 0.000000e+00 : f32
    %9 = vector.broadcast %cst_5 : f32 to vector<8x64xf32>
    %cst_6 = arith.constant 0.000000e+00 : f32
    %10 = vector.broadcast %cst_6 : f32 to vector<8x64xf32>
    %cst_7 = arith.constant 0.000000e+00 : f32
    %11 = vector.broadcast %cst_7 : f32 to vector<8x64xf32>
    %12 = tpu.concatenate %8, %10 in 1 : vector<8x64xf32>, vector<8x64xf32> -> vector<8x128xf32>
    %13 = vector.extract_strided_slice %6 {offsets = [0, 0], sizes = [8, 256], strides = [1, 1]} : vector<64x512xf32> to vector<8x256xf32>
    %14 = vector.extract_strided_slice %6 {offsets = [56, 256], sizes = [8, 256], strides = [1, 1]} : vector<64x512xf32> to vector<8x256xf32>
    %15 = tpu.concatenate %13, %14 in 1 : vector<8x256xf32>, vector<8x256xf32> -> vector<8x512xf32>
    %cst_8 = arith.constant dense<0.000000e+00> : vector<8x512xf32>
    %16 = tpu.matmul %12, %7, %cst_8 {dimension_numbers = #tpu.dot_dimension_numbers<[1], [0], [0], [1], [0, 0, 1, 1], [], []>} : vector<8x128xf32>, vector<128x512xf32>, vector<8x512xf32> -> vector<8x512xf32>
    %17 = arith.addf %15, %16 : vector<8x512xf32>
    %18 = arith.negf %17 : vector<8x512xf32>
    %19 = math.exp %18 : vector<8x512xf32>
    %cst_9 = arith.constant 1.000000e+00 : f32
    %20 = vector.broadcast %cst_9 : f32 to vector<8x512xf32>
    %21 = arith.addf %20, %19 : vector<8x512xf32>
    %22 = arith.divf %20, %21 : vector<8x512xf32>
    %23 = vector.extract_strided_slice %17 {offsets = [0, 128], sizes = [8, 64], strides = [1, 1]} : vector<8x512xf32> to vector<8x64xf32>
    %24 = math.tanh %23 : vector<8x64xf32>
    %25 = vector.extract_strided_slice %17 {offsets = [0, 384], sizes = [8, 64], strides = [1, 1]} : vector<8x512xf32> to vector<8x64xf32>
    %26 = math.tanh %25 : vector<8x64xf32>
    %27 = vector.extract_strided_slice %22 {offsets = [0, 64], sizes = [8, 64], strides = [1, 1]} : vector<8x512xf32> to vector<8x64xf32>
    %28 = arith.mulf %27, %9 : vector<8x64xf32>
    %29 = vector.extract_strided_slice %22 {offsets = [0, 0], sizes = [8, 64], strides = [1, 1]} : vector<8x512xf32> to vector<8x64xf32>
    %30 = arith.mulf %29, %24 : vector<8x64xf32>
    %31 = arith.addf %28, %30 : vector<8x64xf32>
    %32 = vector.extract_strided_slice %22 {offsets = [0, 320], sizes = [8, 64], strides = [1, 1]} : vector<8x512xf32> to vector<8x64xf32>
    %33 = arith.mulf %32, %11 : vector<8x64xf32>
    %34 = vector.extract_strided_slice %22 {offsets = [0, 256], sizes = [8, 64], strides = [1, 1]} : vector<8x512xf32> to vector<8x64xf32>
    %35 = arith.mulf %34, %26 : vector<8x64xf32>
    %36 = arith.addf %33, %35 : vector<8x64xf32>
    %37 = vector.extract_strided_slice %22 {offsets = [0, 192], sizes = [8, 64], strides = [1, 1]} : vector<8x512xf32> to vector<8x64xf32>
    %38 = math.tanh %31 : vector<8x64xf32>
    %39 = arith.mulf %37, %38 : vector<8x64xf32>
    %40 = vector.extract_strided_slice %22 {offsets = [0, 448], sizes = [8, 64], strides = [1, 1]} : vector<8x512xf32> to vector<8x64xf32>
    %41 = math.tanh %36 : vector<8x64xf32>
    %42 = arith.mulf %40, %41 : vector<8x64xf32>
    %43 = tpu.concatenate %39, %42 in 1 : vector<8x64xf32>, vector<8x64xf32> -> vector<8x128xf32>
    %c0_10 = arith.constant 0 : index
    %c0_11 = arith.constant 0 : index
    %44 = vector.load %arg7[%c0_10, %c0_11] : memref<64x128xf32, #tpu.memory_space<vmem>>, vector<8x64xf32>
    tpu.vector_store %arg7[%c0_10, %c0_11], %39 {strides = array<i32>} : memref<64x128xf32, #tpu.memory_space<vmem>>, vector<8x64xf32>,
    %c56 = arith.constant 56 : index
    %c64 = arith.constant 64 : index
    %45 = vector.load %arg7[%c56, %c64] : memref<64x128xf32, #tpu.memory_space<vmem>>, vector<8x64xf32>
    tpu.vector_store %arg7[%c56, %c64], %42 {strides = array<i32>} : memref<64x128xf32, #tpu.memory_space<vmem>>, vector<8x64xf32>,
    %46 = vector.extract_strided_slice %6 {offsets = [8, 0], sizes = [8, 256], strides = [1, 1]} : vector<64x512xf32> to vector<8x256xf32>
    %47 = vector.extract_strided_slice %6 {offsets = [48, 256], sizes = [8, 256], strides = [1, 1]} : vector<64x512xf32> to vector<8x256xf32>
    %48 = tpu.concatenate %46, %47 in 1 : vector<8x256xf32>, vector<8x256xf32> -> vector<8x512xf32>
    %cst_12 = arith.constant dense<0.000000e+00> : vector<8x512xf32>
    %49 = tpu.matmul %43, %7, %cst_12 {dimension_numbers = #tpu.dot_dimension_numbers<[1], [0], [0], [1], [0, 0, 1, 1], [], []>} : vector<8x128xf32>, vector<128x512xf32>, vector<8x512xf32> -> vector<8x512xf32>
    %50 = arith.addf %48, %49 : vector<8x512xf32>
    %51 = arith.negf %50 : vector<8x512xf32>
    %52 = math.exp %51 : vector<8x512xf32>
    %cst_13 = arith.constant 1.000000e+00 : f32
    %53 = vector.broadcast %cst_13 : f32 to vector<8x512xf32>
    %54 = arith.addf %53, %52 : vector<8x512xf32>
    %55 = arith.divf %53, %54 : vector<8x512xf32>
    %56 = vector.extract_strided_slice %50 {offsets = [0, 128], sizes = [8, 64], strides = [1, 1]} : vector<8x512xf32> to vector<8x64xf32>
    %57 = math.tanh %56 : vector<8x64xf32>
    %58 = vector.extract_strided_slice %50 {offsets = [0, 384], sizes = [8, 64], strides = [1, 1]} : vector<8x512xf32> to vector<8x64xf32>
    %59 = math.tanh %58 : vector<8x64xf32>
    %60 = vector.extract_strided_slice %55 {offsets = [0, 64], sizes = [8, 64], strides = [1, 1]} : vector<8x512xf32> to vector<8x64xf32>
    %61 = arith.mulf %60, %31 : vector<8x64xf32>
    %62 = vector.extract_strided_slice %55 {offsets = [0, 0], sizes = [8, 64], strides = [1, 1]} : vector<8x512xf32> to vector<8x64xf32>
    %63 = arith.mulf %62, %57 : vector<8x64xf32>
    %64 = arith.addf %61, %63 : vector<8x64xf32>
    %65 = vector.extract_strided_slice %55 {offsets = [0, 320], sizes = [8, 64], strides = [1, 1]} : vector<8x512xf32> to vector<8x64xf32>
    %66 = arith.mulf %65, %36 : vector<8x64xf32>
    %67 = vector.extract_strided_slice %55 {offsets = [0, 256], sizes = [8, 64], strides = [1, 1]} : vector<8x512xf32> to vector<8x64xf32>
    %68 = arith.mulf %67, %59 : vector<8x64xf32>
    %69 = arith.addf %66, %68 : vector<8x64xf32>
    %70 = vector.extract_strided_slice %55 {offsets = [0, 192], sizes = [8, 64], strides = [1, 1]} : vector<8x512xf32> to vector<8x64xf32>
    %71 = math.tanh %64 : vector<8x64xf32>
    %72 = arith.mulf %70, %71 : vector<8x64xf32>
    %73 = vector.extract_strided_slice %55 {offsets = [0, 448], sizes = [8, 64], strides = [1, 1]} : vector<8x512xf32> to vector<8x64xf32>
    %74 = math.tanh %69 : vector<8x64xf32>
    %75 = arith.mulf %73, %74 : vector<8x64xf32>
    %76 = tpu.concatenate %72, %75 in 1 : vector<8x64xf32>, vector<8x64xf32> -> vector<8x128xf32>
    %c8_14 = arith.constant 8 : index
    %c0_15 = arith.constant 0 : index
    %77 = vector.load %arg7[%c8_14, %c0_15] : memref<64x128xf32, #tpu.memory_space<vmem>>, vector<8x64xf32>
    tpu.vector_store %arg7[%c8_14, %c0_15], %72 {strides = array<i32>} : memref<64x128xf32, #tpu.memory_space<vmem>>, vector<8x64xf32>,
    %c48 = arith.constant 48 : index
    %c64_16 = arith.constant 64 : index
    %78 = vector.load %arg7[%c48, %c64_16] : memref<64x128xf32, #tpu.memory_space<vmem>>, vector<8x64xf32>
    tpu.vector_store %arg7[%c48, %c64_16], %75 {strides = array<i32>} : memref<64x128xf32, #tpu.memory_space<vmem>>, vector<8x64xf32>,
    %79 = vector.extract_strided_slice %6 {offsets = [16, 0], sizes = [8, 256], strides = [1, 1]} : vector<64x512xf32> to vector<8x256xf32>
    %80 = vector.extract_strided_slice %6 {offsets = [40, 256], sizes = [8, 256], strides = [1, 1]} : vector<64x512xf32> to vector<8x256xf32>
    %81 = tpu.concatenate %79, %80 in 1 : vector<8x256xf32>, vector<8x256xf32> -> vector<8x512xf32>
    %cst_17 = arith.constant dense<0.000000e+00> : vector<8x512xf32>
    %82 = tpu.matmul %76, %7, %cst_17 {dimension_numbers = #tpu.dot_dimension_numbers<[1], [0], [0], [1], [0, 0, 1, 1], [], []>} : vector<8x128xf32>, vector<128x512xf32>, vector<8x512xf32> -> vector<8x512xf32>
    %83 = arith.addf %81, %82 : vector<8x512xf32>
    %84 = arith.negf %83 : vector<8x512xf32>
    %85 = math.exp %84 : vector<8x512xf32>
    %cst_18 = arith.constant 1.000000e+00 : f32
    %86 = vector.broadcast %cst_18 : f32 to vector<8x512xf32>
    %87 = arith.addf %86, %85 : vector<8x512xf32>
    %88 = arith.divf %86, %87 : vector<8x512xf32>
    %89 = vector.extract_strided_slice %83 {offsets = [0, 128], sizes = [8, 64], strides = [1, 1]} : vector<8x512xf32> to vector<8x64xf32>
    %90 = math.tanh %89 : vector<8x64xf32>
    %91 = vector.extract_strided_slice %83 {offsets = [0, 384], sizes = [8, 64], strides = [1, 1]} : vector<8x512xf32> to vector<8x64xf32>
    %92 = math.tanh %91 : vector<8x64xf32>
    %93 = vector.extract_strided_slice %88 {offsets = [0, 64], sizes = [8, 64], strides = [1, 1]} : vector<8x512xf32> to vector<8x64xf32>
    %94 = arith.mulf %93, %64 : vector<8x64xf32>
    %95 = vector.extract_strided_slice %88 {offsets = [0, 0], sizes = [8, 64], strides = [1, 1]} : vector<8x512xf32> to vector<8x64xf32>
    %96 = arith.mulf %95, %90 : vector<8x64xf32>
    %97 = arith.addf %94, %96 : vector<8x64xf32>
    %98 = vector.extract_strided_slice %88 {offsets = [0, 320], sizes = [8, 64], strides = [1, 1]} : vector<8x512xf32> to vector<8x64xf32>
    %99 = arith.mulf %98, %69 : vector<8x64xf32>
    %100 = vector.extract_strided_slice %88 {offsets = [0, 256], sizes = [8, 64], strides = [1, 1]} : vector<8x512xf32> to vector<8x64xf32>
    %101 = arith.mulf %100, %92 : vector<8x64xf32>
    %102 = arith.addf %99, %101 : vector<8x64xf32>
    %103 = vector.extract_strided_slice %88 {offsets = [0, 192], sizes = [8, 64], strides = [1, 1]} : vector<8x512xf32> to vector<8x64xf32>
    %104 = math.tanh %97 : vector<8x64xf32>
    %105 = arith.mulf %103, %104 : vector<8x64xf32>
    %106 = vector.extract_strided_slice %88 {offsets = [0, 448], sizes = [8, 64], strides = [1, 1]} : vector<8x512xf32> to vector<8x64xf32>
    %107 = math.tanh %102 : vector<8x64xf32>
    %108 = arith.mulf %106, %107 : vector<8x64xf32>
    %109 = tpu.concatenate %105, %108 in 1 : vector<8x64xf32>, vector<8x64xf32> -> vector<8x128xf32>
    %c16 = arith.constant 16 : index
    %c0_19 = arith.constant 0 : index
    %110 = vector.load %arg7[%c16, %c0_19] : memref<64x128xf32, #tpu.memory_space<vmem>>, vector<8x64xf32>
    tpu.vector_store %arg7[%c16, %c0_19], %105 {strides = array<i32>} : memref<64x128xf32, #tpu.memory_space<vmem>>, vector<8x64xf32>,
    %c40 = arith.constant 40 : index
    %c64_20 = arith.constant 64 : index
    %111 = vector.load %arg7[%c40, %c64_20] : memref<64x128xf32, #tpu.memory_space<vmem>>, vector<8x64xf32>
    tpu.vector_store %arg7[%c40, %c64_20], %108 {strides = array<i32>} : memref<64x128xf32, #tpu.memory_space<vmem>>, vector<8x64xf32>,
    %112 = vector.extract_strided_slice %6 {offsets = [24, 0], sizes = [8, 256], strides = [1, 1]} : vector<64x512xf32> to vector<8x256xf32>
    %113 = vector.extract_strided_slice %6 {offsets = [32, 256], sizes = [8, 256], strides = [1, 1]} : vector<64x512xf32> to vector<8x256xf32>
    %114 = tpu.concatenate %112, %113 in 1 : vector<8x256xf32>, vector<8x256xf32> -> vector<8x512xf32>
    %cst_21 = arith.constant dense<0.000000e+00> : vector<8x512xf32>
    %115 = tpu.matmul %109, %7, %cst_21 {dimension_numbers = #tpu.dot_dimension_numbers<[1], [0], [0], [1], [0, 0, 1, 1], [], []>} : vector<8x128xf32>, vector<128x512xf32>, vector<8x512xf32> -> vector<8x512xf32>
    %116 = arith.addf %114, %115 : vector<8x512xf32>
    %117 = arith.negf %116 : vector<8x512xf32>
    %118 = math.exp %117 : vector<8x512xf32>
    %cst_22 = arith.constant 1.000000e+00 : f32
    %119 = vector.broadcast %cst_22 : f32 to vector<8x512xf32>
    %120 = arith.addf %119, %118 : vector<8x512xf32>
    %121 = arith.divf %119, %120 : vector<8x512xf32>
    %122 = vector.extract_strided_slice %116 {offsets = [0, 128], sizes = [8, 64], strides = [1, 1]} : vector<8x512xf32> to vector<8x64xf32>
    %123 = math.tanh %122 : vector<8x64xf32>
    %124 = vector.extract_strided_slice %116 {offsets = [0, 384], sizes = [8, 64], strides = [1, 1]} : vector<8x512xf32> to vector<8x64xf32>
    %125 = math.tanh %124 : vector<8x64xf32>
    %126 = vector.extract_strided_slice %121 {offsets = [0, 64], sizes = [8, 64], strides = [1, 1]} : vector<8x512xf32> to vector<8x64xf32>
    %127 = arith.mulf %126, %97 : vector<8x64xf32>
    %128 = vector.extract_strided_slice %121 {offsets = [0, 0], sizes = [8, 64], strides = [1, 1]} : vector<8x512xf32> to vector<8x64xf32>
    %129 = arith.mulf %128, %123 : vector<8x64xf32>
    %130 = arith.addf %127, %129 : vector<8x64xf32>
    %131 = vector.extract_strided_slice %121 {offsets = [0, 320], sizes = [8, 64], strides = [1, 1]} : vector<8x512xf32> to vector<8x64xf32>
    %132 = arith.mulf %131, %102 : vector<8x64xf32>
    %133 = vector.extract_strided_slice %121 {offsets = [0, 256], sizes = [8, 64], strides = [1, 1]} : vector<8x512xf32> to vector<8x64xf32>
    %134 = arith.mulf %133, %125 : vector<8x64xf32>
    %135 = arith.addf %132, %134 : vector<8x64xf32>
    %136 = vector.extract_strided_slice %121 {offsets = [0, 192], sizes = [8, 64], strides = [1, 1]} : vector<8x512xf32> to vector<8x64xf32>
    %137 = math.tanh %130 : vector<8x64xf32>
    %138 = arith.mulf %136, %137 : vector<8x64xf32>
    %139 = vector.extract_strided_slice %121 {offsets = [0, 448], sizes = [8, 64], strides = [1, 1]} : vector<8x512xf32> to vector<8x64xf32>
    %140 = math.tanh %135 : vector<8x64xf32>
    %141 = arith.mulf %139, %140 : vector<8x64xf32>
    %142 = tpu.concatenate %138, %141 in 1 : vector<8x64xf32>, vector<8x64xf32> -> vector<8x128xf32>
    %c24 = arith.constant 24 : index
    %c0_23 = arith.constant 0 : index
    %143 = vector.load %arg7[%c24, %c0_23] : memref<64x128xf32, #tpu.memory_space<vmem>>, vector<8x64xf32>
    tpu.vector_store %arg7[%c24, %c0_23], %138 {strides = array<i32>} : memref<64x128xf32, #tpu.memory_space<vmem>>, vector<8x64xf32>,
    %c32 = arith.constant 32 : index
    %c64_24 = arith.constant 64 : index
    %144 = vector.load %arg7[%c32, %c64_24] : memref<64x128xf32, #tpu.memory_space<vmem>>, vector<8x64xf32>
    tpu.vector_store %arg7[%c32, %c64_24], %141 {strides = array<i32>} : memref<64x128xf32, #tpu.memory_space<vmem>>, vector<8x64xf32>,
    %145 = vector.extract_strided_slice %6 {offsets = [32, 0], sizes = [8, 256], strides = [1, 1]} : vector<64x512xf32> to vector<8x256xf32>
    %146 = vector.extract_strided_slice %6 {offsets = [24, 256], sizes = [8, 256], strides = [1, 1]} : vector<64x512xf32> to vector<8x256xf32>
    %147 = tpu.concatenate %145, %146 in 1 : vector<8x256xf32>, vector<8x256xf32> -> vector<8x512xf32>
    %cst_25 = arith.constant dense<0.000000e+00> : vector<8x512xf32>
    %148 = tpu.matmul %142, %7, %cst_25 {dimension_numbers = #tpu.dot_dimension_numbers<[1], [0], [0], [1], [0, 0, 1, 1], [], []>} : vector<8x128xf32>, vector<128x512xf32>, vector<8x512xf32> -> vector<8x512xf32>
    %149 = arith.addf %147, %148 : vector<8x512xf32>
    %150 = arith.negf %149 : vector<8x512xf32>
    %151 = math.exp %150 : vector<8x512xf32>
    %cst_26 = arith.constant 1.000000e+00 : f32
    %152 = vector.broadcast %cst_26 : f32 to vector<8x512xf32>
    %153 = arith.addf %152, %151 : vector<8x512xf32>
    %154 = arith.divf %152, %153 : vector<8x512xf32>
    %155 = vector.extract_strided_slice %149 {offsets = [0, 128], sizes = [8, 64], strides = [1, 1]} : vector<8x512xf32> to vector<8x64xf32>
    %156 = math.tanh %155 : vector<8x64xf32>
    %157 = vector.extract_strided_slice %149 {offsets = [0, 384], sizes = [8, 64], strides = [1, 1]} : vector<8x512xf32> to vector<8x64xf32>
    %158 = math.tanh %157 : vector<8x64xf32>
    %159 = vector.extract_strided_slice %154 {offsets = [0, 64], sizes = [8, 64], strides = [1, 1]} : vector<8x512xf32> to vector<8x64xf32>
    %160 = arith.mulf %159, %130 : vector<8x64xf32>
    %161 = vector.extract_strided_slice %154 {offsets = [0, 0], sizes = [8, 64], strides = [1, 1]} : vector<8x512xf32> to vector<8x64xf32>
    %162 = arith.mulf %161, %156 : vector<8x64xf32>
    %163 = arith.addf %160, %162 : vector<8x64xf32>
    %164 = vector.extract_strided_slice %154 {offsets = [0, 320], sizes = [8, 64], strides = [1, 1]} : vector<8x512xf32> to vector<8x64xf32>
    %165 = arith.mulf %164, %135 : vector<8x64xf32>
    %166 = vector.extract_strided_slice %154 {offsets = [0, 256], sizes = [8, 64], strides = [1, 1]} : vector<8x512xf32> to vector<8x64xf32>
    %167 = arith.mulf %166, %158 : vector<8x64xf32>
    %168 = arith.addf %165, %167 : vector<8x64xf32>
    %169 = vector.extract_strided_slice %154 {offsets = [0, 192], sizes = [8, 64], strides = [1, 1]} : vector<8x512xf32> to vector<8x64xf32>
    %170 = math.tanh %163 : vector<8x64xf32>
    %171 = arith.mulf %169, %170 : vector<8x64xf32>
    %172 = vector.extract_strided_slice %154 {offsets = [0, 448], sizes = [8, 64], strides = [1, 1]} : vector<8x512xf32> to vector<8x64xf32>
    %173 = math.tanh %168 : vector<8x64xf32>
    %174 = arith.mulf %172, %173 : vector<8x64xf32>
    %175 = tpu.concatenate %171, %174 in 1 : vector<8x64xf32>, vector<8x64xf32> -> vector<8x128xf32>
    %c32_27 = arith.constant 32 : index
    %c0_28 = arith.constant 0 : index
    %176 = vector.load %arg7[%c32_27, %c0_28] : memref<64x128xf32, #tpu.memory_space<vmem>>, vector<8x64xf32>
    tpu.vector_store %arg7[%c32_27, %c0_28], %171 {strides = array<i32>} : memref<64x128xf32, #tpu.memory_space<vmem>>, vector<8x64xf32>,
    %c24_29 = arith.constant 24 : index
    %c64_30 = arith.constant 64 : index
    %177 = vector.load %arg7[%c24_29, %c64_30] : memref<64x128xf32, #tpu.memory_space<vmem>>, vector<8x64xf32>
    tpu.vector_store %arg7[%c24_29, %c64_30], %174 {strides = array<i32>} : memref<64x128xf32, #tpu.memory_space<vmem>>, vector<8x64xf32>,
    %178 = vector.extract_strided_slice %6 {offsets = [40, 0], sizes = [8, 256], strides = [1, 1]} : vector<64x512xf32> to vector<8x256xf32>
    %179 = vector.extract_strided_slice %6 {offsets = [16, 256], sizes = [8, 256], strides = [1, 1]} : vector<64x512xf32> to vector<8x256xf32>
    %180 = tpu.concatenate %178, %179 in 1 : vector<8x256xf32>, vector<8x256xf32> -> vector<8x512xf32>
    %cst_31 = arith.constant dense<0.000000e+00> : vector<8x512xf32>
    %181 = tpu.matmul %175, %7, %cst_31 {dimension_numbers = #tpu.dot_dimension_numbers<[1], [0], [0], [1], [0, 0, 1, 1], [], []>} : vector<8x128xf32>, vector<128x512xf32>, vector<8x512xf32> -> vector<8x512xf32>
    %182 = arith.addf %180, %181 : vector<8x512xf32>
    %183 = arith.negf %182 : vector<8x512xf32>
    %184 = math.exp %183 : vector<8x512xf32>
    %cst_32 = arith.constant 1.000000e+00 : f32
    %185 = vector.broadcast %cst_32 : f32 to vector<8x512xf32>
    %186 = arith.addf %185, %184 : vector<8x512xf32>
    %187 = arith.divf %185, %186 : vector<8x512xf32>
    %188 = vector.extract_strided_slice %182 {offsets = [0, 128], sizes = [8, 64], strides = [1, 1]} : vector<8x512xf32> to vector<8x64xf32>
    %189 = math.tanh %188 : vector<8x64xf32>
    %190 = vector.extract_strided_slice %182 {offsets = [0, 384], sizes = [8, 64], strides = [1, 1]} : vector<8x512xf32> to vector<8x64xf32>
    %191 = math.tanh %190 : vector<8x64xf32>
    %192 = vector.extract_strided_slice %187 {offsets = [0, 64], sizes = [8, 64], strides = [1, 1]} : vector<8x512xf32> to vector<8x64xf32>
    %193 = arith.mulf %192, %163 : vector<8x64xf32>
    %194 = vector.extract_strided_slice %187 {offsets = [0, 0], sizes = [8, 64], strides = [1, 1]} : vector<8x512xf32> to vector<8x64xf32>
    %195 = arith.mulf %194, %189 : vector<8x64xf32>
    %196 = arith.addf %193, %195 : vector<8x64xf32>
    %197 = vector.extract_strided_slice %187 {offsets = [0, 320], sizes = [8, 64], strides = [1, 1]} : vector<8x512xf32> to vector<8x64xf32>
    %198 = arith.mulf %197, %168 : vector<8x64xf32>
    %199 = vector.extract_strided_slice %187 {offsets = [0, 256], sizes = [8, 64], strides = [1, 1]} : vector<8x512xf32> to vector<8x64xf32>
    %200 = arith.mulf %199, %191 : vector<8x64xf32>
    %201 = arith.addf %198, %200 : vector<8x64xf32>
    %202 = vector.extract_strided_slice %187 {offsets = [0, 192], sizes = [8, 64], strides = [1, 1]} : vector<8x512xf32> to vector<8x64xf32>
    %203 = math.tanh %196 : vector<8x64xf32>
    %204 = arith.mulf %202, %203 : vector<8x64xf32>
    %205 = vector.extract_strided_slice %187 {offsets = [0, 448], sizes = [8, 64], strides = [1, 1]} : vector<8x512xf32> to vector<8x64xf32>
    %206 = math.tanh %201 : vector<8x64xf32>
    %207 = arith.mulf %205, %206 : vector<8x64xf32>
    %208 = tpu.concatenate %204, %207 in 1 : vector<8x64xf32>, vector<8x64xf32> -> vector<8x128xf32>
    %c40_33 = arith.constant 40 : index
    %c0_34 = arith.constant 0 : index
    %209 = vector.load %arg7[%c40_33, %c0_34] : memref<64x128xf32, #tpu.memory_space<vmem>>, vector<8x64xf32>
    tpu.vector_store %arg7[%c40_33, %c0_34], %204 {strides = array<i32>} : memref<64x128xf32, #tpu.memory_space<vmem>>, vector<8x64xf32>,
    %c16_35 = arith.constant 16 : index
    %c64_36 = arith.constant 64 : index
    %210 = vector.load %arg7[%c16_35, %c64_36] : memref<64x128xf32, #tpu.memory_space<vmem>>, vector<8x64xf32>
    tpu.vector_store %arg7[%c16_35, %c64_36], %207 {strides = array<i32>} : memref<64x128xf32, #tpu.memory_space<vmem>>, vector<8x64xf32>,
    %211 = vector.extract_strided_slice %6 {offsets = [48, 0], sizes = [8, 256], strides = [1, 1]} : vector<64x512xf32> to vector<8x256xf32>
    %212 = vector.extract_strided_slice %6 {offsets = [8, 256], sizes = [8, 256], strides = [1, 1]} : vector<64x512xf32> to vector<8x256xf32>
    %213 = tpu.concatenate %211, %212 in 1 : vector<8x256xf32>, vector<8x256xf32> -> vector<8x512xf32>
    %cst_37 = arith.constant dense<0.000000e+00> : vector<8x512xf32>
    %214 = tpu.matmul %208, %7, %cst_37 {dimension_numbers = #tpu.dot_dimension_numbers<[1], [0], [0], [1], [0, 0, 1, 1], [], []>} : vector<8x128xf32>, vector<128x512xf32>, vector<8x512xf32> -> vector<8x512xf32>
    %215 = arith.addf %213, %214 : vector<8x512xf32>
    %216 = arith.negf %215 : vector<8x512xf32>
    %217 = math.exp %216 : vector<8x512xf32>
    %cst_38 = arith.constant 1.000000e+00 : f32
    %218 = vector.broadcast %cst_38 : f32 to vector<8x512xf32>
    %219 = arith.addf %218, %217 : vector<8x512xf32>
    %220 = arith.divf %218, %219 : vector<8x512xf32>
    %221 = vector.extract_strided_slice %215 {offsets = [0, 128], sizes = [8, 64], strides = [1, 1]} : vector<8x512xf32> to vector<8x64xf32>
    %222 = math.tanh %221 : vector<8x64xf32>
    %223 = vector.extract_strided_slice %215 {offsets = [0, 384], sizes = [8, 64], strides = [1, 1]} : vector<8x512xf32> to vector<8x64xf32>
    %224 = math.tanh %223 : vector<8x64xf32>
    %225 = vector.extract_strided_slice %220 {offsets = [0, 64], sizes = [8, 64], strides = [1, 1]} : vector<8x512xf32> to vector<8x64xf32>
    %226 = arith.mulf %225, %196 : vector<8x64xf32>
    %227 = vector.extract_strided_slice %220 {offsets = [0, 0], sizes = [8, 64], strides = [1, 1]} : vector<8x512xf32> to vector<8x64xf32>
    %228 = arith.mulf %227, %222 : vector<8x64xf32>
    %229 = arith.addf %226, %228 : vector<8x64xf32>
    %230 = vector.extract_strided_slice %220 {offsets = [0, 320], sizes = [8, 64], strides = [1, 1]} : vector<8x512xf32> to vector<8x64xf32>
    %231 = arith.mulf %230, %201 : vector<8x64xf32>
    %232 = vector.extract_strided_slice %220 {offsets = [0, 256], sizes = [8, 64], strides = [1, 1]} : vector<8x512xf32> to vector<8x64xf32>
    %233 = arith.mulf %232, %224 : vector<8x64xf32>
    %234 = arith.addf %231, %233 : vector<8x64xf32>
    %235 = vector.extract_strided_slice %220 {offsets = [0, 192], sizes = [8, 64], strides = [1, 1]} : vector<8x512xf32> to vector<8x64xf32>
    %236 = math.tanh %229 : vector<8x64xf32>
    %237 = arith.mulf %235, %236 : vector<8x64xf32>
    %238 = vector.extract_strided_slice %220 {offsets = [0, 448], sizes = [8, 64], strides = [1, 1]} : vector<8x512xf32> to vector<8x64xf32>
    %239 = math.tanh %234 : vector<8x64xf32>
    %240 = arith.mulf %238, %239 : vector<8x64xf32>
    %241 = tpu.concatenate %237, %240 in 1 : vector<8x64xf32>, vector<8x64xf32> -> vector<8x128xf32>
    %c48_39 = arith.constant 48 : index
    %c0_40 = arith.constant 0 : index
    %242 = vector.load %arg7[%c48_39, %c0_40] : memref<64x128xf32, #tpu.memory_space<vmem>>, vector<8x64xf32>
    tpu.vector_store %arg7[%c48_39, %c0_40], %237 {strides = array<i32>} : memref<64x128xf32, #tpu.memory_space<vmem>>, vector<8x64xf32>,
    %c8_41 = arith.constant 8 : index
    %c64_42 = arith.constant 64 : index
    %243 = vector.load %arg7[%c8_41, %c64_42] : memref<64x128xf32, #tpu.memory_space<vmem>>, vector<8x64xf32>
    tpu.vector_store %arg7[%c8_41, %c64_42], %240 {strides = array<i32>} : memref<64x128xf32, #tpu.memory_space<vmem>>, vector<8x64xf32>,
    %244 = vector.extract_strided_slice %6 {offsets = [56, 0], sizes = [8, 256], strides = [1, 1]} : vector<64x512xf32> to vector<8x256xf32>
    %245 = vector.extract_strided_slice %6 {offsets = [0, 256], sizes = [8, 256], strides = [1, 1]} : vector<64x512xf32> to vector<8x256xf32>
    %246 = tpu.concatenate %244, %245 in 1 : vector<8x256xf32>, vector<8x256xf32> -> vector<8x512xf32>
    %cst_43 = arith.constant dense<0.000000e+00> : vector<8x512xf32>
    %247 = tpu.matmul %241, %7, %cst_43 {dimension_numbers = #tpu.dot_dimension_numbers<[1], [0], [0], [1], [0, 0, 1, 1], [], []>} : vector<8x128xf32>, vector<128x512xf32>, vector<8x512xf32> -> vector<8x512xf32>
    %248 = arith.addf %246, %247 : vector<8x512xf32>
    %249 = arith.negf %248 : vector<8x512xf32>
    %250 = math.exp %249 : vector<8x512xf32>
    %cst_44 = arith.constant 1.000000e+00 : f32
    %251 = vector.broadcast %cst_44 : f32 to vector<8x512xf32>
    %252 = arith.addf %251, %250 : vector<8x512xf32>
    %253 = arith.divf %251, %252 : vector<8x512xf32>
    %254 = vector.extract_strided_slice %248 {offsets = [0, 128], sizes = [8, 64], strides = [1, 1]} : vector<8x512xf32> to vector<8x64xf32>
    %255 = math.tanh %254 : vector<8x64xf32>
    %256 = vector.extract_strided_slice %248 {offsets = [0, 384], sizes = [8, 64], strides = [1, 1]} : vector<8x512xf32> to vector<8x64xf32>
    %257 = math.tanh %256 : vector<8x64xf32>
    %258 = vector.extract_strided_slice %253 {offsets = [0, 64], sizes = [8, 64], strides = [1, 1]} : vector<8x512xf32> to vector<8x64xf32>
    %259 = arith.mulf %258, %229 : vector<8x64xf32>
    %260 = vector.extract_strided_slice %253 {offsets = [0, 0], sizes = [8, 64], strides = [1, 1]} : vector<8x512xf32> to vector<8x64xf32>
    %261 = arith.mulf %260, %255 : vector<8x64xf32>
    %262 = arith.addf %259, %261 : vector<8x64xf32>
    %263 = vector.extract_strided_slice %253 {offsets = [0, 320], sizes = [8, 64], strides = [1, 1]} : vector<8x512xf32> to vector<8x64xf32>
    %264 = arith.mulf %263, %234 : vector<8x64xf32>
    %265 = vector.extract_strided_slice %253 {offsets = [0, 256], sizes = [8, 64], strides = [1, 1]} : vector<8x512xf32> to vector<8x64xf32>
    %266 = arith.mulf %265, %257 : vector<8x64xf32>
    %267 = arith.addf %264, %266 : vector<8x64xf32>
    %268 = vector.extract_strided_slice %253 {offsets = [0, 192], sizes = [8, 64], strides = [1, 1]} : vector<8x512xf32> to vector<8x64xf32>
    %269 = math.tanh %262 : vector<8x64xf32>
    %270 = arith.mulf %268, %269 : vector<8x64xf32>
    %271 = vector.extract_strided_slice %253 {offsets = [0, 448], sizes = [8, 64], strides = [1, 1]} : vector<8x512xf32> to vector<8x64xf32>
    %272 = math.tanh %267 : vector<8x64xf32>
    %273 = arith.mulf %271, %272 : vector<8x64xf32>
    %c56_45 = arith.constant 56 : index
    %c0_46 = arith.constant 0 : index
    %274 = vector.load %arg7[%c56_45, %c0_46] : memref<64x128xf32, #tpu.memory_space<vmem>>, vector<8x64xf32>
    tpu.vector_store %arg7[%c56_45, %c0_46], %270 {strides = array<i32>} : memref<64x128xf32, #tpu.memory_space<vmem>>, vector<8x64xf32>,
    %c0_47 = arith.constant 0 : index
    %c64_48 = arith.constant 64 : index
    %275 = vector.load %arg7[%c0_47, %c64_48] : memref<64x128xf32, #tpu.memory_space<vmem>>, vector<8x64xf32>
    tpu.vector_store %arg7[%c0_47, %c64_48], %273 {strides = array<i32>} : memref<64x128xf32, #tpu.memory_space<vmem>>, vector<8x64xf32>,
    %c0_49 = arith.constant 0 : index
    %c0_50 = arith.constant 0 : index
    %276 = vector.load %arg7[%c0_49, %c0_50] : memref<64x128xf32, #tpu.memory_space<vmem>>, vector<64x128xf32>
    %c136 = arith.constant 136 : index
    %c0_51 = arith.constant 0 : index
    %277 = vector.load %arg4[%c136, %c0_51] : memref<400x512xf32, #tpu.memory_space<vmem>>, vector<129x512xf32>
    %278 = vector.extract_strided_slice %277 {offsets = [0, 0], sizes = [128, 512], strides = [1, 1]} : vector<129x512xf32> to vector<128x512xf32>
    %cst_52 = arith.constant dense<0.000000e+00> : vector<64x512xf32>
    %279 = tpu.matmul %276, %278, %cst_52 {dimension_numbers = #tpu.dot_dimension_numbers<[1], [0], [0], [1], [0, 0, 1, 1], [], []>} : vector<64x128xf32>, vector<128x512xf32>, vector<64x512xf32> -> vector<64x512xf32>
    %280 = vector.extract_strided_slice %277 {offsets = [128, 0], sizes = [1, 512], strides = [1, 1]} : vector<129x512xf32> to vector<1x512xf32>
    %281 = vector.broadcast %280 : vector<1x512xf32> to vector<64x512xf32>
    %282 = arith.addf %279, %281 : vector<64x512xf32>
    %c272 = arith.constant 272 : index
    %c0_53 = arith.constant 0 : index
    %283 = vector.load %arg4[%c272, %c0_53] : memref<400x512xf32, #tpu.memory_space<vmem>>, vector<128x512xf32>
    %cst_54 = arith.constant 0.000000e+00 : f32
    %284 = vector.broadcast %cst_54 : f32 to vector<8x64xf32>
    %cst_55 = arith.constant 0.000000e+00 : f32
    %285 = vector.broadcast %cst_55 : f32 to vector<8x64xf32>
    %cst_56 = arith.constant 0.000000e+00 : f32
    %286 = vector.broadcast %cst_56 : f32 to vector<8x64xf32>
    %cst_57 = arith.constant 0.000000e+00 : f32
    %287 = vector.broadcast %cst_57 : f32 to vector<8x64xf32>
    %288 = tpu.concatenate %284, %286 in 1 : vector<8x64xf32>, vector<8x64xf32> -> vector<8x128xf32>
    %289 = vector.extract_strided_slice %282 {offsets = [0, 0], sizes = [8, 256], strides = [1, 1]} : vector<64x512xf32> to vector<8x256xf32>
    %290 = vector.extract_strided_slice %282 {offsets = [56, 256], sizes = [8, 256], strides = [1, 1]} : vector<64x512xf32> to vector<8x256xf32>
    %291 = tpu.concatenate %289, %290 in 1 : vector<8x256xf32>, vector<8x256xf32> -> vector<8x512xf32>
    %cst_58 = arith.constant dense<0.000000e+00> : vector<8x512xf32>
    %292 = tpu.matmul %288, %283, %cst_58 {dimension_numbers = #tpu.dot_dimension_numbers<[1], [0], [0], [1], [0, 0, 1, 1], [], []>} : vector<8x128xf32>, vector<128x512xf32>, vector<8x512xf32> -> vector<8x512xf32>
    %293 = arith.addf %291, %292 : vector<8x512xf32>
    %294 = arith.negf %293 : vector<8x512xf32>
    %295 = math.exp %294 : vector<8x512xf32>
    %cst_59 = arith.constant 1.000000e+00 : f32
    %296 = vector.broadcast %cst_59 : f32 to vector<8x512xf32>
    %297 = arith.addf %296, %295 : vector<8x512xf32>
    %298 = arith.divf %296, %297 : vector<8x512xf32>
    %299 = vector.extract_strided_slice %293 {offsets = [0, 128], sizes = [8, 64], strides = [1, 1]} : vector<8x512xf32> to vector<8x64xf32>
    %300 = math.tanh %299 : vector<8x64xf32>
    %301 = vector.extract_strided_slice %293 {offsets = [0, 384], sizes = [8, 64], strides = [1, 1]} : vector<8x512xf32> to vector<8x64xf32>
    %302 = math.tanh %301 : vector<8x64xf32>
    %303 = vector.extract_strided_slice %298 {offsets = [0, 64], sizes = [8, 64], strides = [1, 1]} : vector<8x512xf32> to vector<8x64xf32>
    %304 = arith.mulf %303, %285 : vector<8x64xf32>
    %305 = vector.extract_strided_slice %298 {offsets = [0, 0], sizes = [8, 64], strides = [1, 1]} : vector<8x512xf32> to vector<8x64xf32>
    %306 = arith.mulf %305, %300 : vector<8x64xf32>
    %307 = arith.addf %304, %306 : vector<8x64xf32>
    %308 = vector.extract_strided_slice %298 {offsets = [0, 320], sizes = [8, 64], strides = [1, 1]} : vector<8x512xf32> to vector<8x64xf32>
    %309 = arith.mulf %308, %287 : vector<8x64xf32>
    %310 = vector.extract_strided_slice %298 {offsets = [0, 256], sizes = [8, 64], strides = [1, 1]} : vector<8x512xf32> to vector<8x64xf32>
    %311 = arith.mulf %310, %302 : vector<8x64xf32>
    %312 = arith.addf %309, %311 : vector<8x64xf32>
    %313 = vector.extract_strided_slice %298 {offsets = [0, 192], sizes = [8, 64], strides = [1, 1]} : vector<8x512xf32> to vector<8x64xf32>
    %314 = math.tanh %307 : vector<8x64xf32>
    %315 = arith.mulf %313, %314 : vector<8x64xf32>
    %316 = vector.extract_strided_slice %298 {offsets = [0, 448], sizes = [8, 64], strides = [1, 1]} : vector<8x512xf32> to vector<8x64xf32>
    %317 = math.tanh %312 : vector<8x64xf32>
    %318 = arith.mulf %316, %317 : vector<8x64xf32>
    %319 = tpu.concatenate %315, %318 in 1 : vector<8x64xf32>, vector<8x64xf32> -> vector<8x128xf32>
    %320 = vector.extract_strided_slice %282 {offsets = [8, 0], sizes = [8, 256], strides = [1, 1]} : vector<64x512xf32> to vector<8x256xf32>
    %321 = vector.extract_strided_slice %282 {offsets = [48, 256], sizes = [8, 256], strides = [1, 1]} : vector<64x512xf32> to vector<8x256xf32>
    %322 = tpu.concatenate %320, %321 in 1 : vector<8x256xf32>, vector<8x256xf32> -> vector<8x512xf32>
    %cst_60 = arith.constant dense<0.000000e+00> : vector<8x512xf32>
    %323 = tpu.matmul %319, %283, %cst_60 {dimension_numbers = #tpu.dot_dimension_numbers<[1], [0], [0], [1], [0, 0, 1, 1], [], []>} : vector<8x128xf32>, vector<128x512xf32>, vector<8x512xf32> -> vector<8x512xf32>
    %324 = arith.addf %322, %323 : vector<8x512xf32>
    %325 = arith.negf %324 : vector<8x512xf32>
    %326 = math.exp %325 : vector<8x512xf32>
    %cst_61 = arith.constant 1.000000e+00 : f32
    %327 = vector.broadcast %cst_61 : f32 to vector<8x512xf32>
    %328 = arith.addf %327, %326 : vector<8x512xf32>
    %329 = arith.divf %327, %328 : vector<8x512xf32>
    %330 = vector.extract_strided_slice %324 {offsets = [0, 128], sizes = [8, 64], strides = [1, 1]} : vector<8x512xf32> to vector<8x64xf32>
    %331 = math.tanh %330 : vector<8x64xf32>
    %332 = vector.extract_strided_slice %324 {offsets = [0, 384], sizes = [8, 64], strides = [1, 1]} : vector<8x512xf32> to vector<8x64xf32>
    %333 = math.tanh %332 : vector<8x64xf32>
    %334 = vector.extract_strided_slice %329 {offsets = [0, 64], sizes = [8, 64], strides = [1, 1]} : vector<8x512xf32> to vector<8x64xf32>
    %335 = arith.mulf %334, %307 : vector<8x64xf32>
    %336 = vector.extract_strided_slice %329 {offsets = [0, 0], sizes = [8, 64], strides = [1, 1]} : vector<8x512xf32> to vector<8x64xf32>
    %337 = arith.mulf %336, %331 : vector<8x64xf32>
    %338 = arith.addf %335, %337 : vector<8x64xf32>
    %339 = vector.extract_strided_slice %329 {offsets = [0, 320], sizes = [8, 64], strides = [1, 1]} : vector<8x512xf32> to vector<8x64xf32>
    %340 = arith.mulf %339, %312 : vector<8x64xf32>
    %341 = vector.extract_strided_slice %329 {offsets = [0, 256], sizes = [8, 64], strides = [1, 1]} : vector<8x512xf32> to vector<8x64xf32>
    %342 = arith.mulf %341, %333 : vector<8x64xf32>
    %343 = arith.addf %340, %342 : vector<8x64xf32>
    %344 = vector.extract_strided_slice %329 {offsets = [0, 192], sizes = [8, 64], strides = [1, 1]} : vector<8x512xf32> to vector<8x64xf32>
    %345 = math.tanh %338 : vector<8x64xf32>
    %346 = arith.mulf %344, %345 : vector<8x64xf32>
    %347 = vector.extract_strided_slice %329 {offsets = [0, 448], sizes = [8, 64], strides = [1, 1]} : vector<8x512xf32> to vector<8x64xf32>
    %348 = math.tanh %343 : vector<8x64xf32>
    %349 = arith.mulf %347, %348 : vector<8x64xf32>
    %350 = tpu.concatenate %346, %349 in 1 : vector<8x64xf32>, vector<8x64xf32> -> vector<8x128xf32>
    %351 = vector.extract_strided_slice %282 {offsets = [16, 0], sizes = [8, 256], strides = [1, 1]} : vector<64x512xf32> to vector<8x256xf32>
    %352 = vector.extract_strided_slice %282 {offsets = [40, 256], sizes = [8, 256], strides = [1, 1]} : vector<64x512xf32> to vector<8x256xf32>
    %353 = tpu.concatenate %351, %352 in 1 : vector<8x256xf32>, vector<8x256xf32> -> vector<8x512xf32>
    %cst_62 = arith.constant dense<0.000000e+00> : vector<8x512xf32>
    %354 = tpu.matmul %350, %283, %cst_62 {dimension_numbers = #tpu.dot_dimension_numbers<[1], [0], [0], [1], [0, 0, 1, 1], [], []>} : vector<8x128xf32>, vector<128x512xf32>, vector<8x512xf32> -> vector<8x512xf32>
    %355 = arith.addf %353, %354 : vector<8x512xf32>
    %356 = arith.negf %355 : vector<8x512xf32>
    %357 = math.exp %356 : vector<8x512xf32>
    %cst_63 = arith.constant 1.000000e+00 : f32
    %358 = vector.broadcast %cst_63 : f32 to vector<8x512xf32>
    %359 = arith.addf %358, %357 : vector<8x512xf32>
    %360 = arith.divf %358, %359 : vector<8x512xf32>
    %361 = vector.extract_strided_slice %355 {offsets = [0, 128], sizes = [8, 64], strides = [1, 1]} : vector<8x512xf32> to vector<8x64xf32>
    %362 = math.tanh %361 : vector<8x64xf32>
    %363 = vector.extract_strided_slice %355 {offsets = [0, 384], sizes = [8, 64], strides = [1, 1]} : vector<8x512xf32> to vector<8x64xf32>
    %364 = math.tanh %363 : vector<8x64xf32>
    %365 = vector.extract_strided_slice %360 {offsets = [0, 64], sizes = [8, 64], strides = [1, 1]} : vector<8x512xf32> to vector<8x64xf32>
    %366 = arith.mulf %365, %338 : vector<8x64xf32>
    %367 = vector.extract_strided_slice %360 {offsets = [0, 0], sizes = [8, 64], strides = [1, 1]} : vector<8x512xf32> to vector<8x64xf32>
    %368 = arith.mulf %367, %362 : vector<8x64xf32>
    %369 = arith.addf %366, %368 : vector<8x64xf32>
    %370 = vector.extract_strided_slice %360 {offsets = [0, 320], sizes = [8, 64], strides = [1, 1]} : vector<8x512xf32> to vector<8x64xf32>
    %371 = arith.mulf %370, %343 : vector<8x64xf32>
    %372 = vector.extract_strided_slice %360 {offsets = [0, 256], sizes = [8, 64], strides = [1, 1]} : vector<8x512xf32> to vector<8x64xf32>
    %373 = arith.mulf %372, %364 : vector<8x64xf32>
    %374 = arith.addf %371, %373 : vector<8x64xf32>
    %375 = vector.extract_strided_slice %360 {offsets = [0, 192], sizes = [8, 64], strides = [1, 1]} : vector<8x512xf32> to vector<8x64xf32>
    %376 = math.tanh %369 : vector<8x64xf32>
    %377 = arith.mulf %375, %376 : vector<8x64xf32>
    %378 = vector.extract_strided_slice %360 {offsets = [0, 448], sizes = [8, 64], strides = [1, 1]} : vector<8x512xf32> to vector<8x64xf32>
    %379 = math.tanh %374 : vector<8x64xf32>
    %380 = arith.mulf %378, %379 : vector<8x64xf32>
    %381 = tpu.concatenate %377, %380 in 1 : vector<8x64xf32>, vector<8x64xf32> -> vector<8x128xf32>
    %382 = vector.extract_strided_slice %282 {offsets = [24, 0], sizes = [8, 256], strides = [1, 1]} : vector<64x512xf32> to vector<8x256xf32>
    %383 = vector.extract_strided_slice %282 {offsets = [32, 256], sizes = [8, 256], strides = [1, 1]} : vector<64x512xf32> to vector<8x256xf32>
    %384 = tpu.concatenate %382, %383 in 1 : vector<8x256xf32>, vector<8x256xf32> -> vector<8x512xf32>
    %cst_64 = arith.constant dense<0.000000e+00> : vector<8x512xf32>
    %385 = tpu.matmul %381, %283, %cst_64 {dimension_numbers = #tpu.dot_dimension_numbers<[1], [0], [0], [1], [0, 0, 1, 1], [], []>} : vector<8x128xf32>, vector<128x512xf32>, vector<8x512xf32> -> vector<8x512xf32>
    %386 = arith.addf %384, %385 : vector<8x512xf32>
    %387 = arith.negf %386 : vector<8x512xf32>
    %388 = math.exp %387 : vector<8x512xf32>
    %cst_65 = arith.constant 1.000000e+00 : f32
    %389 = vector.broadcast %cst_65 : f32 to vector<8x512xf32>
    %390 = arith.addf %389, %388 : vector<8x512xf32>
    %391 = arith.divf %389, %390 : vector<8x512xf32>
    %392 = vector.extract_strided_slice %386 {offsets = [0, 128], sizes = [8, 64], strides = [1, 1]} : vector<8x512xf32> to vector<8x64xf32>
    %393 = math.tanh %392 : vector<8x64xf32>
    %394 = vector.extract_strided_slice %386 {offsets = [0, 384], sizes = [8, 64], strides = [1, 1]} : vector<8x512xf32> to vector<8x64xf32>
    %395 = math.tanh %394 : vector<8x64xf32>
    %396 = vector.extract_strided_slice %391 {offsets = [0, 64], sizes = [8, 64], strides = [1, 1]} : vector<8x512xf32> to vector<8x64xf32>
    %397 = arith.mulf %396, %369 : vector<8x64xf32>
    %398 = vector.extract_strided_slice %391 {offsets = [0, 0], sizes = [8, 64], strides = [1, 1]} : vector<8x512xf32> to vector<8x64xf32>
    %399 = arith.mulf %398, %393 : vector<8x64xf32>
    %400 = arith.addf %397, %399 : vector<8x64xf32>
    %401 = vector.extract_strided_slice %391 {offsets = [0, 320], sizes = [8, 64], strides = [1, 1]} : vector<8x512xf32> to vector<8x64xf32>
    %402 = arith.mulf %401, %374 : vector<8x64xf32>
    %403 = vector.extract_strided_slice %391 {offsets = [0, 256], sizes = [8, 64], strides = [1, 1]} : vector<8x512xf32> to vector<8x64xf32>
    %404 = arith.mulf %403, %395 : vector<8x64xf32>
    %405 = arith.addf %402, %404 : vector<8x64xf32>
    %406 = vector.extract_strided_slice %391 {offsets = [0, 192], sizes = [8, 64], strides = [1, 1]} : vector<8x512xf32> to vector<8x64xf32>
    %407 = math.tanh %400 : vector<8x64xf32>
    %408 = arith.mulf %406, %407 : vector<8x64xf32>
    %409 = vector.extract_strided_slice %391 {offsets = [0, 448], sizes = [8, 64], strides = [1, 1]} : vector<8x512xf32> to vector<8x64xf32>
    %410 = math.tanh %405 : vector<8x64xf32>
    %411 = arith.mulf %409, %410 : vector<8x64xf32>
    %412 = tpu.concatenate %408, %411 in 1 : vector<8x64xf32>, vector<8x64xf32> -> vector<8x128xf32>
    %413 = vector.extract_strided_slice %282 {offsets = [32, 0], sizes = [8, 256], strides = [1, 1]} : vector<64x512xf32> to vector<8x256xf32>
    %414 = vector.extract_strided_slice %282 {offsets = [24, 256], sizes = [8, 256], strides = [1, 1]} : vector<64x512xf32> to vector<8x256xf32>
    %415 = tpu.concatenate %413, %414 in 1 : vector<8x256xf32>, vector<8x256xf32> -> vector<8x512xf32>
    %cst_66 = arith.constant dense<0.000000e+00> : vector<8x512xf32>
    %416 = tpu.matmul %412, %283, %cst_66 {dimension_numbers = #tpu.dot_dimension_numbers<[1], [0], [0], [1], [0, 0, 1, 1], [], []>} : vector<8x128xf32>, vector<128x512xf32>, vector<8x512xf32> -> vector<8x512xf32>
    %417 = arith.addf %415, %416 : vector<8x512xf32>
    %418 = arith.negf %417 : vector<8x512xf32>
    %419 = math.exp %418 : vector<8x512xf32>
    %cst_67 = arith.constant 1.000000e+00 : f32
    %420 = vector.broadcast %cst_67 : f32 to vector<8x512xf32>
    %421 = arith.addf %420, %419 : vector<8x512xf32>
    %422 = arith.divf %420, %421 : vector<8x512xf32>
    %423 = vector.extract_strided_slice %417 {offsets = [0, 128], sizes = [8, 64], strides = [1, 1]} : vector<8x512xf32> to vector<8x64xf32>
    %424 = math.tanh %423 : vector<8x64xf32>
    %425 = vector.extract_strided_slice %417 {offsets = [0, 384], sizes = [8, 64], strides = [1, 1]} : vector<8x512xf32> to vector<8x64xf32>
    %426 = math.tanh %425 : vector<8x64xf32>
    %427 = vector.extract_strided_slice %422 {offsets = [0, 64], sizes = [8, 64], strides = [1, 1]} : vector<8x512xf32> to vector<8x64xf32>
    %428 = arith.mulf %427, %400 : vector<8x64xf32>
    %429 = vector.extract_strided_slice %422 {offsets = [0, 0], sizes = [8, 64], strides = [1, 1]} : vector<8x512xf32> to vector<8x64xf32>
    %430 = arith.mulf %429, %424 : vector<8x64xf32>
    %431 = arith.addf %428, %430 : vector<8x64xf32>
    %432 = vector.extract_strided_slice %422 {offsets = [0, 320], sizes = [8, 64], strides = [1, 1]} : vector<8x512xf32> to vector<8x64xf32>
    %433 = arith.mulf %432, %405 : vector<8x64xf32>
    %434 = vector.extract_strided_slice %422 {offsets = [0, 256], sizes = [8, 64], strides = [1, 1]} : vector<8x512xf32> to vector<8x64xf32>
    %435 = arith.mulf %434, %426 : vector<8x64xf32>
    %436 = arith.addf %433, %435 : vector<8x64xf32>
    %437 = vector.extract_strided_slice %422 {offsets = [0, 192], sizes = [8, 64], strides = [1, 1]} : vector<8x512xf32> to vector<8x64xf32>
    %438 = math.tanh %431 : vector<8x64xf32>
    %439 = arith.mulf %437, %438 : vector<8x64xf32>
    %440 = vector.extract_strided_slice %422 {offsets = [0, 448], sizes = [8, 64], strides = [1, 1]} : vector<8x512xf32> to vector<8x64xf32>
    %441 = math.tanh %436 : vector<8x64xf32>
    %442 = arith.mulf %440, %441 : vector<8x64xf32>
    %443 = tpu.concatenate %439, %442 in 1 : vector<8x64xf32>, vector<8x64xf32> -> vector<8x128xf32>
    %444 = vector.extract_strided_slice %282 {offsets = [40, 0], sizes = [8, 256], strides = [1, 1]} : vector<64x512xf32> to vector<8x256xf32>
    %445 = vector.extract_strided_slice %282 {offsets = [16, 256], sizes = [8, 256], strides = [1, 1]} : vector<64x512xf32> to vector<8x256xf32>
    %446 = tpu.concatenate %444, %445 in 1 : vector<8x256xf32>, vector<8x256xf32> -> vector<8x512xf32>
    %cst_68 = arith.constant dense<0.000000e+00> : vector<8x512xf32>
    %447 = tpu.matmul %443, %283, %cst_68 {dimension_numbers = #tpu.dot_dimension_numbers<[1], [0], [0], [1], [0, 0, 1, 1], [], []>} : vector<8x128xf32>, vector<128x512xf32>, vector<8x512xf32> -> vector<8x512xf32>
    %448 = arith.addf %446, %447 : vector<8x512xf32>
    %449 = arith.negf %448 : vector<8x512xf32>
    %450 = math.exp %449 : vector<8x512xf32>
    %cst_69 = arith.constant 1.000000e+00 : f32
    %451 = vector.broadcast %cst_69 : f32 to vector<8x512xf32>
    %452 = arith.addf %451, %450 : vector<8x512xf32>
    %453 = arith.divf %451, %452 : vector<8x512xf32>
    %454 = vector.extract_strided_slice %448 {offsets = [0, 128], sizes = [8, 64], strides = [1, 1]} : vector<8x512xf32> to vector<8x64xf32>
    %455 = math.tanh %454 : vector<8x64xf32>
    %456 = vector.extract_strided_slice %448 {offsets = [0, 384], sizes = [8, 64], strides = [1, 1]} : vector<8x512xf32> to vector<8x64xf32>
    %457 = math.tanh %456 : vector<8x64xf32>
    %458 = vector.extract_strided_slice %453 {offsets = [0, 64], sizes = [8, 64], strides = [1, 1]} : vector<8x512xf32> to vector<8x64xf32>
    %459 = arith.mulf %458, %431 : vector<8x64xf32>
    %460 = vector.extract_strided_slice %453 {offsets = [0, 0], sizes = [8, 64], strides = [1, 1]} : vector<8x512xf32> to vector<8x64xf32>
    %461 = arith.mulf %460, %455 : vector<8x64xf32>
    %462 = arith.addf %459, %461 : vector<8x64xf32>
    %463 = vector.extract_strided_slice %453 {offsets = [0, 320], sizes = [8, 64], strides = [1, 1]} : vector<8x512xf32> to vector<8x64xf32>
    %464 = arith.mulf %463, %436 : vector<8x64xf32>
    %465 = vector.extract_strided_slice %453 {offsets = [0, 256], sizes = [8, 64], strides = [1, 1]} : vector<8x512xf32> to vector<8x64xf32>
    %466 = arith.mulf %465, %457 : vector<8x64xf32>
    %467 = arith.addf %464, %466 : vector<8x64xf32>
    %468 = vector.extract_strided_slice %453 {offsets = [0, 192], sizes = [8, 64], strides = [1, 1]} : vector<8x512xf32> to vector<8x64xf32>
    %469 = math.tanh %462 : vector<8x64xf32>
    %470 = arith.mulf %468, %469 : vector<8x64xf32>
    %471 = vector.extract_strided_slice %453 {offsets = [0, 448], sizes = [8, 64], strides = [1, 1]} : vector<8x512xf32> to vector<8x64xf32>
    %472 = math.tanh %467 : vector<8x64xf32>
    %473 = arith.mulf %471, %472 : vector<8x64xf32>
    %474 = tpu.concatenate %470, %473 in 1 : vector<8x64xf32>, vector<8x64xf32> -> vector<8x128xf32>
    %475 = vector.extract_strided_slice %282 {offsets = [48, 0], sizes = [8, 256], strides = [1, 1]} : vector<64x512xf32> to vector<8x256xf32>
    %476 = vector.extract_strided_slice %282 {offsets = [8, 256], sizes = [8, 256], strides = [1, 1]} : vector<64x512xf32> to vector<8x256xf32>
    %477 = tpu.concatenate %475, %476 in 1 : vector<8x256xf32>, vector<8x256xf32> -> vector<8x512xf32>
    %cst_70 = arith.constant dense<0.000000e+00> : vector<8x512xf32>
    %478 = tpu.matmul %474, %283, %cst_70 {dimension_numbers = #tpu.dot_dimension_numbers<[1], [0], [0], [1], [0, 0, 1, 1], [], []>} : vector<8x128xf32>, vector<128x512xf32>, vector<8x512xf32> -> vector<8x512xf32>
    %479 = arith.addf %477, %478 : vector<8x512xf32>
    %480 = arith.negf %479 : vector<8x512xf32>
    %481 = math.exp %480 : vector<8x512xf32>
    %cst_71 = arith.constant 1.000000e+00 : f32
    %482 = vector.broadcast %cst_71 : f32 to vector<8x512xf32>
    %483 = arith.addf %482, %481 : vector<8x512xf32>
    %484 = arith.divf %482, %483 : vector<8x512xf32>
    %485 = vector.extract_strided_slice %479 {offsets = [0, 128], sizes = [8, 64], strides = [1, 1]} : vector<8x512xf32> to vector<8x64xf32>
    %486 = math.tanh %485 : vector<8x64xf32>
    %487 = vector.extract_strided_slice %479 {offsets = [0, 384], sizes = [8, 64], strides = [1, 1]} : vector<8x512xf32> to vector<8x64xf32>
    %488 = math.tanh %487 : vector<8x64xf32>
    %489 = vector.extract_strided_slice %484 {offsets = [0, 64], sizes = [8, 64], strides = [1, 1]} : vector<8x512xf32> to vector<8x64xf32>
    %490 = arith.mulf %489, %462 : vector<8x64xf32>
    %491 = vector.extract_strided_slice %484 {offsets = [0, 0], sizes = [8, 64], strides = [1, 1]} : vector<8x512xf32> to vector<8x64xf32>
    %492 = arith.mulf %491, %486 : vector<8x64xf32>
    %493 = arith.addf %490, %492 : vector<8x64xf32>
    %494 = vector.extract_strided_slice %484 {offsets = [0, 320], sizes = [8, 64], strides = [1, 1]} : vector<8x512xf32> to vector<8x64xf32>
    %495 = arith.mulf %494, %467 : vector<8x64xf32>
    %496 = vector.extract_strided_slice %484 {offsets = [0, 256], sizes = [8, 64], strides = [1, 1]} : vector<8x512xf32> to vector<8x64xf32>
    %497 = arith.mulf %496, %488 : vector<8x64xf32>
    %498 = arith.addf %495, %497 : vector<8x64xf32>
    %499 = vector.extract_strided_slice %484 {offsets = [0, 192], sizes = [8, 64], strides = [1, 1]} : vector<8x512xf32> to vector<8x64xf32>
    %500 = math.tanh %493 : vector<8x64xf32>
    %501 = arith.mulf %499, %500 : vector<8x64xf32>
    %502 = vector.extract_strided_slice %484 {offsets = [0, 448], sizes = [8, 64], strides = [1, 1]} : vector<8x512xf32> to vector<8x64xf32>
    %503 = math.tanh %498 : vector<8x64xf32>
    %504 = arith.mulf %502, %503 : vector<8x64xf32>
    %505 = tpu.concatenate %501, %504 in 1 : vector<8x64xf32>, vector<8x64xf32> -> vector<8x128xf32>
    %506 = vector.extract_strided_slice %282 {offsets = [56, 0], sizes = [8, 256], strides = [1, 1]} : vector<64x512xf32> to vector<8x256xf32>
    %507 = vector.extract_strided_slice %282 {offsets = [0, 256], sizes = [8, 256], strides = [1, 1]} : vector<64x512xf32> to vector<8x256xf32>
    %508 = tpu.concatenate %506, %507 in 1 : vector<8x256xf32>, vector<8x256xf32> -> vector<8x512xf32>
    %cst_72 = arith.constant dense<0.000000e+00> : vector<8x512xf32>
    %509 = tpu.matmul %505, %283, %cst_72 {dimension_numbers = #tpu.dot_dimension_numbers<[1], [0], [0], [1], [0, 0, 1, 1], [], []>} : vector<8x128xf32>, vector<128x512xf32>, vector<8x512xf32> -> vector<8x512xf32>
    %510 = arith.addf %508, %509 : vector<8x512xf32>
    %511 = arith.negf %510 : vector<8x512xf32>
    %512 = math.exp %511 : vector<8x512xf32>
    %cst_73 = arith.constant 1.000000e+00 : f32
    %513 = vector.broadcast %cst_73 : f32 to vector<8x512xf32>
    %514 = arith.addf %513, %512 : vector<8x512xf32>
    %515 = arith.divf %513, %514 : vector<8x512xf32>
    %516 = vector.extract_strided_slice %510 {offsets = [0, 384], sizes = [8, 64], strides = [1, 1]} : vector<8x512xf32> to vector<8x64xf32>
    %517 = math.tanh %516 : vector<8x64xf32>
    %518 = vector.extract_strided_slice %515 {offsets = [0, 320], sizes = [8, 64], strides = [1, 1]} : vector<8x512xf32> to vector<8x64xf32>
    %519 = arith.mulf %518, %498 : vector<8x64xf32>
    %520 = vector.extract_strided_slice %515 {offsets = [0, 256], sizes = [8, 64], strides = [1, 1]} : vector<8x512xf32> to vector<8x64xf32>
    %521 = arith.mulf %520, %517 : vector<8x64xf32>
    %522 = arith.addf %519, %521 : vector<8x64xf32>
    %523 = vector.extract_strided_slice %515 {offsets = [0, 448], sizes = [8, 64], strides = [1, 1]} : vector<8x512xf32> to vector<8x64xf32>
    %524 = math.tanh %522 : vector<8x64xf32>
    %525 = arith.mulf %523, %524 : vector<8x64xf32>
    %526 = tpu.concatenate %315, %525 in 1 : vector<8x64xf32>, vector<8x64xf32> -> vector<8x128xf32>
    %c0_74 = arith.constant 0 : index
    %c0_75 = arith.constant 0 : index
    %527 = vector.load %arg5[%c0_74, %c0_75] : memref<1184x128xf32, #tpu.memory_space<vmem>>, vector<129x32xf32>
    %528 = vector.extract_strided_slice %527 {offsets = [0, 0], sizes = [128, 32], strides = [1, 1]} : vector<129x32xf32> to vector<128x32xf32>
    %cst_76 = arith.constant dense<0.000000e+00> : vector<8x32xf32>
    %529 = tpu.matmul %526, %528, %cst_76 {dimension_numbers = #tpu.dot_dimension_numbers<[1], [0], [0], [1], [0, 0, 1, 1], [], []>} : vector<8x128xf32>, vector<128x32xf32>, vector<8x32xf32> -> vector<8x32xf32>
    %530 = vector.extract_strided_slice %527 {offsets = [128, 0], sizes = [1, 32], strides = [1, 1]} : vector<129x32xf32> to vector<1x32xf32>
    %531 = vector.broadcast %530 : vector<1x32xf32> to vector<8x32xf32>
    %532 = arith.addf %529, %531 : vector<8x32xf32>
    %c0_77 = arith.constant 0 : index
    %c0_78 = arith.constant 0 : index
    %533 = vector.load %arg1[%c0_77, %c0_78] : memref<64x32xf32, #tpu.memory_space<vmem>>, vector<64x32xf32>
    %c136_79 = arith.constant 136 : index
    %c0_80 = arith.constant 0 : index
    %534 = vector.load %arg5[%c136_79, %c0_80] : memref<1184x128xf32, #tpu.memory_space<vmem>>, vector<33x32xf32>
    %535 = vector.extract_strided_slice %534 {offsets = [0, 0], sizes = [32, 32], strides = [1, 1]} : vector<33x32xf32> to vector<32x32xf32>
    %cst_81 = arith.constant dense<0.000000e+00> : vector<64x32xf32>
    %536 = tpu.matmul %533, %535, %cst_81 {dimension_numbers = #tpu.dot_dimension_numbers<[1], [0], [0], [1], [0, 0, 1, 1], [], []>} : vector<64x32xf32>, vector<32x32xf32>, vector<64x32xf32> -> vector<64x32xf32>
    %537 = vector.extract_strided_slice %534 {offsets = [32, 0], sizes = [1, 32], strides = [1, 1]} : vector<33x32xf32> to vector<1x32xf32>
    %538 = vector.broadcast %537 : vector<1x32xf32> to vector<64x32xf32>
    %539 = arith.addf %536, %538 : vector<64x32xf32>
    %540 = math.tanh %539 : vector<64x32xf32>
    %c0_82 = arith.constant 0 : index
    %c0_83 = arith.constant 0 : index
    %541 = vector.load %arg2[%c0_82, %c0_83] : memref<24x64xf32, #tpu.memory_space<vmem>>, vector<24x64xf32>
    %cst_84 = arith.constant dense<0.000000e+00> : vector<24x32xf32>
    %542 = tpu.matmul %541, %540, %cst_84 {dimension_numbers = #tpu.dot_dimension_numbers<[1], [0], [0], [1], [0, 0, 1, 1], [], []>} : vector<24x64xf32>, vector<64x32xf32>, vector<24x32xf32> -> vector<24x32xf32>
    %c176 = arith.constant 176 : index
    %c0_85 = arith.constant 0 : index
    %543 = vector.load %arg5[%c176, %c0_85] : memref<1184x128xf32, #tpu.memory_space<vmem>>, vector<6x32xf32>
    %544 = vector.extract_strided_slice %542 {offsets = [0, 0], sizes = [8, 32], strides = [1, 1]} : vector<24x32xf32> to vector<8x32xf32>
    %545 = vector.extract_strided_slice %543 {offsets = [0, 0], sizes = [1, 32], strides = [1, 1]} : vector<6x32xf32> to vector<1x32xf32>
    %546 = vector.extract_strided_slice %543 {offsets = [1, 0], sizes = [1, 32], strides = [1, 1]} : vector<6x32xf32> to vector<1x32xf32>
    %cst_86 = arith.constant dense<0.000000e+00> : vector<8xf32>
    %547 = vector.multi_reduction <add>, %544, %cst_86 [1] : vector<8x32xf32> to vector<8xf32>
    %548 = vector.shape_cast %547 : vector<8xf32> to vector<8x1xf32>
    %cst_87 = arith.constant 3.200000e+01 : f32
    %549 = vector.broadcast %cst_87 : f32 to vector<8x1xf32>
    %550 = arith.divf %548, %549 : vector<8x1xf32>
    %551 = vector.broadcast %550 : vector<8x1xf32> to vector<8x32xf32>
    %552 = arith.subf %544, %551 : vector<8x32xf32>
    %553 = arith.mulf %552, %552 : vector<8x32xf32>
    %cst_88 = arith.constant dense<0.000000e+00> : vector<8xf32>
    %554 = vector.multi_reduction <add>, %553, %cst_88 [1] : vector<8x32xf32> to vector<8xf32>
    %555 = vector.shape_cast %554 : vector<8xf32> to vector<8x1xf32>
    %cst_89 = arith.constant 3.200000e+01 : f32
    %556 = vector.broadcast %cst_89 : f32 to vector<8x1xf32>
    %557 = arith.divf %555, %556 : vector<8x1xf32>
    %cst_90 = arith.constant 9.99999974E-6 : f32
    %558 = vector.broadcast %cst_90 : f32 to vector<8x1xf32>
    %559 = arith.addf %557, %558 : vector<8x1xf32>
    %560 = math.rsqrt %559 : vector<8x1xf32>
    %561 = vector.broadcast %560 : vector<8x1xf32> to vector<8x32xf32>
    %562 = arith.mulf %552, %561 : vector<8x32xf32>
    %563 = vector.broadcast %545 : vector<1x32xf32> to vector<8x32xf32>
    %564 = arith.mulf %562, %563 : vector<8x32xf32>
    %565 = vector.broadcast %546 : vector<1x32xf32> to vector<8x32xf32>
    %566 = arith.addf %564, %565 : vector<8x32xf32>
    %567 = vector.extract_strided_slice %542 {offsets = [8, 0], sizes = [8, 32], strides = [1, 1]} : vector<24x32xf32> to vector<8x32xf32>
    %568 = vector.extract_strided_slice %543 {offsets = [2, 0], sizes = [1, 32], strides = [1, 1]} : vector<6x32xf32> to vector<1x32xf32>
    %569 = vector.extract_strided_slice %543 {offsets = [3, 0], sizes = [1, 32], strides = [1, 1]} : vector<6x32xf32> to vector<1x32xf32>
    %cst_91 = arith.constant dense<0.000000e+00> : vector<8xf32>
    %570 = vector.multi_reduction <add>, %567, %cst_91 [1] : vector<8x32xf32> to vector<8xf32>
    %571 = vector.shape_cast %570 : vector<8xf32> to vector<8x1xf32>
    %cst_92 = arith.constant 3.200000e+01 : f32
    %572 = vector.broadcast %cst_92 : f32 to vector<8x1xf32>
    %573 = arith.divf %571, %572 : vector<8x1xf32>
    %574 = vector.broadcast %573 : vector<8x1xf32> to vector<8x32xf32>
    %575 = arith.subf %567, %574 : vector<8x32xf32>
    %576 = arith.mulf %575, %575 : vector<8x32xf32>
    %cst_93 = arith.constant dense<0.000000e+00> : vector<8xf32>
    %577 = vector.multi_reduction <add>, %576, %cst_93 [1] : vector<8x32xf32> to vector<8xf32>
    %578 = vector.shape_cast %577 : vector<8xf32> to vector<8x1xf32>
    %cst_94 = arith.constant 3.200000e+01 : f32
    %579 = vector.broadcast %cst_94 : f32 to vector<8x1xf32>
    %580 = arith.divf %578, %579 : vector<8x1xf32>
    %cst_95 = arith.constant 9.99999974E-6 : f32
    %581 = vector.broadcast %cst_95 : f32 to vector<8x1xf32>
    %582 = arith.addf %580, %581 : vector<8x1xf32>
    %583 = math.rsqrt %582 : vector<8x1xf32>
    %584 = vector.broadcast %583 : vector<8x1xf32> to vector<8x32xf32>
    %585 = arith.mulf %575, %584 : vector<8x32xf32>
    %586 = vector.broadcast %568 : vector<1x32xf32> to vector<8x32xf32>
    %587 = arith.mulf %585, %586 : vector<8x32xf32>
    %588 = vector.broadcast %569 : vector<1x32xf32> to vector<8x32xf32>
    %589 = arith.addf %587, %588 : vector<8x32xf32>
    %590 = vector.extract_strided_slice %542 {offsets = [16, 0], sizes = [8, 32], strides = [1, 1]} : vector<24x32xf32> to vector<8x32xf32>
    %591 = vector.extract_strided_slice %543 {offsets = [4, 0], sizes = [1, 32], strides = [1, 1]} : vector<6x32xf32> to vector<1x32xf32>
    %592 = vector.extract_strided_slice %543 {offsets = [5, 0], sizes = [1, 32], strides = [1, 1]} : vector<6x32xf32> to vector<1x32xf32>
    %cst_96 = arith.constant dense<0.000000e+00> : vector<8xf32>
    %593 = vector.multi_reduction <add>, %590, %cst_96 [1] : vector<8x32xf32> to vector<8xf32>
    %594 = vector.shape_cast %593 : vector<8xf32> to vector<8x1xf32>
    %cst_97 = arith.constant 3.200000e+01 : f32
    %595 = vector.broadcast %cst_97 : f32 to vector<8x1xf32>
    %596 = arith.divf %594, %595 : vector<8x1xf32>
    %597 = vector.broadcast %596 : vector<8x1xf32> to vector<8x32xf32>
    %598 = arith.subf %590, %597 : vector<8x32xf32>
    %599 = arith.mulf %598, %598 : vector<8x32xf32>
    %cst_98 = arith.constant dense<0.000000e+00> : vector<8xf32>
    %600 = vector.multi_reduction <add>, %599, %cst_98 [1] : vector<8x32xf32> to vector<8xf32>
    %601 = vector.shape_cast %600 : vector<8xf32> to vector<8x1xf32>
    %cst_99 = arith.constant 3.200000e+01 : f32
    %602 = vector.broadcast %cst_99 : f32 to vector<8x1xf32>
    %603 = arith.divf %601, %602 : vector<8x1xf32>
    %cst_100 = arith.constant 9.99999974E-6 : f32
    %604 = vector.broadcast %cst_100 : f32 to vector<8x1xf32>
    %605 = arith.addf %603, %604 : vector<8x1xf32>
    %606 = math.rsqrt %605 : vector<8x1xf32>
    %607 = vector.broadcast %606 : vector<8x1xf32> to vector<8x32xf32>
    %608 = arith.mulf %598, %607 : vector<8x32xf32>
    %609 = vector.broadcast %591 : vector<1x32xf32> to vector<8x32xf32>
    %610 = arith.mulf %608, %609 : vector<8x32xf32>
    %611 = vector.broadcast %592 : vector<1x32xf32> to vector<8x32xf32>
    %612 = arith.addf %610, %611 : vector<8x32xf32>
    %613 = tpu.concatenate %566, %589, %612 in 1 : vector<8x32xf32>, vector<8x32xf32>, vector<8x32xf32> -> vector<8x96xf32>
    %c184 = arith.constant 184 : index
    %c0_101 = arith.constant 0 : index
    %614 = vector.load %arg5[%c184, %c0_101] : memref<1184x128xf32, #tpu.memory_space<vmem>>, vector<97x96xf32>
    %615 = vector.extract_strided_slice %614 {offsets = [0, 0], sizes = [96, 96], strides = [1, 1]} : vector<97x96xf32> to vector<96x96xf32>
    %cst_102 = arith.constant dense<0.000000e+00> : vector<8x96xf32>
    %616 = tpu.matmul %613, %615, %cst_102 {dimension_numbers = #tpu.dot_dimension_numbers<[1], [0], [0], [1], [0, 0, 1, 1], [], []>} : vector<8x96xf32>, vector<96x96xf32>, vector<8x96xf32> -> vector<8x96xf32>
    %617 = vector.extract_strided_slice %614 {offsets = [96, 0], sizes = [1, 96], strides = [1, 1]} : vector<97x96xf32> to vector<1x96xf32>
    %618 = vector.broadcast %617 : vector<1x96xf32> to vector<8x96xf32>
    %619 = arith.addf %616, %618 : vector<8x96xf32>
    %cst_103 = arith.constant 0.000000e+00 : f32
    %620 = vector.broadcast %cst_103 : f32 to vector<8x96xf32>
    %621 = arith.maximumf %619, %620 : vector<8x96xf32>
    %c288 = arith.constant 288 : index
    %c0_104 = arith.constant 0 : index
    %622 = vector.load %arg5[%c288, %c0_104] : memref<1184x128xf32, #tpu.memory_space<vmem>>, vector<97x96xf32>
    %623 = vector.extract_strided_slice %622 {offsets = [0, 0], sizes = [96, 96], strides = [1, 1]} : vector<97x96xf32> to vector<96x96xf32>
    %cst_105 = arith.constant dense<0.000000e+00> : vector<8x96xf32>
    %624 = tpu.matmul %621, %623, %cst_105 {dimension_numbers = #tpu.dot_dimension_numbers<[1], [0], [0], [1], [0, 0, 1, 1], [], []>} : vector<8x96xf32>, vector<96x96xf32>, vector<8x96xf32> -> vector<8x96xf32>
    %625 = vector.extract_strided_slice %622 {offsets = [96, 0], sizes = [1, 96], strides = [1, 1]} : vector<97x96xf32> to vector<1x96xf32>
    %626 = vector.broadcast %625 : vector<1x96xf32> to vector<8x96xf32>
    %627 = arith.addf %624, %626 : vector<8x96xf32>
    %c392 = arith.constant 392 : index
    %c0_106 = arith.constant 0 : index
    %628 = vector.load %arg5[%c392, %c0_106] : memref<1184x128xf32, #tpu.memory_space<vmem>>, vector<6x32xf32>
    %629 = vector.extract_strided_slice %627 {offsets = [0, 0], sizes = [8, 32], strides = [1, 1]} : vector<8x96xf32> to vector<8x32xf32>
    %630 = vector.extract_strided_slice %628 {offsets = [0, 0], sizes = [1, 32], strides = [1, 1]} : vector<6x32xf32> to vector<1x32xf32>
    %631 = vector.extract_strided_slice %628 {offsets = [1, 0], sizes = [1, 32], strides = [1, 1]} : vector<6x32xf32> to vector<1x32xf32>
    %cst_107 = arith.constant dense<0.000000e+00> : vector<8xf32>
    %632 = vector.multi_reduction <add>, %629, %cst_107 [1] : vector<8x32xf32> to vector<8xf32>
    %633 = vector.shape_cast %632 : vector<8xf32> to vector<8x1xf32>
    %cst_108 = arith.constant 3.200000e+01 : f32
    %634 = vector.broadcast %cst_108 : f32 to vector<8x1xf32>
    %635 = arith.divf %633, %634 : vector<8x1xf32>
    %636 = vector.broadcast %635 : vector<8x1xf32> to vector<8x32xf32>
    %637 = arith.subf %629, %636 : vector<8x32xf32>
    %638 = arith.mulf %637, %637 : vector<8x32xf32>
    %cst_109 = arith.constant dense<0.000000e+00> : vector<8xf32>
    %639 = vector.multi_reduction <add>, %638, %cst_109 [1] : vector<8x32xf32> to vector<8xf32>
    %640 = vector.shape_cast %639 : vector<8xf32> to vector<8x1xf32>
    %cst_110 = arith.constant 3.200000e+01 : f32
    %641 = vector.broadcast %cst_110 : f32 to vector<8x1xf32>
    %642 = arith.divf %640, %641 : vector<8x1xf32>
    %cst_111 = arith.constant 9.99999974E-6 : f32
    %643 = vector.broadcast %cst_111 : f32 to vector<8x1xf32>
    %644 = arith.addf %642, %643 : vector<8x1xf32>
    %645 = math.rsqrt %644 : vector<8x1xf32>
    %646 = vector.broadcast %645 : vector<8x1xf32> to vector<8x32xf32>
    %647 = arith.mulf %637, %646 : vector<8x32xf32>
    %648 = vector.broadcast %630 : vector<1x32xf32> to vector<8x32xf32>
    %649 = arith.mulf %647, %648 : vector<8x32xf32>
    %650 = vector.broadcast %631 : vector<1x32xf32> to vector<8x32xf32>
    %651 = arith.addf %649, %650 : vector<8x32xf32>
    %cst_112 = arith.constant 0.000000e+00 : f32
    %652 = vector.broadcast %cst_112 : f32 to vector<8x32xf32>
    %653 = arith.maximumf %651, %652 : vector<8x32xf32>
    %654 = vector.extract_strided_slice %627 {offsets = [0, 32], sizes = [8, 32], strides = [1, 1]} : vector<8x96xf32> to vector<8x32xf32>
    %655 = vector.extract_strided_slice %628 {offsets = [2, 0], sizes = [1, 32], strides = [1, 1]} : vector<6x32xf32> to vector<1x32xf32>
    %656 = vector.extract_strided_slice %628 {offsets = [3, 0], sizes = [1, 32], strides = [1, 1]} : vector<6x32xf32> to vector<1x32xf32>
    %cst_113 = arith.constant dense<0.000000e+00> : vector<8xf32>
    %657 = vector.multi_reduction <add>, %654, %cst_113 [1] : vector<8x32xf32> to vector<8xf32>
    %658 = vector.shape_cast %657 : vector<8xf32> to vector<8x1xf32>
    %cst_114 = arith.constant 3.200000e+01 : f32
    %659 = vector.broadcast %cst_114 : f32 to vector<8x1xf32>
    %660 = arith.divf %658, %659 : vector<8x1xf32>
    %661 = vector.broadcast %660 : vector<8x1xf32> to vector<8x32xf32>
    %662 = arith.subf %654, %661 : vector<8x32xf32>
    %663 = arith.mulf %662, %662 : vector<8x32xf32>
    %cst_115 = arith.constant dense<0.000000e+00> : vector<8xf32>
    %664 = vector.multi_reduction <add>, %663, %cst_115 [1] : vector<8x32xf32> to vector<8xf32>
    %665 = vector.shape_cast %664 : vector<8xf32> to vector<8x1xf32>
    %cst_116 = arith.constant 3.200000e+01 : f32
    %666 = vector.broadcast %cst_116 : f32 to vector<8x1xf32>
    %667 = arith.divf %665, %666 : vector<8x1xf32>
    %cst_117 = arith.constant 9.99999974E-6 : f32
    %668 = vector.broadcast %cst_117 : f32 to vector<8x1xf32>
    %669 = arith.addf %667, %668 : vector<8x1xf32>
    %670 = math.rsqrt %669 : vector<8x1xf32>
    %671 = vector.broadcast %670 : vector<8x1xf32> to vector<8x32xf32>
    %672 = arith.mulf %662, %671 : vector<8x32xf32>
    %673 = vector.broadcast %655 : vector<1x32xf32> to vector<8x32xf32>
    %674 = arith.mulf %672, %673 : vector<8x32xf32>
    %675 = vector.broadcast %656 : vector<1x32xf32> to vector<8x32xf32>
    %676 = arith.addf %674, %675 : vector<8x32xf32>
    %cst_118 = arith.constant 0.000000e+00 : f32
    %677 = vector.broadcast %cst_118 : f32 to vector<8x32xf32>
    %678 = arith.maximumf %676, %677 : vector<8x32xf32>
    %679 = vector.extract_strided_slice %627 {offsets = [0, 64], sizes = [8, 32], strides = [1, 1]} : vector<8x96xf32> to vector<8x32xf32>
    %680 = vector.extract_strided_slice %628 {offsets = [4, 0], sizes = [1, 32], strides = [1, 1]} : vector<6x32xf32> to vector<1x32xf32>
    %681 = vector.extract_strided_slice %628 {offsets = [5, 0], sizes = [1, 32], strides = [1, 1]} : vector<6x32xf32> to vector<1x32xf32>
    %cst_119 = arith.constant dense<0.000000e+00> : vector<8xf32>
    %682 = vector.multi_reduction <add>, %679, %cst_119 [1] : vector<8x32xf32> to vector<8xf32>
    %683 = vector.shape_cast %682 : vector<8xf32> to vector<8x1xf32>
    %cst_120 = arith.constant 3.200000e+01 : f32
    %684 = vector.broadcast %cst_120 : f32 to vector<8x1xf32>
    %685 = arith.divf %683, %684 : vector<8x1xf32>
    %686 = vector.broadcast %685 : vector<8x1xf32> to vector<8x32xf32>
    %687 = arith.subf %679, %686 : vector<8x32xf32>
    %688 = arith.mulf %687, %687 : vector<8x32xf32>
    %cst_121 = arith.constant dense<0.000000e+00> : vector<8xf32>
    %689 = vector.multi_reduction <add>, %688, %cst_121 [1] : vector<8x32xf32> to vector<8xf32>
    %690 = vector.shape_cast %689 : vector<8xf32> to vector<8x1xf32>
    %cst_122 = arith.constant 3.200000e+01 : f32
    %691 = vector.broadcast %cst_122 : f32 to vector<8x1xf32>
    %692 = arith.divf %690, %691 : vector<8x1xf32>
    %cst_123 = arith.constant 9.99999974E-6 : f32
    %693 = vector.broadcast %cst_123 : f32 to vector<8x1xf32>
    %694 = arith.addf %692, %693 : vector<8x1xf32>
    %695 = math.rsqrt %694 : vector<8x1xf32>
    %696 = vector.broadcast %695 : vector<8x1xf32> to vector<8x32xf32>
    %697 = arith.mulf %687, %696 : vector<8x32xf32>
    %698 = vector.broadcast %680 : vector<1x32xf32> to vector<8x32xf32>
    %699 = arith.mulf %697, %698 : vector<8x32xf32>
    %700 = vector.broadcast %681 : vector<1x32xf32> to vector<8x32xf32>
    %701 = arith.addf %699, %700 : vector<8x32xf32>
    %cst_124 = arith.constant 0.000000e+00 : f32
    %702 = vector.broadcast %cst_124 : f32 to vector<8x32xf32>
    %703 = arith.maximumf %701, %702 : vector<8x32xf32>
    %704 = tpu.concatenate %653, %678, %703 in 1 : vector<8x32xf32>, vector<8x32xf32>, vector<8x32xf32> -> vector<8x96xf32>
    %c400 = arith.constant 400 : index
    %c0_125 = arith.constant 0 : index
    %705 = vector.load %arg5[%c400, %c0_125] : memref<1184x128xf32, #tpu.memory_space<vmem>>, vector<97x48xf32>
    %706 = vector.extract_strided_slice %705 {offsets = [0, 0], sizes = [96, 48], strides = [1, 1]} : vector<97x48xf32> to vector<96x48xf32>
    %cst_126 = arith.constant dense<0.000000e+00> : vector<8x48xf32>
    %707 = tpu.matmul %704, %706, %cst_126 {dimension_numbers = #tpu.dot_dimension_numbers<[1], [0], [0], [1], [0, 0, 1, 1], [], []>} : vector<8x96xf32>, vector<96x48xf32>, vector<8x48xf32> -> vector<8x48xf32>
    %708 = vector.extract_strided_slice %705 {offsets = [96, 0], sizes = [1, 48], strides = [1, 1]} : vector<97x48xf32> to vector<1x48xf32>
    %709 = vector.broadcast %708 : vector<1x48xf32> to vector<8x48xf32>
    %710 = arith.addf %707, %709 : vector<8x48xf32>
    %c504 = arith.constant 504 : index
    %c0_127 = arith.constant 0 : index
    %711 = vector.load %arg5[%c504, %c0_127] : memref<1184x128xf32, #tpu.memory_space<vmem>>, vector<97x32xf32>
    %712 = vector.extract_strided_slice %711 {offsets = [0, 0], sizes = [96, 32], strides = [1, 1]} : vector<97x32xf32> to vector<96x32xf32>
    %cst_128 = arith.constant dense<0.000000e+00> : vector<8x32xf32>
    %713 = tpu.matmul %627, %712, %cst_128 {dimension_numbers = #tpu.dot_dimension_numbers<[1], [0], [0], [1], [0, 0, 1, 1], [], []>} : vector<8x96xf32>, vector<96x32xf32>, vector<8x32xf32> -> vector<8x32xf32>
    %714 = vector.extract_strided_slice %711 {offsets = [96, 0], sizes = [1, 32], strides = [1, 1]} : vector<97x32xf32> to vector<1x32xf32>
    %715 = vector.broadcast %714 : vector<1x32xf32> to vector<8x32xf32>
    %716 = arith.addf %713, %715 : vector<8x32xf32>
    %c608 = arith.constant 608 : index
    %c0_129 = arith.constant 0 : index
    %717 = vector.load %arg5[%c608, %c0_129] : memref<1184x128xf32, #tpu.memory_space<vmem>>, vector<4x32xf32>
    %718 = vector.extract_strided_slice %717 {offsets = [2, 0], sizes = [1, 32], strides = [1, 1]} : vector<4x32xf32> to vector<1x32xf32>
    %719 = vector.broadcast %718 : vector<1x32xf32> to vector<8x32xf32>
    %720 = arith.subf %716, %719 : vector<8x32xf32>
    %721 = vector.extract_strided_slice %717 {offsets = [3, 0], sizes = [1, 32], strides = [1, 1]} : vector<4x32xf32> to vector<1x32xf32>
    %cst_130 = arith.constant 9.99999974E-6 : f32
    %722 = vector.broadcast %cst_130 : f32 to vector<1x32xf32>
    %723 = arith.addf %721, %722 : vector<1x32xf32>
    %724 = math.rsqrt %723 : vector<1x32xf32>
    %725 = vector.broadcast %724 : vector<1x32xf32> to vector<8x32xf32>
    %726 = arith.mulf %720, %725 : vector<8x32xf32>
    %727 = vector.extract_strided_slice %717 {offsets = [0, 0], sizes = [1, 32], strides = [1, 1]} : vector<4x32xf32> to vector<1x32xf32>
    %728 = vector.broadcast %727 : vector<1x32xf32> to vector<8x32xf32>
    %729 = arith.mulf %726, %728 : vector<8x32xf32>
    %730 = vector.extract_strided_slice %717 {offsets = [1, 0], sizes = [1, 32], strides = [1, 1]} : vector<4x32xf32> to vector<1x32xf32>
    %731 = vector.broadcast %730 : vector<1x32xf32> to vector<8x32xf32>
    %732 = arith.addf %729, %731 : vector<8x32xf32>
    %cst_131 = arith.constant 0.000000e+00 : f32
    %733 = vector.broadcast %cst_131 : f32 to vector<8x32xf32>
    %734 = arith.maximumf %732, %733 : vector<8x32xf32>
    %c616 = arith.constant 616 : index
    %c0_132 = arith.constant 0 : index
    %735 = vector.load %arg5[%c616, %c0_132] : memref<1184x128xf32, #tpu.memory_space<vmem>>, vector<33x32xf32>
    %736 = vector.extract_strided_slice %735 {offsets = [0, 0], sizes = [32, 32], strides = [1, 1]} : vector<33x32xf32> to vector<32x32xf32>
    %cst_133 = arith.constant dense<0.000000e+00> : vector<8x32xf32>
    %737 = tpu.matmul %734, %736, %cst_133 {dimension_numbers = #tpu.dot_dimension_numbers<[1], [0], [0], [1], [0, 0, 1, 1], [], []>} : vector<8x32xf32>, vector<32x32xf32>, vector<8x32xf32> -> vector<8x32xf32>
    %738 = vector.extract_strided_slice %735 {offsets = [32, 0], sizes = [1, 32], strides = [1, 1]} : vector<33x32xf32> to vector<1x32xf32>
    %739 = vector.broadcast %738 : vector<1x32xf32> to vector<8x32xf32>
    %740 = arith.addf %737, %739 : vector<8x32xf32>
    %c0_134 = arith.constant 0 : index
    %c0_135 = arith.constant 0 : index
    %741 = vector.load %arg3[%c0_134, %c0_135] : memref<8x6xf32, #tpu.memory_space<vmem>>, vector<8x6xf32>
    %c656 = arith.constant 656 : index
    %c0_136 = arith.constant 0 : index
    %742 = vector.load %arg5[%c656, %c0_136] : memref<1184x128xf32, #tpu.memory_space<vmem>>, vector<7x64xf32>
    %743 = vector.extract_strided_slice %742 {offsets = [0, 0], sizes = [6, 64], strides = [1, 1]} : vector<7x64xf32> to vector<6x64xf32>
    %cst_137 = arith.constant dense<0.000000e+00> : vector<8x64xf32>
    %744 = tpu.matmul %741, %743, %cst_137 {dimension_numbers = #tpu.dot_dimension_numbers<[1], [0], [0], [1], [0, 0, 1, 1], [], []>} : vector<8x6xf32>, vector<6x64xf32>, vector<8x64xf32> -> vector<8x64xf32>
    %745 = vector.extract_strided_slice %742 {offsets = [6, 0], sizes = [1, 64], strides = [1, 1]} : vector<7x64xf32> to vector<1x64xf32>
    %746 = vector.broadcast %745 : vector<1x64xf32> to vector<8x64xf32>
    %747 = arith.addf %744, %746 : vector<8x64xf32>
    %748 = tpu.concatenate %747, %532 in 1 : vector<8x64xf32>, vector<8x32xf32> -> vector<8x96xf32>
    %c664 = arith.constant 664 : index
    %c0_138 = arith.constant 0 : index
    %749 = vector.load %arg5[%c664, %c0_138] : memref<1184x128xf32, #tpu.memory_space<vmem>>, vector<4x96xf32>
    %750 = vector.extract_strided_slice %749 {offsets = [2, 0], sizes = [1, 96], strides = [1, 1]} : vector<4x96xf32> to vector<1x96xf32>
    %751 = vector.broadcast %750 : vector<1x96xf32> to vector<8x96xf32>
    %752 = arith.subf %748, %751 : vector<8x96xf32>
    %753 = vector.extract_strided_slice %749 {offsets = [3, 0], sizes = [1, 96], strides = [1, 1]} : vector<4x96xf32> to vector<1x96xf32>
    %cst_139 = arith.constant 9.99999974E-6 : f32
    %754 = vector.broadcast %cst_139 : f32 to vector<1x96xf32>
    %755 = arith.addf %753, %754 : vector<1x96xf32>
    %756 = math.rsqrt %755 : vector<1x96xf32>
    %757 = vector.broadcast %756 : vector<1x96xf32> to vector<8x96xf32>
    %758 = arith.mulf %752, %757 : vector<8x96xf32>
    %759 = vector.extract_strided_slice %749 {offsets = [0, 0], sizes = [1, 96], strides = [1, 1]} : vector<4x96xf32> to vector<1x96xf32>
    %760 = vector.broadcast %759 : vector<1x96xf32> to vector<8x96xf32>
    %761 = arith.mulf %758, %760 : vector<8x96xf32>
    %762 = vector.extract_strided_slice %749 {offsets = [1, 0], sizes = [1, 96], strides = [1, 1]} : vector<4x96xf32> to vector<1x96xf32>
    %763 = vector.broadcast %762 : vector<1x96xf32> to vector<8x96xf32>
    %764 = arith.addf %761, %763 : vector<8x96xf32>
    %cst_140 = arith.constant 0.000000e+00 : f32
    %765 = vector.broadcast %cst_140 : f32 to vector<8x96xf32>
    %766 = arith.maximumf %764, %765 : vector<8x96xf32>
    %c672 = arith.constant 672 : index
    %c0_141 = arith.constant 0 : index
    %767 = vector.load %arg5[%c672, %c0_141] : memref<1184x128xf32, #tpu.memory_space<vmem>>, vector<97x48xf32>
    %768 = vector.extract_strided_slice %767 {offsets = [0, 0], sizes = [96, 48], strides = [1, 1]} : vector<97x48xf32> to vector<96x48xf32>
    %cst_142 = arith.constant dense<0.000000e+00> : vector<8x48xf32>
    %769 = tpu.matmul %766, %768, %cst_142 {dimension_numbers = #tpu.dot_dimension_numbers<[1], [0], [0], [1], [0, 0, 1, 1], [], []>} : vector<8x96xf32>, vector<96x48xf32>, vector<8x48xf32> -> vector<8x48xf32>
    %770 = vector.extract_strided_slice %767 {offsets = [96, 0], sizes = [1, 48], strides = [1, 1]} : vector<97x48xf32> to vector<1x48xf32>
    %771 = vector.broadcast %770 : vector<1x48xf32> to vector<8x48xf32>
    %772 = arith.addf %769, %771 : vector<8x48xf32>
    %c776 = arith.constant 776 : index
    %c0_143 = arith.constant 0 : index
    %773 = vector.load %arg5[%c776, %c0_143] : memref<1184x128xf32, #tpu.memory_space<vmem>>, vector<49x32xf32>
    %774 = vector.extract_strided_slice %773 {offsets = [0, 0], sizes = [48, 32], strides = [1, 1]} : vector<49x32xf32> to vector<48x32xf32>
    %cst_144 = arith.constant dense<0.000000e+00> : vector<8x32xf32>
    %775 = tpu.matmul %772, %774, %cst_144 {dimension_numbers = #tpu.dot_dimension_numbers<[1], [0], [0], [1], [0, 0, 1, 1], [], []>} : vector<8x48xf32>, vector<48x32xf32>, vector<8x32xf32> -> vector<8x32xf32>
    %776 = vector.extract_strided_slice %773 {offsets = [48, 0], sizes = [1, 32], strides = [1, 1]} : vector<49x32xf32> to vector<1x32xf32>
    %777 = vector.broadcast %776 : vector<1x32xf32> to vector<8x32xf32>
    %778 = arith.addf %775, %777 : vector<8x32xf32>
    %c832 = arith.constant 832 : index
    %c0_145 = arith.constant 0 : index
    %779 = vector.load %arg5[%c832, %c0_145] : memref<1184x128xf32, #tpu.memory_space<vmem>>, vector<4x32xf32>
    %780 = vector.extract_strided_slice %779 {offsets = [2, 0], sizes = [1, 32], strides = [1, 1]} : vector<4x32xf32> to vector<1x32xf32>
    %781 = vector.broadcast %780 : vector<1x32xf32> to vector<8x32xf32>
    %782 = arith.subf %778, %781 : vector<8x32xf32>
    %783 = vector.extract_strided_slice %779 {offsets = [3, 0], sizes = [1, 32], strides = [1, 1]} : vector<4x32xf32> to vector<1x32xf32>
    %cst_146 = arith.constant 9.99999974E-6 : f32
    %784 = vector.broadcast %cst_146 : f32 to vector<1x32xf32>
    %785 = arith.addf %783, %784 : vector<1x32xf32>
    %786 = math.rsqrt %785 : vector<1x32xf32>
    %787 = vector.broadcast %786 : vector<1x32xf32> to vector<8x32xf32>
    %788 = arith.mulf %782, %787 : vector<8x32xf32>
    %789 = vector.extract_strided_slice %779 {offsets = [0, 0], sizes = [1, 32], strides = [1, 1]} : vector<4x32xf32> to vector<1x32xf32>
    %790 = vector.broadcast %789 : vector<1x32xf32> to vector<8x32xf32>
    %791 = arith.mulf %788, %790 : vector<8x32xf32>
    %792 = vector.extract_strided_slice %779 {offsets = [1, 0], sizes = [1, 32], strides = [1, 1]} : vector<4x32xf32> to vector<1x32xf32>
    %793 = vector.broadcast %792 : vector<1x32xf32> to vector<8x32xf32>
    %794 = arith.addf %791, %793 : vector<8x32xf32>
    %cst_147 = arith.constant 0.000000e+00 : f32
    %795 = vector.broadcast %cst_147 : f32 to vector<8x32xf32>
    %796 = arith.maximumf %794, %795 : vector<8x32xf32>
    %c840 = arith.constant 840 : index
    %c0_148 = arith.constant 0 : index
    %797 = vector.load %arg5[%c840, %c0_148] : memref<1184x128xf32, #tpu.memory_space<vmem>>, vector<33x32xf32>
    %798 = vector.extract_strided_slice %797 {offsets = [0, 0], sizes = [32, 32], strides = [1, 1]} : vector<33x32xf32> to vector<32x32xf32>
    %cst_149 = arith.constant dense<0.000000e+00> : vector<8x32xf32>
    %799 = tpu.matmul %796, %798, %cst_149 {dimension_numbers = #tpu.dot_dimension_numbers<[1], [0], [0], [1], [0, 0, 1, 1], [], []>} : vector<8x32xf32>, vector<32x32xf32>, vector<8x32xf32> -> vector<8x32xf32>
    %800 = vector.extract_strided_slice %797 {offsets = [32, 0], sizes = [1, 32], strides = [1, 1]} : vector<33x32xf32> to vector<1x32xf32>
    %801 = vector.broadcast %800 : vector<1x32xf32> to vector<8x32xf32>
    %802 = arith.addf %799, %801 : vector<8x32xf32>
    %c880 = arith.constant 880 : index
    %c0_150 = arith.constant 0 : index
    %803 = vector.load %arg5[%c880, %c0_150] : memref<1184x128xf32, #tpu.memory_space<vmem>>, vector<97x96xf32>
    %804 = vector.extract_strided_slice %803 {offsets = [0, 0], sizes = [96, 96], strides = [1, 1]} : vector<97x96xf32> to vector<96x96xf32>
    %cst_151 = arith.constant dense<0.000000e+00> : vector<8x96xf32>
    %805 = tpu.matmul %748, %804, %cst_151 {dimension_numbers = #tpu.dot_dimension_numbers<[1], [0], [0], [1], [0, 0, 1, 1], [], []>} : vector<8x96xf32>, vector<96x96xf32>, vector<8x96xf32> -> vector<8x96xf32>
    %806 = vector.extract_strided_slice %803 {offsets = [96, 0], sizes = [1, 96], strides = [1, 1]} : vector<97x96xf32> to vector<1x96xf32>
    %807 = vector.broadcast %806 : vector<1x96xf32> to vector<8x96xf32>
    %808 = arith.addf %805, %807 : vector<8x96xf32>
    %c984 = arith.constant 984 : index
    %c0_152 = arith.constant 0 : index
    %809 = vector.load %arg5[%c984, %c0_152] : memref<1184x128xf32, #tpu.memory_space<vmem>>, vector<4x96xf32>
    %810 = vector.extract_strided_slice %809 {offsets = [2, 0], sizes = [1, 96], strides = [1, 1]} : vector<4x96xf32> to vector<1x96xf32>
    %811 = vector.broadcast %810 : vector<1x96xf32> to vector<8x96xf32>
    %812 = arith.subf %808, %811 : vector<8x96xf32>
    %813 = vector.extract_strided_slice %809 {offsets = [3, 0], sizes = [1, 96], strides = [1, 1]} : vector<4x96xf32> to vector<1x96xf32>
    %cst_153 = arith.constant 9.99999974E-6 : f32
    %814 = vector.broadcast %cst_153 : f32 to vector<1x96xf32>
    %815 = arith.addf %813, %814 : vector<1x96xf32>
    %816 = math.rsqrt %815 : vector<1x96xf32>
    %817 = vector.broadcast %816 : vector<1x96xf32> to vector<8x96xf32>
    %818 = arith.mulf %812, %817 : vector<8x96xf32>
    %819 = vector.extract_strided_slice %809 {offsets = [0, 0], sizes = [1, 96], strides = [1, 1]} : vector<4x96xf32> to vector<1x96xf32>
    %820 = vector.broadcast %819 : vector<1x96xf32> to vector<8x96xf32>
    %821 = arith.mulf %818, %820 : vector<8x96xf32>
    %822 = vector.extract_strided_slice %809 {offsets = [1, 0], sizes = [1, 96], strides = [1, 1]} : vector<4x96xf32> to vector<1x96xf32>
    %823 = vector.broadcast %822 : vector<1x96xf32> to vector<8x96xf32>
    %824 = arith.addf %821, %823 : vector<8x96xf32>
    %cst_154 = arith.constant 0.000000e+00 : f32
    %825 = vector.broadcast %cst_154 : f32 to vector<8x96xf32>
    %826 = arith.maximumf %824, %825 : vector<8x96xf32>
    %c992 = arith.constant 992 : index
    %c0_155 = arith.constant 0 : index
    %827 = vector.load %arg5[%c992, %c0_155] : memref<1184x128xf32, #tpu.memory_space<vmem>>, vector<97x24xf32>
    %828 = vector.extract_strided_slice %827 {offsets = [0, 0], sizes = [96, 24], strides = [1, 1]} : vector<97x24xf32> to vector<96x24xf32>
    %cst_156 = arith.constant dense<0.000000e+00> : vector<8x24xf32>
    %829 = tpu.matmul %826, %828, %cst_156 {dimension_numbers = #tpu.dot_dimension_numbers<[1], [0], [0], [1], [0, 0, 1, 1], [], []>} : vector<8x96xf32>, vector<96x24xf32>, vector<8x24xf32> -> vector<8x24xf32>
    %830 = vector.extract_strided_slice %827 {offsets = [96, 0], sizes = [1, 24], strides = [1, 1]} : vector<97x24xf32> to vector<1x24xf32>
    %831 = vector.broadcast %830 : vector<1x24xf32> to vector<8x24xf32>
    %832 = arith.addf %829, %831 : vector<8x24xf32>
    %833 = tpu.concatenate %740, %802 in 0 : vector<8x32xf32>, vector<8x32xf32> -> vector<16x32xf32>
    %c1096 = arith.constant 1096 : index
    %c0_157 = arith.constant 0 : index
    %834 = vector.load %arg5[%c1096, %c0_157] : memref<1184x128xf32, #tpu.memory_space<vmem>>, vector<33x32xf32>
    %835 = vector.extract_strided_slice %834 {offsets = [0, 0], sizes = [32, 32], strides = [1, 1]} : vector<33x32xf32> to vector<32x32xf32>
    %cst_158 = arith.constant dense<0.000000e+00> : vector<16x32xf32>
    %836 = tpu.matmul %833, %835, %cst_158 {dimension_numbers = #tpu.dot_dimension_numbers<[1], [0], [0], [1], [0, 0, 1, 1], [], []>} : vector<16x32xf32>, vector<32x32xf32>, vector<16x32xf32> -> vector<16x32xf32>
    %837 = vector.extract_strided_slice %834 {offsets = [32, 0], sizes = [1, 32], strides = [1, 1]} : vector<33x32xf32> to vector<1x32xf32>
    %838 = vector.broadcast %837 : vector<1x32xf32> to vector<16x32xf32>
    %839 = arith.addf %836, %838 : vector<16x32xf32>
    %c1136 = arith.constant 1136 : index
    %c0_159 = arith.constant 0 : index
    %840 = vector.load %arg5[%c1136, %c0_159] : memref<1184x128xf32, #tpu.memory_space<vmem>>, vector<4x32xf32>
    %841 = vector.extract_strided_slice %840 {offsets = [2, 0], sizes = [1, 32], strides = [1, 1]} : vector<4x32xf32> to vector<1x32xf32>
    %842 = vector.broadcast %841 : vector<1x32xf32> to vector<16x32xf32>
    %843 = arith.subf %839, %842 : vector<16x32xf32>
    %844 = vector.extract_strided_slice %840 {offsets = [3, 0], sizes = [1, 32], strides = [1, 1]} : vector<4x32xf32> to vector<1x32xf32>
    %cst_160 = arith.constant 9.99999974E-6 : f32
    %845 = vector.broadcast %cst_160 : f32 to vector<1x32xf32>
    %846 = arith.addf %844, %845 : vector<1x32xf32>
    %847 = math.rsqrt %846 : vector<1x32xf32>
    %848 = vector.broadcast %847 : vector<1x32xf32> to vector<16x32xf32>
    %849 = arith.mulf %843, %848 : vector<16x32xf32>
    %850 = vector.extract_strided_slice %840 {offsets = [0, 0], sizes = [1, 32], strides = [1, 1]} : vector<4x32xf32> to vector<1x32xf32>
    %851 = vector.broadcast %850 : vector<1x32xf32> to vector<16x32xf32>
    %852 = arith.mulf %849, %851 : vector<16x32xf32>
    %853 = vector.extract_strided_slice %840 {offsets = [1, 0], sizes = [1, 32], strides = [1, 1]} : vector<4x32xf32> to vector<1x32xf32>
    %854 = vector.broadcast %853 : vector<1x32xf32> to vector<16x32xf32>
    %855 = arith.addf %852, %854 : vector<16x32xf32>
    %cst_161 = arith.constant 0.000000e+00 : f32
    %856 = vector.broadcast %cst_161 : f32 to vector<16x32xf32>
    %857 = arith.maximumf %855, %856 : vector<16x32xf32>
    %c1144 = arith.constant 1144 : index
    %c0_162 = arith.constant 0 : index
    %858 = vector.load %arg5[%c1144, %c0_162] : memref<1184x128xf32, #tpu.memory_space<vmem>>, vector<33x8xf32>
    %859 = vector.extract_strided_slice %858 {offsets = [0, 0], sizes = [32, 8], strides = [1, 1]} : vector<33x8xf32> to vector<32x8xf32>
    %cst_163 = arith.constant dense<0.000000e+00> : vector<16x8xf32>
    %860 = tpu.matmul %857, %859, %cst_163 {dimension_numbers = #tpu.dot_dimension_numbers<[1], [0], [0], [1], [0, 0, 1, 1], [], []>} : vector<16x32xf32>, vector<32x8xf32>, vector<16x8xf32> -> vector<16x8xf32>
    %861 = vector.extract_strided_slice %858 {offsets = [32, 0], sizes = [1, 8], strides = [1, 1]} : vector<33x8xf32> to vector<1x8xf32>
    %862 = vector.broadcast %861 : vector<1x8xf32> to vector<16x8xf32>
    %863 = arith.addf %860, %862 : vector<16x8xf32>
    %864 = vector.extract_strided_slice %710 {offsets = [0, 0], sizes = [8, 16], strides = [1, 1]} : vector<8x48xf32> to vector<8x16xf32>
    %865 = arith.mulf %864, %864 : vector<8x16xf32>
    %cst_164 = arith.constant dense<0.000000e+00> : vector<8xf32>
    %866 = vector.multi_reduction <add>, %865, %cst_164 [1] : vector<8x16xf32> to vector<8xf32>
    %867 = vector.shape_cast %866 : vector<8xf32> to vector<8x1xf32>
    %cst_165 = arith.constant 1.000000e-24 : f32
    %868 = vector.broadcast %cst_165 : f32 to vector<8x1xf32>
    %869 = arith.maximumf %867, %868 : vector<8x1xf32>
    %870 = math.rsqrt %869 : vector<8x1xf32>
    %871 = vector.broadcast %870 : vector<8x1xf32> to vector<8x16xf32>
    %872 = arith.mulf %864, %871 : vector<8x16xf32>
    %873 = vector.extract_strided_slice %710 {offsets = [0, 16], sizes = [8, 16], strides = [1, 1]} : vector<8x48xf32> to vector<8x16xf32>
    %874 = arith.mulf %873, %873 : vector<8x16xf32>
    %cst_166 = arith.constant dense<0.000000e+00> : vector<8xf32>
    %875 = vector.multi_reduction <add>, %874, %cst_166 [1] : vector<8x16xf32> to vector<8xf32>
    %876 = vector.shape_cast %875 : vector<8xf32> to vector<8x1xf32>
    %cst_167 = arith.constant 1.000000e-24 : f32
    %877 = vector.broadcast %cst_167 : f32 to vector<8x1xf32>
    %878 = arith.maximumf %876, %877 : vector<8x1xf32>
    %879 = math.rsqrt %878 : vector<8x1xf32>
    %880 = vector.broadcast %879 : vector<8x1xf32> to vector<8x16xf32>
    %881 = arith.mulf %873, %880 : vector<8x16xf32>
    %882 = vector.extract_strided_slice %710 {offsets = [0, 32], sizes = [8, 16], strides = [1, 1]} : vector<8x48xf32> to vector<8x16xf32>
    %883 = arith.mulf %882, %882 : vector<8x16xf32>
    %cst_168 = arith.constant dense<0.000000e+00> : vector<8xf32>
    %884 = vector.multi_reduction <add>, %883, %cst_168 [1] : vector<8x16xf32> to vector<8xf32>
    %885 = vector.shape_cast %884 : vector<8xf32> to vector<8x1xf32>
    %cst_169 = arith.constant 1.000000e-24 : f32
    %886 = vector.broadcast %cst_169 : f32 to vector<8x1xf32>
    %887 = arith.maximumf %885, %886 : vector<8x1xf32>
    %888 = math.rsqrt %887 : vector<8x1xf32>
    %889 = vector.broadcast %888 : vector<8x1xf32> to vector<8x16xf32>
    %890 = arith.mulf %882, %889 : vector<8x16xf32>
    %891 = arith.mulf %740, %740 : vector<8x32xf32>
    %cst_170 = arith.constant dense<0.000000e+00> : vector<8xf32>
    %892 = vector.multi_reduction <add>, %891, %cst_170 [1] : vector<8x32xf32> to vector<8xf32>
    %893 = vector.shape_cast %892 : vector<8xf32> to vector<8x1xf32>
    %cst_171 = arith.constant 1.000000e-24 : f32
    %894 = vector.broadcast %cst_171 : f32 to vector<8x1xf32>
    %895 = arith.maximumf %893, %894 : vector<8x1xf32>
    %896 = math.rsqrt %895 : vector<8x1xf32>
    %897 = vector.broadcast %896 : vector<8x1xf32> to vector<8x32xf32>
    %898 = arith.mulf %740, %897 : vector<8x32xf32>
    %cst_172 = arith.constant 0.000000e+00 : f32
    %899 = vector.broadcast %cst_172 : f32 to vector<8x48xf32>
    %900 = vector.extract_strided_slice %772 {offsets = [0, 0], sizes = [8, 16], strides = [1, 1]} : vector<8x48xf32> to vector<8x16xf32>
    %901 = arith.mulf %900, %900 : vector<8x16xf32>
    %cst_173 = arith.constant dense<0.000000e+00> : vector<8xf32>
    %902 = vector.multi_reduction <add>, %901, %cst_173 [1] : vector<8x16xf32> to vector<8xf32>
    %903 = vector.shape_cast %902 : vector<8xf32> to vector<8x1xf32>
    %cst_174 = arith.constant 1.000000e-24 : f32
    %904 = vector.broadcast %cst_174 : f32 to vector<8x1xf32>
    %905 = arith.maximumf %903, %904 : vector<8x1xf32>
    %906 = math.rsqrt %905 : vector<8x1xf32>
    %907 = vector.broadcast %906 : vector<8x1xf32> to vector<8x16xf32>
    %908 = arith.mulf %900, %907 : vector<8x16xf32>
    %909 = vector.extract_strided_slice %772 {offsets = [0, 16], sizes = [8, 16], strides = [1, 1]} : vector<8x48xf32> to vector<8x16xf32>
    %910 = arith.mulf %909, %909 : vector<8x16xf32>
    %cst_175 = arith.constant dense<0.000000e+00> : vector<8xf32>
    %911 = vector.multi_reduction <add>, %910, %cst_175 [1] : vector<8x16xf32> to vector<8xf32>
    %912 = vector.shape_cast %911 : vector<8xf32> to vector<8x1xf32>
    %cst_176 = arith.constant 1.000000e-24 : f32
    %913 = vector.broadcast %cst_176 : f32 to vector<8x1xf32>
    %914 = arith.maximumf %912, %913 : vector<8x1xf32>
    %915 = math.rsqrt %914 : vector<8x1xf32>
    %916 = vector.broadcast %915 : vector<8x1xf32> to vector<8x16xf32>
    %917 = arith.mulf %909, %916 : vector<8x16xf32>
    %918 = vector.extract_strided_slice %772 {offsets = [0, 32], sizes = [8, 16], strides = [1, 1]} : vector<8x48xf32> to vector<8x16xf32>
    %919 = arith.mulf %918, %918 : vector<8x16xf32>
    %cst_177 = arith.constant dense<0.000000e+00> : vector<8xf32>
    %920 = vector.multi_reduction <add>, %919, %cst_177 [1] : vector<8x16xf32> to vector<8xf32>
    %921 = vector.shape_cast %920 : vector<8xf32> to vector<8x1xf32>
    %cst_178 = arith.constant 1.000000e-24 : f32
    %922 = vector.broadcast %cst_178 : f32 to vector<8x1xf32>
    %923 = arith.maximumf %921, %922 : vector<8x1xf32>
    %924 = math.rsqrt %923 : vector<8x1xf32>
    %925 = vector.broadcast %924 : vector<8x1xf32> to vector<8x16xf32>
    %926 = arith.mulf %918, %925 : vector<8x16xf32>
    %927 = arith.mulf %802, %802 : vector<8x32xf32>
    %cst_179 = arith.constant dense<0.000000e+00> : vector<8xf32>
    %928 = vector.multi_reduction <add>, %927, %cst_179 [1] : vector<8x32xf32> to vector<8xf32>
    %929 = vector.shape_cast %928 : vector<8xf32> to vector<8x1xf32>
    %cst_180 = arith.constant 1.000000e-24 : f32
    %930 = vector.broadcast %cst_180 : f32 to vector<8x1xf32>
    %931 = arith.maximumf %929, %930 : vector<8x1xf32>
    %932 = math.rsqrt %931 : vector<8x1xf32>
    %933 = vector.broadcast %932 : vector<8x1xf32> to vector<8x32xf32>
    %934 = arith.mulf %802, %933 : vector<8x32xf32>
    %935 = vector.extract_strided_slice %863 {offsets = [0, 0], sizes = [8, 8], strides = [1, 1]} : vector<16x8xf32> to vector<8x8xf32>
    %936 = vector.extract_strided_slice %863 {offsets = [8, 0], sizes = [8, 8], strides = [1, 1]} : vector<16x8xf32> to vector<8x8xf32>
    %cst_181 = arith.constant 0.000000e+00 : f32
    %937 = vector.broadcast %cst_181 : f32 to vector<8x8xf32>
    %938 = tpu.concatenate %872, %881, %890, %898, %899, %908, %917, %926, %934, %832, %935, %936, %937 in 1 : vector<8x16xf32>, vector<8x16xf32>, vector<8x16xf32>, vector<8x32xf32>, vector<8x48xf32>, vector<8x16xf32>, vector<8x16xf32>, vector<8x16xf32>, vector<8x32xf32>, vector<8x24xf32>, vector<8x8xf32>, vector<8x8xf32>, vector<8x8xf32> -> vector<8x256xf32>
    %c0_182 = arith.constant 0 : index
    %c0_183 = arith.constant 0 : index
    %939 = vector.load %arg6[%c0_182, %c0_183] : memref<8x256xf32, #tpu.memory_space<vmem>>, vector<8x256xf32>
    tpu.vector_store %arg6[%c0_182, %c0_183], %938 {strides = array<i32>} : memref<8x256xf32, #tpu.memory_space<vmem>>, vector<8x256xf32>,
    return
  }
}

</mosaic_0001>

<llo_original>
// kernel: forward.1
$region0: #{forward.1}
  #allocation0 [shape = 'u32[]', space=smem, size = 0x4, offset = 0x4, fixed_abs, tag = 'smem constant byte address 0x4 - core index']
  #allocation1 [shape = 'u32[144,128]{1,0:T(1,128)}', space=vmem, size = 0x12000, scoped, tag = 'internal scratch']
  #allocation2 [shape = 'f32[64,128]{1,0:T(8,128)}', space=vmem, size = 0x8000, scoped, tag = 'scratch operand']
  %s0 = inlined_call_operand.vmem [shape: f32[64,2], index: 0, kind: input, shape index: {}]
  %s1 = inlined_call_operand.vmem [shape: f32[64,32], index: 1, kind: input, shape index: {}]
  %s2 = inlined_call_operand.vmem [shape: f32[24,64], index: 2, kind: input, shape index: {}]
  %s3 = inlined_call_operand.vmem [shape: f32[8,6], index: 3, kind: input, shape index: {}]
  %s4 = inlined_call_operand.hbm [shape: f32[400,512], index: 4, kind: input, shape index: {}]
  %s5 = inlined_call_operand.vmem [shape: f32[1184,128], index: 5, kind: input, shape index: {}]
  %s6 = inlined_call_operand.vmem [shape: f32[8,256], index: 6, kind: output, shape index: {}]
  %s7 = sld [smem:[#allocation0]]
  $region38: #{forward.1} parent=0
    _
  %s9 = ssub.s32 1, %s7
  %s10 = scalar_select 0, %s9, %s7
  $region1: #{forward.1} parent=0
    #allocation3 [shape = 'u8[819200]{0}', space=vmem, size = 0xc8000, scoped, tag = 'input window, operand 4, single buffered']
    #allocation4 [shape = 's32[1]{0}', space=sflag, size = 0x4, scoped, tag = 'scoped memory for forward.1']
    %11 = vsyncpa [#allocation4], 0
    // Predicated region
    $region2: #{forward.1} parent=1 // pred_check
      _
    $region3: #{forward.1} parent=1 // pred_check_branch
      %13 = sbr.rel (0) target = $region5
    $region4: #{forward.1} parent=1 // pred_region
      _
    $region5: #{forward.1} parent=1 // pred_fallthru
      _
    // Predicated region
    $region6: #{forward.1} parent=1 // pred_check
      _
    $region7: #{forward.1} parent=1 // pred_check_branch
      %15 = sbr.rel (0) target = $region9
    $region8: #{forward.1} parent=1 // pred_region
      _
    $region9: #{forward.1} parent=1 // pred_fallthru
      _
    // Predicated region
    $region10: #{forward.1} parent=1 // pred_check
      _
    $region11: #{forward.1} parent=1 // pred_check_branch
      %17 = sbr.rel (0) target = $region13
    $region12: #{forward.1} parent=1 // pred_region
      _
    $region13: #{forward.1} parent=1 // pred_fallthru
      _
    // Predicated region
    $region14: #{forward.1} parent=1 // pred_check
      _
    $region15: #{forward.1} parent=1 // pred_check_branch
      %19 = sbr.rel (0) target = $region17
    $region16: #{forward.1} parent=1 // pred_region
      _
    $region17: #{forward.1} parent=1 // pred_fallthru
      _
    // Predicated region
    $region18: #{forward.1} parent=1 // pred_check
      _
    $region19: #{forward.1} parent=1 // pred_check_branch
      %21 = sbr.rel (0) target = $region21
    $region20: #{forward.1} parent=1 // pred_region
      %s23 = ssub.s32 25600, 25600
      %24 = vsyncadd [#allocation4], %s23
      %s25 = sshll.u32 [#allocation3], 4
      %s26 = int_to_ptr.vmem [resolvable:$true] %s25
      %31 = dma.hbm_to_vmem [thread:$0]  %s4, 25600, %s26, [#allocation4], 512, 512, 32
    $region21: #{forward.1} parent=1 // pred_fallthru
      _
    // Predicated region
    $region22: #{forward.1} parent=1 // pred_check
      _
    $region23: #{forward.1} parent=1 // pred_check_branch
      %33 = sbr.rel (0) target = $region25
    $region24: #{forward.1} parent=1 // pred_region
      _
    $region25: #{forward.1} parent=1 // pred_fallthru
      _
    // Predicated region
    $region26: #{forward.1} parent=1 // pred_check
      _
    $region27: #{forward.1} parent=1 // pred_check_branch
      %35 = sbr.rel (0) target = $region29
    $region28: #{forward.1} parent=1 // pred_region
      %36 = dma.done [#allocation4], 25600
    $region29: #{forward.1} parent=1 // pred_fallthru
      _
    %v37 = vld [vmem:[%s0] sm:$0xff]
    %v38 = vld [vmem:[%s0 + $0x8] sm:$0xff]
    %v39 = vld [vmem:[%s0 + $0x10] sm:$0xff]
    %v40 = vld [vmem:[%s0 + $0x18] sm:$0xff]
    %v41 = vld [vmem:[%s0 + $0x20] sm:$0xff]
    %v42 = vld [vmem:[%s0 + $0x28] sm:$0xff]
    %v43 = vld [vmem:[%s0 + $0x30] sm:$0xff]
    %v44 = vld [vmem:[%s0 + $0x38] sm:$0xff]
    %v45 = vld [vmem:[#allocation3] sm:$0x7]
    %v46 = vld [vmem:[#allocation3 + $0x8] sm:$0x7]
    %v47 = vld [vmem:[#allocation3 + $0x10] sm:$0x7]
    %v48 = vld [vmem:[#allocation3 + $0x18] sm:$0x7]
    %v49 = vlaneseq
    %v50 = vshrl.u32 %v49, 7
    %v51 = vsub.s32 2, %v50
    %v52 = vrot.slane %v45, %v51
    %v53 = vlaneseq
    %v54 = vshrl.u32 %v53, 7
    %v55 = vsub.s32 2, %v54
    %v56 = vrot.slane %v46, %v55
    %v57 = vlaneseq
    %v58 = vshrl.u32 %v57, 7
    %v59 = vsub.s32 2, %v58
    %v60 = vrot.slane %v47, %v59
    %v61 = vlaneseq
    %v62 = vshrl.u32 %v61, 7
    %v63 = vsub.s32 2, %v62
    %v64 = vrot.slane %v48, %v63
    %vm65 = vcmask 15360
    %v67 = vsel %vm65, %v37, 0
    %v70 = vsel %vm65, %v38, 0
    %v73 = vsel %vm65, %v39, 0
    %v76 = vsel %vm65, %v40, 0
    %v79 = vsel %vm65, %v41, 0
    %v82 = vsel %vm65, %v42, 0
    %v85 = vsel %vm65, %v43, 0
    %v88 = vsel %vm65, %v44, 0
    %vm90 = vcmask 1041408
    %v92 = vsel %vm90, %v45, 0
    %v95 = vsel %vm90, %v46, 0
    %v98 = vsel %vm90, %v47, 0
    %v101 = vsel %vm90, %v48, 0
    %103 = vmatprep.subr.mxu0 %v95
    %104 = vmatpush1.msra.mxu0 %v92
    %105 = vmatprep.subr.mxu0 0.0
    %106 = vmatpush1.msra.mxu0 0.0
    %107 = vmatprep.subr.mxu0 0.0
    %108 = vmatpush1.msra.mxu0 0.0
    %109 = vmatprep.subr.mxu0 0.0
    %110 = vmatpush1.msra.mxu0 0.0
    %111 = vmatprep.subr.mxu0 0.0
    %112 = vmatpush1.msra.mxu0 0.0
    %113 = vmatprep.subr.mxu0 0.0
    %114 = vmatpush1.msra.mxu0 0.0
    %115 = vmatprep.subr.mxu0 0.0
    %116 = vmatpush1.msra.mxu0 0.0
    %117 = vmatprep.subr.mxu0 0.0
    %118 = vmatpush1.msra.mxu0 0.0
    %119 = vmatprep.subr.mxu0 0.0
    %120 = vmatpush1.msra.mxu0 0.0
    %121 = vmatprep.subr.mxu0 0.0
    %122 = vmatpush1.msra.mxu0 0.0
    %123 = vmatprep.subr.mxu0 0.0
    %124 = vmatpush1.msra.mxu0 0.0
    %125 = vmatprep.subr.mxu0 0.0
    %126 = vmatpush1.msra.mxu0 0.0
    %127 = vmatprep.subr.mxu0 0.0
    %128 = vmatpush1.msra.mxu0 0.0
    %129 = vmatprep.subr.mxu0 0.0
    %130 = vmatpush1.msra.mxu0 0.0
    %131 = vmatprep.subr.mxu0 0.0
    %132 = vmatpush1.msra.mxu0 0.0
    %133 = vmatprep.subr.mxu0 0.0
    %134 = vmatpush1.msra.mxu0 0.0
    %135 = vmatprep.subr.mxu0 0.0
    %136 = vmatpush1.msra.mxu0 0.0
    %137 = vmatprep.subr.mxu0 0.0
    %138 = vmatpush1.msra.mxu0 0.0
    %139 = vmatprep.subr.mxu0 0.0
    %140 = vmatpush1.msra.mxu0 0.0
    %141 = vmatprep.subr.mxu0 0.0
    %142 = vmatpush1.msra.mxu0 0.0
    %143 = vmatprep.subr.mxu0 0.0
    %144 = vmatpush1.msra.mxu0 0.0
    %145 = vmatprep.subr.mxu0 0.0
    %146 = vmatpush1.msra.mxu0 0.0
    %147 = vmatprep.subr.mxu0 0.0
    %148 = vmatpush1.msra.mxu0 0.0
    %149 = vmatprep.subr.mxu0 0.0
    %150 = vmatpush1.msra.mxu0 0.0
    %151 = vmatprep.subr.mxu0 0.0
    %152 = vmatpush1.msra.mxu0 0.0
    %153 = vmatprep.subr.mxu0 0.0
    %154 = vmatpush1.msra.mxu0 0.0
    %155 = vmatprep.subr.mxu0 0.0
    %156 = vmatpush1.msra.mxu0 0.0
    %157 = vmatprep.subr.mxu0 0.0
    %158 = vmatpush1.msra.mxu0 0.0
    %159 = vmatprep.subr.mxu0 0.0
    %160 = vmatpush1.msra.mxu0 0.0
    %161 = vmatprep.subr.mxu0 0.0
    %162 = vmatpush1.msra.mxu0 0.0
    %163 = vmatprep.subr.mxu0 0.0
    %164 = vmatpush1.msra.mxu0 0.0
    %165 = vmatprep.subr.mxu0 0.0
    %166 = vmatpush1.msra.mxu0 0.0
    %167 = vmatprep.mubr.f32.mxu0 0.0
    %168 = vmatmul.mubr.f32.gmra.mrb[0].mxu0 %v67
    %v169 = vpop.f32.mrb[0].mxu0
    %v170 = vadd.f32 %v52, %v169
    %v171 = vpop.f32.mrb[0].mxu0
    %v172 = vadd.f32 %v56, %v171
    %173 = vmatprep.mubr.f32.mxu0 0.0
    %174 = vmatmul.mubr.f32.gmra.mrb[0].mxu0 %v70
    %v175 = vpop.f32.mrb[0].mxu0
    %v176 = vadd.f32 %v52, %v175
    %v177 = vpop.f32.mrb[0].mxu0
    %v178 = vadd.f32 %v56, %v177
    %179 = vmatprep.mubr.f32.mxu0 0.0
    %180 = vmatmul.mubr.f32.gmra.mrb[0].mxu0 %v73
    %v181 = vpop.f32.mrb[0].mxu0
    %v182 = vadd.f32 %v52, %v181
    %v183 = vpop.f32.mrb[0].mxu0
    %v184 = vadd.f32 %v56, %v183
    %185 = vmatprep.mubr.f32.mxu0 0.0
    %186 = vmatmul.mubr.f32.gmra.mrb[0].mxu0 %v76
    %v187 = vpop.f32.mrb[0].mxu0
    %v188 = vadd.f32 %v52, %v187
    %v189 = vpop.f32.mrb[0].mxu0
    %v190 = vadd.f32 %v56, %v189
    %191 = vmatprep.mubr.f32.mxu0 0.0
    %192 = vmatmul.mubr.f32.gmra.mrb[0].mxu0 %v79
    %v193 = vpop.f32.mrb[0].mxu0
    %v194 = vadd.f32 %v52, %v193
    %v195 = vpop.f32.mrb[0].mxu0
    %v196 = vadd.f32 %v56, %v195
    %197 = vmatprep.mubr.f32.mxu0 0.0
    %198 = vmatmul.mubr.f32.gmra.mrb[0].mxu0 %v82
    %v199 = vpop.f32.mrb[0].mxu0
    %v200 = vadd.f32 %v52, %v199
    %v201 = vpop.f32.mrb[0].mxu0
    %v202 = vadd.f32 %v56, %v201
    %203 = vmatprep.mubr.f32.mxu0 0.0
    %204 = vmatmul.mubr.f32.gmra.mrb[0].mxu0 %v85
    %v205 = vpop.f32.mrb[0].mxu0
    %v206 = vadd.f32 %v52, %v205
    %v207 = vpop.f32.mrb[0].mxu0
    %v208 = vadd.f32 %v56, %v207
    %209 = vmatprep.mubr.f32.mxu0 0.0
    %210 = vmatmul.mubr.f32.gmra.mrb[0].mxu0 %v88
    %v211 = vpop.f32.mrb[0].mxu0
    %v212 = vadd.f32 %v52, %v211
    %v213 = vpop.f32.mrb[0].mxu0
    %v214 = vadd.f32 %v56, %v213
    %215 = vdwg.mxu0
    %216 = vmatprep.subr.mxu0 %v101
    %217 = vmatpush1.msra.mxu0 %v98
    %218 = vmatprep.subr.mxu0 0.0
    %219 = vmatpush1.msra.mxu0 0.0
    %220 = vmatprep.subr.mxu0 0.0
    %221 = vmatpush1.msra.mxu0 0.0
    %222 = vmatprep.subr.mxu0 0.0
    %223 = vmatpush1.msra.mxu0 0.0
    %224 = vmatprep.subr.mxu0 0.0
    %225 = vmatpush1.msra.mxu0 0.0
    %226 = vmatprep.subr.mxu0 0.0
    %227 = vmatpush1.msra.mxu0 0.0
    %228 = vmatprep.subr.mxu0 0.0
    %229 = vmatpush1.msra.mxu0 0.0
    %230 = vmatprep.subr.mxu0 0.0
    %231 = vmatpush1.msra.mxu0 0.0
    %232 = vmatprep.subr.mxu0 0.0
    %233 = vmatpush1.msra.mxu0 0.0
    %234 = vmatprep.subr.mxu0 0.0
    %235 = vmatpush1.msra.mxu0 0.0
    %236 = vmatprep.subr.mxu0 0.0
    %237 = vmatpush1.msra.mxu0 0.0
    %238 = vmatprep.subr.mxu0 0.0
    %239 = vmatpush1.msra.mxu0 0.0
    %240 = vmatprep.subr.mxu0 0.0
    %241 = vmatpush1.msra.mxu0 0.0
    %242 = vmatprep.subr.mxu0 0.0
    %243 = vmatpush1.msra.mxu0 0.0
    %244 = vmatprep.subr.mxu0 0.0
    %245 = vmatpush1.msra.mxu0 0.0
    %246 = vmatprep.subr.mxu0 0.0
    %247 = vmatpush1.msra.mxu0 0.0
    %248 = vmatprep.subr.mxu0 0.0
    %249 = vmatpush1.msra.mxu0 0.0
    %250 = vmatprep.subr.mxu0 0.0
    %251 = vmatpush1.msra.mxu0 0.0
    %252 = vmatprep.subr.mxu0 0.0
    %253 = vmatpush1.msra.mxu0 0.0
    %254 = vmatprep.subr.mxu0 0.0
    %255 = vmatpush1.msra.mxu0 0.0
    %256 = vmatprep.subr.mxu0 0.0
    %257 = vmatpush1.msra.mxu0 0.0
    %258 = vmatprep.subr.mxu0 0.0
    %259 = vmatpush1.msra.mxu0 0.0
    %260 = vmatprep.subr.mxu0 0.0
    %261 = vmatpush1.msra.mxu0 0.0
    %262 = vmatprep.subr.mxu0 0.0
    %263 = vmatpush1.msra.mxu0 0.0
    %264 = vmatprep.subr.mxu0 0.0
    %265 = vmatpush1.msra.mxu0 0.0
    %266 = vmatprep.subr.mxu0 0.0
    %267 = vmatpush1.msra.mxu0 0.0
    %268 = vmatprep.subr.mxu0 0.0
    %269 = vmatpush1.msra.mxu0 0.0
    %270 = vmatprep.subr.mxu0 0.0
    %271 = vmatpush1.msra.mxu0 0.0
    %272 = vmatprep.subr.mxu0 0.0
    %273 = vmatpush1.msra.mxu0 0.0
    %274 = vmatprep.subr.mxu0 0.0
    %275 = vmatpush1.msra.mxu0 0.0
    %276 = vmatprep.subr.mxu0 0.0
    %277 = vmatpush1.msra.mxu0 0.0
    %278 = vmatprep.subr.mxu0 0.0
    %279 = vmatpush1.msra.mxu0 0.0
    %280 = vmatprep.mubr.f32.mxu0 0.0
    %281 = vmatmul.mubr.f32.gmra.mrb[0].mxu0 %v67
    %v282 = vpop.f32.mrb[0].mxu0
    %v283 = vadd.f32 %v60, %v282
    %v284 = vpop.f32.mrb[0].mxu0
    %v285 = vadd.f32 %v64, %v284
    %286 = vmatprep.mubr.f32.mxu0 0.0
    %287 = vmatmul.mubr.f32.gmra.mrb[0].mxu0 %v70
    %v288 = vpop.f32.mrb[0].mxu0
    %v289 = vadd.f32 %v60, %v288
    %v290 = vpop.f32.mrb[0].mxu0
    %v291 = vadd.f32 %v64, %v290
    %292 = vmatprep.mubr.f32.mxu0 0.0
    %293 = vmatmul.mubr.f32.gmra.mrb[0].mxu0 %v73
    %v294 = vpop.f32.mrb[0].mxu0
    %v295 = vadd.f32 %v60, %v294
    %v296 = vpop.f32.mrb[0].mxu0
    %v297 = vadd.f32 %v64, %v296
    %298 = vmatprep.mubr.f32.mxu0 0.0
    %299 = vmatmul.mubr.f32.gmra.mrb[0].mxu0 %v76
    %v300 = vpop.f32.mrb[0].mxu0
    %v301 = vadd.f32 %v60, %v300
    %v302 = vpop.f32.mrb[0].mxu0
    %v303 = vadd.f32 %v64, %v302
    %304 = vmatprep.mubr.f32.mxu0 0.0
    %305 = vmatmul.mubr.f32.gmra.mrb[0].mxu0 %v79
    %v306 = vpop.f32.mrb[0].mxu0
    %v307 = vadd.f32 %v60, %v306
    %v308 = vpop.f32.mrb[0].mxu0
    %v309 = vadd.f32 %v64, %v308
    %310 = vmatprep.mubr.f32.mxu0 0.0
    %311 = vmatmul.mubr.f32.gmra.mrb[0].mxu0 %v82
    %v312 = vpop.f32.mrb[0].mxu0
    %v313 = vadd.f32 %v60, %v312
    %v314 = vpop.f32.mrb[0].mxu0
    %v315 = vadd.f32 %v64, %v314
    %316 = vmatprep.mubr.f32.mxu0 0.0
    %317 = vmatmul.mubr.f32.gmra.mrb[0].mxu0 %v85
    %v318 = vpop.f32.mrb[0].mxu0
    %v319 = vadd.f32 %v60, %v318
    %v320 = vpop.f32.mrb[0].mxu0
    %v321 = vadd.f32 %v64, %v320
    %322 = vmatprep.mubr.f32.mxu0 0.0
    %323 = vmatmul.mubr.f32.gmra.mrb[0].mxu0 %v88
    %v324 = vpop.f32.mrb[0].mxu0
    %v325 = vadd.f32 %v60, %v324
    %v326 = vpop.f32.mrb[0].mxu0
    %v327 = vadd.f32 %v64, %v326
    %328 = vdwg.mxu0
    %v329 = vld [vmem:[#allocation3 + $0x20] sm:$0xff]
    %v330 = vld [vmem:[#allocation3 + $0x28] sm:$0xff]
    %v331 = vld [vmem:[#allocation3 + $0x30] sm:$0xff]
    %v332 = vld [vmem:[#allocation3 + $0x38] sm:$0xff]
    %v333 = vld [vmem:[#allocation3 + $0x40] sm:$0xff]
    %v334 = vld [vmem:[#allocation3 + $0x48] sm:$0xff]
    %v335 = vld [vmem:[#allocation3 + $0x50] sm:$0xff]
    %v336 = vld [vmem:[#allocation3 + $0x58] sm:$0xff]
    %v337 = vld [vmem:[#allocation3 + $0x60] sm:$0xff]
    %v338 = vld [vmem:[#allocation3 + $0x68] sm:$0xff]
    %v339 = vld [vmem:[#allocation3 + $0x70] sm:$0xff]
    %v340 = vld [vmem:[#allocation3 + $0x78] sm:$0xff]
    %v341 = vld [vmem:[#allocation3 + $0x80] sm:$0xff]
    %v342 = vld [vmem:[#allocation3 + $0x88] sm:$0xff]
    %v343 = vld [vmem:[#allocation3 + $0x90] sm:$0xff]
    %v344 = vld [vmem:[#allocation3 + $0x98] sm:$0xff]
    %v345 = vld [vmem:[#allocation3 + $0xa0] sm:$0xff]
    %v346 = vld [vmem:[#allocation3 + $0xa8] sm:$0xff]
    %v347 = vld [vmem:[#allocation3 + $0xb0] sm:$0xff]
    %v348 = vld [vmem:[#allocation3 + $0xb8] sm:$0xff]
    %v349 = vld [vmem:[#allocation3 + $0xc0] sm:$0xff]
    %v350 = vld [vmem:[#allocation3 + $0xc8] sm:$0xff]
    %v351 = vld [vmem:[#allocation3 + $0xd0] sm:$0xff]
    %v352 = vld [vmem:[#allocation3 + $0xd8] sm:$0xff]
    %v353 = vld [vmem:[#allocation3 + $0xe0] sm:$0xff]
    %v354 = vld [vmem:[#allocation3 + $0xe8] sm:$0xff]
    %v355 = vld [vmem:[#allocation3 + $0xf0] sm:$0xff]
    %v356 = vld [vmem:[#allocation3 + $0xf8] sm:$0xff]
    %v357 = vld [vmem:[#allocation3 + $0x100] sm:$0xff]
    %v358 = vld [vmem:[#allocation3 + $0x108] sm:$0xff]
    %v359 = vld [vmem:[#allocation3 + $0x110] sm:$0xff]
    %v360 = vld [vmem:[#allocation3 + $0x118] sm:$0xff]
    %v361 = vld [vmem:[#allocation3 + $0x120] sm:$0xff]
    %v362 = vld [vmem:[#allocation3 + $0x128] sm:$0xff]
    %v363 = vld [vmem:[#allocation3 + $0x130] sm:$0xff]
    %v364 = vld [vmem:[#allocation3 + $0x138] sm:$0xff]
    %v365 = vld [vmem:[#allocation3 + $0x140] sm:$0xff]
    %v366 = vld [vmem:[#allocation3 + $0x148] sm:$0xff]
    %v367 = vld [vmem:[#allocation3 + $0x150] sm:$0xff]
    %v368 = vld [vmem:[#allocation3 + $0x158] sm:$0xff]
    %v369 = vld [vmem:[#allocation3 + $0x160] sm:$0xff]
    %v370 = vld [vmem:[#allocation3 + $0x168] sm:$0xff]
    %v371 = vld [vmem:[#allocation3 + $0x170] sm:$0xff]
    %v372 = vld [vmem:[#allocation3 + $0x178] sm:$0xff]
    %v373 = vld [vmem:[#allocation3 + $0x180] sm:$0xff]
    %v374 = vld [vmem:[#allocation3 + $0x188] sm:$0xff]
    %v375 = vld [vmem:[#allocation3 + $0x190] sm:$0xff]
    %v376 = vld [vmem:[#allocation3 + $0x198] sm:$0xff]
    %v377 = vld [vmem:[#allocation3 + $0x1a0] sm:$0xff]
    %v378 = vld [vmem:[#allocation3 + $0x1a8] sm:$0xff]
    %v379 = vld [vmem:[#allocation3 + $0x1b0] sm:$0xff]
    %v380 = vld [vmem:[#allocation3 + $0x1b8] sm:$0xff]
    %v381 = vld [vmem:[#allocation3 + $0x1c0] sm:$0xff]
    %v382 = vld [vmem:[#allocation3 + $0x1c8] sm:$0xff]
    %v383 = vld [vmem:[#allocation3 + $0x1d0] sm:$0xff]
    %v384 = vld [vmem:[#allocation3 + $0x1d8] sm:$0xff]
    %v385 = vld [vmem:[#allocation3 + $0x1e0] sm:$0xff]
    %v386 = vld [vmem:[#allocation3 + $0x1e8] sm:$0xff]
    %v387 = vld [vmem:[#allocation3 + $0x1f0] sm:$0xff]
    %v388 = vld [vmem:[#allocation3 + $0x1f8] sm:$0xff]
    %v389 = vld [vmem:[#allocation3 + $0x200] sm:$0xff]
    %v390 = vld [vmem:[#allocation3 + $0x208] sm:$0xff]
    %v391 = vld [vmem:[#allocation3 + $0x210] sm:$0xff]
    %v392 = vld [vmem:[#allocation3 + $0x218] sm:$0xff]
    %393 = vmatprep.subr.mxu0 %v330
    %394 = vmatpush1.msra.mxu0 %v329
    %395 = vmatprep.subr.mxu0 %v334
    %396 = vmatpush1.msra.mxu0 %v333
    %397 = vmatprep.subr.mxu0 %v338
    %398 = vmatpush1.msra.mxu0 %v337
    %399 = vmatprep.subr.mxu0 %v342
    %400 = vmatpush1.msra.mxu0 %v341
    %401 = vmatprep.subr.mxu0 %v346
    %402 = vmatpush1.msra.mxu0 %v345
    %403 = vmatprep.subr.mxu0 %v350
    %404 = vmatpush1.msra.mxu0 %v349
    %405 = vmatprep.subr.mxu0 %v354
    %406 = vmatpush1.msra.mxu0 %v353
    %407 = vmatprep.subr.mxu0 %v358
    %408 = vmatpush1.msra.mxu0 %v357
    %409 = vmatprep.subr.mxu0 %v362
    %410 = vmatpush1.msra.mxu0 %v361
    %411 = vmatprep.subr.mxu0 %v366
    %412 = vmatpush1.msra.mxu0 %v365
    %413 = vmatprep.subr.mxu0 %v370
    %414 = vmatpush1.msra.mxu0 %v369
    %415 = vmatprep.subr.mxu0 %v374
    %416 = vmatpush1.msra.mxu0 %v373
    %417 = vmatprep.subr.mxu0 %v378
    %418 = vmatpush1.msra.mxu0 %v377
    %419 = vmatprep.subr.mxu0 %v382
    %420 = vmatpush1.msra.mxu0 %v381
    %421 = vmatprep.subr.mxu0 %v386
    %422 = vmatpush1.msra.mxu0 %v385
    %423 = vmatprep.subr.mxu0 %v390
    %424 = vmatpush1.msra.mxu0 %v389
    %425 = vmatprep.subr.mxu0 0.0
    %426 = vmatpush1.msra.mxu0 0.0
    %427 = vmatprep.subr.mxu0 0.0
    %428 = vmatpush1.msra.mxu0 0.0
    %429 = vmatprep.subr.mxu0 0.0
    %430 = vmatpush1.msra.mxu0 0.0
    %431 = vmatprep.subr.mxu0 0.0
    %432 = vmatpush1.msra.mxu0 0.0
    %433 = vmatprep.subr.mxu0 0.0
    %434 = vmatpush1.msra.mxu0 0.0
    %435 = vmatprep.subr.mxu0 0.0
    %436 = vmatpush1.msra.mxu0 0.0
    %437 = vmatprep.subr.mxu0 0.0
    %438 = vmatpush1.msra.mxu0 0.0
    %439 = vmatprep.subr.mxu0 0.0
    %440 = vmatpush1.msra.mxu0 0.0
    %441 = vmatprep.subr.mxu0 0.0
    %442 = vmatpush1.msra.mxu0 0.0
    %443 = vmatprep.subr.mxu0 0.0
    %444 = vmatpush1.msra.mxu0 0.0
    %445 = vmatprep.subr.mxu0 0.0
    %446 = vmatpush1.msra.mxu0 0.0
    %447 = vmatprep.subr.mxu0 0.0
    %448 = vmatpush1.msra.mxu0 0.0
    %449 = vmatprep.subr.mxu0 0.0
    %450 = vmatpush1.msra.mxu0 0.0
    %451 = vmatprep.subr.mxu0 0.0
    %452 = vmatpush1.msra.mxu0 0.0
    %453 = vmatprep.subr.mxu0 0.0
    %454 = vmatpush1.msra.mxu0 0.0
    %455 = vmatprep.subr.mxu0 0.0
    %456 = vmatpush1.msra.mxu0 0.0
    %457 = vmatprep.mubr.f32.mxu0 0.0
    %458 = vmatmul.mubr.f32.gmra.mrb[0].mxu0 0.0
    %v459 = vpop.f32.mrb[0].mxu0
    %v460 = vadd.f32 0.0, %v459
    %v461 = vpop.f32.mrb[0].mxu0
    %v462 = vadd.f32 0.0, %v461
    %463 = vdwg.mxu0
    %464 = vmatprep.subr.mxu0 %v332
    %465 = vmatpush1.msra.mxu0 %v331
    %466 = vmatprep.subr.mxu0 %v336
    %467 = vmatpush1.msra.mxu0 %v335
    %468 = vmatprep.subr.mxu0 %v340
    %469 = vmatpush1.msra.mxu0 %v339
    %470 = vmatprep.subr.mxu0 %v344
    %471 = vmatpush1.msra.mxu0 %v343
    %472 = vmatprep.subr.mxu0 %v348
    %473 = vmatpush1.msra.mxu0 %v347
    %474 = vmatprep.subr.mxu0 %v352
    %475 = vmatpush1.msra.mxu0 %v351
    %476 = vmatprep.subr.mxu0 %v356
    %477 = vmatpush1.msra.mxu0 %v355
    %478 = vmatprep.subr.mxu0 %v360
    %479 = vmatpush1.msra.mxu0 %v359
    %480 = vmatprep.subr.mxu0 %v364
    %481 = vmatpush1.msra.mxu0 %v363
    %482 = vmatprep.subr.mxu0 %v368
    %483 = vmatpush1.msra.mxu0 %v367
    %484 = vmatprep.subr.mxu0 %v372
    %485 = vmatpush1.msra.mxu0 %v371
    %486 = vmatprep.subr.mxu0 %v376
    %487 = vmatpush1.msra.mxu0 %v375
    %488 = vmatprep.subr.mxu0 %v380
    %489 = vmatpush1.msra.mxu0 %v379
    %490 = vmatprep.subr.mxu0 %v384
    %491 = vmatpush1.msra.mxu0 %v383
    %492 = vmatprep.subr.mxu0 %v388
    %493 = vmatpush1.msra.mxu0 %v387
    %494 = vmatprep.subr.mxu0 %v392
    %495 = vmatpush1.msra.mxu0 %v391
    %496 = vmatprep.subr.mxu0 0.0
    %497 = vmatpush1.msra.mxu0 0.0
    %498 = vmatprep.subr.mxu0 0.0
    %499 = vmatpush1.msra.mxu0 0.0
    %500 = vmatprep.subr.mxu0 0.0
    %501 = vmatpush1.msra.mxu0 0.0
    %502 = vmatprep.subr.mxu0 0.0
    %503 = vmatpush1.msra.mxu0 0.0
    %504 = vmatprep.subr.mxu0 0.0
    %505 = vmatpush1.msra.mxu0 0.0
    %506 = vmatprep.subr.mxu0 0.0
    %507 = vmatpush1.msra.mxu0 0.0
    %508 = vmatprep.subr.mxu0 0.0
    %509 = vmatpush1.msra.mxu0 0.0
    %510 = vmatprep.subr.mxu0 0.0
    %511 = vmatpush1.msra.mxu0 0.0
    %512 = vmatprep.subr.mxu0 0.0
    %513 = vmatpush1.msra.mxu0 0.0
    %514 = vmatprep.subr.mxu0 0.0
    %515 = vmatpush1.msra.mxu0 0.0
    %516 = vmatprep.subr.mxu0 0.0
    %517 = vmatpush1.msra.mxu0 0.0
    %518 = vmatprep.subr.mxu0 0.0
    %519 = vmatpush1.msra.mxu0 0.0
    %520 = vmatprep.subr.mxu0 0.0
    %521 = vmatpush1.msra.mxu0 0.0
    %522 = vmatprep.subr.mxu0 0.0
    %523 = vmatpush1.msra.mxu0 0.0
    %524 = vmatprep.subr.mxu0 0.0
    %525 = vmatpush1.msra.mxu0 0.0
    %526 = vmatprep.subr.mxu0 0.0
    %527 = vmatpush1.msra.mxu0 0.0
    %528 = vmatprep.mubr.f32.mxu0 0.0
    %529 = vmatmul.mubr.f32.gmra.mrb[0].mxu0 0.0
    %v530 = vpop.f32.mrb[0].mxu0
    %v531 = vadd.f32 0.0, %v530
    %v532 = vpop.f32.mrb[0].mxu0
    %v533 = vadd.f32 0.0, %v532
    %534 = vdwg.mxu0
    %v535 = vadd.f32 %v170, %v460
    %v536 = vadd.f32 %v172, %v462
    %v537 = vadd.f32 %v325, %v531
    %v538 = vadd.f32 %v327, %v533
    %v539 = vxor.u32 %v535, 2147483648
    %v540 = vxor.u32 %v536, 2147483648
    %v541 = vxor.u32 %v537, 2147483648
    %v542 = vxor.u32 %v538, 2147483648
    %v543 = vmul.f32 %v539, 1.442695
    %v544 = vpow.pop %v543
    %v545 = vmul.f32 %v540, 1.442695
    %v546 = vpow.pop %v545
    %v547 = vmul.f32 %v541, 1.442695
    %v548 = vpow.pop %v547
    %v549 = vmul.f32 %v542, 1.442695
    %v550 = vpow.pop %v549
    %v551 = vadd.f32 %v544, 1.0
    %v552 = vadd.f32 %v546, 1.0
    %v553 = vadd.f32 %v548, 1.0
    %v554 = vadd.f32 %v550, 1.0
    %v555 = vrcp.pop %v551
    %v556 = vmul.f32 1.0, %v555
    %v557 = vrcp.pop %v552
    %v558 = vmul.f32 1.0, %v557
    %v559 = vrcp.pop %v553
    %v560 = vmul.f32 1.0, %v559
    %v561 = vrcp.pop %v554
    %v562 = vmul.f32 1.0, %v561
    %v563 = vtanh.pop %v536
    %v564 = vtanh.pop %v538
    %v565 = vmul.f32 %v556, 0.0
    %v566 = vmul.f32 %v556, %v563
    %568 = vrot.lane.b32.xlu0 %v566, 64
    %v569 = vpop.permute.xlu0 %568
    %v571 = vadd.f32 %v565, %v569
    %v572 = vmul.f32 %v560, 0.0
    %v573 = vmul.f32 %v560, %v564
    %575 = vrot.lane.b32.xlu0 %v573, 64
    %v576 = vpop.permute.xlu0 %575
    %v578 = vadd.f32 %v572, %v576
    %v579 = vtanh.pop %v571
    %v580 = vmul.f32 %v558, %v579
    %v581 = vtanh.pop %v578
    %v582 = vmul.f32 %v562, %v581
    %584 = vrot.lane.b32.xlu0 %v580, 64
    %v585 = vpop.permute.xlu0 %584
    %vm587 = vcmask 523264
    %v588 = vsel %vm587, %v585, %v582
    %589 = vst.msk [vmem:[#allocation2] sm:$0xff] %vm587, %v585
    %vm590 = vcmask 1048064
    %591 = vst.msk [vmem:[#allocation2 + $0x38] sm:$0xff] %vm590, %v582
    %592 = vmatprep.subr.mxu0 %v330
    %593 = vmatpush1.msra.mxu0 %v329
    %594 = vmatprep.subr.mxu0 %v334
    %595 = vmatpush1.msra.mxu0 %v333
    %596 = vmatprep.subr.mxu0 %v338
    %597 = vmatpush1.msra.mxu0 %v337
    %598 = vmatprep.subr.mxu0 %v342
    %599 = vmatpush1.msra.mxu0 %v341
    %600 = vmatprep.subr.mxu0 %v346
    %601 = vmatpush1.msra.mxu0 %v345
    %602 = vmatprep.subr.mxu0 %v350
    %603 = vmatpush1.msra.mxu0 %v349
    %604 = vmatprep.subr.mxu0 %v354
    %605 = vmatpush1.msra.mxu0 %v353
    %606 = vmatprep.subr.mxu0 %v358
    %607 = vmatpush1.msra.mxu0 %v357
    %608 = vmatprep.subr.mxu0 %v362
    %609 = vmatpush1.msra.mxu0 %v361
    %610 = vmatprep.subr.mxu0 %v366
    %611 = vmatpush1.msra.mxu0 %v365
    %612 = vmatprep.subr.mxu0 %v370
    %613 = vmatpush1.msra.mxu0 %v369
    %614 = vmatprep.subr.mxu0 %v374
    %615 = vmatpush1.msra.mxu0 %v373
    %616 = vmatprep.subr.mxu0 %v378
    %617 = vmatpush1.msra.mxu0 %v377
    %618 = vmatprep.subr.mxu0 %v382
    %619 = vmatpush1.msra.mxu0 %v381
    %620 = vmatprep.subr.mxu0 %v386
    %621 = vmatpush1.msra.mxu0 %v385
    %622 = vmatprep.subr.mxu0 %v390
    %623 = vmatpush1.msra.mxu0 %v389
    %624 = vmatprep.subr.mxu0 0.0
    %625 = vmatpush1.msra.mxu0 0.0
    %626 = vmatprep.subr.mxu0 0.0
    %627 = vmatpush1.msra.mxu0 0.0
    %628 = vmatprep.subr.mxu0 0.0
    %629 = vmatpush1.msra.mxu0 0.0
    %630 = vmatprep.subr.mxu0 0.0
    %631 = vmatpush1.msra.mxu0 0.0
    %632 = vmatprep.subr.mxu0 0.0
    %633 = vmatpush1.msra.mxu0 0.0
    %634 = vmatprep.subr.mxu0 0.0
    %635 = vmatpush1.msra.mxu0 0.0
    %636 = vmatprep.subr.mxu0 0.0
    %637 = vmatpush1.msra.mxu0 0.0
    %638 = vmatprep.subr.mxu0 0.0
    %639 = vmatpush1.msra.mxu0 0.0
    %640 = vmatprep.subr.mxu0 0.0
    %641 = vmatpush1.msra.mxu0 0.0
    %642 = vmatprep.subr.mxu0 0.0
    %643 = vmatpush1.msra.mxu0 0.0
    %644 = vmatprep.subr.mxu0 0.0
    %645 = vmatpush1.msra.mxu0 0.0
    %646 = vmatprep.subr.mxu0 0.0
    %647 = vmatpush1.msra.mxu0 0.0
    %648 = vmatprep.subr.mxu0 0.0
    %649 = vmatpush1.msra.mxu0 0.0
    %650 = vmatprep.subr.mxu0 0.0
    %651 = vmatpush1.msra.mxu0 0.0
    %652 = vmatprep.subr.mxu0 0.0
    %653 = vmatpush1.msra.mxu0 0.0
    %654 = vmatprep.subr.mxu0 0.0
    %655 = vmatpush1.msra.mxu0 0.0
    %656 = vmatprep.mubr.f32.mxu0 0.0
    %657 = vmatmul.mubr.f32.gmra.mrb[0].mxu0 %v588
    %v658 = vpop.f32.mrb[0].mxu0
    %v659 = vadd.f32 0.0, %v658
    %v660 = vpop.f32.mrb[0].mxu0
    %v661 = vadd.f32 0.0, %v660
    %662 = vdwg.mxu0
    %663 = vmatprep.subr.mxu0 %v332
    %664 = vmatpush1.msra.mxu0 %v331
    %665 = vmatprep.subr.mxu0 %v336
    %666 = vmatpush1.msra.mxu0 %v335
    %667 = vmatprep.subr.mxu0 %v340
    %668 = vmatpush1.msra.mxu0 %v339
    %669 = vmatprep.subr.mxu0 %v344
    %670 = vmatpush1.msra.mxu0 %v343
    %671 = vmatprep.subr.mxu0 %v348
    %672 = vmatpush1.msra.mxu0 %v347
    %673 = vmatprep.subr.mxu0 %v352
    %674 = vmatpush1.msra.mxu0 %v351
    %675 = vmatprep.subr.mxu0 %v356
    %676 = vmatpush1.msra.mxu0 %v355
    %677 = vmatprep.subr.mxu0 %v360
    %678 = vmatpush1.msra.mxu0 %v359
    %679 = vmatprep.subr.mxu0 %v364
    %680 = vmatpush1.msra.mxu0 %v363
    %681 = vmatprep.subr.mxu0 %v368
    %682 = vmatpush1.msra.mxu0 %v367
    %683 = vmatprep.subr.mxu0 %v372
    %684 = vmatpush1.msra.mxu0 %v371
    %685 = vmatprep.subr.mxu0 %v376
    %686 = vmatpush1.msra.mxu0 %v375
    %687 = vmatprep.subr.mxu0 %v380
    %688 = vmatpush1.msra.mxu0 %v379
    %689 = vmatprep.subr.mxu0 %v384
    %690 = vmatpush1.msra.mxu0 %v383
    %691 = vmatprep.subr.mxu0 %v388
    %692 = vmatpush1.msra.mxu0 %v387
    %693 = vmatprep.subr.mxu0 %v392
    %694 = vmatpush1.msra.mxu0 %v391
    %695 = vmatprep.subr.mxu0 0.0
    %696 = vmatpush1.msra.mxu0 0.0
    %697 = vmatprep.subr.mxu0 0.0
    %698 = vmatpush1.msra.mxu0 0.0
    %699 = vmatprep.subr.mxu0 0.0
    %700 = vmatpush1.msra.mxu0 0.0
    %701 = vmatprep.subr.mxu0 0.0
    %702 = vmatpush1.msra.mxu0 0.0
    %703 = vmatprep.subr.mxu0 0.0
    %704 = vmatpush1.msra.mxu0 0.0
    %705 = vmatprep.subr.mxu0 0.0
    %706 = vmatpush1.msra.mxu0 0.0
    %707 = vmatprep.subr.mxu0 0.0
    %708 = vmatpush1.msra.mxu0 0.0
    %709 = vmatprep.subr.mxu0 0.0
    %710 = vmatpush1.msra.mxu0 0.0
    %711 = vmatprep.subr.mxu0 0.0
    %712 = vmatpush1.msra.mxu0 0.0
    %713 = vmatprep.subr.mxu0 0.0
    %714 = vmatpush1.msra.mxu0 0.0
    %715 = vmatprep.subr.mxu0 0.0
    %716 = vmatpush1.msra.mxu0 0.0
    %717 = vmatprep.subr.mxu0 0.0
    %718 = vmatpush1.msra.mxu0 0.0
    %719 = vmatprep.subr.mxu0 0.0
    %720 = vmatpush1.msra.mxu0 0.0
    %721 = vmatprep.subr.mxu0 0.0
    %722 = vmatpush1.msra.mxu0 0.0
    %723 = vmatprep.subr.mxu0 0.0
    %724 = vmatpush1.msra.mxu0 0.0
    %725 = vmatprep.subr.mxu0 0.0
    %726 = vmatpush1.msra.mxu0 0.0
    %727 = vmatprep.mubr.f32.mxu0 0.0
    %728 = vmatmul.mubr.f32.gmra.mrb[0].mxu0 %v588
    %v729 = vpop.f32.mrb[0].mxu0
    %v730 = vadd.f32 0.0, %v729
    %v731 = vpop.f32.mrb[0].mxu0
    %v732 = vadd.f32 0.0, %v731
    %733 = vdwg.mxu0
    %v734 = vadd.f32 %v176, %v659
    %v735 = vadd.f32 %v178, %v661
    %v736 = vadd.f32 %v319, %v730
    %v737 = vadd.f32 %v321, %v732
    %v738 = vxor.u32 %v734, 2147483648
    %v739 = vxor.u32 %v735, 2147483648
    %v740 = vxor.u32 %v736, 2147483648
    %v741 = vxor.u32 %v737, 2147483648
    %v742 = vmul.f32 %v738, 1.442695
    %v743 = vpow.pop %v742
    %v744 = vmul.f32 %v739, 1.442695
    %v745 = vpow.pop %v744
    %v746 = vmul.f32 %v740, 1.442695
    %v747 = vpow.pop %v746
    %v748 = vmul.f32 %v741, 1.442695
    %v749 = vpow.pop %v748
    %v750 = vadd.f32 %v743, 1.0
    %v751 = vadd.f32 %v745, 1.0
    %v752 = vadd.f32 %v747, 1.0
    %v753 = vadd.f32 %v749, 1.0
    %v754 = vrcp.pop %v750
    %v755 = vmul.f32 1.0, %v754
    %v756 = vrcp.pop %v751
    %v757 = vmul.f32 1.0, %v756
    %v758 = vrcp.pop %v752
    %v759 = vmul.f32 1.0, %v758
    %v760 = vrcp.pop %v753
    %v761 = vmul.f32 1.0, %v760
    %v762 = vtanh.pop %v735
    %v763 = vtanh.pop %v737
    %v764 = vmul.f32 %v755, %v571
    %v765 = vmul.f32 %v755, %v762
    %767 = vrot.lane.b32.xlu0 %v765, 64
    %v768 = vpop.permute.xlu0 %767
    %v770 = vadd.f32 %v764, %v768
    %v771 = vmul.f32 %v759, %v578
    %v772 = vmul.f32 %v759, %v763
    %774 = vrot.lane.b32.xlu0 %v772, 64
    %v775 = vpop.permute.xlu0 %774
    %v777 = vadd.f32 %v771, %v775
    %v778 = vtanh.pop %v770
    %v779 = vmul.f32 %v757, %v778
    %v780 = vtanh.pop %v777
    %v781 = vmul.f32 %v761, %v780
    %783 = vrot.lane.b32.xlu0 %v779, 64
    %v784 = vpop.permute.xlu0 %783
    %v786 = vsel %vm587, %v784, %v781
    %787 = vst.msk [vmem:[#allocation2 + $0x8] sm:$0xff] %vm587, %v784
    %788 = vst.msk [vmem:[#allocation2 + $0x30] sm:$0xff] %vm590, %v781
    %789 = vmatprep.subr.mxu0 %v330
    %790 = vmatpush1.msra.mxu0 %v329
    %791 = vmatprep.subr.mxu0 %v334
    %792 = vmatpush1.msra.mxu0 %v333
    %793 = vmatprep.subr.mxu0 %v338
    %794 = vmatpush1.msra.mxu0 %v337
    %795 = vmatprep.subr.mxu0 %v342
    %796 = vmatpush1.msra.mxu0 %v341
    %797 = vmatprep.subr.mxu0 %v346
    %798 = vmatpush1.msra.mxu0 %v345
    %799 = vmatprep.subr.mxu0 %v350
    %800 = vmatpush1.msra.mxu0 %v349
    %801 = vmatprep.subr.mxu0 %v354
    %802 = vmatpush1.msra.mxu0 %v353
    %803 = vmatprep.subr.mxu0 %v358
    %804 = vmatpush1.msra.mxu0 %v357
    %805 = vmatprep.subr.mxu0 %v362
    %806 = vmatpush1.msra.mxu0 %v361
    %807 = vmatprep.subr.mxu0 %v366
    %808 = vmatpush1.msra.mxu0 %v365
    %809 = vmatprep.subr.mxu0 %v370
    %810 = vmatpush1.msra.mxu0 %v369
    %811 = vmatprep.subr.mxu0 %v374
    %812 = vmatpush1.msra.mxu0 %v373
    %813 = vmatprep.subr.mxu0 %v378
    %814 = vmatpush1.msra.mxu0 %v377
    %815 = vmatprep.subr.mxu0 %v382
    %816 = vmatpush1.msra.mxu0 %v381
    %817 = vmatprep.subr.mxu0 %v386
    %818 = vmatpush1.msra.mxu0 %v385
    %819 = vmatprep.subr.mxu0 %v390
    %820 = vmatpush1.msra.mxu0 %v389
    %821 = vmatprep.subr.mxu0 0.0
    %822 = vmatpush1.msra.mxu0 0.0
    %823 = vmatprep.subr.mxu0 0.0
    %824 = vmatpush1.msra.mxu0 0.0
    %825 = vmatprep.subr.mxu0 0.0
    %826 = vmatpush1.msra.mxu0 0.0
    %827 = vmatprep.subr.mxu0 0.0
    %828 = vmatpush1.msra.mxu0 0.0
    %829 = vmatprep.subr.mxu0 0.0
    %830 = vmatpush1.msra.mxu0 0.0
    %831 = vmatprep.subr.mxu0 0.0
    %832 = vmatpush1.msra.mxu0 0.0
    %833 = vmatprep.subr.mxu0 0.0
    %834 = vmatpush1.msra.mxu0 0.0
    %835 = vmatprep.subr.mxu0 0.0
    %836 = vmatpush1.msra.mxu0 0.0
    %837 = vmatprep.subr.mxu0 0.0
    %838 = vmatpush1.msra.mxu0 0.0
    %839 = vmatprep.subr.mxu0 0.0
    %840 = vmatpush1.msra.mxu0 0.0
    %841 = vmatprep.subr.mxu0 0.0
    %842 = vmatpush1.msra.mxu0 0.0
    %843 = vmatprep.subr.mxu0 0.0
    %844 = vmatpush1.msra.mxu0 0.0
    %845 = vmatprep.subr.mxu0 0.0
    %846 = vmatpush1.msra.mxu0 0.0
    %847 = vmatprep.subr.mxu0 0.0
    %848 = vmatpush1.msra.mxu0 0.0
    %849 = vmatprep.subr.mxu0 0.0
    %850 = vmatpush1.msra.mxu0 0.0
    %851 = vmatprep.subr.mxu0 0.0
    %852 = vmatpush1.msra.mxu0 0.0
    %853 = vmatprep.mubr.f32.mxu0 0.0
    %854 = vmatmul.mubr.f32.gmra.mrb[0].mxu0 %v786
    %v855 = vpop.f32.mrb[0].mxu0
    %v856 = vadd.f32 0.0, %v855
    %v857 = vpop.f32.mrb[0].mxu0
    %v858 = vadd.f32 0.0, %v857
    %859 = vdwg.mxu0
    %860 = vmatprep.subr.mxu0 %v332
    %861 = vmatpush1.msra.mxu0 %v331
    %862 = vmatprep.subr.mxu0 %v336
    %863 = vmatpush1.msra.mxu0 %v335
    %864 = vmatprep.subr.mxu0 %v340
    %865 = vmatpush1.msra.mxu0 %v339
    %866 = vmatprep.subr.mxu0 %v344
    %867 = vmatpush1.msra.mxu0 %v343
    %868 = vmatprep.subr.mxu0 %v348
    %869 = vmatpush1.msra.mxu0 %v347
    %870 = vmatprep.subr.mxu0 %v352
    %871 = vmatpush1.msra.mxu0 %v351
    %872 = vmatprep.subr.mxu0 %v356
    %873 = vmatpush1.msra.mxu0 %v355
    %874 = vmatprep.subr.mxu0 %v360
    %875 = vmatpush1.msra.mxu0 %v359
    %876 = vmatprep.subr.mxu0 %v364
    %877 = vmatpush1.msra.mxu0 %v363
    %878 = vmatprep.subr.mxu0 %v368
    %879 = vmatpush1.msra.mxu0 %v367
    %880 = vmatprep.subr.mxu0 %v372
    %881 = vmatpush1.msra.mxu0 %v371
    %882 = vmatprep.subr.mxu0 %v376
    %883 = vmatpush1.msra.mxu0 %v375
    %884 = vmatprep.subr.mxu0 %v380
    %885 = vmatpush1.msra.mxu0 %v379
    %886 = vmatprep.subr.mxu0 %v384
    %887 = vmatpush1.msra.mxu0 %v383
    %888 = vmatprep.subr.mxu0 %v388
    %889 = vmatpush1.msra.mxu0 %v387
    %890 = vmatprep.subr.mxu0 %v392
    %891 = vmatpush1.msra.mxu0 %v391
    %892 = vmatprep.subr.mxu0 0.0
    %893 = vmatpush1.msra.mxu0 0.0
    %894 = vmatprep.subr.mxu0 0.0
    %895 = vmatpush1.msra.mxu0 0.0
    %896 = vmatprep.subr.mxu0 0.0
    %897 = vmatpush1.msra.mxu0 0.0
    %898 = vmatprep.subr.mxu0 0.0
    %899 = vmatpush1.msra.mxu0 0.0
    %900 = vmatprep.subr.mxu0 0.0
    %901 = vmatpush1.msra.mxu0 0.0
    %902 = vmatprep.subr.mxu0 0.0
    %903 = vmatpush1.msra.mxu0 0.0
    %904 = vmatprep.subr.mxu0 0.0
    %905 = vmatpush1.msra.mxu0 0.0
    %906 = vmatprep.subr.mxu0 0.0
    %907 = vmatpush1.msra.mxu0 0.0
    %908 = vmatprep.subr.mxu0 0.0
    %909 = vmatpush1.msra.mxu0 0.0
    %910 = vmatprep.subr.mxu0 0.0
    %911 = vmatpush1.msra.mxu0 0.0
    %912 = vmatprep.subr.mxu0 0.0
    %913 = vmatpush1.msra.mxu0 0.0
    %914 = vmatprep.subr.mxu0 0.0
    %915 = vmatpush1.msra.mxu0 0.0
    %916 = vmatprep.subr.mxu0 0.0
    %917 = vmatpush1.msra.mxu0 0.0
    %918 = vmatprep.subr.mxu0 0.0
    %919 = vmatpush1.msra.mxu0 0.0
    %920 = vmatprep.subr.mxu0 0.0
    %921 = vmatpush1.msra.mxu0 0.0
    %922 = vmatprep.subr.mxu0 0.0
    %923 = vmatpush1.msra.mxu0 0.0
    %924 = vmatprep.mubr.f32.mxu0 0.0
    %925 = vmatmul.mubr.f32.gmra.mrb[0].mxu0 %v786
    %v926 = vpop.f32.mrb[0].mxu0
    %v927 = vadd.f32 0.0, %v926
    %v928 = vpop.f32.mrb[0].mxu0
    %v929 = vadd.f32 0.0, %v928
    %930 = vdwg.mxu0
    %v931 = vadd.f32 %v182, %v856
    %v932 = vadd.f32 %v184, %v858
    %v933 = vadd.f32 %v313, %v927
    %v934 = vadd.f32 %v315, %v929
    %v935 = vxor.u32 %v931, 2147483648
    %v936 = vxor.u32 %v932, 2147483648
    %v937 = vxor.u32 %v933, 2147483648
    %v938 = vxor.u32 %v934, 2147483648
    %v939 = vmul.f32 %v935, 1.442695
    %v940 = vpow.pop %v939
    %v941 = vmul.f32 %v936, 1.442695
    %v942 = vpow.pop %v941
    %v943 = vmul.f32 %v937, 1.442695
    %v944 = vpow.pop %v943
    %v945 = vmul.f32 %v938, 1.442695
    %v946 = vpow.pop %v945
    %v947 = vadd.f32 %v940, 1.0
    %v948 = vadd.f32 %v942, 1.0
    %v949 = vadd.f32 %v944, 1.0
    %v950 = vadd.f32 %v946, 1.0
    %v951 = vrcp.pop %v947
    %v952 = vmul.f32 1.0, %v951
    %v953 = vrcp.pop %v948
    %v954 = vmul.f32 1.0, %v953
    %v955 = vrcp.pop %v949
    %v956 = vmul.f32 1.0, %v955
    %v957 = vrcp.pop %v950
    %v958 = vmul.f32 1.0, %v957
    %v959 = vtanh.pop %v932
    %v960 = vtanh.pop %v934
    %v961 = vmul.f32 %v952, %v770
    %v962 = vmul.f32 %v952, %v959
    %964 = vrot.lane.b32.xlu0 %v962, 64
    %v965 = vpop.permute.xlu0 %964
    %v967 = vadd.f32 %v961, %v965
    %v968 = vmul.f32 %v956, %v777
    %v969 = vmul.f32 %v956, %v960
    %971 = vrot.lane.b32.xlu0 %v969, 64
    %v972 = vpop.permute.xlu0 %971
    %v974 = vadd.f32 %v968, %v972
    %v975 = vtanh.pop %v967
    %v976 = vmul.f32 %v954, %v975
    %v977 = vtanh.pop %v974
    %v978 = vmul.f32 %v958, %v977
    %980 = vrot.lane.b32.xlu0 %v976, 64
    %v981 = vpop.permute.xlu0 %980
    %v983 = vsel %vm587, %v981, %v978
    %984 = vst.msk [vmem:[#allocation2 + $0x10] sm:$0xff] %vm587, %v981
    %985 = vst.msk [vmem:[#allocation2 + $0x28] sm:$0xff] %vm590, %v978
    %986 = vmatprep.subr.mxu0 %v330
    %987 = vmatpush1.msra.mxu0 %v329
    %988 = vmatprep.subr.mxu0 %v334
    %989 = vmatpush1.msra.mxu0 %v333
    %990 = vmatprep.subr.mxu0 %v338
    %991 = vmatpush1.msra.mxu0 %v337
    %992 = vmatprep.subr.mxu0 %v342
    %993 = vmatpush1.msra.mxu0 %v341
    %994 = vmatprep.subr.mxu0 %v346
    %995 = vmatpush1.msra.mxu0 %v345
    %996 = vmatprep.subr.mxu0 %v350
    %997 = vmatpush1.msra.mxu0 %v349
    %998 = vmatprep.subr.mxu0 %v354
    %999 = vmatpush1.msra.mxu0 %v353
    %1000 = vmatprep.subr.mxu0 %v358
    %1001 = vmatpush1.msra.mxu0 %v357
    %1002 = vmatprep.subr.mxu0 %v362
    %1003 = vmatpush1.msra.mxu0 %v361
    %1004 = vmatprep.subr.mxu0 %v366
    %1005 = vmatpush1.msra.mxu0 %v365
    %1006 = vmatprep.subr.mxu0 %v370
    %1007 = vmatpush1.msra.mxu0 %v369
    %1008 = vmatprep.subr.mxu0 %v374
    %1009 = vmatpush1.msra.mxu0 %v373
    %1010 = vmatprep.subr.mxu0 %v378
    %1011 = vmatpush1.msra.mxu0 %v377
    %1012 = vmatprep.subr.mxu0 %v382
    %1013 = vmatpush1.msra.mxu0 %v381
    %1014 = vmatprep.subr.mxu0 %v386
    %1015 = vmatpush1.msra.mxu0 %v385
    %1016 = vmatprep.subr.mxu0 %v390
    %1017 = vmatpush1.msra.mxu0 %v389
    %1018 = vmatprep.subr.mxu0 0.0
    %1019 = vmatpush1.msra.mxu0 0.0
    %1020 = vmatprep.subr.mxu0 0.0
    %1021 = vmatpush1.msra.mxu0 0.0
    %1022 = vmatprep.subr.mxu0 0.0
    %1023 = vmatpush1.msra.mxu0 0.0
    %1024 = vmatprep.subr.mxu0 0.0
    %1025 = vmatpush1.msra.mxu0 0.0
    %1026 = vmatprep.subr.mxu0 0.0
    %1027 = vmatpush1.msra.mxu0 0.0
    %1028 = vmatprep.subr.mxu0 0.0
    %1029 = vmatpush1.msra.mxu0 0.0
    %1030 = vmatprep.subr.mxu0 0.0
    %1031 = vmatpush1.msra.mxu0 0.0
    %1032 = vmatprep.subr.mxu0 0.0
    %1033 = vmatpush1.msra.mxu0 0.0
    %1034 = vmatprep.subr.mxu0 0.0
    %1035 = vmatpush1.msra.mxu0 0.0
    %1036 = vmatprep.subr.mxu0 0.0
    %1037 = vmatpush1.msra.mxu0 0.0
    %1038 = vmatprep.subr.mxu0 0.0
    %1039 = vmatpush1.msra.mxu0 0.0
    %1040 = vmatprep.subr.mxu0 0.0
    %1041 = vmatpush1.msra.mxu0 0.0
    %1042 = vmatprep.subr.mxu0 0.0
    %1043 = vmatpush1.msra.mxu0 0.0
    %1044 = vmatprep.subr.mxu0 0.0
    %1045 = vmatpush1.msra.mxu0 0.0
    %1046 = vmatprep.subr.mxu0 0.0
    %1047 = vmatpush1.msra.mxu0 0.0
    %1048 = vmatprep.subr.mxu0 0.0
    %1049 = vmatpush1.msra.mxu0 0.0
    %1050 = vmatprep.mubr.f32.mxu0 0.0
    %1051 = vmatmul.mubr.f32.gmra.mrb[0].mxu0 %v983
    %v1052 = vpop.f32.mrb[0].mxu0
    %v1053 = vadd.f32 0.0, %v1052
    %v1054 = vpop.f32.mrb[0].mxu0
    %v1055 = vadd.f32 0.0, %v1054
    %1056 = vdwg.mxu0
    %1057 = vmatprep.subr.mxu0 %v332
    %1058 = vmatpush1.msra.mxu0 %v331
    %1059 = vmatprep.subr.mxu0 %v336
    %1060 = vmatpush1.msra.mxu0 %v335
    %1061 = vmatprep.subr.mxu0 %v340
    %1062 = vmatpush1.msra.mxu0 %v339
    %1063 = vmatprep.subr.mxu0 %v344
    %1064 = vmatpush1.msra.mxu0 %v343
    %1065 = vmatprep.subr.mxu0 %v348
    %1066 = vmatpush1.msra.mxu0 %v347
    %1067 = vmatprep.subr.mxu0 %v352
    %1068 = vmatpush1.msra.mxu0 %v351
    %1069 = vmatprep.subr.mxu0 %v356
    %1070 = vmatpush1.msra.mxu0 %v355
    %1071 = vmatprep.subr.mxu0 %v360
    %1072 = vmatpush1.msra.mxu0 %v359
    %1073 = vmatprep.subr.mxu0 %v364
    %1074 = vmatpush1.msra.mxu0 %v363
    %1075 = vmatprep.subr.mxu0 %v368
    %1076 = vmatpush1.msra.mxu0 %v367
    %1077 = vmatprep.subr.mxu0 %v372
    %1078 = vmatpush1.msra.mxu0 %v371
    %1079 = vmatprep.subr.mxu0 %v376
    %1080 = vmatpush1.msra.mxu0 %v375
    %1081 = vmatprep.subr.mxu0 %v380
    %1082 = vmatpush1.msra.mxu0 %v379
    %1083 = vmatprep.subr.mxu0 %v384
    %1084 = vmatpush1.msra.mxu0 %v383
    %1085 = vmatprep.subr.mxu0 %v388
    %1086 = vmatpush1.msra.mxu0 %v387
    %1087 = vmatprep.subr.mxu0 %v392
    %1088 = vmatpush1.msra.mxu0 %v391
    %1089 = vmatprep.subr.mxu0 0.0
    %1090 = vmatpush1.msra.mxu0 0.0
    %1091 = vmatprep.subr.mxu0 0.0
    %1092 = vmatpush1.msra.mxu0 0.0
    %1093 = vmatprep.subr.mxu0 0.0
    %1094 = vmatpush1.msra.mxu0 0.0
    %1095 = vmatprep.subr.mxu0 0.0
    %1096 = vmatpush1.msra.mxu0 0.0
    %1097 = vmatprep.subr.mxu0 0.0
    %1098 = vmatpush1.msra.mxu0 0.0
    %1099 = vmatprep.subr.mxu0 0.0
    %1100 = vmatpush1.msra.mxu0 0.0
    %1101 = vmatprep.subr.mxu0 0.0
    %1102 = vmatpush1.msra.mxu0 0.0
    %1103 = vmatprep.subr.mxu0 0.0
    %1104 = vmatpush1.msra.mxu0 0.0
    %1105 = vmatprep.subr.mxu0 0.0
    %1106 = vmatpush1.msra.mxu0 0.0
    %1107 = vmatprep.subr.mxu0 0.0
    %1108 = vmatpush1.msra.mxu0 0.0
    %1109 = vmatprep.subr.mxu0 0.0
    %1110 = vmatpush1.msra.mxu0 0.0
    %1111 = vmatprep.subr.mxu0 0.0
    %1112 = vmatpush1.msra.mxu0 0.0
    %1113 = vmatprep.subr.mxu0 0.0
    %1114 = vmatpush1.msra.mxu0 0.0
    %1115 = vmatprep.subr.mxu0 0.0
    %1116 = vmatpush1.msra.mxu0 0.0
    %1117 = vmatprep.subr.mxu0 0.0
    %1118 = vmatpush1.msra.mxu0 0.0
    %1119 = vmatprep.subr.mxu0 0.0
    %1120 = vmatpush1.msra.mxu0 0.0
    %1121 = vmatprep.mubr.f32.mxu0 0.0
    %1122 = vmatmul.mubr.f32.gmra.mrb[0].mxu0 %v983
    %v1123 = vpop.f32.mrb[0].mxu0
    %v1124 = vadd.f32 0.0, %v1123
    %v1125 = vpop.f32.mrb[0].mxu0
    %v1126 = vadd.f32 0.0, %v1125
    %1127 = vdwg.mxu0
    %v1128 = vadd.f32 %v188, %v1053
    %v1129 = vadd.f32 %v190, %v1055
    %v1130 = vadd.f32 %v307, %v1124
    %v1131 = vadd.f32 %v309, %v1126
    %v1132 = vxor.u32 %v1128, 2147483648
    %v1133 = vxor.u32 %v1129, 2147483648
    %v1134 = vxor.u32 %v1130, 2147483648
    %v1135 = vxor.u32 %v1131, 2147483648
    %v1136 = vmul.f32 %v1132, 1.442695
    %v1137 = vpow.pop %v1136
    %v1138 = vmul.f32 %v1133, 1.442695
    %v1139 = vpow.pop %v1138
    %v1140 = vmul.f32 %v1134, 1.442695
    %v1141 = vpow.pop %v1140
    %v1142 = vmul.f32 %v1135, 1.442695
    %v1143 = vpow.pop %v1142
    %v1144 = vadd.f32 %v1137, 1.0
    %v1145 = vadd.f32 %v1139, 1.0
    %v1146 = vadd.f32 %v1141, 1.0
    %v1147 = vadd.f32 %v1143, 1.0
    %v1148 = vrcp.pop %v1144
    %v1149 = vmul.f32 1.0, %v1148
    %v1150 = vrcp.pop %v1145
    %v1151 = vmul.f32 1.0, %v1150
    %v1152 = vrcp.pop %v1146
    %v1153 = vmul.f32 1.0, %v1152
    %v1154 = vrcp.pop %v1147
    %v1155 = vmul.f32 1.0, %v1154
    %v1156 = vtanh.pop %v1129
    %v1157 = vtanh.pop %v1131
    %v1158 = vmul.f32 %v1149, %v967
    %v1159 = vmul.f32 %v1149, %v1156
    %1161 = vrot.lane.b32.xlu0 %v1159, 64
    %v1162 = vpop.permute.xlu0 %1161
    %v1164 = vadd.f32 %v1158, %v1162
    %v1165 = vmul.f32 %v1153, %v974
    %v1166 = vmul.f32 %v1153, %v1157
    %1168 = vrot.lane.b32.xlu0 %v1166, 64
    %v1169 = vpop.permute.xlu0 %1168
    %v1171 = vadd.f32 %v1165, %v1169
    %v1172 = vtanh.pop %v1164
    %v1173 = vmul.f32 %v1151, %v1172
    %v1174 = vtanh.pop %v1171
    %v1175 = vmul.f32 %v1155, %v1174
    %1177 = vrot.lane.b32.xlu0 %v1173, 64
    %v1178 = vpop.permute.xlu0 %1177
    %v1180 = vsel %vm587, %v1178, %v1175
    %1181 = vst.msk [vmem:[#allocation2 + $0x18] sm:$0xff] %vm587, %v1178
    %1182 = vst.msk [vmem:[#allocation2 + $0x20] sm:$0xff] %vm590, %v1175
    %1183 = vmatprep.subr.mxu0 %v330
    %1184 = vmatpush1.msra.mxu0 %v329
    %1185 = vmatprep.subr.mxu0 %v334
    %1186 = vmatpush1.msra.mxu0 %v333
    %1187 = vmatprep.subr.mxu0 %v338
    %1188 = vmatpush1.msra.mxu0 %v337
    %1189 = vmatprep.subr.mxu0 %v342
    %1190 = vmatpush1.msra.mxu0 %v341
    %1191 = vmatprep.subr.mxu0 %v346
    %1192 = vmatpush1.msra.mxu0 %v345
    %1193 = vmatprep.subr.mxu0 %v350
    %1194 = vmatpush1.msra.mxu0 %v349
    %1195 = vmatprep.subr.mxu0 %v354
    %1196 = vmatpush1.msra.mxu0 %v353
    %1197 = vmatprep.subr.mxu0 %v358
    %1198 = vmatpush1.msra.mxu0 %v357
    %1199 = vmatprep.subr.mxu0 %v362
    %1200 = vmatpush1.msra.mxu0 %v361
    %1201 = vmatprep.subr.mxu0 %v366
    %1202 = vmatpush1.msra.mxu0 %v365
    %1203 = vmatprep.subr.mxu0 %v370
    %1204 = vmatpush1.msra.mxu0 %v369
    %1205 = vmatprep.subr.mxu0 %v374
    %1206 = vmatpush1.msra.mxu0 %v373
    %1207 = vmatprep.subr.mxu0 %v378
    %1208 = vmatpush1.msra.mxu0 %v377
    %1209 = vmatprep.subr.mxu0 %v382
    %1210 = vmatpush1.msra.mxu0 %v381
    %1211 = vmatprep.subr.mxu0 %v386
    %1212 = vmatpush1.msra.mxu0 %v385
    %1213 = vmatprep.subr.mxu0 %v390
    %1214 = vmatpush1.msra.mxu0 %v389
    %1215 = vmatprep.subr.mxu0 0.0
    %1216 = vmatpush1.msra.mxu0 0.0
    %1217 = vmatprep.subr.mxu0 0.0
    %1218 = vmatpush1.msra.mxu0 0.0
    %1219 = vmatprep.subr.mxu0 0.0
    %1220 = vmatpush1.msra.mxu0 0.0
    %1221 = vmatprep.subr.mxu0 0.0
    %1222 = vmatpush1.msra.mxu0 0.0
    %1223 = vmatprep.subr.mxu0 0.0
    %1224 = vmatpush1.msra.mxu0 0.0
    %1225 = vmatprep.subr.mxu0 0.0
    %1226 = vmatpush1.msra.mxu0 0.0
    %1227 = vmatprep.subr.mxu0 0.0
    %1228 = vmatpush1.msra.mxu0 0.0
    %1229 = vmatprep.subr.mxu0 0.0
    %1230 = vmatpush1.msra.mxu0 0.0
    %1231 = vmatprep.subr.mxu0 0.0
    %1232 = vmatpush1.msra.mxu0 0.0
    %1233 = vmatprep.subr.mxu0 0.0
    %1234 = vmatpush1.msra.mxu0 0.0
    %1235 = vmatprep.subr.mxu0 0.0
    %1236 = vmatpush1.msra.mxu0 0.0
    %1237 = vmatprep.subr.mxu0 0.0
    %1238 = vmatpush1.msra.mxu0 0.0
    %1239 = vmatprep.subr.mxu0 0.0
    %1240 = vmatpush1.msra.mxu0 0.0
    %1241 = vmatprep.subr.mxu0 0.0
    %1242 = vmatpush1.msra.mxu0 0.0
    %1243 = vmatprep.subr.mxu0 0.0
    %1244 = vmatpush1.msra.mxu0 0.0
    %1245 = vmatprep.subr.mxu0 0.0
    %1246 = vmatpush1.msra.mxu0 0.0
    %1247 = vmatprep.mubr.f32.mxu0 0.0
    %1248 = vmatmul.mubr.f32.gmra.mrb[0].mxu0 %v1180
    %v1249 = vpop.f32.mrb[0].mxu0
    %v1250 = vadd.f32 0.0, %v1249
    %v1251 = vpop.f32.mrb[0].mxu0
    %v1252 = vadd.f32 0.0, %v1251
    %1253 = vdwg.mxu0
    %1254 = vmatprep.subr.mxu0 %v332
    %1255 = vmatpush1.msra.mxu0 %v331
    %1256 = vmatprep.subr.mxu0 %v336
    %1257 = vmatpush1.msra.mxu0 %v335
    %1258 = vmatprep.subr.mxu0 %v340
    %1259 = vmatpush1.msra.mxu0 %v339
    %1260 = vmatprep.subr.mxu0 %v344
    %1261 = vmatpush1.msra.mxu0 %v343
    %1262 = vmatprep.subr.mxu0 %v348
    %1263 = vmatpush1.msra.mxu0 %v347
    %1264 = vmatprep.subr.mxu0 %v352
    %1265 = vmatpush1.msra.mxu0 %v351
    %1266 = vmatprep.subr.mxu0 %v356
    %1267 = vmatpush1.msra.mxu0 %v355
    %1268 = vmatprep.subr.mxu0 %v360
    %1269 = vmatpush1.msra.mxu0 %v359
    %1270 = vmatprep.subr.mxu0 %v364
    %1271 = vmatpush1.msra.mxu0 %v363
    %1272 = vmatprep.subr.mxu0 %v368
    %1273 = vmatpush1.msra.mxu0 %v367
    %1274 = vmatprep.subr.mxu0 %v372
    %1275 = vmatpush1.msra.mxu0 %v371
    %1276 = vmatprep.subr.mxu0 %v376
    %1277 = vmatpush1.msra.mxu0 %v375
    %1278 = vmatprep.subr.mxu0 %v380
    %1279 = vmatpush1.msra.mxu0 %v379
    %1280 = vmatprep.subr.mxu0 %v384
    %1281 = vmatpush1.msra.mxu0 %v383
    %1282 = vmatprep.subr.mxu0 %v388
    %1283 = vmatpush1.msra.mxu0 %v387
    %1284 = vmatprep.subr.mxu0 %v392
    %1285 = vmatpush1.msra.mxu0 %v391
    %1286 = vmatprep.subr.mxu0 0.0
    %1287 = vmatpush1.msra.mxu0 0.0
    %1288 = vmatprep.subr.mxu0 0.0
    %1289 = vmatpush1.msra.mxu0 0.0
    %1290 = vmatprep.subr.mxu0 0.0
    %1291 = vmatpush1.msra.mxu0 0.0
    %1292 = vmatprep.subr.mxu0 0.0
    %1293 = vmatpush1.msra.mxu0 0.0
    %1294 = vmatprep.subr.mxu0 0.0
    %1295 = vmatpush1.msra.mxu0 0.0
    %1296 = vmatprep.subr.mxu0 0.0
    %1297 = vmatpush1.msra.mxu0 0.0
    %1298 = vmatprep.subr.mxu0 0.0
    %1299 = vmatpush1.msra.mxu0 0.0
    %1300 = vmatprep.subr.mxu0 0.0
    %1301 = vmatpush1.msra.mxu0 0.0
    %1302 = vmatprep.subr.mxu0 0.0
    %1303 = vmatpush1.msra.mxu0 0.0
    %1304 = vmatprep.subr.mxu0 0.0
    %1305 = vmatpush1.msra.mxu0 0.0
    %1306 = vmatprep.subr.mxu0 0.0
    %1307 = vmatpush1.msra.mxu0 0.0
    %1308 = vmatprep.subr.mxu0 0.0
    %1309 = vmatpush1.msra.mxu0 0.0
    %1310 = vmatprep.subr.mxu0 0.0
    %1311 = vmatpush1.msra.mxu0 0.0
    %1312 = vmatprep.subr.mxu0 0.0
    %1313 = vmatpush1.msra.mxu0 0.0
    %1314 = vmatprep.subr.mxu0 0.0
    %1315 = vmatpush1.msra.mxu0 0.0
    %1316 = vmatprep.subr.mxu0 0.0
    %1317 = vmatpush1.msra.mxu0 0.0
    %1318 = vmatprep.mubr.f32.mxu0 0.0
    %1319 = vmatmul.mubr.f32.gmra.mrb[0].mxu0 %v1180
    %v1320 = vpop.f32.mrb[0].mxu0
    %v1321 = vadd.f32 0.0, %v1320
    %v1322 = vpop.f32.mrb[0].mxu0
    %v1323 = vadd.f32 0.0, %v1322
    %1324 = vdwg.mxu0
    %v1325 = vadd.f32 %v194, %v1250
    %v1326 = vadd.f32 %v196, %v1252
    %v1327 = vadd.f32 %v301, %v1321
    %v1328 = vadd.f32 %v303, %v1323
    %v1329 = vxor.u32 %v1325, 2147483648
    %v1330 = vxor.u32 %v1326, 2147483648
    %v1331 = vxor.u32 %v1327, 2147483648
    %v1332 = vxor.u32 %v1328, 2147483648
    %v1333 = vmul.f32 %v1329, 1.442695
    %v1334 = vpow.pop %v1333
    %v1335 = vmul.f32 %v1330, 1.442695
    %v1336 = vpow.pop %v1335
    %v1337 = vmul.f32 %v1331, 1.442695
    %v1338 = vpow.pop %v1337
    %v1339 = vmul.f32 %v1332, 1.442695
    %v1340 = vpow.pop %v1339
    %v1341 = vadd.f32 %v1334, 1.0
    %v1342 = vadd.f32 %v1336, 1.0
    %v1343 = vadd.f32 %v1338, 1.0
    %v1344 = vadd.f32 %v1340, 1.0
    %v1345 = vrcp.pop %v1341
    %v1346 = vmul.f32 1.0, %v1345
    %v1347 = vrcp.pop %v1342
    %v1348 = vmul.f32 1.0, %v1347
    %v1349 = vrcp.pop %v1343
    %v1350 = vmul.f32 1.0, %v1349
    %v1351 = vrcp.pop %v1344
    %v1352 = vmul.f32 1.0, %v1351
    %v1353 = vtanh.pop %v1326
    %v1354 = vtanh.pop %v1328
    %v1355 = vmul.f32 %v1346, %v1164
    %v1356 = vmul.f32 %v1346, %v1353
    %1358 = vrot.lane.b32.xlu0 %v1356, 64
    %v1359 = vpop.permute.xlu0 %1358
    %v1361 = vadd.f32 %v1355, %v1359
    %v1362 = vmul.f32 %v1350, %v1171
    %v1363 = vmul.f32 %v1350, %v1354
    %1365 = vrot.lane.b32.xlu0 %v1363, 64
    %v1366 = vpop.permute.xlu0 %1365
    %v1368 = vadd.f32 %v1362, %v1366
    %v1369 = vtanh.pop %v1361
    %v1370 = vmul.f32 %v1348, %v1369
    %v1371 = vtanh.pop %v1368
    %v1372 = vmul.f32 %v1352, %v1371
    %1374 = vrot.lane.b32.xlu0 %v1370, 64
    %v1375 = vpop.permute.xlu0 %1374
    %v1377 = vsel %vm587, %v1375, %v1372
    %1378 = vst.msk [vmem:[#allocation2 + $0x20] sm:$0xff] %vm587, %v1375
    %1379 = vst.msk [vmem:[#allocation2 + $0x18] sm:$0xff] %vm590, %v1372
    %1380 = vmatprep.subr.mxu0 %v330
    %1381 = vmatpush1.msra.mxu0 %v329
    %1382 = vmatprep.subr.mxu0 %v334
    %1383 = vmatpush1.msra.mxu0 %v333
    %1384 = vmatprep.subr.mxu0 %v338
    %1385 = vmatpush1.msra.mxu0 %v337
    %1386 = vmatprep.subr.mxu0 %v342
    %1387 = vmatpush1.msra.mxu0 %v341
    %1388 = vmatprep.subr.mxu0 %v346
    %1389 = vmatpush1.msra.mxu0 %v345
    %1390 = vmatprep.subr.mxu0 %v350
    %1391 = vmatpush1.msra.mxu0 %v349
    %1392 = vmatprep.subr.mxu0 %v354
    %1393 = vmatpush1.msra.mxu0 %v353
    %1394 = vmatprep.subr.mxu0 %v358
    %1395 = vmatpush1.msra.mxu0 %v357
    %1396 = vmatprep.subr.mxu0 %v362
    %1397 = vmatpush1.msra.mxu0 %v361
    %1398 = vmatprep.subr.mxu0 %v366
    %1399 = vmatpush1.msra.mxu0 %v365
    %1400 = vmatprep.subr.mxu0 %v370
    %1401 = vmatpush1.msra.mxu0 %v369
    %1402 = vmatprep.subr.mxu0 %v374
    %1403 = vmatpush1.msra.mxu0 %v373
    %1404 = vmatprep.subr.mxu0 %v378
    %1405 = vmatpush1.msra.mxu0 %v377
    %1406 = vmatprep.subr.mxu0 %v382
    %1407 = vmatpush1.msra.mxu0 %v381
    %1408 = vmatprep.subr.mxu0 %v386
    %1409 = vmatpush1.msra.mxu0 %v385
    %1410 = vmatprep.subr.mxu0 %v390
    %1411 = vmatpush1.msra.mxu0 %v389
    %1412 = vmatprep.subr.mxu0 0.0
    %1413 = vmatpush1.msra.mxu0 0.0
    %1414 = vmatprep.subr.mxu0 0.0
    %1415 = vmatpush1.msra.mxu0 0.0
    %1416 = vmatprep.subr.mxu0 0.0
    %1417 = vmatpush1.msra.mxu0 0.0
    %1418 = vmatprep.subr.mxu0 0.0
    %1419 = vmatpush1.msra.mxu0 0.0
    %1420 = vmatprep.subr.mxu0 0.0
    %1421 = vmatpush1.msra.mxu0 0.0
    %1422 = vmatprep.subr.mxu0 0.0
    %1423 = vmatpush1.msra.mxu0 0.0
    %1424 = vmatprep.subr.mxu0 0.0
    %1425 = vmatpush1.msra.mxu0 0.0
    %1426 = vmatprep.subr.mxu0 0.0
    %1427 = vmatpush1.msra.mxu0 0.0
    %1428 = vmatprep.subr.mxu0 0.0
    %1429 = vmatpush1.msra.mxu0 0.0
    %1430 = vmatprep.subr.mxu0 0.0
    %1431 = vmatpush1.msra.mxu0 0.0
    %1432 = vmatprep.subr.mxu0 0.0
    %1433 = vmatpush1.msra.mxu0 0.0
    %1434 = vmatprep.subr.mxu0 0.0
    %1435 = vmatpush1.msra.mxu0 0.0
    %1436 = vmatprep.subr.mxu0 0.0
    %1437 = vmatpush1.msra.mxu0 0.0
    %1438 = vmatprep.subr.mxu0 0.0
    %1439 = vmatpush1.msra.mxu0 0.0
    %1440 = vmatprep.subr.mxu0 0.0
    %1441 = vmatpush1.msra.mxu0 0.0
    %1442 = vmatprep.subr.mxu0 0.0
    %1443 = vmatpush1.msra.mxu0 0.0
    %1444 = vmatprep.mubr.f32.mxu0 0.0
    %1445 = vmatmul.mubr.f32.gmra.mrb[0].mxu0 %v1377
    %v1446 = vpop.f32.mrb[0].mxu0
    %v1447 = vadd.f32 0.0, %v1446
    %v1448 = vpop.f32.mrb[0].mxu0
    %v1449 = vadd.f32 0.0, %v1448
    %1450 = vdwg.mxu0
    %1451 = vmatprep.subr.mxu0 %v332
    %1452 = vmatpush1.msra.mxu0 %v331
    %1453 = vmatprep.subr.mxu0 %v336
    %1454 = vmatpush1.msra.mxu0 %v335
    %1455 = vmatprep.subr.mxu0 %v340
    %1456 = vmatpush1.msra.mxu0 %v339
    %1457 = vmatprep.subr.mxu0 %v344
    %1458 = vmatpush1.msra.mxu0 %v343
    %1459 = vmatprep.subr.mxu0 %v348
    %1460 = vmatpush1.msra.mxu0 %v347
    %1461 = vmatprep.subr.mxu0 %v352
    %1462 = vmatpush1.msra.mxu0 %v351
    %1463 = vmatprep.subr.mxu0 %v356
    %1464 = vmatpush1.msra.mxu0 %v355
    %1465 = vmatprep.subr.mxu0 %v360
    %1466 = vmatpush1.msra.mxu0 %v359
    %1467 = vmatprep.subr.mxu0 %v364
    %1468 = vmatpush1.msra.mxu0 %v363
    %1469 = vmatprep.subr.mxu0 %v368
    %1470 = vmatpush1.msra.mxu0 %v367
    %1471 = vmatprep.subr.mxu0 %v372
    %1472 = vmatpush1.msra.mxu0 %v371
    %1473 = vmatprep.subr.mxu0 %v376
    %1474 = vmatpush1.msra.mxu0 %v375
    %1475 = vmatprep.subr.mxu0 %v380
    %1476 = vmatpush1.msra.mxu0 %v379
    %1477 = vmatprep.subr.mxu0 %v384
    %1478 = vmatpush1.msra.mxu0 %v383
    %1479 = vmatprep.subr.mxu0 %v388
    %1480 = vmatpush1.msra.mxu0 %v387
    %1481 = vmatprep.subr.mxu0 %v392
    %1482 = vmatpush1.msra.mxu0 %v391
    %1483 = vmatprep.subr.mxu0 0.0
    %1484 = vmatpush1.msra.mxu0 0.0
    %1485 = vmatprep.subr.mxu0 0.0
    %1486 = vmatpush1.msra.mxu0 0.0
    %1487 = vmatprep.subr.mxu0 0.0
    %1488 = vmatpush1.msra.mxu0 0.0
    %1489 = vmatprep.subr.mxu0 0.0
    %1490 = vmatpush1.msra.mxu0 0.0
    %1491 = vmatprep.subr.mxu0 0.0
    %1492 = vmatpush1.msra.mxu0 0.0
    %1493 = vmatprep.subr.mxu0 0.0
    %1494 = vmatpush1.msra.mxu0 0.0
    %1495 = vmatprep.subr.mxu0 0.0
    %1496 = vmatpush1.msra.mxu0 0.0
    %1497 = vmatprep.subr.mxu0 0.0
    %1498 = vmatpush1.msra.mxu0 0.0
    %1499 = vmatprep.subr.mxu0 0.0
    %1500 = vmatpush1.msra.mxu0 0.0
    %1501 = vmatprep.subr.mxu0 0.0
    %1502 = vmatpush1.msra.mxu0 0.0
    %1503 = vmatprep.subr.mxu0 0.0
    %1504 = vmatpush1.msra.mxu0 0.0
    %1505 = vmatprep.subr.mxu0 0.0
    %1506 = vmatpush1.msra.mxu0 0.0
    %1507 = vmatprep.subr.mxu0 0.0
    %1508 = vmatpush1.msra.mxu0 0.0
    %1509 = vmatprep.subr.mxu0 0.0
    %1510 = vmatpush1.msra.mxu0 0.0
    %1511 = vmatprep.subr.mxu0 0.0
    %1512 = vmatpush1.msra.mxu0 0.0
    %1513 = vmatprep.subr.mxu0 0.0
    %1514 = vmatpush1.msra.mxu0 0.0
    %1515 = vmatprep.mubr.f32.mxu0 0.0
    %1516 = vmatmul.mubr.f32.gmra.mrb[0].mxu0 %v1377
    %v1517 = vpop.f32.mrb[0].mxu0
    %v1518 = vadd.f32 0.0, %v1517
    %v1519 = vpop.f32.mrb[0].mxu0
    %v1520 = vadd.f32 0.0, %v1519
    %1521 = vdwg.mxu0
    %v1522 = vadd.f32 %v200, %v1447
    %v1523 = vadd.f32 %v202, %v1449
    %v1524 = vadd.f32 %v295, %v1518
    %v1525 = vadd.f32 %v297, %v1520
    %v1526 = vxor.u32 %v1522, 2147483648
    %v1527 = vxor.u32 %v1523, 2147483648
    %v1528 = vxor.u32 %v1524, 2147483648
    %v1529 = vxor.u32 %v1525, 2147483648
    %v1530 = vmul.f32 %v1526, 1.442695
    %v1531 = vpow.pop %v1530
    %v1532 = vmul.f32 %v1527, 1.442695
    %v1533 = vpow.pop %v1532
    %v1534 = vmul.f32 %v1528, 1.442695
    %v1535 = vpow.pop %v1534
    %v1536 = vmul.f32 %v1529, 1.442695
    %v1537 = vpow.pop %v1536
    %v1538 = vadd.f32 %v1531, 1.0
    %v1539 = vadd.f32 %v1533, 1.0
    %v1540 = vadd.f32 %v1535, 1.0
    %v1541 = vadd.f32 %v1537, 1.0
    %v1542 = vrcp.pop %v1538
    %v1543 = vmul.f32 1.0, %v1542
    %v1544 = vrcp.pop %v1539
    %v1545 = vmul.f32 1.0, %v1544
    %v1546 = vrcp.pop %v1540
    %v1547 = vmul.f32 1.0, %v1546
    %v1548 = vrcp.pop %v1541
    %v1549 = vmul.f32 1.0, %v1548
    %v1550 = vtanh.pop %v1523
    %v1551 = vtanh.pop %v1525
    %v1552 = vmul.f32 %v1543, %v1361
    %v1553 = vmul.f32 %v1543, %v1550
    %1555 = vrot.lane.b32.xlu0 %v1553, 64
    %v1556 = vpop.permute.xlu0 %1555
    %v1558 = vadd.f32 %v1552, %v1556
    %v1559 = vmul.f32 %v1547, %v1368
    %v1560 = vmul.f32 %v1547, %v1551
    %1562 = vrot.lane.b32.xlu0 %v1560, 64
    %v1563 = vpop.permute.xlu0 %1562
    %v1565 = vadd.f32 %v1559, %v1563
    %v1566 = vtanh.pop %v1558
    %v1567 = vmul.f32 %v1545, %v1566
    %v1568 = vtanh.pop %v1565
    %v1569 = vmul.f32 %v1549, %v1568
    %1571 = vrot.lane.b32.xlu0 %v1567, 64
    %v1572 = vpop.permute.xlu0 %1571
    %v1574 = vsel %vm587, %v1572, %v1569
    %1575 = vst.msk [vmem:[#allocation2 + $0x28] sm:$0xff] %vm587, %v1572
    %1576 = vst.msk [vmem:[#allocation2 + $0x10] sm:$0xff] %vm590, %v1569
    %1577 = vmatprep.subr.mxu0 %v330
    %1578 = vmatpush1.msra.mxu0 %v329
    %1579 = vmatprep.subr.mxu0 %v334
    %1580 = vmatpush1.msra.mxu0 %v333
    %1581 = vmatprep.subr.mxu0 %v338
    %1582 = vmatpush1.msra.mxu0 %v337
    %1583 = vmatprep.subr.mxu0 %v342
    %1584 = vmatpush1.msra.mxu0 %v341
    %1585 = vmatprep.subr.mxu0 %v346
    %1586 = vmatpush1.msra.mxu0 %v345
    %1587 = vmatprep.subr.mxu0 %v350
    %1588 = vmatpush1.msra.mxu0 %v349
    %1589 = vmatprep.subr.mxu0 %v354
    %1590 = vmatpush1.msra.mxu0 %v353
    %1591 = vmatprep.subr.mxu0 %v358
    %1592 = vmatpush1.msra.mxu0 %v357
    %1593 = vmatprep.subr.mxu0 %v362
    %1594 = vmatpush1.msra.mxu0 %v361
    %1595 = vmatprep.subr.mxu0 %v366
    %1596 = vmatpush1.msra.mxu0 %v365
    %1597 = vmatprep.subr.mxu0 %v370
    %1598 = vmatpush1.msra.mxu0 %v369
    %1599 = vmatprep.subr.mxu0 %v374
    %1600 = vmatpush1.msra.mxu0 %v373
    %1601 = vmatprep.subr.mxu0 %v378
    %1602 = vmatpush1.msra.mxu0 %v377
    %1603 = vmatprep.subr.mxu0 %v382
    %1604 = vmatpush1.msra.mxu0 %v381
    %1605 = vmatprep.subr.mxu0 %v386
    %1606 = vmatpush1.msra.mxu0 %v385
    %1607 = vmatprep.subr.mxu0 %v390
    %1608 = vmatpush1.msra.mxu0 %v389
    %1609 = vmatprep.subr.mxu0 0.0
    %1610 = vmatpush1.msra.mxu0 0.0
    %1611 = vmatprep.subr.mxu0 0.0
    %1612 = vmatpush1.msra.mxu0 0.0
    %1613 = vmatprep.subr.mxu0 0.0
    %1614 = vmatpush1.msra.mxu0 0.0
    %1615 = vmatprep.subr.mxu0 0.0
    %1616 = vmatpush1.msra.mxu0 0.0
    %1617 = vmatprep.subr.mxu0 0.0
    %1618 = vmatpush1.msra.mxu0 0.0
    %1619 = vmatprep.subr.mxu0 0.0
    %1620 = vmatpush1.msra.mxu0 0.0
    %1621 = vmatprep.subr.mxu0 0.0
    %1622 = vmatpush1.msra.mxu0 0.0
    %1623 = vmatprep.subr.mxu0 0.0
    %1624 = vmatpush1.msra.mxu0 0.0
    %1625 = vmatprep.subr.mxu0 0.0
    %1626 = vmatpush1.msra.mxu0 0.0
    %1627 = vmatprep.subr.mxu0 0.0
    %1628 = vmatpush1.msra.mxu0 0.0
    %1629 = vmatprep.subr.mxu0 0.0
    %1630 = vmatpush1.msra.mxu0 0.0
    %1631 = vmatprep.subr.mxu0 0.0
    %1632 = vmatpush1.msra.mxu0 0.0
    %1633 = vmatprep.subr.mxu0 0.0
    %1634 = vmatpush1.msra.mxu0 0.0
    %1635 = vmatprep.subr.mxu0 0.0
    %1636 = vmatpush1.msra.mxu0 0.0
    %1637 = vmatprep.subr.mxu0 0.0
    %1638 = vmatpush1.msra.mxu0 0.0
    %1639 = vmatprep.subr.mxu0 0.0
    %1640 = vmatpush1.msra.mxu0 0.0
    %1641 = vmatprep.mubr.f32.mxu0 0.0
    %1642 = vmatmul.mubr.f32.gmra.mrb[0].mxu0 %v1574
    %v1643 = vpop.f32.mrb[0].mxu0
    %v1644 = vadd.f32 0.0, %v1643
    %v1645 = vpop.f32.mrb[0].mxu0
    %v1646 = vadd.f32 0.0, %v1645
    %1647 = vdwg.mxu0
    %1648 = vmatprep.subr.mxu0 %v332
    %1649 = vmatpush1.msra.mxu0 %v331
    %1650 = vmatprep.subr.mxu0 %v336
    %1651 = vmatpush1.msra.mxu0 %v335
    %1652 = vmatprep.subr.mxu0 %v340
    %1653 = vmatpush1.msra.mxu0 %v339
    %1654 = vmatprep.subr.mxu0 %v344
    %1655 = vmatpush1.msra.mxu0 %v343
    %1656 = vmatprep.subr.mxu0 %v348
    %1657 = vmatpush1.msra.mxu0 %v347
    %1658 = vmatprep.subr.mxu0 %v352
    %1659 = vmatpush1.msra.mxu0 %v351
    %1660 = vmatprep.subr.mxu0 %v356
    %1661 = vmatpush1.msra.mxu0 %v355
    %1662 = vmatprep.subr.mxu0 %v360
    %1663 = vmatpush1.msra.mxu0 %v359
    %1664 = vmatprep.subr.mxu0 %v364
    %1665 = vmatpush1.msra.mxu0 %v363
    %1666 = vmatprep.subr.mxu0 %v368
    %1667 = vmatpush1.msra.mxu0 %v367
    %1668 = vmatprep.subr.mxu0 %v372
    %1669 = vmatpush1.msra.mxu0 %v371
    %1670 = vmatprep.subr.mxu0 %v376
    %1671 = vmatpush1.msra.mxu0 %v375
    %1672 = vmatprep.subr.mxu0 %v380
    %1673 = vmatpush1.msra.mxu0 %v379
    %1674 = vmatprep.subr.mxu0 %v384
    %1675 = vmatpush1.msra.mxu0 %v383
    %1676 = vmatprep.subr.mxu0 %v388
    %1677 = vmatpush1.msra.mxu0 %v387
    %1678 = vmatprep.subr.mxu0 %v392
    %1679 = vmatpush1.msra.mxu0 %v391
    %1680 = vmatprep.subr.mxu0 0.0
    %1681 = vmatpush1.msra.mxu0 0.0
    %1682 = vmatprep.subr.mxu0 0.0
    %1683 = vmatpush1.msra.mxu0 0.0
    %1684 = vmatprep.subr.mxu0 0.0
    %1685 = vmatpush1.msra.mxu0 0.0
    %1686 = vmatprep.subr.mxu0 0.0
    %1687 = vmatpush1.msra.mxu0 0.0
    %1688 = vmatprep.subr.mxu0 0.0
    %1689 = vmatpush1.msra.mxu0 0.0
    %1690 = vmatprep.subr.mxu0 0.0
    %1691 = vmatpush1.msra.mxu0 0.0
    %1692 = vmatprep.subr.mxu0 0.0
    %1693 = vmatpush1.msra.mxu0 0.0
    %1694 = vmatprep.subr.mxu0 0.0
    %1695 = vmatpush1.msra.mxu0 0.0
    %1696 = vmatprep.subr.mxu0 0.0
    %1697 = vmatpush1.msra.mxu0 0.0
    %1698 = vmatprep.subr.mxu0 0.0
    %1699 = vmatpush1.msra.mxu0 0.0
    %1700 = vmatprep.subr.mxu0 0.0
    %1701 = vmatpush1.msra.mxu0 0.0
    %1702 = vmatprep.subr.mxu0 0.0
    %1703 = vmatpush1.msra.mxu0 0.0
    %1704 = vmatprep.subr.mxu0 0.0
    %1705 = vmatpush1.msra.mxu0 0.0
    %1706 = vmatprep.subr.mxu0 0.0
    %1707 = vmatpush1.msra.mxu0 0.0
    %1708 = vmatprep.subr.mxu0 0.0
    %1709 = vmatpush1.msra.mxu0 0.0
    %1710 = vmatprep.subr.mxu0 0.0
    %1711 = vmatpush1.msra.mxu0 0.0
    %1712 = vmatprep.mubr.f32.mxu0 0.0
    %1713 = vmatmul.mubr.f32.gmra.mrb[0].mxu0 %v1574
    %v1714 = vpop.f32.mrb[0].mxu0
    %v1715 = vadd.f32 0.0, %v1714
    %v1716 = vpop.f32.mrb[0].mxu0
    %v1717 = vadd.f32 0.0, %v1716
    %1718 = vdwg.mxu0
    %v1719 = vadd.f32 %v206, %v1644
    %v1720 = vadd.f32 %v208, %v1646
    %v1721 = vadd.f32 %v289, %v1715
    %v1722 = vadd.f32 %v291, %v1717
    %v1723 = vxor.u32 %v1719, 2147483648
    %v1724 = vxor.u32 %v1720, 2147483648
    %v1725 = vxor.u32 %v1721, 2147483648
    %v1726 = vxor.u32 %v1722, 2147483648
    %v1727 = vmul.f32 %v1723, 1.442695
    %v1728 = vpow.pop %v1727
    %v1729 = vmul.f32 %v1724, 1.442695
    %v1730 = vpow.pop %v1729
    %v1731 = vmul.f32 %v1725, 1.442695
    %v1732 = vpow.pop %v1731
    %v1733 = vmul.f32 %v1726, 1.442695
    %v1734 = vpow.pop %v1733
    %v1735 = vadd.f32 %v1728, 1.0
    %v1736 = vadd.f32 %v1730, 1.0
    %v1737 = vadd.f32 %v1732, 1.0
    %v1738 = vadd.f32 %v1734, 1.0
    %v1739 = vrcp.pop %v1735
    %v1740 = vmul.f32 1.0, %v1739
    %v1741 = vrcp.pop %v1736
    %v1742 = vmul.f32 1.0, %v1741
    %v1743 = vrcp.pop %v1737
    %v1744 = vmul.f32 1.0, %v1743
    %v1745 = vrcp.pop %v1738
    %v1746 = vmul.f32 1.0, %v1745
    %v1747 = vtanh.pop %v1720
    %v1748 = vtanh.pop %v1722
    %v1749 = vmul.f32 %v1740, %v1558
    %v1750 = vmul.f32 %v1740, %v1747
    %1752 = vrot.lane.b32.xlu0 %v1750, 64
    %v1753 = vpop.permute.xlu0 %1752
    %v1755 = vadd.f32 %v1749, %v1753
    %v1756 = vmul.f32 %v1744, %v1565
    %v1757 = vmul.f32 %v1744, %v1748
    %1759 = vrot.lane.b32.xlu0 %v1757, 64
    %v1760 = vpop.permute.xlu0 %1759
    %v1762 = vadd.f32 %v1756, %v1760
    %v1763 = vtanh.pop %v1755
    %v1764 = vmul.f32 %v1742, %v1763
    %v1765 = vtanh.pop %v1762
    %v1766 = vmul.f32 %v1746, %v1765
    %1768 = vrot.lane.b32.xlu0 %v1764, 64
    %v1769 = vpop.permute.xlu0 %1768
    %v1771 = vsel %vm587, %v1769, %v1766
    %1772 = vst.msk [vmem:[#allocation2 + $0x30] sm:$0xff] %vm587, %v1769
    %1773 = vst.msk [vmem:[#allocation2 + $0x8] sm:$0xff] %vm590, %v1766
    %1774 = vmatprep.subr.mxu0 %v330
    %1775 = vmatpush1.msra.mxu0 %v329
    %1776 = vmatprep.subr.mxu0 %v334
    %1777 = vmatpush1.msra.mxu0 %v333
    %1778 = vmatprep.subr.mxu0 %v338
    %1779 = vmatpush1.msra.mxu0 %v337
    %1780 = vmatprep.subr.mxu0 %v342
    %1781 = vmatpush1.msra.mxu0 %v341
    %1782 = vmatprep.subr.mxu0 %v346
    %1783 = vmatpush1.msra.mxu0 %v345
    %1784 = vmatprep.subr.mxu0 %v350
    %1785 = vmatpush1.msra.mxu0 %v349
    %1786 = vmatprep.subr.mxu0 %v354
    %1787 = vmatpush1.msra.mxu0 %v353
    %1788 = vmatprep.subr.mxu0 %v358
    %1789 = vmatpush1.msra.mxu0 %v357
    %1790 = vmatprep.subr.mxu0 %v362
    %1791 = vmatpush1.msra.mxu0 %v361
    %1792 = vmatprep.subr.mxu0 %v366
    %1793 = vmatpush1.msra.mxu0 %v365
    %1794 = vmatprep.subr.mxu0 %v370
    %1795 = vmatpush1.msra.mxu0 %v369
    %1796 = vmatprep.subr.mxu0 %v374
    %1797 = vmatpush1.msra.mxu0 %v373
    %1798 = vmatprep.subr.mxu0 %v378
    %1799 = vmatpush1.msra.mxu0 %v377
    %1800 = vmatprep.subr.mxu0 %v382
    %1801 = vmatpush1.msra.mxu0 %v381
    %1802 = vmatprep.subr.mxu0 %v386
    %1803 = vmatpush1.msra.mxu0 %v385
    %1804 = vmatprep.subr.mxu0 %v390
    %1805 = vmatpush1.msra.mxu0 %v389
    %1806 = vmatprep.subr.mxu0 0.0
    %1807 = vmatpush1.msra.mxu0 0.0
    %1808 = vmatprep.subr.mxu0 0.0
    %1809 = vmatpush1.msra.mxu0 0.0
    %1810 = vmatprep.subr.mxu0 0.0
    %1811 = vmatpush1.msra.mxu0 0.0
    %1812 = vmatprep.subr.mxu0 0.0
    %1813 = vmatpush1.msra.mxu0 0.0
    %1814 = vmatprep.subr.mxu0 0.0
    %1815 = vmatpush1.msra.mxu0 0.0
    %1816 = vmatprep.subr.mxu0 0.0
    %1817 = vmatpush1.msra.mxu0 0.0
    %1818 = vmatprep.subr.mxu0 0.0
    %1819 = vmatpush1.msra.mxu0 0.0
    %1820 = vmatprep.subr.mxu0 0.0
    %1821 = vmatpush1.msra.mxu0 0.0
    %1822 = vmatprep.subr.mxu0 0.0
    %1823 = vmatpush1.msra.mxu0 0.0
    %1824 = vmatprep.subr.mxu0 0.0
    %1825 = vmatpush1.msra.mxu0 0.0
    %1826 = vmatprep.subr.mxu0 0.0
    %1827 = vmatpush1.msra.mxu0 0.0
    %1828 = vmatprep.subr.mxu0 0.0
    %1829 = vmatpush1.msra.mxu0 0.0
    %1830 = vmatprep.subr.mxu0 0.0
    %1831 = vmatpush1.msra.mxu0 0.0
    %1832 = vmatprep.subr.mxu0 0.0
    %1833 = vmatpush1.msra.mxu0 0.0
    %1834 = vmatprep.subr.mxu0 0.0
    %1835 = vmatpush1.msra.mxu0 0.0
    %1836 = vmatprep.subr.mxu0 0.0
    %1837 = vmatpush1.msra.mxu0 0.0
    %1838 = vmatprep.mubr.f32.mxu0 0.0
    %1839 = vmatmul.mubr.f32.gmra.mrb[0].mxu0 %v1771
    %v1840 = vpop.f32.mrb[0].mxu0
    %v1841 = vadd.f32 0.0, %v1840
    %v1842 = vpop.f32.mrb[0].mxu0
    %v1843 = vadd.f32 0.0, %v1842
    %1844 = vdwg.mxu0
    %1845 = vmatprep.subr.mxu0 %v332
    %1846 = vmatpush1.msra.mxu0 %v331
    %1847 = vmatprep.subr.mxu0 %v336
    %1848 = vmatpush1.msra.mxu0 %v335
    %1849 = vmatprep.subr.mxu0 %v340
    %1850 = vmatpush1.msra.mxu0 %v339
    %1851 = vmatprep.subr.mxu0 %v344
    %1852 = vmatpush1.msra.mxu0 %v343
    %1853 = vmatprep.subr.mxu0 %v348
    %1854 = vmatpush1.msra.mxu0 %v347
    %1855 = vmatprep.subr.mxu0 %v352
    %1856 = vmatpush1.msra.mxu0 %v351
    %1857 = vmatprep.subr.mxu0 %v356
    %1858 = vmatpush1.msra.mxu0 %v355
    %1859 = vmatprep.subr.mxu0 %v360
    %1860 = vmatpush1.msra.mxu0 %v359
    %1861 = vmatprep.subr.mxu0 %v364
    %1862 = vmatpush1.msra.mxu0 %v363
    %1863 = vmatprep.subr.mxu0 %v368
    %1864 = vmatpush1.msra.mxu0 %v367
    %1865 = vmatprep.subr.mxu0 %v372
    %1866 = vmatpush1.msra.mxu0 %v371
    %1867 = vmatprep.subr.mxu0 %v376
    %1868 = vmatpush1.msra.mxu0 %v375
    %1869 = vmatprep.subr.mxu0 %v380
    %1870 = vmatpush1.msra.mxu0 %v379
    %1871 = vmatprep.subr.mxu0 %v384
    %1872 = vmatpush1.msra.mxu0 %v383
    %1873 = vmatprep.subr.mxu0 %v388
    %1874 = vmatpush1.msra.mxu0 %v387
    %1875 = vmatprep.subr.mxu0 %v392
    %1876 = vmatpush1.msra.mxu0 %v391
    %1877 = vmatprep.subr.mxu0 0.0
    %1878 = vmatpush1.msra.mxu0 0.0
    %1879 = vmatprep.subr.mxu0 0.0
    %1880 = vmatpush1.msra.mxu0 0.0
    %1881 = vmatprep.subr.mxu0 0.0
    %1882 = vmatpush1.msra.mxu0 0.0
    %1883 = vmatprep.subr.mxu0 0.0
    %1884 = vmatpush1.msra.mxu0 0.0
    %1885 = vmatprep.subr.mxu0 0.0
    %1886 = vmatpush1.msra.mxu0 0.0
    %1887 = vmatprep.subr.mxu0 0.0
    %1888 = vmatpush1.msra.mxu0 0.0
    %1889 = vmatprep.subr.mxu0 0.0
    %1890 = vmatpush1.msra.mxu0 0.0
    %1891 = vmatprep.subr.mxu0 0.0
    %1892 = vmatpush1.msra.mxu0 0.0
    %1893 = vmatprep.subr.mxu0 0.0
    %1894 = vmatpush1.msra.mxu0 0.0
    %1895 = vmatprep.subr.mxu0 0.0
    %1896 = vmatpush1.msra.mxu0 0.0
    %1897 = vmatprep.subr.mxu0 0.0
    %1898 = vmatpush1.msra.mxu0 0.0
    %1899 = vmatprep.subr.mxu0 0.0
    %1900 = vmatpush1.msra.mxu0 0.0
    %1901 = vmatprep.subr.mxu0 0.0
    %1902 = vmatpush1.msra.mxu0 0.0
    %1903 = vmatprep.subr.mxu0 0.0
    %1904 = vmatpush1.msra.mxu0 0.0
    %1905 = vmatprep.subr.mxu0 0.0
    %1906 = vmatpush1.msra.mxu0 0.0
    %1907 = vmatprep.subr.mxu0 0.0
    %1908 = vmatpush1.msra.mxu0 0.0
    %1909 = vmatprep.mubr.f32.mxu0 0.0
    %1910 = vmatmul.mubr.f32.gmra.mrb[0].mxu0 %v1771
    %v1911 = vpop.f32.mrb[0].mxu0
    %v1912 = vadd.f32 0.0, %v1911
    %v1913 = vpop.f32.mrb[0].mxu0
    %v1914 = vadd.f32 0.0, %v1913
    %1915 = vdwg.mxu0
    %v1916 = vadd.f32 %v212, %v1841
    %v1917 = vadd.f32 %v214, %v1843
    %v1918 = vadd.f32 %v283, %v1912
    %v1919 = vadd.f32 %v285, %v1914
    %v1920 = vxor.u32 %v1916, 2147483648
    %v1921 = vxor.u32 %v1917, 2147483648
    %v1922 = vxor.u32 %v1918, 2147483648
    %v1923 = vxor.u32 %v1919, 2147483648
    %v1924 = vmul.f32 %v1920, 1.442695
    %v1925 = vpow.pop %v1924
    %v1926 = vmul.f32 %v1921, 1.442695
    %v1927 = vpow.pop %v1926
    %v1928 = vmul.f32 %v1922, 1.442695
    %v1929 = vpow.pop %v1928
    %v1930 = vmul.f32 %v1923, 1.442695
    %v1931 = vpow.pop %v1930
    %v1932 = vadd.f32 %v1925, 1.0
    %v1933 = vadd.f32 %v1927, 1.0
    %v1934 = vadd.f32 %v1929, 1.0
    %v1935 = vadd.f32 %v1931, 1.0
    %v1936 = vrcp.pop %v1932
    %v1937 = vmul.f32 1.0, %v1936
    %v1938 = vrcp.pop %v1933
    %v1939 = vmul.f32 1.0, %v1938
    %v1940 = vrcp.pop %v1934
    %v1941 = vmul.f32 1.0, %v1940
    %v1942 = vrcp.pop %v1935
    %v1943 = vmul.f32 1.0, %v1942
    %v1944 = vtanh.pop %v1917
    %v1945 = vtanh.pop %v1919
    %v1946 = vmul.f32 %v1937, %v1755
    %v1947 = vmul.f32 %v1937, %v1944
    %1949 = vrot.lane.b32.xlu0 %v1947, 64
    %v1950 = vpop.permute.xlu0 %1949
    %v1952 = vadd.f32 %v1946, %v1950
    %v1953 = vmul.f32 %v1941, %v1762
    %v1954 = vmul.f32 %v1941, %v1945
    %1956 = vrot.lane.b32.xlu0 %v1954, 64
    %v1957 = vpop.permute.xlu0 %1956
    %v1959 = vadd.f32 %v1953, %v1957
    %v1960 = vtanh.pop %v1952
    %v1961 = vmul.f32 %v1939, %v1960
    %v1962 = vtanh.pop %v1959
    %v1963 = vmul.f32 %v1943, %v1962
    %1965 = vrot.lane.b32.xlu0 %v1961, 64
    %v1966 = vpop.permute.xlu0 %1965
    %1968 = vst.msk [vmem:[#allocation2 + $0x38] sm:$0xff] %vm587, %v1966
    %1969 = vst.msk [vmem:[#allocation2] sm:$0xff] %vm590, %v1963
    %v1970 = vld [vmem:[#allocation2] sm:$0xff]
    %v1971 = vld [vmem:[#allocation2 + $0x8] sm:$0xff]
    %v1972 = vld [vmem:[#allocation2 + $0x10] sm:$0xff]
    %v1973 = vld [vmem:[#allocation2 + $0x18] sm:$0xff]
    %v1974 = vld [vmem:[#allocation2 + $0x20] sm:$0xff]
    %v1975 = vld [vmem:[#allocation2 + $0x28] sm:$0xff]
    %v1976 = vld [vmem:[#allocation2 + $0x30] sm:$0xff]
    %v1977 = vld [vmem:[#allocation2 + $0x38] sm:$0xff]
    %v1978 = vld [vmem:[#allocation3 + $0x220] sm:$0xff]
    %v1979 = vld [vmem:[#allocation3 + $0x228] sm:$0xff]
    %v1980 = vld [vmem:[#allocation3 + $0x230] sm:$0xff]
    %v1981 = vld [vmem:[#allocation3 + $0x238] sm:$0xff]
    %v1982 = vld [vmem:[#allocation3 + $0x240] sm:$0xff]
    %v1983 = vld [vmem:[#allocation3 + $0x248] sm:$0xff]
    %v1984 = vld [vmem:[#allocation3 + $0x250] sm:$0xff]
    %v1985 = vld [vmem:[#allocation3 + $0x258] sm:$0xff]
    %v1986 = vld [vmem:[#allocation3 + $0x260] sm:$0xff]
    %v1987 = vld [vmem:[#allocation3 + $0x268] sm:$0xff]
    %v1988 = vld [vmem:[#allocation3 + $0x270] sm:$0xff]
    %v1989 = vld [vmem:[#allocation3 + $0x278] sm:$0xff]
    %v1990 = vld [vmem:[#allocation3 + $0x280] sm:$0xff]
    %v1991 = vld [vmem:[#allocation3 + $0x288] sm:$0xff]
    %v1992 = vld [vmem:[#allocation3 + $0x290] sm:$0xff]
    %v1993 = vld [vmem:[#allocation3 + $0x298] sm:$0xff]
    %v1994 = vld [vmem:[#allocation3 + $0x2a0] sm:$0xff]
    %v1995 = vld [vmem:[#allocation3 + $0x2a8] sm:$0xff]
    %v1996 = vld [vmem:[#allocation3 + $0x2b0] sm:$0xff]
    %v1997 = vld [vmem:[#allocation3 + $0x2b8] sm:$0xff]
    %v1998 = vld [vmem:[#allocation3 + $0x2c0] sm:$0xff]
    %v1999 = vld [vmem:[#allocation3 + $0x2c8] sm:$0xff]
    %v2000 = vld [vmem:[#allocation3 + $0x2d0] sm:$0xff]
    %v2001 = vld [vmem:[#allocation3 + $0x2d8] sm:$0xff]
    %v2002 = vld [vmem:[#allocation3 + $0x2e0] sm:$0xff]
    %v2003 = vld [vmem:[#allocation3 + $0x2e8] sm:$0xff]
    %v2004 = vld [vmem:[#allocation3 + $0x2f0] sm:$0xff]
    %v2005 = vld [vmem:[#allocation3 + $0x2f8] sm:$0xff]
    %v2006 = vld [vmem:[#allocation3 + $0x300] sm:$0xff]
    %v2007 = vld [vmem:[#allocation3 + $0x308] sm:$0xff]
    %v2008 = vld [vmem:[#allocation3 + $0x310] sm:$0xff]
    %v2009 = vld [vmem:[#allocation3 + $0x318] sm:$0xff]
    %v2010 = vld [vmem:[#allocation3 + $0x320] sm:$0xff]
    %v2011 = vld [vmem:[#allocation3 + $0x328] sm:$0xff]
    %v2012 = vld [vmem:[#allocation3 + $0x330] sm:$0xff]
    %v2013 = vld [vmem:[#allocation3 + $0x338] sm:$0xff]
    %v2014 = vld [vmem:[#allocation3 + $0x340] sm:$0xff]
    %v2015 = vld [vmem:[#allocation3 + $0x348] sm:$0xff]
    %v2016 = vld [vmem:[#allocation3 + $0x350] sm:$0xff]
    %v2017 = vld [vmem:[#allocation3 + $0x358] sm:$0xff]
    %v2018 = vld [vmem:[#allocation3 + $0x360] sm:$0xff]
    %v2019 = vld [vmem:[#allocation3 + $0x368] sm:$0xff]
    %v2020 = vld [vmem:[#allocation3 + $0x370] sm:$0xff]
    %v2021 = vld [vmem:[#allocation3 + $0x378] sm:$0xff]
    %v2022 = vld [vmem:[#allocation3 + $0x380] sm:$0xff]
    %v2023 = vld [vmem:[#allocation3 + $0x388] sm:$0xff]
    %v2024 = vld [vmem:[#allocation3 + $0x390] sm:$0xff]
    %v2025 = vld [vmem:[#allocation3 + $0x398] sm:$0xff]
    %v2026 = vld [vmem:[#allocation3 + $0x3a0] sm:$0xff]
    %v2027 = vld [vmem:[#allocation3 + $0x3a8] sm:$0xff]
    %v2028 = vld [vmem:[#allocation3 + $0x3b0] sm:$0xff]
    %v2029 = vld [vmem:[#allocation3 + $0x3b8] sm:$0xff]
    %v2030 = vld [vmem:[#allocation3 + $0x3c0] sm:$0xff]
    %v2031 = vld [vmem:[#allocation3 + $0x3c8] sm:$0xff]
    %v2032 = vld [vmem:[#allocation3 + $0x3d0] sm:$0xff]
    %v2033 = vld [vmem:[#allocation3 + $0x3d8] sm:$0xff]
    %v2034 = vld [vmem:[#allocation3 + $0x3e0] sm:$0xff]
    %v2035 = vld [vmem:[#allocation3 + $0x3e8] sm:$0xff]
    %v2036 = vld [vmem:[#allocation3 + $0x3f0] sm:$0xff]
    %v2037 = vld [vmem:[#allocation3 + $0x3f8] sm:$0xff]
    %v2038 = vld [vmem:[#allocation3 + $0x400] sm:$0xff]
    %v2039 = vld [vmem:[#allocation3 + $0x408] sm:$0xff]
    %v2040 = vld [vmem:[#allocation3 + $0x410] sm:$0xff]
    %v2041 = vld [vmem:[#allocation3 + $0x418] sm:$0xff]
    %v2042 = vld [vmem:[#allocation3 + $0x420] sm:$0x1]
    %v2043 = vld [vmem:[#allocation3 + $0x428] sm:$0x1]
    %v2044 = vld [vmem:[#allocation3 + $0x430] sm:$0x1]
    %v2045 = vld [vmem:[#allocation3 + $0x438] sm:$0x1]
    %v2046 = vlaneseq
    %v2047 = vshrl.u32 %v2046, 7
    %v2048 = vsub.s32 0, %v2047
    %v2049 = vrot.slane %v2042, %v2048
    %v2050 = vlaneseq
    %v2051 = vshrl.u32 %v2050, 7
    %v2052 = vsub.s32 0, %v2051
    %v2053 = vrot.slane %v2043, %v2052
    %v2054 = vlaneseq
    %v2055 = vshrl.u32 %v2054, 7
    %v2056 = vsub.s32 0, %v2055
    %v2057 = vrot.slane %v2044, %v2056
    %v2058 = vlaneseq
    %v2059 = vshrl.u32 %v2058, 7
    %v2060 = vsub.s32 0, %v2059
    %v2061 = vrot.slane %v2045, %v2060
    %2062 = vmatprep.subr.mxu0 %v1979
    %2063 = vmatpush1.msra.mxu0 %v1978
    %2064 = vmatprep.subr.mxu0 %v1983
    %2065 = vmatpush1.msra.mxu0 %v1982
    %2066 = vmatprep.subr.mxu0 %v1987
    %2067 = vmatpush1.msra.mxu0 %v1986
    %2068 = vmatprep.subr.mxu0 %v1991
    %2069 = vmatpush1.msra.mxu0 %v1990
    %2070 = vmatprep.subr.mxu0 %v1995
    %2071 = vmatpush1.msra.mxu0 %v1994
    %2072 = vmatprep.subr.mxu0 %v1999
    %2073 = vmatpush1.msra.mxu0 %v1998
    %2074 = vmatprep.subr.mxu0 %v2003
    %2075 = vmatpush1.msra.mxu0 %v2002
    %2076 = vmatprep.subr.mxu0 %v2007
    %2077 = vmatpush1.msra.mxu0 %v2006
    %2078 = vmatprep.subr.mxu0 %v2011
    %2079 = vmatpush1.msra.mxu0 %v2010
    %2080 = vmatprep.subr.mxu0 %v2015
    %2081 = vmatpush1.msra.mxu0 %v2014
    %2082 = vmatprep.subr.mxu0 %v2019
    %2083 = vmatpush1.msra.mxu0 %v2018
    %2084 = vmatprep.subr.mxu0 %v2023
    %2085 = vmatpush1.msra.mxu0 %v2022
    %2086 = vmatprep.subr.mxu0 %v2027
    %2087 = vmatpush1.msra.mxu0 %v2026
    %2088 = vmatprep.subr.mxu0 %v2031
    %2089 = vmatpush1.msra.mxu0 %v2030
    %2090 = vmatprep.subr.mxu0 %v2035
    %2091 = vmatpush1.msra.mxu0 %v2034
    %2092 = vmatprep.subr.mxu0 %v2039
    %2093 = vmatpush1.msra.mxu0 %v2038
    %2094 = vmatprep.subr.mxu0 0.0
    %2095 = vmatpush1.msra.mxu0 0.0
    %2096 = vmatprep.subr.mxu0 0.0
    %2097 = vmatpush1.msra.mxu0 0.0
    %2098 = vmatprep.subr.mxu0 0.0
    %2099 = vmatpush1.msra.mxu0 0.0
    %2100 = vmatprep.subr.mxu0 0.0
    %2101 = vmatpush1.msra.mxu0 0.0
    %2102 = vmatprep.subr.mxu0 0.0
    %2103 = vmatpush1.msra.mxu0 0.0
    %2104 = vmatprep.subr.mxu0 0.0
    %2105 = vmatpush1.msra.mxu0 0.0
    %2106 = vmatprep.subr.mxu0 0.0
    %2107 = vmatpush1.msra.mxu0 0.0
    %2108 = vmatprep.subr.mxu0 0.0
    %2109 = vmatpush1.msra.mxu0 0.0
    %2110 = vmatprep.subr.mxu0 0.0
    %2111 = vmatpush1.msra.mxu0 0.0
    %2112 = vmatprep.subr.mxu0 0.0
    %2113 = vmatpush1.msra.mxu0 0.0
    %2114 = vmatprep.subr.mxu0 0.0
    %2115 = vmatpush1.msra.mxu0 0.0
    %2116 = vmatprep.subr.mxu0 0.0
    %2117 = vmatpush1.msra.mxu0 0.0
    %2118 = vmatprep.subr.mxu0 0.0
    %2119 = vmatpush1.msra.mxu0 0.0
    %2120 = vmatprep.subr.mxu0 0.0
    %2121 = vmatpush1.msra.mxu0 0.0
    %2122 = vmatprep.subr.mxu0 0.0
    %2123 = vmatpush1.msra.mxu0 0.0
    %2124 = vmatprep.subr.mxu0 0.0
    %2125 = vmatpush1.msra.mxu0 0.0
    %2126 = vmatprep.mubr.f32.mxu0 0.0
    %2127 = vmatmul.mubr.f32.gmra.mrb[0].mxu0 %v1970
    %v2128 = vpop.f32.mrb[0].mxu0
    %v2129 = vadd.f32 %v2049, %v2128
    %v2130 = vpop.f32.mrb[0].mxu0
    %v2131 = vadd.f32 %v2053, %v2130
    %2132 = vmatprep.mubr.f32.mxu0 0.0
    %2133 = vmatmul.mubr.f32.gmra.mrb[0].mxu0 %v1971
    %v2134 = vpop.f32.mrb[0].mxu0
    %v2135 = vadd.f32 %v2049, %v2134
    %v2136 = vpop.f32.mrb[0].mxu0
    %v2137 = vadd.f32 %v2053, %v2136
    %2138 = vmatprep.mubr.f32.mxu0 0.0
    %2139 = vmatmul.mubr.f32.gmra.mrb[0].mxu0 %v1972
    %v2140 = vpop.f32.mrb[0].mxu0
    %v2141 = vadd.f32 %v2049, %v2140
    %v2142 = vpop.f32.mrb[0].mxu0
    %v2143 = vadd.f32 %v2053, %v2142
    %2144 = vmatprep.mubr.f32.mxu0 0.0
    %2145 = vmatmul.mubr.f32.gmra.mrb[0].mxu0 %v1973
    %v2146 = vpop.f32.mrb[0].mxu0
    %v2147 = vadd.f32 %v2049, %v2146
    %v2148 = vpop.f32.mrb[0].mxu0
    %v2149 = vadd.f32 %v2053, %v2148
    %2150 = vmatprep.mubr.f32.mxu0 0.0
    %2151 = vmatmul.mubr.f32.gmra.mrb[0].mxu0 %v1974
    %v2152 = vpop.f32.mrb[0].mxu0
    %v2153 = vadd.f32 %v2049, %v2152
    %v2154 = vpop.f32.mrb[0].mxu0
    %v2155 = vadd.f32 %v2053, %v2154
    %2156 = vmatprep.mubr.f32.mxu0 0.0
    %2157 = vmatmul.mubr.f32.gmra.mrb[0].mxu0 %v1975
    %v2158 = vpop.f32.mrb[0].mxu0
    %v2159 = vadd.f32 %v2049, %v2158
    %v2160 = vpop.f32.mrb[0].mxu0
    %v2161 = vadd.f32 %v2053, %v2160
    %2162 = vmatprep.mubr.f32.mxu0 0.0
    %2163 = vmatmul.mubr.f32.gmra.mrb[0].mxu0 %v1976
    %v2164 = vpop.f32.mrb[0].mxu0
    %v2165 = vadd.f32 %v2049, %v2164
    %v2166 = vpop.f32.mrb[0].mxu0
    %v2167 = vadd.f32 %v2053, %v2166
    %2168 = vmatprep.mubr.f32.mxu0 0.0
    %2169 = vmatmul.mubr.f32.gmra.mrb[0].mxu0 %v1977
    %v2170 = vpop.f32.mrb[0].mxu0
    %v2171 = vpop.f32.mrb[0].mxu0
    %2172 = vdwg.mxu0
    %2173 = vmatprep.subr.mxu0 %v1981
    %2174 = vmatpush1.msra.mxu0 %v1980
    %2175 = vmatprep.subr.mxu0 %v1985
    %2176 = vmatpush1.msra.mxu0 %v1984
    %2177 = vmatprep.subr.mxu0 %v1989
    %2178 = vmatpush1.msra.mxu0 %v1988
    %2179 = vmatprep.subr.mxu0 %v1993
    %2180 = vmatpush1.msra.mxu0 %v1992
    %2181 = vmatprep.subr.mxu0 %v1997
    %2182 = vmatpush1.msra.mxu0 %v1996
    %2183 = vmatprep.subr.mxu0 %v2001
    %2184 = vmatpush1.msra.mxu0 %v2000
    %2185 = vmatprep.subr.mxu0 %v2005
    %2186 = vmatpush1.msra.mxu0 %v2004
    %2187 = vmatprep.subr.mxu0 %v2009
    %2188 = vmatpush1.msra.mxu0 %v2008
    %2189 = vmatprep.subr.mxu0 %v2013
    %2190 = vmatpush1.msra.mxu0 %v2012
    %2191 = vmatprep.subr.mxu0 %v2017
    %2192 = vmatpush1.msra.mxu0 %v2016
    %2193 = vmatprep.subr.mxu0 %v2021
    %2194 = vmatpush1.msra.mxu0 %v2020
    %2195 = vmatprep.subr.mxu0 %v2025
    %2196 = vmatpush1.msra.mxu0 %v2024
    %2197 = vmatprep.subr.mxu0 %v2029
    %2198 = vmatpush1.msra.mxu0 %v2028
    %2199 = vmatprep.subr.mxu0 %v2033
    %2200 = vmatpush1.msra.mxu0 %v2032
    %2201 = vmatprep.subr.mxu0 %v2037
    %2202 = vmatpush1.msra.mxu0 %v2036
    %2203 = vmatprep.subr.mxu0 %v2041
    %2204 = vmatpush1.msra.mxu0 %v2040
    %2205 = vmatprep.subr.mxu0 0.0
    %2206 = vmatpush1.msra.mxu0 0.0
    %2207 = vmatprep.subr.mxu0 0.0
    %2208 = vmatpush1.msra.mxu0 0.0
    %2209 = vmatprep.subr.mxu0 0.0
    %2210 = vmatpush1.msra.mxu0 0.0
    %2211 = vmatprep.subr.mxu0 0.0
    %2212 = vmatpush1.msra.mxu0 0.0
    %2213 = vmatprep.subr.mxu0 0.0
    %2214 = vmatpush1.msra.mxu0 0.0
    %2215 = vmatprep.subr.mxu0 0.0
    %2216 = vmatpush1.msra.mxu0 0.0
    %2217 = vmatprep.subr.mxu0 0.0
    %2218 = vmatpush1.msra.mxu0 0.0
    %2219 = vmatprep.subr.mxu0 0.0
    %2220 = vmatpush1.msra.mxu0 0.0
    %2221 = vmatprep.subr.mxu0 0.0
    %2222 = vmatpush1.msra.mxu0 0.0
    %2223 = vmatprep.subr.mxu0 0.0
    %2224 = vmatpush1.msra.mxu0 0.0
    %2225 = vmatprep.subr.mxu0 0.0
    %2226 = vmatpush1.msra.mxu0 0.0
    %2227 = vmatprep.subr.mxu0 0.0
    %2228 = vmatpush1.msra.mxu0 0.0
    %2229 = vmatprep.subr.mxu0 0.0
    %2230 = vmatpush1.msra.mxu0 0.0
    %2231 = vmatprep.subr.mxu0 0.0
    %2232 = vmatpush1.msra.mxu0 0.0
    %2233 = vmatprep.subr.mxu0 0.0
    %2234 = vmatpush1.msra.mxu0 0.0
    %2235 = vmatprep.subr.mxu0 0.0
    %2236 = vmatpush1.msra.mxu0 0.0
    %2237 = vmatprep.mubr.f32.mxu0 0.0
    %2238 = vmatmul.mubr.f32.gmra.mrb[0].mxu0 %v1970
    %v2239 = vpop.f32.mrb[0].mxu0
    %v2240 = vadd.f32 %v2057, %v2239
    %v2241 = vpop.f32.mrb[0].mxu0
    %v2242 = vadd.f32 %v2061, %v2241
    %2243 = vmatprep.mubr.f32.mxu0 0.0
    %2244 = vmatmul.mubr.f32.gmra.mrb[0].mxu0 %v1971
    %v2245 = vpop.f32.mrb[0].mxu0
    %v2246 = vadd.f32 %v2057, %v2245
    %v2247 = vpop.f32.mrb[0].mxu0
    %v2248 = vadd.f32 %v2061, %v2247
    %2249 = vmatprep.mubr.f32.mxu0 0.0
    %2250 = vmatmul.mubr.f32.gmra.mrb[0].mxu0 %v1972
    %v2251 = vpop.f32.mrb[0].mxu0
    %v2252 = vadd.f32 %v2057, %v2251
    %v2253 = vpop.f32.mrb[0].mxu0
    %v2254 = vadd.f32 %v2061, %v2253
    %2255 = vmatprep.mubr.f32.mxu0 0.0
    %2256 = vmatmul.mubr.f32.gmra.mrb[0].mxu0 %v1973
    %v2257 = vpop.f32.mrb[0].mxu0
    %v2258 = vadd.f32 %v2057, %v2257
    %v2259 = vpop.f32.mrb[0].mxu0
    %v2260 = vadd.f32 %v2061, %v2259
    %2261 = vmatprep.mubr.f32.mxu0 0.0
    %2262 = vmatmul.mubr.f32.gmra.mrb[0].mxu0 %v1974
    %v2263 = vpop.f32.mrb[0].mxu0
    %v2264 = vadd.f32 %v2057, %v2263
    %v2265 = vpop.f32.mrb[0].mxu0
    %v2266 = vadd.f32 %v2061, %v2265
    %2267 = vmatprep.mubr.f32.mxu0 0.0
    %2268 = vmatmul.mubr.f32.gmra.mrb[0].mxu0 %v1975
    %v2269 = vpop.f32.mrb[0].mxu0
    %v2270 = vadd.f32 %v2057, %v2269
    %v2271 = vpop.f32.mrb[0].mxu0
    %v2272 = vadd.f32 %v2061, %v2271
    %2273 = vmatprep.mubr.f32.mxu0 0.0
    %2274 = vmatmul.mubr.f32.gmra.mrb[0].mxu0 %v1976
    %v2275 = vpop.f32.mrb[0].mxu0
    %v2276 = vadd.f32 %v2057, %v2275
    %v2277 = vpop.f32.mrb[0].mxu0
    %v2278 = vadd.f32 %v2061, %v2277
    %2279 = vmatprep.mubr.f32.mxu0 0.0
    %2280 = vmatmul.mubr.f32.gmra.mrb[0].mxu0 %v1977
    %v2281 = vpop.f32.mrb[0].mxu0
    %v2282 = vadd.f32 %v2057, %v2281
    %v2283 = vpop.f32.mrb[0].mxu0
    %v2284 = vadd.f32 %v2061, %v2283
    %2285 = vdwg.mxu0
    %v2286 = vld [vmem:[#allocation3 + $0x440] sm:$0xff]
    %v2287 = vld [vmem:[#allocation3 + $0x448] sm:$0xff]
    %v2288 = vld [vmem:[#allocation3 + $0x450] sm:$0xff]
    %v2289 = vld [vmem:[#allocation3 + $0x458] sm:$0xff]
    %v2290 = vld [vmem:[#allocation3 + $0x460] sm:$0xff]
    %v2291 = vld [vmem:[#allocation3 + $0x468] sm:$0xff]
    %v2292 = vld [vmem:[#allocation3 + $0x470] sm:$0xff]
    %v2293 = vld [vmem:[#allocation3 + $0x478] sm:$0xff]
    %v2294 = vld [vmem:[#allocation3 + $0x480] sm:$0xff]
    %v2295 = vld [vmem:[#allocation3 + $0x488] sm:$0xff]
    %v2296 = vld [vmem:[#allocation3 + $0x490] sm:$0xff]
    %v2297 = vld [vmem:[#allocation3 + $0x498] sm:$0xff]
    %v2298 = vld [vmem:[#allocation3 + $0x4a0] sm:$0xff]
    %v2299 = vld [vmem:[#allocation3 + $0x4a8] sm:$0xff]
    %v2300 = vld [vmem:[#allocation3 + $0x4b0] sm:$0xff]
    %v2301 = vld [vmem:[#allocation3 + $0x4b8] sm:$0xff]
    %v2302 = vld [vmem:[#allocation3 + $0x4c0] sm:$0xff]
    %v2303 = vld [vmem:[#allocation3 + $0x4c8] sm:$0xff]
    %v2304 = vld [vmem:[#allocation3 + $0x4d0] sm:$0xff]
    %v2305 = vld [vmem:[#allocation3 + $0x4d8] sm:$0xff]
    %v2306 = vld [vmem:[#allocation3 + $0x4e0] sm:$0xff]
    %v2307 = vld [vmem:[#allocation3 + $0x4e8] sm:$0xff]
    %v2308 = vld [vmem:[#allocation3 + $0x4f0] sm:$0xff]
    %v2309 = vld [vmem:[#allocation3 + $0x4f8] sm:$0xff]
    %v2310 = vld [vmem:[#allocation3 + $0x500] sm:$0xff]
    %v2311 = vld [vmem:[#allocation3 + $0x508] sm:$0xff]
    %v2312 = vld [vmem:[#allocation3 + $0x510] sm:$0xff]
    %v2313 = vld [vmem:[#allocation3 + $0x518] sm:$0xff]
    %v2314 = vld [vmem:[#allocation3 + $0x520] sm:$0xff]
    %v2315 = vld [vmem:[#allocation3 + $0x528] sm:$0xff]
    %v2316 = vld [vmem:[#allocation3 + $0x530] sm:$0xff]
    %v2317 = vld [vmem:[#allocation3 + $0x538] sm:$0xff]
    %v2318 = vld [vmem:[#allocation3 + $0x540] sm:$0xff]
    %v2319 = vld [vmem:[#allocation3 + $0x548] sm:$0xff]
    %v2320 = vld [vmem:[#allocation3 + $0x550] sm:$0xff]
    %v2321 = vld [vmem:[#allocation3 + $0x558] sm:$0xff]
    %v2322 = vld [vmem:[#allocation3 + $0x560] sm:$0xff]
    %v2323 = vld [vmem:[#allocation3 + $0x568] sm:$0xff]
    %v2324 = vld [vmem:[#allocation3 + $0x570] sm:$0xff]
    %v2325 = vld [vmem:[#allocation3 + $0x578] sm:$0xff]
    %v2326 = vld [vmem:[#allocation3 + $0x580] sm:$0xff]
    %v2327 = vld [vmem:[#allocation3 + $0x588] sm:$0xff]
    %v2328 = vld [vmem:[#allocation3 + $0x590] sm:$0xff]
    %v2329 = vld [vmem:[#allocation3 + $0x598] sm:$0xff]
    %v2330 = vld [vmem:[#allocation3 + $0x5a0] sm:$0xff]
    %v2331 = vld [vmem:[#allocation3 + $0x5a8] sm:$0xff]
    %v2332 = vld [vmem:[#allocation3 + $0x5b0] sm:$0xff]
    %v2333 = vld [vmem:[#allocation3 + $0x5b8] sm:$0xff]
    %v2334 = vld [vmem:[#allocation3 + $0x5c0] sm:$0xff]
    %v2335 = vld [vmem:[#allocation3 + $0x5c8] sm:$0xff]
    %v2336 = vld [vmem:[#allocation3 + $0x5d0] sm:$0xff]
    %v2337 = vld [vmem:[#allocation3 + $0x5d8] sm:$0xff]
    %v2338 = vld [vmem:[#allocation3 + $0x5e0] sm:$0xff]
    %v2339 = vld [vmem:[#allocation3 + $0x5e8] sm:$0xff]
    %v2340 = vld [vmem:[#allocation3 + $0x5f0] sm:$0xff]
    %v2341 = vld [vmem:[#allocation3 + $0x5f8] sm:$0xff]
    %v2342 = vld [vmem:[#allocation3 + $0x600] sm:$0xff]
    %v2343 = vld [vmem:[#allocation3 + $0x608] sm:$0xff]
    %v2344 = vld [vmem:[#allocation3 + $0x610] sm:$0xff]
    %v2345 = vld [vmem:[#allocation3 + $0x618] sm:$0xff]
    %v2346 = vld [vmem:[#allocation3 + $0x620] sm:$0xff]
    %v2347 = vld [vmem:[#allocation3 + $0x628] sm:$0xff]
    %v2348 = vld [vmem:[#allocation3 + $0x630] sm:$0xff]
    %v2349 = vld [vmem:[#allocation3 + $0x638] sm:$0xff]
    %2350 = vmatprep.subr.mxu0 %v2287
    %2351 = vmatpush1.msra.mxu0 %v2286
    %2352 = vmatprep.subr.mxu0 %v2291
    %2353 = vmatpush1.msra.mxu0 %v2290
    %2354 = vmatprep.subr.mxu0 %v2295
    %2355 = vmatpush1.msra.mxu0 %v2294
    %2356 = vmatprep.subr.mxu0 %v2299
    %2357 = vmatpush1.msra.mxu0 %v2298
    %2358 = vmatprep.subr.mxu0 %v2303
    %2359 = vmatpush1.msra.mxu0 %v2302
    %2360 = vmatprep.subr.mxu0 %v2307
    %2361 = vmatpush1.msra.mxu0 %v2306
    %2362 = vmatprep.subr.mxu0 %v2311
    %2363 = vmatpush1.msra.mxu0 %v2310
    %2364 = vmatprep.subr.mxu0 %v2315
    %2365 = vmatpush1.msra.mxu0 %v2314
    %2366 = vmatprep.subr.mxu0 %v2319
    %2367 = vmatpush1.msra.mxu0 %v2318
    %2368 = vmatprep.subr.mxu0 %v2323
    %2369 = vmatpush1.msra.mxu0 %v2322
    %2370 = vmatprep.subr.mxu0 %v2327
    %2371 = vmatpush1.msra.mxu0 %v2326
    %2372 = vmatprep.subr.mxu0 %v2331
    %2373 = vmatpush1.msra.mxu0 %v2330
    %2374 = vmatprep.subr.mxu0 %v2335
    %2375 = vmatpush1.msra.mxu0 %v2334
    %2376 = vmatprep.subr.mxu0 %v2339
    %2377 = vmatpush1.msra.mxu0 %v2338
    %2378 = vmatprep.subr.mxu0 %v2343
    %2379 = vmatpush1.msra.mxu0 %v2342
    %2380 = vmatprep.subr.mxu0 %v2347
    %2381 = vmatpush1.msra.mxu0 %v2346
    %2382 = vmatprep.subr.mxu0 0.0
    %2383 = vmatpush1.msra.mxu0 0.0
    %2384 = vmatprep.subr.mxu0 0.0
    %2385 = vmatpush1.msra.mxu0 0.0
    %2386 = vmatprep.subr.mxu0 0.0
    %2387 = vmatpush1.msra.mxu0 0.0
    %2388 = vmatprep.subr.mxu0 0.0
    %2389 = vmatpush1.msra.mxu0 0.0
    %2390 = vmatprep.subr.mxu0 0.0
    %2391 = vmatpush1.msra.mxu0 0.0
    %2392 = vmatprep.subr.mxu0 0.0
    %2393 = vmatpush1.msra.mxu0 0.0
    %2394 = vmatprep.subr.mxu0 0.0
    %2395 = vmatpush1.msra.mxu0 0.0
    %2396 = vmatprep.subr.mxu0 0.0
    %2397 = vmatpush1.msra.mxu0 0.0
    %2398 = vmatprep.subr.mxu0 0.0
    %2399 = vmatpush1.msra.mxu0 0.0
    %2400 = vmatprep.subr.mxu0 0.0
    %2401 = vmatpush1.msra.mxu0 0.0
    %2402 = vmatprep.subr.mxu0 0.0
    %2403 = vmatpush1.msra.mxu0 0.0
    %2404 = vmatprep.subr.mxu0 0.0
    %2405 = vmatpush1.msra.mxu0 0.0
    %2406 = vmatprep.subr.mxu0 0.0
    %2407 = vmatpush1.msra.mxu0 0.0
    %2408 = vmatprep.subr.mxu0 0.0
    %2409 = vmatpush1.msra.mxu0 0.0
    %2410 = vmatprep.subr.mxu0 0.0
    %2411 = vmatpush1.msra.mxu0 0.0
    %2412 = vmatprep.subr.mxu0 0.0
    %2413 = vmatpush1.msra.mxu0 0.0
    %2414 = vmatprep.mubr.f32.mxu0 0.0
    %2415 = vmatmul.mubr.f32.gmra.mrb[0].mxu0 0.0
    %v2416 = vpop.f32.mrb[0].mxu0
    %v2417 = vadd.f32 0.0, %v2416
    %v2418 = vpop.f32.mrb[0].mxu0
    %v2419 = vadd.f32 0.0, %v2418
    %2420 = vdwg.mxu0
    %2421 = vmatprep.subr.mxu0 %v2289
    %2422 = vmatpush1.msra.mxu0 %v2288
    %2423 = vmatprep.subr.mxu0 %v2293
    %2424 = vmatpush1.msra.mxu0 %v2292
    %2425 = vmatprep.subr.mxu0 %v2297
    %2426 = vmatpush1.msra.mxu0 %v2296
    %2427 = vmatprep.subr.mxu0 %v2301
    %2428 = vmatpush1.msra.mxu0 %v2300
    %2429 = vmatprep.subr.mxu0 %v2305
    %2430 = vmatpush1.msra.mxu0 %v2304
    %2431 = vmatprep.subr.mxu0 %v2309
    %2432 = vmatpush1.msra.mxu0 %v2308
    %2433 = vmatprep.subr.mxu0 %v2313
    %2434 = vmatpush1.msra.mxu0 %v2312
    %2435 = vmatprep.subr.mxu0 %v2317
    %2436 = vmatpush1.msra.mxu0 %v2316
    %2437 = vmatprep.subr.mxu0 %v2321
    %2438 = vmatpush1.msra.mxu0 %v2320
    %2439 = vmatprep.subr.mxu0 %v2325
    %2440 = vmatpush1.msra.mxu0 %v2324
    %2441 = vmatprep.subr.mxu0 %v2329
    %2442 = vmatpush1.msra.mxu0 %v2328
    %2443 = vmatprep.subr.mxu0 %v2333
    %2444 = vmatpush1.msra.mxu0 %v2332
    %2445 = vmatprep.subr.mxu0 %v2337
    %2446 = vmatpush1.msra.mxu0 %v2336
    %2447 = vmatprep.subr.mxu0 %v2341
    %2448 = vmatpush1.msra.mxu0 %v2340
    %2449 = vmatprep.subr.mxu0 %v2345
    %2450 = vmatpush1.msra.mxu0 %v2344
    %2451 = vmatprep.subr.mxu0 %v2349
    %2452 = vmatpush1.msra.mxu0 %v2348
    %2453 = vmatprep.subr.mxu0 0.0
    %2454 = vmatpush1.msra.mxu0 0.0
    %2455 = vmatprep.subr.mxu0 0.0
    %2456 = vmatpush1.msra.mxu0 0.0
    %2457 = vmatprep.subr.mxu0 0.0
    %2458 = vmatpush1.msra.mxu0 0.0
    %2459 = vmatprep.subr.mxu0 0.0
    %2460 = vmatpush1.msra.mxu0 0.0
    %2461 = vmatprep.subr.mxu0 0.0
    %2462 = vmatpush1.msra.mxu0 0.0
    %2463 = vmatprep.subr.mxu0 0.0
    %2464 = vmatpush1.msra.mxu0 0.0
    %2465 = vmatprep.subr.mxu0 0.0
    %2466 = vmatpush1.msra.mxu0 0.0
    %2467 = vmatprep.subr.mxu0 0.0
    %2468 = vmatpush1.msra.mxu0 0.0
    %2469 = vmatprep.subr.mxu0 0.0
    %2470 = vmatpush1.msra.mxu0 0.0
    %2471 = vmatprep.subr.mxu0 0.0
    %2472 = vmatpush1.msra.mxu0 0.0
    %2473 = vmatprep.subr.mxu0 0.0
    %2474 = vmatpush1.msra.mxu0 0.0
    %2475 = vmatprep.subr.mxu0 0.0
    %2476 = vmatpush1.msra.mxu0 0.0
    %2477 = vmatprep.subr.mxu0 0.0
    %2478 = vmatpush1.msra.mxu0 0.0
    %2479 = vmatprep.subr.mxu0 0.0
    %2480 = vmatpush1.msra.mxu0 0.0
    %2481 = vmatprep.subr.mxu0 0.0
    %2482 = vmatpush1.msra.mxu0 0.0
    %2483 = vmatprep.subr.mxu0 0.0
    %2484 = vmatpush1.msra.mxu0 0.0
    %2485 = vmatprep.mubr.f32.mxu0 0.0
    %2486 = vmatmul.mubr.f32.gmra.mrb[0].mxu0 0.0
    %v2487 = vpop.f32.mrb[0].mxu0
    %v2488 = vadd.f32 0.0, %v2487
    %v2489 = vpop.f32.mrb[0].mxu0
    %v2490 = vadd.f32 0.0, %v2489
    %2491 = vdwg.mxu0
    %v2492 = vadd.f32 %v2129, %v2417
    %v2493 = vadd.f32 %v2131, %v2419
    %v2494 = vadd.f32 %v2282, %v2488
    %v2495 = vadd.f32 %v2284, %v2490
    %v2496 = vxor.u32 %v2492, 2147483648
    %v2497 = vxor.u32 %v2493, 2147483648
    %v2498 = vxor.u32 %v2494, 2147483648
    %v2499 = vxor.u32 %v2495, 2147483648
    %v2500 = vmul.f32 %v2496, 1.442695
    %v2501 = vpow.pop %v2500
    %v2502 = vmul.f32 %v2497, 1.442695
    %v2503 = vpow.pop %v2502
    %v2504 = vmul.f32 %v2498, 1.442695
    %v2505 = vpow.pop %v2504
    %v2506 = vmul.f32 %v2499, 1.442695
    %v2507 = vpow.pop %v2506
    %v2508 = vadd.f32 %v2501, 1.0
    %v2509 = vadd.f32 %v2503, 1.0
    %v2510 = vadd.f32 %v2505, 1.0
    %v2511 = vadd.f32 %v2507, 1.0
    %v2512 = vrcp.pop %v2508
    %v2513 = vmul.f32 1.0, %v2512
    %v2514 = vrcp.pop %v2509
    %v2515 = vmul.f32 1.0, %v2514
    %v2516 = vrcp.pop %v2510
    %v2517 = vmul.f32 1.0, %v2516
    %v2518 = vrcp.pop %v2511
    %v2519 = vmul.f32 1.0, %v2518
    %v2520 = vtanh.pop %v2493
    %v2521 = vtanh.pop %v2495
    %v2522 = vmul.f32 %v2513, 0.0
    %v2523 = vmul.f32 %v2513, %v2520
    %2525 = vrot.lane.b32.xlu0 %v2523, 64
    %v2526 = vpop.permute.xlu0 %2525
    %v2528 = vadd.f32 %v2522, %v2526
    %v2529 = vmul.f32 %v2517, 0.0
    %v2530 = vmul.f32 %v2517, %v2521
    %2532 = vrot.lane.b32.xlu0 %v2530, 64
    %v2533 = vpop.permute.xlu0 %2532
    %v2535 = vadd.f32 %v2529, %v2533
    %v2536 = vtanh.pop %v2528
    %v2537 = vmul.f32 %v2515, %v2536
    %v2538 = vtanh.pop %v2535
    %v2539 = vmul.f32 %v2519, %v2538
    %2541 = vrot.lane.b32.xlu0 %v2537, 64
    %v2542 = vpop.permute.xlu0 %2541
    %v2544 = vsel %vm587, %v2542, %v2539
    %2545 = vmatprep.subr.mxu0 %v2287
    %2546 = vmatpush1.msra.mxu0 %v2286
    %2547 = vmatprep.subr.mxu0 %v2291
    %2548 = vmatpush1.msra.mxu0 %v2290
    %2549 = vmatprep.subr.mxu0 %v2295
    %2550 = vmatpush1.msra.mxu0 %v2294
    %2551 = vmatprep.subr.mxu0 %v2299
    %2552 = vmatpush1.msra.mxu0 %v2298
    %2553 = vmatprep.subr.mxu0 %v2303
    %2554 = vmatpush1.msra.mxu0 %v2302
    %2555 = vmatprep.subr.mxu0 %v2307
    %2556 = vmatpush1.msra.mxu0 %v2306
    %2557 = vmatprep.subr.mxu0 %v2311
    %2558 = vmatpush1.msra.mxu0 %v2310
    %2559 = vmatprep.subr.mxu0 %v2315
    %2560 = vmatpush1.msra.mxu0 %v2314
    %2561 = vmatprep.subr.mxu0 %v2319
    %2562 = vmatpush1.msra.mxu0 %v2318
    %2563 = vmatprep.subr.mxu0 %v2323
    %2564 = vmatpush1.msra.mxu0 %v2322
    %2565 = vmatprep.subr.mxu0 %v2327
    %2566 = vmatpush1.msra.mxu0 %v2326
    %2567 = vmatprep.subr.mxu0 %v2331
    %2568 = vmatpush1.msra.mxu0 %v2330
    %2569 = vmatprep.subr.mxu0 %v2335
    %2570 = vmatpush1.msra.mxu0 %v2334
    %2571 = vmatprep.subr.mxu0 %v2339
    %2572 = vmatpush1.msra.mxu0 %v2338
    %2573 = vmatprep.subr.mxu0 %v2343
    %2574 = vmatpush1.msra.mxu0 %v2342
    %2575 = vmatprep.subr.mxu0 %v2347
    %2576 = vmatpush1.msra.mxu0 %v2346
    %2577 = vmatprep.subr.mxu0 0.0
    %2578 = vmatpush1.msra.mxu0 0.0
    %2579 = vmatprep.subr.mxu0 0.0
    %2580 = vmatpush1.msra.mxu0 0.0
    %2581 = vmatprep.subr.mxu0 0.0
    %2582 = vmatpush1.msra.mxu0 0.0
    %2583 = vmatprep.subr.mxu0 0.0
    %2584 = vmatpush1.msra.mxu0 0.0
    %2585 = vmatprep.subr.mxu0 0.0
    %2586 = vmatpush1.msra.mxu0 0.0
    %2587 = vmatprep.subr.mxu0 0.0
    %2588 = vmatpush1.msra.mxu0 0.0
    %2589 = vmatprep.subr.mxu0 0.0
    %2590 = vmatpush1.msra.mxu0 0.0
    %2591 = vmatprep.subr.mxu0 0.0
    %2592 = vmatpush1.msra.mxu0 0.0
    %2593 = vmatprep.subr.mxu0 0.0
    %2594 = vmatpush1.msra.mxu0 0.0
    %2595 = vmatprep.subr.mxu0 0.0
    %2596 = vmatpush1.msra.mxu0 0.0
    %2597 = vmatprep.subr.mxu0 0.0
    %2598 = vmatpush1.msra.mxu0 0.0
    %2599 = vmatprep.subr.mxu0 0.0
    %2600 = vmatpush1.msra.mxu0 0.0
    %2601 = vmatprep.subr.mxu0 0.0
    %2602 = vmatpush1.msra.mxu0 0.0
    %2603 = vmatprep.subr.mxu0 0.0
    %2604 = vmatpush1.msra.mxu0 0.0
    %2605 = vmatprep.subr.mxu0 0.0
    %2606 = vmatpush1.msra.mxu0 0.0
    %2607 = vmatprep.subr.mxu0 0.0
    %2608 = vmatpush1.msra.mxu0 0.0
    %2609 = vmatprep.mubr.f32.mxu0 0.0
    %2610 = vmatmul.mubr.f32.gmra.mrb[0].mxu0 %v2544
    %v2611 = vpop.f32.mrb[0].mxu0
    %v2612 = vadd.f32 0.0, %v2611
    %v2613 = vpop.f32.mrb[0].mxu0
    %v2614 = vadd.f32 0.0, %v2613
    %2615 = vdwg.mxu0
    %2616 = vmatprep.subr.mxu0 %v2289
    %2617 = vmatpush1.msra.mxu0 %v2288
    %2618 = vmatprep.subr.mxu0 %v2293
    %2619 = vmatpush1.msra.mxu0 %v2292
    %2620 = vmatprep.subr.mxu0 %v2297
    %2621 = vmatpush1.msra.mxu0 %v2296
    %2622 = vmatprep.subr.mxu0 %v2301
    %2623 = vmatpush1.msra.mxu0 %v2300
    %2624 = vmatprep.subr.mxu0 %v2305
    %2625 = vmatpush1.msra.mxu0 %v2304
    %2626 = vmatprep.subr.mxu0 %v2309
    %2627 = vmatpush1.msra.mxu0 %v2308
    %2628 = vmatprep.subr.mxu0 %v2313
    %2629 = vmatpush1.msra.mxu0 %v2312
    %2630 = vmatprep.subr.mxu0 %v2317
    %2631 = vmatpush1.msra.mxu0 %v2316
    %2632 = vmatprep.subr.mxu0 %v2321
    %2633 = vmatpush1.msra.mxu0 %v2320
    %2634 = vmatprep.subr.mxu0 %v2325
    %2635 = vmatpush1.msra.mxu0 %v2324
    %2636 = vmatprep.subr.mxu0 %v2329
    %2637 = vmatpush1.msra.mxu0 %v2328
    %2638 = vmatprep.subr.mxu0 %v2333
    %2639 = vmatpush1.msra.mxu0 %v2332
    %2640 = vmatprep.subr.mxu0 %v2337
    %2641 = vmatpush1.msra.mxu0 %v2336
    %2642 = vmatprep.subr.mxu0 %v2341
    %2643 = vmatpush1.msra.mxu0 %v2340
    %2644 = vmatprep.subr.mxu0 %v2345
    %2645 = vmatpush1.msra.mxu0 %v2344
    %2646 = vmatprep.subr.mxu0 %v2349
    %2647 = vmatpush1.msra.mxu0 %v2348
    %2648 = vmatprep.subr.mxu0 0.0
    %2649 = vmatpush1.msra.mxu0 0.0
    %2650 = vmatprep.subr.mxu0 0.0
    %2651 = vmatpush1.msra.mxu0 0.0
    %2652 = vmatprep.subr.mxu0 0.0
    %2653 = vmatpush1.msra.mxu0 0.0
    %2654 = vmatprep.subr.mxu0 0.0
    %2655 = vmatpush1.msra.mxu0 0.0
    %2656 = vmatprep.subr.mxu0 0.0
    %2657 = vmatpush1.msra.mxu0 0.0
    %2658 = vmatprep.subr.mxu0 0.0
    %2659 = vmatpush1.msra.mxu0 0.0
    %2660 = vmatprep.subr.mxu0 0.0
    %2661 = vmatpush1.msra.mxu0 0.0
    %2662 = vmatprep.subr.mxu0 0.0
    %2663 = vmatpush1.msra.mxu0 0.0
    %2664 = vmatprep.subr.mxu0 0.0
    %2665 = vmatpush1.msra.mxu0 0.0
    %2666 = vmatprep.subr.mxu0 0.0
    %2667 = vmatpush1.msra.mxu0 0.0
    %2668 = vmatprep.subr.mxu0 0.0
    %2669 = vmatpush1.msra.mxu0 0.0
    %2670 = vmatprep.subr.mxu0 0.0
    %2671 = vmatpush1.msra.mxu0 0.0
    %2672 = vmatprep.subr.mxu0 0.0
    %2673 = vmatpush1.msra.mxu0 0.0
    %2674 = vmatprep.subr.mxu0 0.0
    %2675 = vmatpush1.msra.mxu0 0.0
    %2676 = vmatprep.subr.mxu0 0.0
    %2677 = vmatpush1.msra.mxu0 0.0
    %2678 = vmatprep.subr.mxu0 0.0
    %2679 = vmatpush1.msra.mxu0 0.0
    %2680 = vmatprep.mubr.f32.mxu0 0.0
    %2681 = vmatmul.mubr.f32.gmra.mrb[0].mxu0 %v2544
    %v2682 = vpop.f32.mrb[0].mxu0
    %v2683 = vadd.f32 0.0, %v2682
    %v2684 = vpop.f32.mrb[0].mxu0
    %v2685 = vadd.f32 0.0, %v2684
    %2686 = vdwg.mxu0
    %v2687 = vadd.f32 %v2135, %v2612
    %v2688 = vadd.f32 %v2137, %v2614
    %v2689 = vadd.f32 %v2276, %v2683
    %v2690 = vadd.f32 %v2278, %v2685
    %v2691 = vxor.u32 %v2687, 2147483648
    %v2692 = vxor.u32 %v2688, 2147483648
    %v2693 = vxor.u32 %v2689, 2147483648
    %v2694 = vxor.u32 %v2690, 2147483648
    %v2695 = vmul.f32 %v2691, 1.442695
    %v2696 = vpow.pop %v2695
    %v2697 = vmul.f32 %v2692, 1.442695
    %v2698 = vpow.pop %v2697
    %v2699 = vmul.f32 %v2693, 1.442695
    %v2700 = vpow.pop %v2699
    %v2701 = vmul.f32 %v2694, 1.442695
    %v2702 = vpow.pop %v2701
    %v2703 = vadd.f32 %v2696, 1.0
    %v2704 = vadd.f32 %v2698, 1.0
    %v2705 = vadd.f32 %v2700, 1.0
    %v2706 = vadd.f32 %v2702, 1.0
    %v2707 = vrcp.pop %v2703
    %v2708 = vmul.f32 1.0, %v2707
    %v2709 = vrcp.pop %v2704
    %v2710 = vmul.f32 1.0, %v2709
    %v2711 = vrcp.pop %v2705
    %v2712 = vmul.f32 1.0, %v2711
    %v2713 = vrcp.pop %v2706
    %v2714 = vmul.f32 1.0, %v2713
    %v2715 = vtanh.pop %v2688
    %v2716 = vtanh.pop %v2690
    %v2717 = vmul.f32 %v2708, %v2528
    %v2718 = vmul.f32 %v2708, %v2715
    %2720 = vrot.lane.b32.xlu0 %v2718, 64
    %v2721 = vpop.permute.xlu0 %2720
    %v2723 = vadd.f32 %v2717, %v2721
    %v2724 = vmul.f32 %v2712, %v2535
    %v2725 = vmul.f32 %v2712, %v2716
    %2727 = vrot.lane.b32.xlu0 %v2725, 64
    %v2728 = vpop.permute.xlu0 %2727
    %v2730 = vadd.f32 %v2724, %v2728
    %v2731 = vtanh.pop %v2723
    %v2732 = vmul.f32 %v2710, %v2731
    %v2733 = vtanh.pop %v2730
    %v2734 = vmul.f32 %v2714, %v2733
    %2736 = vrot.lane.b32.xlu0 %v2732, 64
    %v2737 = vpop.permute.xlu0 %2736
    %v2739 = vsel %vm587, %v2737, %v2734
    %2740 = vmatprep.subr.mxu0 %v2287
    %2741 = vmatpush1.msra.mxu0 %v2286
    %2742 = vmatprep.subr.mxu0 %v2291
    %2743 = vmatpush1.msra.mxu0 %v2290
    %2744 = vmatprep.subr.mxu0 %v2295
    %2745 = vmatpush1.msra.mxu0 %v2294
    %2746 = vmatprep.subr.mxu0 %v2299
    %2747 = vmatpush1.msra.mxu0 %v2298
    %2748 = vmatprep.subr.mxu0 %v2303
    %2749 = vmatpush1.msra.mxu0 %v2302
    %2750 = vmatprep.subr.mxu0 %v2307
    %2751 = vmatpush1.msra.mxu0 %v2306
    %2752 = vmatprep.subr.mxu0 %v2311
    %2753 = vmatpush1.msra.mxu0 %v2310
    %2754 = vmatprep.subr.mxu0 %v2315
    %2755 = vmatpush1.msra.mxu0 %v2314
    %2756 = vmatprep.subr.mxu0 %v2319
    %2757 = vmatpush1.msra.mxu0 %v2318
    %2758 = vmatprep.subr.mxu0 %v2323
    %2759 = vmatpush1.msra.mxu0 %v2322
    %2760 = vmatprep.subr.mxu0 %v2327
    %2761 = vmatpush1.msra.mxu0 %v2326
    %2762 = vmatprep.subr.mxu0 %v2331
    %2763 = vmatpush1.msra.mxu0 %v2330
    %2764 = vmatprep.subr.mxu0 %v2335
    %2765 = vmatpush1.msra.mxu0 %v2334
    %2766 = vmatprep.subr.mxu0 %v2339
    %2767 = vmatpush1.msra.mxu0 %v2338
    %2768 = vmatprep.subr.mxu0 %v2343
    %2769 = vmatpush1.msra.mxu0 %v2342
    %2770 = vmatprep.subr.mxu0 %v2347
    %2771 = vmatpush1.msra.mxu0 %v2346
    %2772 = vmatprep.subr.mxu0 0.0
    %2773 = vmatpush1.msra.mxu0 0.0
    %2774 = vmatprep.subr.mxu0 0.0
    %2775 = vmatpush1.msra.mxu0 0.0
    %2776 = vmatprep.subr.mxu0 0.0
    %2777 = vmatpush1.msra.mxu0 0.0
    %2778 = vmatprep.subr.mxu0 0.0
    %2779 = vmatpush1.msra.mxu0 0.0
    %2780 = vmatprep.subr.mxu0 0.0
    %2781 = vmatpush1.msra.mxu0 0.0
    %2782 = vmatprep.subr.mxu0 0.0
    %2783 = vmatpush1.msra.mxu0 0.0
    %2784 = vmatprep.subr.mxu0 0.0
    %2785 = vmatpush1.msra.mxu0 0.0
    %2786 = vmatprep.subr.mxu0 0.0
    %2787 = vmatpush1.msra.mxu0 0.0
    %2788 = vmatprep.subr.mxu0 0.0
    %2789 = vmatpush1.msra.mxu0 0.0
    %2790 = vmatprep.subr.mxu0 0.0
    %2791 = vmatpush1.msra.mxu0 0.0
    %2792 = vmatprep.subr.mxu0 0.0
    %2793 = vmatpush1.msra.mxu0 0.0
    %2794 = vmatprep.subr.mxu0 0.0
    %2795 = vmatpush1.msra.mxu0 0.0
    %2796 = vmatprep.subr.mxu0 0.0
    %2797 = vmatpush1.msra.mxu0 0.0
    %2798 = vmatprep.subr.mxu0 0.0
    %2799 = vmatpush1.msra.mxu0 0.0
    %2800 = vmatprep.subr.mxu0 0.0
    %2801 = vmatpush1.msra.mxu0 0.0
    %2802 = vmatprep.subr.mxu0 0.0
    %2803 = vmatpush1.msra.mxu0 0.0
    %2804 = vmatprep.mubr.f32.mxu0 0.0
    %2805 = vmatmul.mubr.f32.gmra.mrb[0].mxu0 %v2739
    %v2806 = vpop.f32.mrb[0].mxu0
    %v2807 = vadd.f32 0.0, %v2806
    %v2808 = vpop.f32.mrb[0].mxu0
    %v2809 = vadd.f32 0.0, %v2808
    %2810 = vdwg.mxu0
    %2811 = vmatprep.subr.mxu0 %v2289
    %2812 = vmatpush1.msra.mxu0 %v2288
    %2813 = vmatprep.subr.mxu0 %v2293
    %2814 = vmatpush1.msra.mxu0 %v2292
    %2815 = vmatprep.subr.mxu0 %v2297
    %2816 = vmatpush1.msra.mxu0 %v2296
    %2817 = vmatprep.subr.mxu0 %v2301
    %2818 = vmatpush1.msra.mxu0 %v2300
    %2819 = vmatprep.subr.mxu0 %v2305
    %2820 = vmatpush1.msra.mxu0 %v2304
    %2821 = vmatprep.subr.mxu0 %v2309
    %2822 = vmatpush1.msra.mxu0 %v2308
    %2823 = vmatprep.subr.mxu0 %v2313
    %2824 = vmatpush1.msra.mxu0 %v2312
    %2825 = vmatprep.subr.mxu0 %v2317
    %2826 = vmatpush1.msra.mxu0 %v2316
    %2827 = vmatprep.subr.mxu0 %v2321
    %2828 = vmatpush1.msra.mxu0 %v2320
    %2829 = vmatprep.subr.mxu0 %v2325
    %2830 = vmatpush1.msra.mxu0 %v2324
    %2831 = vmatprep.subr.mxu0 %v2329
    %2832 = vmatpush1.msra.mxu0 %v2328
    %2833 = vmatprep.subr.mxu0 %v2333
    %2834 = vmatpush1.msra.mxu0 %v2332
    %2835 = vmatprep.subr.mxu0 %v2337
    %2836 = vmatpush1.msra.mxu0 %v2336
    %2837 = vmatprep.subr.mxu0 %v2341
    %2838 = vmatpush1.msra.mxu0 %v2340
    %2839 = vmatprep.subr.mxu0 %v2345
    %2840 = vmatpush1.msra.mxu0 %v2344
    %2841 = vmatprep.subr.mxu0 %v2349
    %2842 = vmatpush1.msra.mxu0 %v2348
    %2843 = vmatprep.subr.mxu0 0.0
    %2844 = vmatpush1.msra.mxu0 0.0
    %2845 = vmatprep.subr.mxu0 0.0
    %2846 = vmatpush1.msra.mxu0 0.0
    %2847 = vmatprep.subr.mxu0 0.0
    %2848 = vmatpush1.msra.mxu0 0.0
    %2849 = vmatprep.subr.mxu0 0.0
    %2850 = vmatpush1.msra.mxu0 0.0
    %2851 = vmatprep.subr.mxu0 0.0
    %2852 = vmatpush1.msra.mxu0 0.0
    %2853 = vmatprep.subr.mxu0 0.0
    %2854 = vmatpush1.msra.mxu0 0.0
    %2855 = vmatprep.subr.mxu0 0.0
    %2856 = vmatpush1.msra.mxu0 0.0
    %2857 = vmatprep.subr.mxu0 0.0
    %2858 = vmatpush1.msra.mxu0 0.0
    %2859 = vmatprep.subr.mxu0 0.0
    %2860 = vmatpush1.msra.mxu0 0.0
    %2861 = vmatprep.subr.mxu0 0.0
    %2862 = vmatpush1.msra.mxu0 0.0
    %2863 = vmatprep.subr.mxu0 0.0
    %2864 = vmatpush1.msra.mxu0 0.0
    %2865 = vmatprep.subr.mxu0 0.0
    %2866 = vmatpush1.msra.mxu0 0.0
    %2867 = vmatprep.subr.mxu0 0.0
    %2868 = vmatpush1.msra.mxu0 0.0
    %2869 = vmatprep.subr.mxu0 0.0
    %2870 = vmatpush1.msra.mxu0 0.0
    %2871 = vmatprep.subr.mxu0 0.0
    %2872 = vmatpush1.msra.mxu0 0.0
    %2873 = vmatprep.subr.mxu0 0.0
    %2874 = vmatpush1.msra.mxu0 0.0
    %2875 = vmatprep.mubr.f32.mxu0 0.0
    %2876 = vmatmul.mubr.f32.gmra.mrb[0].mxu0 %v2739
    %v2877 = vpop.f32.mrb[0].mxu0
    %v2878 = vadd.f32 0.0, %v2877
    %v2879 = vpop.f32.mrb[0].mxu0
    %v2880 = vadd.f32 0.0, %v2879
    %2881 = vdwg.mxu0
    %v2882 = vadd.f32 %v2141, %v2807
    %v2883 = vadd.f32 %v2143, %v2809
    %v2884 = vadd.f32 %v2270, %v2878
    %v2885 = vadd.f32 %v2272, %v2880
    %v2886 = vxor.u32 %v2882, 2147483648
    %v2887 = vxor.u32 %v2883, 2147483648
    %v2888 = vxor.u32 %v2884, 2147483648
    %v2889 = vxor.u32 %v2885, 2147483648
    %v2890 = vmul.f32 %v2886, 1.442695
    %v2891 = vpow.pop %v2890
    %v2892 = vmul.f32 %v2887, 1.442695
    %v2893 = vpow.pop %v2892
    %v2894 = vmul.f32 %v2888, 1.442695
    %v2895 = vpow.pop %v2894
    %v2896 = vmul.f32 %v2889, 1.442695
    %v2897 = vpow.pop %v2896
    %v2898 = vadd.f32 %v2891, 1.0
    %v2899 = vadd.f32 %v2893, 1.0
    %v2900 = vadd.f32 %v2895, 1.0
    %v2901 = vadd.f32 %v2897, 1.0
    %v2902 = vrcp.pop %v2898
    %v2903 = vmul.f32 1.0, %v2902
    %v2904 = vrcp.pop %v2899
    %v2905 = vmul.f32 1.0, %v2904
    %v2906 = vrcp.pop %v2900
    %v2907 = vmul.f32 1.0, %v2906
    %v2908 = vrcp.pop %v2901
    %v2909 = vmul.f32 1.0, %v2908
    %v2910 = vtanh.pop %v2883
    %v2911 = vtanh.pop %v2885
    %v2912 = vmul.f32 %v2903, %v2723
    %v2913 = vmul.f32 %v2903, %v2910
    %2915 = vrot.lane.b32.xlu0 %v2913, 64
    %v2916 = vpop.permute.xlu0 %2915
    %v2918 = vadd.f32 %v2912, %v2916
    %v2919 = vmul.f32 %v2907, %v2730
    %v2920 = vmul.f32 %v2907, %v2911
    %2922 = vrot.lane.b32.xlu0 %v2920, 64
    %v2923 = vpop.permute.xlu0 %2922
    %v2925 = vadd.f32 %v2919, %v2923
    %v2926 = vtanh.pop %v2918
    %v2927 = vmul.f32 %v2905, %v2926
    %v2928 = vtanh.pop %v2925
    %v2929 = vmul.f32 %v2909, %v2928
    %2931 = vrot.lane.b32.xlu0 %v2927, 64
    %v2932 = vpop.permute.xlu0 %2931
    %v2934 = vsel %vm587, %v2932, %v2929
    %2935 = vmatprep.subr.mxu0 %v2287
    %2936 = vmatpush1.msra.mxu0 %v2286
    %2937 = vmatprep.subr.mxu0 %v2291
    %2938 = vmatpush1.msra.mxu0 %v2290
    %2939 = vmatprep.subr.mxu0 %v2295
    %2940 = vmatpush1.msra.mxu0 %v2294
    %2941 = vmatprep.subr.mxu0 %v2299
    %2942 = vmatpush1.msra.mxu0 %v2298
    %2943 = vmatprep.subr.mxu0 %v2303
    %2944 = vmatpush1.msra.mxu0 %v2302
    %2945 = vmatprep.subr.mxu0 %v2307
    %2946 = vmatpush1.msra.mxu0 %v2306
    %2947 = vmatprep.subr.mxu0 %v2311
    %2948 = vmatpush1.msra.mxu0 %v2310
    %2949 = vmatprep.subr.mxu0 %v2315
    %2950 = vmatpush1.msra.mxu0 %v2314
    %2951 = vmatprep.subr.mxu0 %v2319
    %2952 = vmatpush1.msra.mxu0 %v2318
    %2953 = vmatprep.subr.mxu0 %v2323
    %2954 = vmatpush1.msra.mxu0 %v2322
    %2955 = vmatprep.subr.mxu0 %v2327
    %2956 = vmatpush1.msra.mxu0 %v2326
    %2957 = vmatprep.subr.mxu0 %v2331
    %2958 = vmatpush1.msra.mxu0 %v2330
    %2959 = vmatprep.subr.mxu0 %v2335
    %2960 = vmatpush1.msra.mxu0 %v2334
    %2961 = vmatprep.subr.mxu0 %v2339
    %2962 = vmatpush1.msra.mxu0 %v2338
    %2963 = vmatprep.subr.mxu0 %v2343
    %2964 = vmatpush1.msra.mxu0 %v2342
    %2965 = vmatprep.subr.mxu0 %v2347
    %2966 = vmatpush1.msra.mxu0 %v2346
    %2967 = vmatprep.subr.mxu0 0.0
    %2968 = vmatpush1.msra.mxu0 0.0
    %2969 = vmatprep.subr.mxu0 0.0
    %2970 = vmatpush1.msra.mxu0 0.0
    %2971 = vmatprep.subr.mxu0 0.0
    %2972 = vmatpush1.msra.mxu0 0.0
    %2973 = vmatprep.subr.mxu0 0.0
    %2974 = vmatpush1.msra.mxu0 0.0
    %2975 = vmatprep.subr.mxu0 0.0
    %2976 = vmatpush1.msra.mxu0 0.0
    %2977 = vmatprep.subr.mxu0 0.0
    %2978 = vmatpush1.msra.mxu0 0.0
    %2979 = vmatprep.subr.mxu0 0.0
    %2980 = vmatpush1.msra.mxu0 0.0
    %2981 = vmatprep.subr.mxu0 0.0
    %2982 = vmatpush1.msra.mxu0 0.0
    %2983 = vmatprep.subr.mxu0 0.0
    %2984 = vmatpush1.msra.mxu0 0.0
    %2985 = vmatprep.subr.mxu0 0.0
    %2986 = vmatpush1.msra.mxu0 0.0
    %2987 = vmatprep.subr.mxu0 0.0
    %2988 = vmatpush1.msra.mxu0 0.0
    %2989 = vmatprep.subr.mxu0 0.0
    %2990 = vmatpush1.msra.mxu0 0.0
    %2991 = vmatprep.subr.mxu0 0.0
    %2992 = vmatpush1.msra.mxu0 0.0
    %2993 = vmatprep.subr.mxu0 0.0
    %2994 = vmatpush1.msra.mxu0 0.0
    %2995 = vmatprep.subr.mxu0 0.0
    %2996 = vmatpush1.msra.mxu0 0.0
    %2997 = vmatprep.subr.mxu0 0.0
    %2998 = vmatpush1.msra.mxu0 0.0
    %2999 = vmatprep.mubr.f32.mxu0 0.0
    %3000 = vmatmul.mubr.f32.gmra.mrb[0].mxu0 %v2934
    %v3001 = vpop.f32.mrb[0].mxu0
    %v3002 = vadd.f32 0.0, %v3001
    %v3003 = vpop.f32.mrb[0].mxu0
    %v3004 = vadd.f32 0.0, %v3003
    %3005 = vdwg.mxu0
    %3006 = vmatprep.subr.mxu0 %v2289
    %3007 = vmatpush1.msra.mxu0 %v2288
    %3008 = vmatprep.subr.mxu0 %v2293
    %3009 = vmatpush1.msra.mxu0 %v2292
    %3010 = vmatprep.subr.mxu0 %v2297
    %3011 = vmatpush1.msra.mxu0 %v2296
    %3012 = vmatprep.subr.mxu0 %v2301
    %3013 = vmatpush1.msra.mxu0 %v2300
    %3014 = vmatprep.subr.mxu0 %v2305
    %3015 = vmatpush1.msra.mxu0 %v2304
    %3016 = vmatprep.subr.mxu0 %v2309
    %3017 = vmatpush1.msra.mxu0 %v2308
    %3018 = vmatprep.subr.mxu0 %v2313
    %3019 = vmatpush1.msra.mxu0 %v2312
    %3020 = vmatprep.subr.mxu0 %v2317
    %3021 = vmatpush1.msra.mxu0 %v2316
    %3022 = vmatprep.subr.mxu0 %v2321
    %3023 = vmatpush1.msra.mxu0 %v2320
    %3024 = vmatprep.subr.mxu0 %v2325
    %3025 = vmatpush1.msra.mxu0 %v2324
    %3026 = vmatprep.subr.mxu0 %v2329
    %3027 = vmatpush1.msra.mxu0 %v2328
    %3028 = vmatprep.subr.mxu0 %v2333
    %3029 = vmatpush1.msra.mxu0 %v2332
    %3030 = vmatprep.subr.mxu0 %v2337
    %3031 = vmatpush1.msra.mxu0 %v2336
    %3032 = vmatprep.subr.mxu0 %v2341
    %3033 = vmatpush1.msra.mxu0 %v2340
    %3034 = vmatprep.subr.mxu0 %v2345
    %3035 = vmatpush1.msra.mxu0 %v2344
    %3036 = vmatprep.subr.mxu0 %v2349
    %3037 = vmatpush1.msra.mxu0 %v2348
    %3038 = vmatprep.subr.mxu0 0.0
    %3039 = vmatpush1.msra.mxu0 0.0
    %3040 = vmatprep.subr.mxu0 0.0
    %3041 = vmatpush1.msra.mxu0 0.0
    %3042 = vmatprep.subr.mxu0 0.0
    %3043 = vmatpush1.msra.mxu0 0.0
    %3044 = vmatprep.subr.mxu0 0.0
    %3045 = vmatpush1.msra.mxu0 0.0
    %3046 = vmatprep.subr.mxu0 0.0
    %3047 = vmatpush1.msra.mxu0 0.0
    %3048 = vmatprep.subr.mxu0 0.0
    %3049 = vmatpush1.msra.mxu0 0.0
    %3050 = vmatprep.subr.mxu0 0.0
    %3051 = vmatpush1.msra.mxu0 0.0
    %3052 = vmatprep.subr.mxu0 0.0
    %3053 = vmatpush1.msra.mxu0 0.0
    %3054 = vmatprep.subr.mxu0 0.0
    %3055 = vmatpush1.msra.mxu0 0.0
    %3056 = vmatprep.subr.mxu0 0.0
    %3057 = vmatpush1.msra.mxu0 0.0
    %3058 = vmatprep.subr.mxu0 0.0
    %3059 = vmatpush1.msra.mxu0 0.0
    %3060 = vmatprep.subr.mxu0 0.0
    %3061 = vmatpush1.msra.mxu0 0.0
    %3062 = vmatprep.subr.mxu0 0.0
    %3063 = vmatpush1.msra.mxu0 0.0
    %3064 = vmatprep.subr.mxu0 0.0
    %3065 = vmatpush1.msra.mxu0 0.0
    %3066 = vmatprep.subr.mxu0 0.0
    %3067 = vmatpush1.msra.mxu0 0.0
    %3068 = vmatprep.subr.mxu0 0.0
    %3069 = vmatpush1.msra.mxu0 0.0
    %3070 = vmatprep.mubr.f32.mxu0 0.0
    %3071 = vmatmul.mubr.f32.gmra.mrb[0].mxu0 %v2934
    %v3072 = vpop.f32.mrb[0].mxu0
    %v3073 = vadd.f32 0.0, %v3072
    %v3074 = vpop.f32.mrb[0].mxu0
    %v3075 = vadd.f32 0.0, %v3074
    %3076 = vdwg.mxu0
    %v3077 = vadd.f32 %v2147, %v3002
    %v3078 = vadd.f32 %v2149, %v3004
    %v3079 = vadd.f32 %v2264, %v3073
    %v3080 = vadd.f32 %v2266, %v3075
    %v3081 = vxor.u32 %v3077, 2147483648
    %v3082 = vxor.u32 %v3078, 2147483648
    %v3083 = vxor.u32 %v3079, 2147483648
    %v3084 = vxor.u32 %v3080, 2147483648
    %v3085 = vmul.f32 %v3081, 1.442695
    %v3086 = vpow.pop %v3085
    %v3087 = vmul.f32 %v3082, 1.442695
    %v3088 = vpow.pop %v3087
    %v3089 = vmul.f32 %v3083, 1.442695
    %v3090 = vpow.pop %v3089
    %v3091 = vmul.f32 %v3084, 1.442695
    %v3092 = vpow.pop %v3091
    %v3093 = vadd.f32 %v3086, 1.0
    %v3094 = vadd.f32 %v3088, 1.0
    %v3095 = vadd.f32 %v3090, 1.0
    %v3096 = vadd.f32 %v3092, 1.0
    %v3097 = vrcp.pop %v3093
    %v3098 = vmul.f32 1.0, %v3097
    %v3099 = vrcp.pop %v3094
    %v3100 = vmul.f32 1.0, %v3099
    %v3101 = vrcp.pop %v3095
    %v3102 = vmul.f32 1.0, %v3101
    %v3103 = vrcp.pop %v3096
    %v3104 = vmul.f32 1.0, %v3103
    %v3105 = vtanh.pop %v3078
    %v3106 = vtanh.pop %v3080
    %v3107 = vmul.f32 %v3098, %v2918
    %v3108 = vmul.f32 %v3098, %v3105
    %3110 = vrot.lane.b32.xlu0 %v3108, 64
    %v3111 = vpop.permute.xlu0 %3110
    %v3113 = vadd.f32 %v3107, %v3111
    %v3114 = vmul.f32 %v3102, %v2925
    %v3115 = vmul.f32 %v3102, %v3106
    %3117 = vrot.lane.b32.xlu0 %v3115, 64
    %v3118 = vpop.permute.xlu0 %3117
    %v3120 = vadd.f32 %v3114, %v3118
    %v3121 = vtanh.pop %v3113
    %v3122 = vmul.f32 %v3100, %v3121
    %v3123 = vtanh.pop %v3120
    %v3124 = vmul.f32 %v3104, %v3123
    %3126 = vrot.lane.b32.xlu0 %v3122, 64
    %v3127 = vpop.permute.xlu0 %3126
    %v3129 = vsel %vm587, %v3127, %v3124
    %3130 = vmatprep.subr.mxu0 %v2287
    %3131 = vmatpush1.msra.mxu0 %v2286
    %3132 = vmatprep.subr.mxu0 %v2291
    %3133 = vmatpush1.msra.mxu0 %v2290
    %3134 = vmatprep.subr.mxu0 %v2295
    %3135 = vmatpush1.msra.mxu0 %v2294
    %3136 = vmatprep.subr.mxu0 %v2299
    %3137 = vmatpush1.msra.mxu0 %v2298
    %3138 = vmatprep.subr.mxu0 %v2303
    %3139 = vmatpush1.msra.mxu0 %v2302
    %3140 = vmatprep.subr.mxu0 %v2307
    %3141 = vmatpush1.msra.mxu0 %v2306
    %3142 = vmatprep.subr.mxu0 %v2311
    %3143 = vmatpush1.msra.mxu0 %v2310
    %3144 = vmatprep.subr.mxu0 %v2315
    %3145 = vmatpush1.msra.mxu0 %v2314
    %3146 = vmatprep.subr.mxu0 %v2319
    %3147 = vmatpush1.msra.mxu0 %v2318
    %3148 = vmatprep.subr.mxu0 %v2323
    %3149 = vmatpush1.msra.mxu0 %v2322
    %3150 = vmatprep.subr.mxu0 %v2327
    %3151 = vmatpush1.msra.mxu0 %v2326
    %3152 = vmatprep.subr.mxu0 %v2331
    %3153 = vmatpush1.msra.mxu0 %v2330
    %3154 = vmatprep.subr.mxu0 %v2335
    %3155 = vmatpush1.msra.mxu0 %v2334
    %3156 = vmatprep.subr.mxu0 %v2339
    %3157 = vmatpush1.msra.mxu0 %v2338
    %3158 = vmatprep.subr.mxu0 %v2343
    %3159 = vmatpush1.msra.mxu0 %v2342
    %3160 = vmatprep.subr.mxu0 %v2347
    %3161 = vmatpush1.msra.mxu0 %v2346
    %3162 = vmatprep.subr.mxu0 0.0
    %3163 = vmatpush1.msra.mxu0 0.0
    %3164 = vmatprep.subr.mxu0 0.0
    %3165 = vmatpush1.msra.mxu0 0.0
    %3166 = vmatprep.subr.mxu0 0.0
    %3167 = vmatpush1.msra.mxu0 0.0
    %3168 = vmatprep.subr.mxu0 0.0
    %3169 = vmatpush1.msra.mxu0 0.0
    %3170 = vmatprep.subr.mxu0 0.0
    %3171 = vmatpush1.msra.mxu0 0.0
    %3172 = vmatprep.subr.mxu0 0.0
    %3173 = vmatpush1.msra.mxu0 0.0
    %3174 = vmatprep.subr.mxu0 0.0
    %3175 = vmatpush1.msra.mxu0 0.0
    %3176 = vmatprep.subr.mxu0 0.0
    %3177 = vmatpush1.msra.mxu0 0.0
    %3178 = vmatprep.subr.mxu0 0.0
    %3179 = vmatpush1.msra.mxu0 0.0
    %3180 = vmatprep.subr.mxu0 0.0
    %3181 = vmatpush1.msra.mxu0 0.0
    %3182 = vmatprep.subr.mxu0 0.0
    %3183 = vmatpush1.msra.mxu0 0.0
    %3184 = vmatprep.subr.mxu0 0.0
    %3185 = vmatpush1.msra.mxu0 0.0
    %3186 = vmatprep.subr.mxu0 0.0
    %3187 = vmatpush1.msra.mxu0 0.0
    %3188 = vmatprep.subr.mxu0 0.0
    %3189 = vmatpush1.msra.mxu0 0.0
    %3190 = vmatprep.subr.mxu0 0.0
    %3191 = vmatpush1.msra.mxu0 0.0
    %3192 = vmatprep.subr.mxu0 0.0
    %3193 = vmatpush1.msra.mxu0 0.0
    %3194 = vmatprep.mubr.f32.mxu0 0.0
    %3195 = vmatmul.mubr.f32.gmra.mrb[0].mxu0 %v3129
    %v3196 = vpop.f32.mrb[0].mxu0
    %v3197 = vadd.f32 0.0, %v3196
    %v3198 = vpop.f32.mrb[0].mxu0
    %v3199 = vadd.f32 0.0, %v3198
    %3200 = vdwg.mxu0
    %3201 = vmatprep.subr.mxu0 %v2289
    %3202 = vmatpush1.msra.mxu0 %v2288
    %3203 = vmatprep.subr.mxu0 %v2293
    %3204 = vmatpush1.msra.mxu0 %v2292
    %3205 = vmatprep.subr.mxu0 %v2297
    %3206 = vmatpush1.msra.mxu0 %v2296
    %3207 = vmatprep.subr.mxu0 %v2301
    %3208 = vmatpush1.msra.mxu0 %v2300
    %3209 = vmatprep.subr.mxu0 %v2305
    %3210 = vmatpush1.msra.mxu0 %v2304
    %3211 = vmatprep.subr.mxu0 %v2309
    %3212 = vmatpush1.msra.mxu0 %v2308
    %3213 = vmatprep.subr.mxu0 %v2313
    %3214 = vmatpush1.msra.mxu0 %v2312
    %3215 = vmatprep.subr.mxu0 %v2317
    %3216 = vmatpush1.msra.mxu0 %v2316
    %3217 = vmatprep.subr.mxu0 %v2321
    %3218 = vmatpush1.msra.mxu0 %v2320
    %3219 = vmatprep.subr.mxu0 %v2325
    %3220 = vmatpush1.msra.mxu0 %v2324
    %3221 = vmatprep.subr.mxu0 %v2329
    %3222 = vmatpush1.msra.mxu0 %v2328
    %3223 = vmatprep.subr.mxu0 %v2333
    %3224 = vmatpush1.msra.mxu0 %v2332
    %3225 = vmatprep.subr.mxu0 %v2337
    %3226 = vmatpush1.msra.mxu0 %v2336
    %3227 = vmatprep.subr.mxu0 %v2341
    %3228 = vmatpush1.msra.mxu0 %v2340
    %3229 = vmatprep.subr.mxu0 %v2345
    %3230 = vmatpush1.msra.mxu0 %v2344
    %3231 = vmatprep.subr.mxu0 %v2349
    %3232 = vmatpush1.msra.mxu0 %v2348
    %3233 = vmatprep.subr.mxu0 0.0
    %3234 = vmatpush1.msra.mxu0 0.0
    %3235 = vmatprep.subr.mxu0 0.0
    %3236 = vmatpush1.msra.mxu0 0.0
    %3237 = vmatprep.subr.mxu0 0.0
    %3238 = vmatpush1.msra.mxu0 0.0
    %3239 = vmatprep.subr.mxu0 0.0
    %3240 = vmatpush1.msra.mxu0 0.0
    %3241 = vmatprep.subr.mxu0 0.0
    %3242 = vmatpush1.msra.mxu0 0.0
    %3243 = vmatprep.subr.mxu0 0.0
    %3244 = vmatpush1.msra.mxu0 0.0
    %3245 = vmatprep.subr.mxu0 0.0
    %3246 = vmatpush1.msra.mxu0 0.0
    %3247 = vmatprep.subr.mxu0 0.0
    %3248 = vmatpush1.msra.mxu0 0.0
    %3249 = vmatprep.subr.mxu0 0.0
    %3250 = vmatpush1.msra.mxu0 0.0
    %3251 = vmatprep.subr.mxu0 0.0
    %3252 = vmatpush1.msra.mxu0 0.0
    %3253 = vmatprep.subr.mxu0 0.0
    %3254 = vmatpush1.msra.mxu0 0.0
    %3255 = vmatprep.subr.mxu0 0.0
    %3256 = vmatpush1.msra.mxu0 0.0
    %3257 = vmatprep.subr.mxu0 0.0
    %3258 = vmatpush1.msra.mxu0 0.0
    %3259 = vmatprep.subr.mxu0 0.0
    %3260 = vmatpush1.msra.mxu0 0.0
    %3261 = vmatprep.subr.mxu0 0.0
    %3262 = vmatpush1.msra.mxu0 0.0
    %3263 = vmatprep.subr.mxu0 0.0
    %3264 = vmatpush1.msra.mxu0 0.0
    %3265 = vmatprep.mubr.f32.mxu0 0.0
    %3266 = vmatmul.mubr.f32.gmra.mrb[0].mxu0 %v3129
    %v3267 = vpop.f32.mrb[0].mxu0
    %v3268 = vadd.f32 0.0, %v3267
    %v3269 = vpop.f32.mrb[0].mxu0
    %v3270 = vadd.f32 0.0, %v3269
    %3271 = vdwg.mxu0
    %v3272 = vadd.f32 %v2153, %v3197
    %v3273 = vadd.f32 %v2155, %v3199
    %v3274 = vadd.f32 %v2258, %v3268
    %v3275 = vadd.f32 %v2260, %v3270
    %v3276 = vxor.u32 %v3272, 2147483648
    %v3277 = vxor.u32 %v3273, 2147483648
    %v3278 = vxor.u32 %v3274, 2147483648
    %v3279 = vxor.u32 %v3275, 2147483648
    %v3280 = vmul.f32 %v3276, 1.442695
    %v3281 = vpow.pop %v3280
    %v3282 = vmul.f32 %v3277, 1.442695
    %v3283 = vpow.pop %v3282
    %v3284 = vmul.f32 %v3278, 1.442695
    %v3285 = vpow.pop %v3284
    %v3286 = vmul.f32 %v3279, 1.442695
    %v3287 = vpow.pop %v3286
    %v3288 = vadd.f32 %v3281, 1.0
    %v3289 = vadd.f32 %v3283, 1.0
    %v3290 = vadd.f32 %v3285, 1.0
    %v3291 = vadd.f32 %v3287, 1.0
    %v3292 = vrcp.pop %v3288
    %v3293 = vmul.f32 1.0, %v3292
    %v3294 = vrcp.pop %v3289
    %v3295 = vmul.f32 1.0, %v3294
    %v3296 = vrcp.pop %v3290
    %v3297 = vmul.f32 1.0, %v3296
    %v3298 = vrcp.pop %v3291
    %v3299 = vmul.f32 1.0, %v3298
    %v3300 = vtanh.pop %v3273
    %v3301 = vtanh.pop %v3275
    %v3302 = vmul.f32 %v3293, %v3113
    %v3303 = vmul.f32 %v3293, %v3300
    %3305 = vrot.lane.b32.xlu0 %v3303, 64
    %v3306 = vpop.permute.xlu0 %3305
    %v3308 = vadd.f32 %v3302, %v3306
    %v3309 = vmul.f32 %v3297, %v3120
    %v3310 = vmul.f32 %v3297, %v3301
    %3312 = vrot.lane.b32.xlu0 %v3310, 64
    %v3313 = vpop.permute.xlu0 %3312
    %v3315 = vadd.f32 %v3309, %v3313
    %v3316 = vtanh.pop %v3308
    %v3317 = vmul.f32 %v3295, %v3316
    %v3318 = vtanh.pop %v3315
    %v3319 = vmul.f32 %v3299, %v3318
    %3321 = vrot.lane.b32.xlu0 %v3317, 64
    %v3322 = vpop.permute.xlu0 %3321
    %v3324 = vsel %vm587, %v3322, %v3319
    %3325 = vmatprep.subr.mxu0 %v2287
    %3326 = vmatpush1.msra.mxu0 %v2286
    %3327 = vmatprep.subr.mxu0 %v2291
    %3328 = vmatpush1.msra.mxu0 %v2290
    %3329 = vmatprep.subr.mxu0 %v2295
    %3330 = vmatpush1.msra.mxu0 %v2294
    %3331 = vmatprep.subr.mxu0 %v2299
    %3332 = vmatpush1.msra.mxu0 %v2298
    %3333 = vmatprep.subr.mxu0 %v2303
    %3334 = vmatpush1.msra.mxu0 %v2302
    %3335 = vmatprep.subr.mxu0 %v2307
    %3336 = vmatpush1.msra.mxu0 %v2306
    %3337 = vmatprep.subr.mxu0 %v2311
    %3338 = vmatpush1.msra.mxu0 %v2310
    %3339 = vmatprep.subr.mxu0 %v2315
    %3340 = vmatpush1.msra.mxu0 %v2314
    %3341 = vmatprep.subr.mxu0 %v2319
    %3342 = vmatpush1.msra.mxu0 %v2318
    %3343 = vmatprep.subr.mxu0 %v2323
    %3344 = vmatpush1.msra.mxu0 %v2322
    %3345 = vmatprep.subr.mxu0 %v2327
    %3346 = vmatpush1.msra.mxu0 %v2326
    %3347 = vmatprep.subr.mxu0 %v2331
    %3348 = vmatpush1.msra.mxu0 %v2330
    %3349 = vmatprep.subr.mxu0 %v2335
    %3350 = vmatpush1.msra.mxu0 %v2334
    %3351 = vmatprep.subr.mxu0 %v2339
    %3352 = vmatpush1.msra.mxu0 %v2338
    %3353 = vmatprep.subr.mxu0 %v2343
    %3354 = vmatpush1.msra.mxu0 %v2342
    %3355 = vmatprep.subr.mxu0 %v2347
    %3356 = vmatpush1.msra.mxu0 %v2346
    %3357 = vmatprep.subr.mxu0 0.0
    %3358 = vmatpush1.msra.mxu0 0.0
    %3359 = vmatprep.subr.mxu0 0.0
    %3360 = vmatpush1.msra.mxu0 0.0
    %3361 = vmatprep.subr.mxu0 0.0
    %3362 = vmatpush1.msra.mxu0 0.0
    %3363 = vmatprep.subr.mxu0 0.0
    %3364 = vmatpush1.msra.mxu0 0.0
    %3365 = vmatprep.subr.mxu0 0.0
    %3366 = vmatpush1.msra.mxu0 0.0
    %3367 = vmatprep.subr.mxu0 0.0
    %3368 = vmatpush1.msra.mxu0 0.0
    %3369 = vmatprep.subr.mxu0 0.0
    %3370 = vmatpush1.msra.mxu0 0.0
    %3371 = vmatprep.subr.mxu0 0.0
    %3372 = vmatpush1.msra.mxu0 0.0
    %3373 = vmatprep.subr.mxu0 0.0
    %3374 = vmatpush1.msra.mxu0 0.0
    %3375 = vmatprep.subr.mxu0 0.0
    %3376 = vmatpush1.msra.mxu0 0.0
    %3377 = vmatprep.subr.mxu0 0.0
    %3378 = vmatpush1.msra.mxu0 0.0
    %3379 = vmatprep.subr.mxu0 0.0
    %3380 = vmatpush1.msra.mxu0 0.0
    %3381 = vmatprep.subr.mxu0 0.0
    %3382 = vmatpush1.msra.mxu0 0.0
    %3383 = vmatprep.subr.mxu0 0.0
    %3384 = vmatpush1.msra.mxu0 0.0
    %3385 = vmatprep.subr.mxu0 0.0
    %3386 = vmatpush1.msra.mxu0 0.0
    %3387 = vmatprep.subr.mxu0 0.0
    %3388 = vmatpush1.msra.mxu0 0.0
    %3389 = vmatprep.mubr.f32.mxu0 0.0
    %3390 = vmatmul.mubr.f32.gmra.mrb[0].mxu0 %v3324
    %v3391 = vpop.f32.mrb[0].mxu0
    %v3392 = vadd.f32 0.0, %v3391
    %v3393 = vpop.f32.mrb[0].mxu0
    %v3394 = vadd.f32 0.0, %v3393
    %3395 = vdwg.mxu0
    %3396 = vmatprep.subr.mxu0 %v2289
    %3397 = vmatpush1.msra.mxu0 %v2288
    %3398 = vmatprep.subr.mxu0 %v2293
    %3399 = vmatpush1.msra.mxu0 %v2292
    %3400 = vmatprep.subr.mxu0 %v2297
    %3401 = vmatpush1.msra.mxu0 %v2296
    %3402 = vmatprep.subr.mxu0 %v2301
    %3403 = vmatpush1.msra.mxu0 %v2300
    %3404 = vmatprep.subr.mxu0 %v2305
    %3405 = vmatpush1.msra.mxu0 %v2304
    %3406 = vmatprep.subr.mxu0 %v2309
    %3407 = vmatpush1.msra.mxu0 %v2308
    %3408 = vmatprep.subr.mxu0 %v2313
    %3409 = vmatpush1.msra.mxu0 %v2312
    %3410 = vmatprep.subr.mxu0 %v2317
    %3411 = vmatpush1.msra.mxu0 %v2316
    %3412 = vmatprep.subr.mxu0 %v2321
    %3413 = vmatpush1.msra.mxu0 %v2320
    %3414 = vmatprep.subr.mxu0 %v2325
    %3415 = vmatpush1.msra.mxu0 %v2324
    %3416 = vmatprep.subr.mxu0 %v2329
    %3417 = vmatpush1.msra.mxu0 %v2328
    %3418 = vmatprep.subr.mxu0 %v2333
    %3419 = vmatpush1.msra.mxu0 %v2332
    %3420 = vmatprep.subr.mxu0 %v2337
    %3421 = vmatpush1.msra.mxu0 %v2336
    %3422 = vmatprep.subr.mxu0 %v2341
    %3423 = vmatpush1.msra.mxu0 %v2340
    %3424 = vmatprep.subr.mxu0 %v2345
    %3425 = vmatpush1.msra.mxu0 %v2344
    %3426 = vmatprep.subr.mxu0 %v2349
    %3427 = vmatpush1.msra.mxu0 %v2348
    %3428 = vmatprep.subr.mxu0 0.0
    %3429 = vmatpush1.msra.mxu0 0.0
    %3430 = vmatprep.subr.mxu0 0.0
    %3431 = vmatpush1.msra.mxu0 0.0
    %3432 = vmatprep.subr.mxu0 0.0
    %3433 = vmatpush1.msra.mxu0 0.0
    %3434 = vmatprep.subr.mxu0 0.0
    %3435 = vmatpush1.msra.mxu0 0.0
    %3436 = vmatprep.subr.mxu0 0.0
    %3437 = vmatpush1.msra.mxu0 0.0
    %3438 = vmatprep.subr.mxu0 0.0
    %3439 = vmatpush1.msra.mxu0 0.0
    %3440 = vmatprep.subr.mxu0 0.0
    %3441 = vmatpush1.msra.mxu0 0.0
    %3442 = vmatprep.subr.mxu0 0.0
    %3443 = vmatpush1.msra.mxu0 0.0
    %3444 = vmatprep.subr.mxu0 0.0
    %3445 = vmatpush1.msra.mxu0 0.0
    %3446 = vmatprep.subr.mxu0 0.0
    %3447 = vmatpush1.msra.mxu0 0.0
    %3448 = vmatprep.subr.mxu0 0.0
    %3449 = vmatpush1.msra.mxu0 0.0
    %3450 = vmatprep.subr.mxu0 0.0
    %3451 = vmatpush1.msra.mxu0 0.0
    %3452 = vmatprep.subr.mxu0 0.0
    %3453 = vmatpush1.msra.mxu0 0.0
    %3454 = vmatprep.subr.mxu0 0.0
    %3455 = vmatpush1.msra.mxu0 0.0
    %3456 = vmatprep.subr.mxu0 0.0
    %3457 = vmatpush1.msra.mxu0 0.0
    %3458 = vmatprep.subr.mxu0 0.0
    %3459 = vmatpush1.msra.mxu0 0.0
    %3460 = vmatprep.mubr.f32.mxu0 0.0
    %3461 = vmatmul.mubr.f32.gmra.mrb[0].mxu0 %v3324
    %v3462 = vpop.f32.mrb[0].mxu0
    %v3463 = vadd.f32 0.0, %v3462
    %v3464 = vpop.f32.mrb[0].mxu0
    %v3465 = vadd.f32 0.0, %v3464
    %3466 = vdwg.mxu0
    %v3467 = vadd.f32 %v2159, %v3392
    %v3468 = vadd.f32 %v2161, %v3394
    %v3469 = vadd.f32 %v2252, %v3463
    %v3470 = vadd.f32 %v2254, %v3465
    %v3471 = vxor.u32 %v3467, 2147483648
    %v3472 = vxor.u32 %v3468, 2147483648
    %v3473 = vxor.u32 %v3469, 2147483648
    %v3474 = vxor.u32 %v3470, 2147483648
    %v3475 = vmul.f32 %v3471, 1.442695
    %v3476 = vpow.pop %v3475
    %v3477 = vmul.f32 %v3472, 1.442695
    %v3478 = vpow.pop %v3477
    %v3479 = vmul.f32 %v3473, 1.442695
    %v3480 = vpow.pop %v3479
    %v3481 = vmul.f32 %v3474, 1.442695
    %v3482 = vpow.pop %v3481
    %v3483 = vadd.f32 %v3476, 1.0
    %v3484 = vadd.f32 %v3478, 1.0
    %v3485 = vadd.f32 %v3480, 1.0
    %v3486 = vadd.f32 %v3482, 1.0
    %v3487 = vrcp.pop %v3483
    %v3488 = vmul.f32 1.0, %v3487
    %v3489 = vrcp.pop %v3484
    %v3490 = vmul.f32 1.0, %v3489
    %v3491 = vrcp.pop %v3485
    %v3492 = vmul.f32 1.0, %v3491
    %v3493 = vrcp.pop %v3486
    %v3494 = vmul.f32 1.0, %v3493
    %v3495 = vtanh.pop %v3468
    %v3496 = vtanh.pop %v3470
    %v3497 = vmul.f32 %v3488, %v3308
    %v3498 = vmul.f32 %v3488, %v3495
    %3500 = vrot.lane.b32.xlu0 %v3498, 64
    %v3501 = vpop.permute.xlu0 %3500
    %v3503 = vadd.f32 %v3497, %v3501
    %v3504 = vmul.f32 %v3492, %v3315
    %v3505 = vmul.f32 %v3492, %v3496
    %3507 = vrot.lane.b32.xlu0 %v3505, 64
    %v3508 = vpop.permute.xlu0 %3507
    %v3510 = vadd.f32 %v3504, %v3508
    %v3511 = vtanh.pop %v3503
    %v3512 = vmul.f32 %v3490, %v3511
    %v3513 = vtanh.pop %v3510
    %v3514 = vmul.f32 %v3494, %v3513
    %3516 = vrot.lane.b32.xlu0 %v3512, 64
    %v3517 = vpop.permute.xlu0 %3516
    %v3519 = vsel %vm587, %v3517, %v3514
    %3520 = vmatprep.subr.mxu0 %v2287
    %3521 = vmatpush1.msra.mxu0 %v2286
    %3522 = vmatprep.subr.mxu0 %v2291
    %3523 = vmatpush1.msra.mxu0 %v2290
    %3524 = vmatprep.subr.mxu0 %v2295
    %3525 = vmatpush1.msra.mxu0 %v2294
    %3526 = vmatprep.subr.mxu0 %v2299
    %3527 = vmatpush1.msra.mxu0 %v2298
    %3528 = vmatprep.subr.mxu0 %v2303
    %3529 = vmatpush1.msra.mxu0 %v2302
    %3530 = vmatprep.subr.mxu0 %v2307
    %3531 = vmatpush1.msra.mxu0 %v2306
    %3532 = vmatprep.subr.mxu0 %v2311
    %3533 = vmatpush1.msra.mxu0 %v2310
    %3534 = vmatprep.subr.mxu0 %v2315
    %3535 = vmatpush1.msra.mxu0 %v2314
    %3536 = vmatprep.subr.mxu0 %v2319
    %3537 = vmatpush1.msra.mxu0 %v2318
    %3538 = vmatprep.subr.mxu0 %v2323
    %3539 = vmatpush1.msra.mxu0 %v2322
    %3540 = vmatprep.subr.mxu0 %v2327
    %3541 = vmatpush1.msra.mxu0 %v2326
    %3542 = vmatprep.subr.mxu0 %v2331
    %3543 = vmatpush1.msra.mxu0 %v2330
    %3544 = vmatprep.subr.mxu0 %v2335
    %3545 = vmatpush1.msra.mxu0 %v2334
    %3546 = vmatprep.subr.mxu0 %v2339
    %3547 = vmatpush1.msra.mxu0 %v2338
    %3548 = vmatprep.subr.mxu0 %v2343
    %3549 = vmatpush1.msra.mxu0 %v2342
    %3550 = vmatprep.subr.mxu0 %v2347
    %3551 = vmatpush1.msra.mxu0 %v2346
    %3552 = vmatprep.subr.mxu0 0.0
    %3553 = vmatpush1.msra.mxu0 0.0
    %3554 = vmatprep.subr.mxu0 0.0
    %3555 = vmatpush1.msra.mxu0 0.0
    %3556 = vmatprep.subr.mxu0 0.0
    %3557 = vmatpush1.msra.mxu0 0.0
    %3558 = vmatprep.subr.mxu0 0.0
    %3559 = vmatpush1.msra.mxu0 0.0
    %3560 = vmatprep.subr.mxu0 0.0
    %3561 = vmatpush1.msra.mxu0 0.0
    %3562 = vmatprep.subr.mxu0 0.0
    %3563 = vmatpush1.msra.mxu0 0.0
    %3564 = vmatprep.subr.mxu0 0.0
    %3565 = vmatpush1.msra.mxu0 0.0
    %3566 = vmatprep.subr.mxu0 0.0
    %3567 = vmatpush1.msra.mxu0 0.0
    %3568 = vmatprep.subr.mxu0 0.0
    %3569 = vmatpush1.msra.mxu0 0.0
    %3570 = vmatprep.subr.mxu0 0.0
    %3571 = vmatpush1.msra.mxu0 0.0
    %3572 = vmatprep.subr.mxu0 0.0
    %3573 = vmatpush1.msra.mxu0 0.0
    %3574 = vmatprep.subr.mxu0 0.0
    %3575 = vmatpush1.msra.mxu0 0.0
    %3576 = vmatprep.subr.mxu0 0.0
    %3577 = vmatpush1.msra.mxu0 0.0
    %3578 = vmatprep.subr.mxu0 0.0
    %3579 = vmatpush1.msra.mxu0 0.0
    %3580 = vmatprep.subr.mxu0 0.0
    %3581 = vmatpush1.msra.mxu0 0.0
    %3582 = vmatprep.subr.mxu0 0.0
    %3583 = vmatpush1.msra.mxu0 0.0
    %3584 = vmatprep.mubr.f32.mxu0 0.0
    %3585 = vmatmul.mubr.f32.gmra.mrb[0].mxu0 %v3519
    %v3586 = vpop.f32.mrb[0].mxu0
    %v3587 = vadd.f32 0.0, %v3586
    %v3588 = vpop.f32.mrb[0].mxu0
    %v3589 = vadd.f32 0.0, %v3588
    %3590 = vdwg.mxu0
    %3591 = vmatprep.subr.mxu0 %v2289
    %3592 = vmatpush1.msra.mxu0 %v2288
    %3593 = vmatprep.subr.mxu0 %v2293
    %3594 = vmatpush1.msra.mxu0 %v2292
    %3595 = vmatprep.subr.mxu0 %v2297
    %3596 = vmatpush1.msra.mxu0 %v2296
    %3597 = vmatprep.subr.mxu0 %v2301
    %3598 = vmatpush1.msra.mxu0 %v2300
    %3599 = vmatprep.subr.mxu0 %v2305
    %3600 = vmatpush1.msra.mxu0 %v2304
    %3601 = vmatprep.subr.mxu0 %v2309
    %3602 = vmatpush1.msra.mxu0 %v2308
    %3603 = vmatprep.subr.mxu0 %v2313
    %3604 = vmatpush1.msra.mxu0 %v2312
    %3605 = vmatprep.subr.mxu0 %v2317
    %3606 = vmatpush1.msra.mxu0 %v2316
    %3607 = vmatprep.subr.mxu0 %v2321
    %3608 = vmatpush1.msra.mxu0 %v2320
    %3609 = vmatprep.subr.mxu0 %v2325
    %3610 = vmatpush1.msra.mxu0 %v2324
    %3611 = vmatprep.subr.mxu0 %v2329
    %3612 = vmatpush1.msra.mxu0 %v2328
    %3613 = vmatprep.subr.mxu0 %v2333
    %3614 = vmatpush1.msra.mxu0 %v2332
    %3615 = vmatprep.subr.mxu0 %v2337
    %3616 = vmatpush1.msra.mxu0 %v2336
    %3617 = vmatprep.subr.mxu0 %v2341
    %3618 = vmatpush1.msra.mxu0 %v2340
    %3619 = vmatprep.subr.mxu0 %v2345
    %3620 = vmatpush1.msra.mxu0 %v2344
    %3621 = vmatprep.subr.mxu0 %v2349
    %3622 = vmatpush1.msra.mxu0 %v2348
    %3623 = vmatprep.subr.mxu0 0.0
    %3624 = vmatpush1.msra.mxu0 0.0
    %3625 = vmatprep.subr.mxu0 0.0
    %3626 = vmatpush1.msra.mxu0 0.0
    %3627 = vmatprep.subr.mxu0 0.0
    %3628 = vmatpush1.msra.mxu0 0.0
    %3629 = vmatprep.subr.mxu0 0.0
    %3630 = vmatpush1.msra.mxu0 0.0
    %3631 = vmatprep.subr.mxu0 0.0
    %3632 = vmatpush1.msra.mxu0 0.0
    %3633 = vmatprep.subr.mxu0 0.0
    %3634 = vmatpush1.msra.mxu0 0.0
    %3635 = vmatprep.subr.mxu0 0.0
    %3636 = vmatpush1.msra.mxu0 0.0
    %3637 = vmatprep.subr.mxu0 0.0
    %3638 = vmatpush1.msra.mxu0 0.0
    %3639 = vmatprep.subr.mxu0 0.0
    %3640 = vmatpush1.msra.mxu0 0.0
    %3641 = vmatprep.subr.mxu0 0.0
    %3642 = vmatpush1.msra.mxu0 0.0
    %3643 = vmatprep.subr.mxu0 0.0
    %3644 = vmatpush1.msra.mxu0 0.0
    %3645 = vmatprep.subr.mxu0 0.0
    %3646 = vmatpush1.msra.mxu0 0.0
    %3647 = vmatprep.subr.mxu0 0.0
    %3648 = vmatpush1.msra.mxu0 0.0
    %3649 = vmatprep.subr.mxu0 0.0
    %3650 = vmatpush1.msra.mxu0 0.0
    %3651 = vmatprep.subr.mxu0 0.0
    %3652 = vmatpush1.msra.mxu0 0.0
    %3653 = vmatprep.subr.mxu0 0.0
    %3654 = vmatpush1.msra.mxu0 0.0
    %3655 = vmatprep.mubr.f32.mxu0 0.0
    %3656 = vmatmul.mubr.f32.gmra.mrb[0].mxu0 %v3519
    %v3657 = vpop.f32.mrb[0].mxu0
    %v3658 = vadd.f32 0.0, %v3657
    %v3659 = vpop.f32.mrb[0].mxu0
    %v3660 = vadd.f32 0.0, %v3659
    %3661 = vdwg.mxu0
    %v3662 = vadd.f32 %v2165, %v3587
    %v3663 = vadd.f32 %v2167, %v3589
    %v3664 = vadd.f32 %v2246, %v3658
    %v3665 = vadd.f32 %v2248, %v3660
    %v3666 = vxor.u32 %v3662, 2147483648
    %v3667 = vxor.u32 %v3663, 2147483648
    %v3668 = vxor.u32 %v3664, 2147483648
    %v3669 = vxor.u32 %v3665, 2147483648
    %v3670 = vmul.f32 %v3666, 1.442695
    %v3671 = vpow.pop %v3670
    %v3672 = vmul.f32 %v3667, 1.442695
    %v3673 = vpow.pop %v3672
    %v3674 = vmul.f32 %v3668, 1.442695
    %v3675 = vpow.pop %v3674
    %v3676 = vmul.f32 %v3669, 1.442695
    %v3677 = vpow.pop %v3676
    %v3678 = vadd.f32 %v3671, 1.0
    %v3679 = vadd.f32 %v3673, 1.0
    %v3680 = vadd.f32 %v3675, 1.0
    %v3681 = vadd.f32 %v3677, 1.0
    %v3682 = vrcp.pop %v3678
    %v3683 = vmul.f32 1.0, %v3682
    %v3684 = vrcp.pop %v3679
    %v3685 = vmul.f32 1.0, %v3684
    %v3686 = vrcp.pop %v3680
    %v3687 = vmul.f32 1.0, %v3686
    %v3688 = vrcp.pop %v3681
    %v3689 = vmul.f32 1.0, %v3688
    %v3690 = vtanh.pop %v3663
    %v3691 = vtanh.pop %v3665
    %v3692 = vmul.f32 %v3683, %v3503
    %v3693 = vmul.f32 %v3683, %v3690
    %3695 = vrot.lane.b32.xlu0 %v3693, 64
    %v3696 = vpop.permute.xlu0 %3695
    %v3698 = vadd.f32 %v3692, %v3696
    %v3699 = vmul.f32 %v3687, %v3510
    %v3700 = vmul.f32 %v3687, %v3691
    %3702 = vrot.lane.b32.xlu0 %v3700, 64
    %v3703 = vpop.permute.xlu0 %3702
    %v3705 = vadd.f32 %v3699, %v3703
    %v3706 = vtanh.pop %v3698
    %v3707 = vmul.f32 %v3685, %v3706
    %v3708 = vtanh.pop %v3705
    %v3709 = vmul.f32 %v3689, %v3708
    %3711 = vrot.lane.b32.xlu0 %v3707, 64
    %v3712 = vpop.permute.xlu0 %3711
    %v3714 = vsel %vm587, %v3712, %v3709
    %3715 = vmatprep.subr.mxu0 %v2289
    %3716 = vmatpush1.msra.mxu0 %v2288
    %3717 = vmatprep.subr.mxu0 %v2293
    %3718 = vmatpush1.msra.mxu0 %v2292
    %3719 = vmatprep.subr.mxu0 %v2297
    %3720 = vmatpush1.msra.mxu0 %v2296
    %3721 = vmatprep.subr.mxu0 %v2301
    %3722 = vmatpush1.msra.mxu0 %v2300
    %3723 = vmatprep.subr.mxu0 %v2305
    %3724 = vmatpush1.msra.mxu0 %v2304
    %3725 = vmatprep.subr.mxu0 %v2309
    %3726 = vmatpush1.msra.mxu0 %v2308
    %3727 = vmatprep.subr.mxu0 %v2313
    %3728 = vmatpush1.msra.mxu0 %v2312
    %3729 = vmatprep.subr.mxu0 %v2317
    %3730 = vmatpush1.msra.mxu0 %v2316
    %3731 = vmatprep.subr.mxu0 %v2321
    %3732 = vmatpush1.msra.mxu0 %v2320
    %3733 = vmatprep.subr.mxu0 %v2325
    %3734 = vmatpush1.msra.mxu0 %v2324
    %3735 = vmatprep.subr.mxu0 %v2329
    %3736 = vmatpush1.msra.mxu0 %v2328
    %3737 = vmatprep.subr.mxu0 %v2333
    %3738 = vmatpush1.msra.mxu0 %v2332
    %3739 = vmatprep.subr.mxu0 %v2337
    %3740 = vmatpush1.msra.mxu0 %v2336
    %3741 = vmatprep.subr.mxu0 %v2341
    %3742 = vmatpush1.msra.mxu0 %v2340
    %3743 = vmatprep.subr.mxu0 %v2345
    %3744 = vmatpush1.msra.mxu0 %v2344
    %3745 = vmatprep.subr.mxu0 %v2349
    %3746 = vmatpush1.msra.mxu0 %v2348
    %3747 = vmatprep.subr.mxu0 0.0
    %3748 = vmatpush1.msra.mxu0 0.0
    %3749 = vmatprep.subr.mxu0 0.0
    %3750 = vmatpush1.msra.mxu0 0.0
    %3751 = vmatprep.subr.mxu0 0.0
    %3752 = vmatpush1.msra.mxu0 0.0
    %3753 = vmatprep.subr.mxu0 0.0
    %3754 = vmatpush1.msra.mxu0 0.0
    %3755 = vmatprep.subr.mxu0 0.0
    %3756 = vmatpush1.msra.mxu0 0.0
    %3757 = vmatprep.subr.mxu0 0.0
    %3758 = vmatpush1.msra.mxu0 0.0
    %3759 = vmatprep.subr.mxu0 0.0
    %3760 = vmatpush1.msra.mxu0 0.0
    %3761 = vmatprep.subr.mxu0 0.0
    %3762 = vmatpush1.msra.mxu0 0.0
    %3763 = vmatprep.subr.mxu0 0.0
    %3764 = vmatpush1.msra.mxu0 0.0
    %3765 = vmatprep.subr.mxu0 0.0
    %3766 = vmatpush1.msra.mxu0 0.0
    %3767 = vmatprep.subr.mxu0 0.0
    %3768 = vmatpush1.msra.mxu0 0.0
    %3769 = vmatprep.subr.mxu0 0.0
    %3770 = vmatpush1.msra.mxu0 0.0
    %3771 = vmatprep.subr.mxu0 0.0
    %3772 = vmatpush1.msra.mxu0 0.0
    %3773 = vmatprep.subr.mxu0 0.0
    %3774 = vmatpush1.msra.mxu0 0.0
    %3775 = vmatprep.subr.mxu0 0.0
    %3776 = vmatpush1.msra.mxu0 0.0
    %3777 = vmatprep.subr.mxu0 0.0
    %3778 = vmatpush1.msra.mxu0 0.0
    %3779 = vmatprep.mubr.f32.mxu0 0.0
    %3780 = vmatmul.mubr.f32.gmra.mrb[0].mxu0 %v3714
    %v3781 = vpop.f32.mrb[0].mxu0
    %v3782 = vadd.f32 0.0, %v3781
    %v3783 = vpop.f32.mrb[0].mxu0
    %v3784 = vadd.f32 0.0, %v3783
    %3785 = vdwg.mxu0
    %v3786 = vadd.f32 %v2240, %v3782
    %v3787 = vadd.f32 %v2242, %v3784
    %v3788 = vxor.u32 %v3786, 2147483648
    %v3789 = vxor.u32 %v3787, 2147483648
    %v3790 = vmul.f32 %v3788, 1.442695
    %v3791 = vpow.pop %v3790
    %v3792 = vmul.f32 %v3789, 1.442695
    %v3793 = vpow.pop %v3792
    %v3794 = vadd.f32 %v3791, 1.0
    %v3795 = vadd.f32 %v3793, 1.0
    %v3796 = vrcp.pop %v3794
    %v3797 = vmul.f32 1.0, %v3796
    %v3798 = vrcp.pop %v3795
    %v3799 = vmul.f32 1.0, %v3798
    %v3800 = vtanh.pop %v3787
    %v3801 = vmul.f32 %v3797, %v3705
    %v3802 = vmul.f32 %v3797, %v3800
    %3804 = vrot.lane.b32.xlu0 %v3802, 64
    %v3805 = vpop.permute.xlu0 %3804
    %v3807 = vadd.f32 %v3801, %v3805
    %v3808 = vtanh.pop %v3807
    %v3809 = vmul.f32 %v3799, %v3808
    %v3810 = vsel %vm587, %v2542, %v3809
    %v3811 = vld [vmem:[%s5] sm:$0xff]
    %v3812 = vld [vmem:[%s5 + $0x8] sm:$0xff]
    %v3813 = vld [vmem:[%s5 + $0x10] sm:$0xff]
    %v3814 = vld [vmem:[%s5 + $0x18] sm:$0xff]
    %v3815 = vld [vmem:[%s5 + $0x20] sm:$0xff]
    %v3816 = vld [vmem:[%s5 + $0x28] sm:$0xff]
    %v3817 = vld [vmem:[%s5 + $0x30] sm:$0xff]
    %v3818 = vld [vmem:[%s5 + $0x38] sm:$0xff]
    %v3819 = vld [vmem:[%s5 + $0x40] sm:$0xff]
    %v3820 = vld [vmem:[%s5 + $0x48] sm:$0xff]
    %v3821 = vld [vmem:[%s5 + $0x50] sm:$0xff]
    %v3822 = vld [vmem:[%s5 + $0x58] sm:$0xff]
    %v3823 = vld [vmem:[%s5 + $0x60] sm:$0xff]
    %v3824 = vld [vmem:[%s5 + $0x68] sm:$0xff]
    %v3825 = vld [vmem:[%s5 + $0x70] sm:$0xff]
    %v3826 = vld [vmem:[%s5 + $0x78] sm:$0xff]
    %v3827 = vld [vmem:[%s5 + $0x80] sm:$0x1]
    %v3828 = vlaneseq
    %v3829 = vshrl.u32 %v3828, 7
    %v3830 = vsub.s32 0, %v3829
    %v3831 = vrot.slane %v3827, %v3830
    %3832 = vmatprep.subr.mxu0 0.0
    %3833 = vmatpush1.msra.mxu0 %v3811
    %3834 = vmatprep.subr.mxu0 0.0
    %3835 = vmatpush1.msra.mxu0 %v3812
    %3836 = vmatprep.subr.mxu0 0.0
    %3837 = vmatpush1.msra.mxu0 %v3813
    %3838 = vmatprep.subr.mxu0 0.0
    %3839 = vmatpush1.msra.mxu0 %v3814
    %3840 = vmatprep.subr.mxu0 0.0
    %3841 = vmatpush1.msra.mxu0 %v3815
    %3842 = vmatprep.subr.mxu0 0.0
    %3843 = vmatpush1.msra.mxu0 %v3816
    %3844 = vmatprep.subr.mxu0 0.0
    %3845 = vmatpush1.msra.mxu0 %v3817
    %3846 = vmatprep.subr.mxu0 0.0
    %3847 = vmatpush1.msra.mxu0 %v3818
    %3848 = vmatprep.subr.mxu0 0.0
    %3849 = vmatpush1.msra.mxu0 %v3819
    %3850 = vmatprep.subr.mxu0 0.0
    %3851 = vmatpush1.msra.mxu0 %v3820
    %3852 = vmatprep.subr.mxu0 0.0
    %3853 = vmatpush1.msra.mxu0 %v3821
    %3854 = vmatprep.subr.mxu0 0.0
    %3855 = vmatpush1.msra.mxu0 %v3822
    %3856 = vmatprep.subr.mxu0 0.0
    %3857 = vmatpush1.msra.mxu0 %v3823
    %3858 = vmatprep.subr.mxu0 0.0
    %3859 = vmatpush1.msra.mxu0 %v3824
    %3860 = vmatprep.subr.mxu0 0.0
    %3861 = vmatpush1.msra.mxu0 %v3825
    %3862 = vmatprep.subr.mxu0 0.0
    %3863 = vmatpush1.msra.mxu0 %v3826
    %3864 = vmatprep.subr.mxu0 0.0
    %3865 = vmatpush1.msra.mxu0 0.0
    %3866 = vmatprep.subr.mxu0 0.0
    %3867 = vmatpush1.msra.mxu0 0.0
    %3868 = vmatprep.subr.mxu0 0.0
    %3869 = vmatpush1.msra.mxu0 0.0
    %3870 = vmatprep.subr.mxu0 0.0
    %3871 = vmatpush1.msra.mxu0 0.0
    %3872 = vmatprep.subr.mxu0 0.0
    %3873 = vmatpush1.msra.mxu0 0.0
    %3874 = vmatprep.subr.mxu0 0.0
    %3875 = vmatpush1.msra.mxu0 0.0
    %3876 = vmatprep.subr.mxu0 0.0
    %3877 = vmatpush1.msra.mxu0 0.0
    %3878 = vmatprep.subr.mxu0 0.0
    %3879 = vmatpush1.msra.mxu0 0.0
    %3880 = vmatprep.subr.mxu0 0.0
    %3881 = vmatpush1.msra.mxu0 0.0
    %3882 = vmatprep.subr.mxu0 0.0
    %3883 = vmatpush1.msra.mxu0 0.0
    %3884 = vmatprep.subr.mxu0 0.0
    %3885 = vmatpush1.msra.mxu0 0.0
    %3886 = vmatprep.subr.mxu0 0.0
    %3887 = vmatpush1.msra.mxu0 0.0
    %3888 = vmatprep.subr.mxu0 0.0
    %3889 = vmatpush1.msra.mxu0 0.0
    %3890 = vmatprep.subr.mxu0 0.0
    %3891 = vmatpush1.msra.mxu0 0.0
    %3892 = vmatprep.subr.mxu0 0.0
    %3893 = vmatpush1.msra.mxu0 0.0
    %3894 = vmatprep.subr.mxu0 0.0
    %3895 = vmatpush1.msra.mxu0 0.0
    %3896 = vmatprep.mubr.f32.mxu0 0.0
    %3897 = vmatmul.mubr.f32.gmra.mrb[0].mxu0 %v3810
    %v3898 = vpop.f32.mrb[0].mxu0
    %v3899 = vadd.f32 %v3831, %v3898
    %v3900 = vpop.f32.mrb[0].mxu0
    %3901 = vdwg.mxu0
    %v3902 = vld [vmem:[%s1] sm:$0xff]
    %v3903 = vld [vmem:[%s1 + $0x8] sm:$0xff]
    %v3904 = vld [vmem:[%s1 + $0x10] sm:$0xff]
    %v3905 = vld [vmem:[%s1 + $0x18] sm:$0xff]
    %v3906 = vld [vmem:[%s1 + $0x20] sm:$0xff]
    %v3907 = vld [vmem:[%s1 + $0x28] sm:$0xff]
    %v3908 = vld [vmem:[%s1 + $0x30] sm:$0xff]
    %v3909 = vld [vmem:[%s1 + $0x38] sm:$0xff]
    %v3910 = vld [vmem:[%s5 + $0x88] sm:$0xff]
    %v3911 = vld [vmem:[%s5 + $0x90] sm:$0xff]
    %v3912 = vld [vmem:[%s5 + $0x98] sm:$0xff]
    %v3913 = vld [vmem:[%s5 + $0xa0] sm:$0xff]
    %v3914 = vld [vmem:[%s5 + $0xa8] sm:$0x1]
    %v3915 = vlaneseq
    %v3916 = vshrl.u32 %v3915, 7
    %v3917 = vsub.s32 0, %v3916
    %v3918 = vrot.slane %v3914, %v3917
    %vm3919 = vcmask 261120
    %v3921 = vsel %vm3919, %v3902, 0
    %v3924 = vsel %vm3919, %v3903, 0
    %v3927 = vsel %vm3919, %v3904, 0
    %v3930 = vsel %vm3919, %v3905, 0
    %v3933 = vsel %vm3919, %v3906, 0
    %v3936 = vsel %vm3919, %v3907, 0
    %v3939 = vsel %vm3919, %v3908, 0
    %v3942 = vsel %vm3919, %v3909, 0
    %3944 = vmatprep.subr.mxu0 0.0
    %3945 = vmatpush1.msra.mxu0 %v3910
    %3946 = vmatprep.subr.mxu0 0.0
    %3947 = vmatpush1.msra.mxu0 %v3911
    %3948 = vmatprep.subr.mxu0 0.0
    %3949 = vmatpush1.msra.mxu0 %v3912
    %3950 = vmatprep.subr.mxu0 0.0
    %3951 = vmatpush1.msra.mxu0 %v3913
    %3952 = vmatprep.subr.mxu0 0.0
    %3953 = vmatpush1.msra.mxu0 0.0
    %3954 = vmatprep.subr.mxu0 0.0
    %3955 = vmatpush1.msra.mxu0 0.0
    %3956 = vmatprep.subr.mxu0 0.0
    %3957 = vmatpush1.msra.mxu0 0.0
    %3958 = vmatprep.subr.mxu0 0.0
    %3959 = vmatpush1.msra.mxu0 0.0
    %3960 = vmatprep.subr.mxu0 0.0
    %3961 = vmatpush1.msra.mxu0 0.0
    %3962 = vmatprep.subr.mxu0 0.0
    %3963 = vmatpush1.msra.mxu0 0.0
    %3964 = vmatprep.subr.mxu0 0.0
    %3965 = vmatpush1.msra.mxu0 0.0
    %3966 = vmatprep.subr.mxu0 0.0
    %3967 = vmatpush1.msra.mxu0 0.0
    %3968 = vmatprep.subr.mxu0 0.0
    %3969 = vmatpush1.msra.mxu0 0.0
    %3970 = vmatprep.subr.mxu0 0.0
    %3971 = vmatpush1.msra.mxu0 0.0
    %3972 = vmatprep.subr.mxu0 0.0
    %3973 = vmatpush1.msra.mxu0 0.0
    %3974 = vmatprep.subr.mxu0 0.0
    %3975 = vmatpush1.msra.mxu0 0.0
    %3976 = vmatprep.subr.mxu0 0.0
    %3977 = vmatpush1.msra.mxu0 0.0
    %3978 = vmatprep.subr.mxu0 0.0
    %3979 = vmatpush1.msra.mxu0 0.0
    %3980 = vmatprep.subr.mxu0 0.0
    %3981 = vmatpush1.msra.mxu0 0.0
    %3982 = vmatprep.subr.mxu0 0.0
    %3983 = vmatpush1.msra.mxu0 0.0
    %3984 = vmatprep.subr.mxu0 0.0
    %3985 = vmatpush1.msra.mxu0 0.0
    %3986 = vmatprep.subr.mxu0 0.0
    %3987 = vmatpush1.msra.mxu0 0.0
    %3988 = vmatprep.subr.mxu0 0.0
    %3989 = vmatpush1.msra.mxu0 0.0
    %3990 = vmatprep.subr.mxu0 0.0
    %3991 = vmatpush1.msra.mxu0 0.0
    %3992 = vmatprep.subr.mxu0 0.0
    %3993 = vmatpush1.msra.mxu0 0.0
    %3994 = vmatprep.subr.mxu0 0.0
    %3995 = vmatpush1.msra.mxu0 0.0
    %3996 = vmatprep.subr.mxu0 0.0
    %3997 = vmatpush1.msra.mxu0 0.0
    %3998 = vmatprep.subr.mxu0 0.0
    %3999 = vmatpush1.msra.mxu0 0.0
    %4000 = vmatprep.subr.mxu0 0.0
    %4001 = vmatpush1.msra.mxu0 0.0
    %4002 = vmatprep.subr.mxu0 0.0
    %4003 = vmatpush1.msra.mxu0 0.0
    %4004 = vmatprep.subr.mxu0 0.0
    %4005 = vmatpush1.msra.mxu0 0.0
    %4006 = vmatprep.subr.mxu0 0.0
    %4007 = vmatpush1.msra.mxu0 0.0
    %4008 = vmatprep.mubr.f32.mxu0 0.0
    %4009 = vmatmul.mubr.f32.gmra.mrb[0].mxu0 %v3921
    %v4010 = vpop.f32.mrb[0].mxu0
    %v4011 = vadd.f32 %v3918, %v4010
    %v4012 = vpop.f32.mrb[0].mxu0
    %4013 = vmatprep.mubr.f32.mxu0 0.0
    %4014 = vmatmul.mubr.f32.gmra.mrb[0].mxu0 %v3924
    %v4015 = vpop.f32.mrb[0].mxu0
    %v4016 = vadd.f32 %v3918, %v4015
    %v4017 = vpop.f32.mrb[0].mxu0
    %4018 = vmatprep.mubr.f32.mxu0 0.0
    %4019 = vmatmul.mubr.f32.gmra.mrb[0].mxu0 %v3927
    %v4020 = vpop.f32.mrb[0].mxu0
    %v4021 = vadd.f32 %v3918, %v4020
    %v4022 = vpop.f32.mrb[0].mxu0
    %4023 = vmatprep.mubr.f32.mxu0 0.0
    %4024 = vmatmul.mubr.f32.gmra.mrb[0].mxu0 %v3930
    %v4025 = vpop.f32.mrb[0].mxu0
    %v4026 = vadd.f32 %v3918, %v4025
    %v4027 = vpop.f32.mrb[0].mxu0
    %4028 = vmatprep.mubr.f32.mxu0 0.0
    %4029 = vmatmul.mubr.f32.gmra.mrb[0].mxu0 %v3933
    %v4030 = vpop.f32.mrb[0].mxu0
    %v4031 = vadd.f32 %v3918, %v4030
    %v4032 = vpop.f32.mrb[0].mxu0
    %4033 = vmatprep.mubr.f32.mxu0 0.0
    %4034 = vmatmul.mubr.f32.gmra.mrb[0].mxu0 %v3936
    %v4035 = vpop.f32.mrb[0].mxu0
    %v4036 = vadd.f32 %v3918, %v4035
    %v4037 = vpop.f32.mrb[0].mxu0
    %4038 = vmatprep.mubr.f32.mxu0 0.0
    %4039 = vmatmul.mubr.f32.gmra.mrb[0].mxu0 %v3939
    %v4040 = vpop.f32.mrb[0].mxu0
    %v4041 = vadd.f32 %v3918, %v4040
    %v4042 = vpop.f32.mrb[0].mxu0
    %4043 = vmatprep.mubr.f32.mxu0 0.0
    %4044 = vmatmul.mubr.f32.gmra.mrb[0].mxu0 %v3942
    %v4045 = vpop.f32.mrb[0].mxu0
    %v4046 = vadd.f32 %v3918, %v4045
    %v4047 = vpop.f32.mrb[0].mxu0
    %4048 = vdwg.mxu0
    %v4049 = vtanh.pop %v4011
    %v4050 = vtanh.pop %v4016
    %v4051 = vtanh.pop %v4021
    %v4052 = vtanh.pop %v4026
    %v4053 = vtanh.pop %v4031
    %v4054 = vtanh.pop %v4036
    %v4055 = vtanh.pop %v4041
    %v4056 = vtanh.pop %v4046
    %v4057 = vld [vmem:[%s2] sm:$0xff]
    %v4058 = vld [vmem:[%s2 + $0x8] sm:$0xff]
    %v4059 = vld [vmem:[%s2 + $0x10] sm:$0xff]
    %v4061 = vsel %vm587, %v4057, 0
    %v4064 = vsel %vm587, %v4058, 0
    %v4067 = vsel %vm587, %v4059, 0
    %4069 = vmatprep.subr.mxu0 0.0
    %4070 = vmatpush1.msra.mxu0 %v4049
    %4071 = vmatprep.subr.mxu0 0.0
    %4072 = vmatpush1.msra.mxu0 %v4050
    %4073 = vmatprep.subr.mxu0 0.0
    %4074 = vmatpush1.msra.mxu0 %v4051
    %4075 = vmatprep.subr.mxu0 0.0
    %4076 = vmatpush1.msra.mxu0 %v4052
    %4077 = vmatprep.subr.mxu0 0.0
    %4078 = vmatpush1.msra.mxu0 %v4053
    %4079 = vmatprep.subr.mxu0 0.0
    %4080 = vmatpush1.msra.mxu0 %v4054
    %4081 = vmatprep.subr.mxu0 0.0
    %4082 = vmatpush1.msra.mxu0 %v4055
    %4083 = vmatprep.subr.mxu0 0.0
    %4084 = vmatpush1.msra.mxu0 %v4056
    %4085 = vmatprep.subr.mxu0 0.0
    %4086 = vmatpush1.msra.mxu0 0.0
    %4087 = vmatprep.subr.mxu0 0.0
    %4088 = vmatpush1.msra.mxu0 0.0
    %4089 = vmatprep.subr.mxu0 0.0
    %4090 = vmatpush1.msra.mxu0 0.0
    %4091 = vmatprep.subr.mxu0 0.0
    %4092 = vmatpush1.msra.mxu0 0.0
    %4093 = vmatprep.subr.mxu0 0.0
    %4094 = vmatpush1.msra.mxu0 0.0
    %4095 = vmatprep.subr.mxu0 0.0
    %4096 = vmatpush1.msra.mxu0 0.0
    %4097 = vmatprep.subr.mxu0 0.0
    %4098 = vmatpush1.msra.mxu0 0.0
    %4099 = vmatprep.subr.mxu0 0.0
    %4100 = vmatpush1.msra.mxu0 0.0
    %4101 = vmatprep.subr.mxu0 0.0
    %4102 = vmatpush1.msra.mxu0 0.0
    %4103 = vmatprep.subr.mxu0 0.0
    %4104 = vmatpush1.msra.mxu0 0.0
    %4105 = vmatprep.subr.mxu0 0.0
    %4106 = vmatpush1.msra.mxu0 0.0
    %4107 = vmatprep.subr.mxu0 0.0
    %4108 = vmatpush1.msra.mxu0 0.0
    %4109 = vmatprep.subr.mxu0 0.0
    %4110 = vmatpush1.msra.mxu0 0.0
    %4111 = vmatprep.subr.mxu0 0.0
    %4112 = vmatpush1.msra.mxu0 0.0
    %4113 = vmatprep.subr.mxu0 0.0
    %4114 = vmatpush1.msra.mxu0 0.0
    %4115 = vmatprep.subr.mxu0 0.0
    %4116 = vmatpush1.msra.mxu0 0.0
    %4117 = vmatprep.subr.mxu0 0.0
    %4118 = vmatpush1.msra.mxu0 0.0
    %4119 = vmatprep.subr.mxu0 0.0
    %4120 = vmatpush1.msra.mxu0 0.0
    %4121 = vmatprep.subr.mxu0 0.0
    %4122 = vmatpush1.msra.mxu0 0.0
    %4123 = vmatprep.subr.mxu0 0.0
    %4124 = vmatpush1.msra.mxu0 0.0
    %4125 = vmatprep.subr.mxu0 0.0
    %4126 = vmatpush1.msra.mxu0 0.0
    %4127 = vmatprep.subr.mxu0 0.0
    %4128 = vmatpush1.msra.mxu0 0.0
    %4129 = vmatprep.subr.mxu0 0.0
    %4130 = vmatpush1.msra.mxu0 0.0
    %4131 = vmatprep.subr.mxu0 0.0
    %4132 = vmatpush1.msra.mxu0 0.0
    %4133 = vmatprep.mubr.f32.mxu0 0.0
    %4134 = vmatmul.mubr.f32.gmra.mrb[0].mxu0 %v4061
    %v4135 = vpop.f32.mrb[0].mxu0
    %v4136 = vadd.f32 0.0, %v4135
    %v4137 = vpop.f32.mrb[0].mxu0
    %4138 = vmatprep.mubr.f32.mxu0 0.0
    %4139 = vmatmul.mubr.f32.gmra.mrb[0].mxu0 %v4064
    %v4140 = vpop.f32.mrb[0].mxu0
    %v4141 = vadd.f32 0.0, %v4140
    %v4142 = vpop.f32.mrb[0].mxu0
    %4143 = vmatprep.mubr.f32.mxu0 0.0
    %4144 = vmatmul.mubr.f32.gmra.mrb[0].mxu0 %v4067
    %v4145 = vpop.f32.mrb[0].mxu0
    %v4146 = vadd.f32 0.0, %v4145
    %v4147 = vpop.f32.mrb[0].mxu0
    %4148 = vdwg.mxu0
    %v4149 = vld [vmem:[%s5 + $0xb0] sm:$0x3f]
    %v4150 = vsel %vm3919, %v4136, 0.0
    %4151 = vadd.xlane.f32.xlu0 %v4150
    %v4152 = vpop.xlane.xlu0 %4151
    %v4153 = vrcp.pop 32.0
    %v4154 = vmul.f32 %v4152, %v4153
    %v4155 = vsub.f32 %v4136, %v4154
    %v4156 = vmul.f32 %v4155, %v4155
    %v4157 = vsel %vm3919, %v4156, 0.0
    %4158 = vadd.xlane.f32.xlu0 %v4157
    %v4159 = vpop.xlane.xlu0 %4158
    %v4160 = vmul.f32 %v4159, %v4153
    %v4161 = vadd.f32 %v4160, 1e-05
    %v4162 = vrsqrt.pop %v4161
    %v4163 = vmul.f32 %v4155, %v4162
    %v4164 = vlaneseq
    %v4165 = vshrl.u32 %v4164, 7
    %v4166 = vsub.s32 0, %v4165
    %v4167 = vrot.slane %v4149, %v4166
    %v4168 = vmul.f32 %v4163, %v4167
    %v4169 = vlaneseq
    %v4170 = vshrl.u32 %v4169, 7
    %v4171 = vsub.s32 1, %v4170
    %v4172 = vrot.slane %v4149, %v4171
    %v4173 = vadd.f32 %v4168, %v4172
    %v4174 = vsel %vm3919, %v4141, 0.0
    %4175 = vadd.xlane.f32.xlu0 %v4174
    %v4176 = vpop.xlane.xlu0 %4175
    %v4177 = vmul.f32 %v4176, %v4153
    %v4178 = vsub.f32 %v4141, %v4177
    %v4179 = vmul.f32 %v4178, %v4178
    %v4180 = vsel %vm3919, %v4179, 0.0
    %4181 = vadd.xlane.f32.xlu0 %v4180
    %v4182 = vpop.xlane.xlu0 %4181
    %v4183 = vmul.f32 %v4182, %v4153
    %v4184 = vadd.f32 %v4183, 1e-05
    %v4185 = vrsqrt.pop %v4184
    %v4186 = vmul.f32 %v4178, %v4185
    %v4187 = vlaneseq
    %v4188 = vshrl.u32 %v4187, 7
    %v4189 = vsub.s32 2, %v4188
    %v4190 = vrot.slane %v4149, %v4189
    %v4191 = vmul.f32 %v4186, %v4190
    %v4192 = vlaneseq
    %v4193 = vshrl.u32 %v4192, 7
    %v4194 = vsub.s32 3, %v4193
    %v4195 = vrot.slane %v4149, %v4194
    %v4196 = vadd.f32 %v4191, %v4195
    %v4197 = vsel %vm3919, %v4146, 0.0
    %4198 = vadd.xlane.f32.xlu0 %v4197
    %v4199 = vpop.xlane.xlu0 %4198
    %v4200 = vmul.f32 %v4199, %v4153
    %v4201 = vsub.f32 %v4146, %v4200
    %v4202 = vmul.f32 %v4201, %v4201
    %v4203 = vsel %vm3919, %v4202, 0.0
    %4204 = vadd.xlane.f32.xlu0 %v4203
    %v4205 = vpop.xlane.xlu0 %4204
    %v4206 = vmul.f32 %v4205, %v4153
    %v4207 = vadd.f32 %v4206, 1e-05
    %v4208 = vrsqrt.pop %v4207
    %v4209 = vmul.f32 %v4201, %v4208
    %v4210 = vlaneseq
    %v4211 = vshrl.u32 %v4210, 7
    %v4212 = vsub.s32 4, %v4211
    %v4213 = vrot.slane %v4149, %v4212
    %v4214 = vmul.f32 %v4209, %v4213
    %v4215 = vlaneseq
    %v4216 = vshrl.u32 %v4215, 7
    %v4217 = vsub.s32 5, %v4216
    %v4218 = vrot.slane %v4149, %v4217
    %v4219 = vadd.f32 %v4214, %v4218
    %4221 = vrot.lane.b32.xlu0 %v4196, 32
    %v4222 = vpop.permute.xlu0 %4221
    %4225 = vrot.lane.b32.xlu0 %v4219, 64
    %v4226 = vpop.permute.xlu0 %4225
    %v4228 = vsel %vm3919, %v4173, %v4222
    %v4229 = vsel %vm587, %v4228, %v4226
    %v4230 = vld [vmem:[%s5 + $0xb8] sm:$0xff]
    %v4231 = vld [vmem:[%s5 + $0xc0] sm:$0xff]
    %v4232 = vld [vmem:[%s5 + $0xc8] sm:$0xff]
    %v4233 = vld [vmem:[%s5 + $0xd0] sm:$0xff]
    %v4234 = vld [vmem:[%s5 + $0xd8] sm:$0xff]
    %v4235 = vld [vmem:[%s5 + $0xe0] sm:$0xff]
    %v4236 = vld [vmem:[%s5 + $0xe8] sm:$0xff]
    %v4237 = vld [vmem:[%s5 + $0xf0] sm:$0xff]
    %v4238 = vld [vmem:[%s5 + $0xf8] sm:$0xff]
    %v4239 = vld [vmem:[%s5 + $0x100] sm:$0xff]
    %v4240 = vld [vmem:[%s5 + $0x108] sm:$0xff]
    %v4241 = vld [vmem:[%s5 + $0x110] sm:$0xff]
    %v4242 = vld [vmem:[%s5 + $0x118] sm:$0x1]
    %v4243 = vlaneseq
    %v4244 = vshrl.u32 %v4243, 7
    %v4245 = vsub.s32 0, %v4244
    %v4246 = vrot.slane %v4242, %v4245
    %vm4247 = vcmask 785408
    %v4249 = vsel %vm4247, %v4229, 0
    %4251 = vmatprep.subr.mxu0 0.0
    %4252 = vmatpush1.msra.mxu0 %v4230
    %4253 = vmatprep.subr.mxu0 0.0
    %4254 = vmatpush1.msra.mxu0 %v4231
    %4255 = vmatprep.subr.mxu0 0.0
    %4256 = vmatpush1.msra.mxu0 %v4232
    %4257 = vmatprep.subr.mxu0 0.0
    %4258 = vmatpush1.msra.mxu0 %v4233
    %4259 = vmatprep.subr.mxu0 0.0
    %4260 = vmatpush1.msra.mxu0 %v4234
    %4261 = vmatprep.subr.mxu0 0.0
    %4262 = vmatpush1.msra.mxu0 %v4235
    %4263 = vmatprep.subr.mxu0 0.0
    %4264 = vmatpush1.msra.mxu0 %v4236
    %4265 = vmatprep.subr.mxu0 0.0
    %4266 = vmatpush1.msra.mxu0 %v4237
    %4267 = vmatprep.subr.mxu0 0.0
    %4268 = vmatpush1.msra.mxu0 %v4238
    %4269 = vmatprep.subr.mxu0 0.0
    %4270 = vmatpush1.msra.mxu0 %v4239
    %4271 = vmatprep.subr.mxu0 0.0
    %4272 = vmatpush1.msra.mxu0 %v4240
    %4273 = vmatprep.subr.mxu0 0.0
    %4274 = vmatpush1.msra.mxu0 %v4241
    %4275 = vmatprep.subr.mxu0 0.0
    %4276 = vmatpush1.msra.mxu0 0.0
    %4277 = vmatprep.subr.mxu0 0.0
    %4278 = vmatpush1.msra.mxu0 0.0
    %4279 = vmatprep.subr.mxu0 0.0
    %4280 = vmatpush1.msra.mxu0 0.0
    %4281 = vmatprep.subr.mxu0 0.0
    %4282 = vmatpush1.msra.mxu0 0.0
    %4283 = vmatprep.subr.mxu0 0.0
    %4284 = vmatpush1.msra.mxu0 0.0
    %4285 = vmatprep.subr.mxu0 0.0
    %4286 = vmatpush1.msra.mxu0 0.0
    %4287 = vmatprep.subr.mxu0 0.0
    %4288 = vmatpush1.msra.mxu0 0.0
    %4289 = vmatprep.subr.mxu0 0.0
    %4290 = vmatpush1.msra.mxu0 0.0
    %4291 = vmatprep.subr.mxu0 0.0
    %4292 = vmatpush1.msra.mxu0 0.0
    %4293 = vmatprep.subr.mxu0 0.0
    %4294 = vmatpush1.msra.mxu0 0.0
    %4295 = vmatprep.subr.mxu0 0.0
    %4296 = vmatpush1.msra.mxu0 0.0
    %4297 = vmatprep.subr.mxu0 0.0
    %4298 = vmatpush1.msra.mxu0 0.0
    %4299 = vmatprep.subr.mxu0 0.0
    %4300 = vmatpush1.msra.mxu0 0.0
    %4301 = vmatprep.subr.mxu0 0.0
    %4302 = vmatpush1.msra.mxu0 0.0
    %4303 = vmatprep.subr.mxu0 0.0
    %4304 = vmatpush1.msra.mxu0 0.0
    %4305 = vmatprep.subr.mxu0 0.0
    %4306 = vmatpush1.msra.mxu0 0.0
    %4307 = vmatprep.subr.mxu0 0.0
    %4308 = vmatpush1.msra.mxu0 0.0
    %4309 = vmatprep.subr.mxu0 0.0
    %4310 = vmatpush1.msra.mxu0 0.0
    %4311 = vmatprep.subr.mxu0 0.0
    %4312 = vmatpush1.msra.mxu0 0.0
    %4313 = vmatprep.subr.mxu0 0.0
    %4314 = vmatpush1.msra.mxu0 0.0
    %4315 = vmatprep.mubr.f32.mxu0 0.0
    %4316 = vmatmul.mubr.f32.gmra.mrb[0].mxu0 %v4249
    %v4317 = vpop.f32.mrb[0].mxu0
    %v4318 = vadd.f32 %v4246, %v4317
    %v4319 = vpop.f32.mrb[0].mxu0
    %4320 = vdwg.mxu0
    %v4321 = vmax.f32 %v4318, 0.0
    %v4322 = vld [vmem:[%s5 + $0x120] sm:$0xff]
    %v4323 = vld [vmem:[%s5 + $0x128] sm:$0xff]
    %v4324 = vld [vmem:[%s5 + $0x130] sm:$0xff]
    %v4325 = vld [vmem:[%s5 + $0x138] sm:$0xff]
    %v4326 = vld [vmem:[%s5 + $0x140] sm:$0xff]
    %v4327 = vld [vmem:[%s5 + $0x148] sm:$0xff]
    %v4328 = vld [vmem:[%s5 + $0x150] sm:$0xff]
    %v4329 = vld [vmem:[%s5 + $0x158] sm:$0xff]
    %v4330 = vld [vmem:[%s5 + $0x160] sm:$0xff]
    %v4331 = vld [vmem:[%s5 + $0x168] sm:$0xff]
    %v4332 = vld [vmem:[%s5 + $0x170] sm:$0xff]
    %v4333 = vld [vmem:[%s5 + $0x178] sm:$0xff]
    %v4334 = vld [vmem:[%s5 + $0x180] sm:$0x1]
    %v4335 = vlaneseq
    %v4336 = vshrl.u32 %v4335, 7
    %v4337 = vsub.s32 0, %v4336
    %v4338 = vrot.slane %v4334, %v4337
    %v4340 = vsel %vm4247, %v4321, 0
    %4342 = vmatprep.subr.mxu0 0.0
    %4343 = vmatpush1.msra.mxu0 %v4322
    %4344 = vmatprep.subr.mxu0 0.0
    %4345 = vmatpush1.msra.mxu0 %v4323
    %4346 = vmatprep.subr.mxu0 0.0
    %4347 = vmatpush1.msra.mxu0 %v4324
    %4348 = vmatprep.subr.mxu0 0.0
    %4349 = vmatpush1.msra.mxu0 %v4325
    %4350 = vmatprep.subr.mxu0 0.0
    %4351 = vmatpush1.msra.mxu0 %v4326
    %4352 = vmatprep.subr.mxu0 0.0
    %4353 = vmatpush1.msra.mxu0 %v4327
    %4354 = vmatprep.subr.mxu0 0.0
    %4355 = vmatpush1.msra.mxu0 %v4328
    %4356 = vmatprep.subr.mxu0 0.0
    %4357 = vmatpush1.msra.mxu0 %v4329
    %4358 = vmatprep.subr.mxu0 0.0
    %4359 = vmatpush1.msra.mxu0 %v4330
    %4360 = vmatprep.subr.mxu0 0.0
    %4361 = vmatpush1.msra.mxu0 %v4331
    %4362 = vmatprep.subr.mxu0 0.0
    %4363 = vmatpush1.msra.mxu0 %v4332
    %4364 = vmatprep.subr.mxu0 0.0
    %4365 = vmatpush1.msra.mxu0 %v4333
    %4366 = vmatprep.subr.mxu0 0.0
    %4367 = vmatpush1.msra.mxu0 0.0
    %4368 = vmatprep.subr.mxu0 0.0
    %4369 = vmatpush1.msra.mxu0 0.0
    %4370 = vmatprep.subr.mxu0 0.0
    %4371 = vmatpush1.msra.mxu0 0.0
    %4372 = vmatprep.subr.mxu0 0.0
    %4373 = vmatpush1.msra.mxu0 0.0
    %4374 = vmatprep.subr.mxu0 0.0
    %4375 = vmatpush1.msra.mxu0 0.0
    %4376 = vmatprep.subr.mxu0 0.0
    %4377 = vmatpush1.msra.mxu0 0.0
    %4378 = vmatprep.subr.mxu0 0.0
    %4379 = vmatpush1.msra.mxu0 0.0
    %4380 = vmatprep.subr.mxu0 0.0
    %4381 = vmatpush1.msra.mxu0 0.0
    %4382 = vmatprep.subr.mxu0 0.0
    %4383 = vmatpush1.msra.mxu0 0.0
    %4384 = vmatprep.subr.mxu0 0.0
    %4385 = vmatpush1.msra.mxu0 0.0
    %4386 = vmatprep.subr.mxu0 0.0
    %4387 = vmatpush1.msra.mxu0 0.0
    %4388 = vmatprep.subr.mxu0 0.0
    %4389 = vmatpush1.msra.mxu0 0.0
    %4390 = vmatprep.subr.mxu0 0.0
    %4391 = vmatpush1.msra.mxu0 0.0
    %4392 = vmatprep.subr.mxu0 0.0
    %4393 = vmatpush1.msra.mxu0 0.0
    %4394 = vmatprep.subr.mxu0 0.0
    %4395 = vmatpush1.msra.mxu0 0.0
    %4396 = vmatprep.subr.mxu0 0.0
    %4397 = vmatpush1.msra.mxu0 0.0
    %4398 = vmatprep.subr.mxu0 0.0
    %4399 = vmatpush1.msra.mxu0 0.0
    %4400 = vmatprep.subr.mxu0 0.0
    %4401 = vmatpush1.msra.mxu0 0.0
    %4402 = vmatprep.subr.mxu0 0.0
    %4403 = vmatpush1.msra.mxu0 0.0
    %4404 = vmatprep.subr.mxu0 0.0
    %4405 = vmatpush1.msra.mxu0 0.0
    %4406 = vmatprep.mubr.f32.mxu0 0.0
    %4407 = vmatmul.mubr.f32.gmra.mrb[0].mxu0 %v4340
    %v4408 = vpop.f32.mrb[0].mxu0
    %v4409 = vadd.f32 %v4338, %v4408
    %v4410 = vpop.f32.mrb[0].mxu0
    %4411 = vdwg.mxu0
    %v4412 = vld [vmem:[%s5 + $0x188] sm:$0x3f]
    %v4413 = vsel %vm3919, %v4409, 0.0
    %4414 = vadd.xlane.f32.xlu0 %v4413
    %v4415 = vpop.xlane.xlu0 %4414
    %v4416 = vmul.f32 %v4415, %v4153
    %v4417 = vsub.f32 %v4409, %v4416
    %v4418 = vmul.f32 %v4417, %v4417
    %v4419 = vsel %vm3919, %v4418, 0.0
    %4420 = vadd.xlane.f32.xlu0 %v4419
    %v4421 = vpop.xlane.xlu0 %4420
    %v4422 = vmul.f32 %v4421, %v4153
    %v4423 = vadd.f32 %v4422, 1e-05
    %v4424 = vrsqrt.pop %v4423
    %v4425 = vmul.f32 %v4417, %v4424
    %v4426 = vlaneseq
    %v4427 = vshrl.u32 %v4426, 7
    %v4428 = vsub.s32 0, %v4427
    %v4429 = vrot.slane %v4412, %v4428
    %v4430 = vmul.f32 %v4425, %v4429
    %v4431 = vlaneseq
    %v4432 = vshrl.u32 %v4431, 7
    %v4433 = vsub.s32 1, %v4432
    %v4434 = vrot.slane %v4412, %v4433
    %v4435 = vadd.f32 %v4430, %v4434
    %v4436 = vmax.f32 %v4435, 0.0
    %4438 = vrot.lane.b32.xlu0 %v4409, 96
    %v4439 = vpop.permute.xlu0 %4438
    %v4441 = vsel %vm3919, %v4439, 0.0
    %4442 = vadd.xlane.f32.xlu0 %v4441
    %v4443 = vpop.xlane.xlu0 %4442
    %v4444 = vmul.f32 %v4443, %v4153
    %v4445 = vsub.f32 %v4409, %v4444
    %v4446 = vmul.f32 %v4445, %v4445
    %4448 = vrot.lane.b32.xlu0 %v4446, 96
    %v4449 = vpop.permute.xlu0 %4448
    %v4451 = vsel %vm3919, %v4449, 0.0
    %4452 = vadd.xlane.f32.xlu0 %v4451
    %v4453 = vpop.xlane.xlu0 %4452
    %v4454 = vmul.f32 %v4453, %v4153
    %v4455 = vadd.f32 %v4454, 1e-05
    %v4456 = vrsqrt.pop %v4455
    %v4457 = vmul.f32 %v4445, %v4456
    %v4458 = vlaneseq
    %v4459 = vshrl.u32 %v4458, 7
    %v4460 = vsub.s32 2, %v4459
    %v4461 = vrot.slane %v4412, %v4460
    %4463 = vrot.lane.b32.xlu0 %v4461, 32
    %v4464 = vpop.permute.xlu0 %4463
    %v4466 = vmul.f32 %v4457, %v4464
    %v4467 = vlaneseq
    %v4468 = vshrl.u32 %v4467, 7
    %v4469 = vsub.s32 3, %v4468
    %v4470 = vrot.slane %v4412, %v4469
    %4472 = vrot.lane.b32.xlu0 %v4470, 32
    %v4473 = vpop.permute.xlu0 %4472
    %v4475 = vadd.f32 %v4466, %v4473
    %v4476 = vmax.f32 %v4475, 0.0
    %4477 = vrot.lane.b32.xlu0 %v4409, 64
    %v4478 = vpop.permute.xlu0 %4477
    %v4480 = vsel %vm3919, %v4478, 0.0
    %4481 = vadd.xlane.f32.xlu0 %v4480
    %v4482 = vpop.xlane.xlu0 %4481
    %v4483 = vmul.f32 %v4482, %v4153
    %v4484 = vsub.f32 %v4409, %v4483
    %v4485 = vmul.f32 %v4484, %v4484
    %4487 = vrot.lane.b32.xlu0 %v4485, 64
    %v4488 = vpop.permute.xlu0 %4487
    %v4490 = vsel %vm3919, %v4488, 0.0
    %4491 = vadd.xlane.f32.xlu0 %v4490
    %v4492 = vpop.xlane.xlu0 %4491
    %v4493 = vmul.f32 %v4492, %v4153
    %v4494 = vadd.f32 %v4493, 1e-05
    %v4495 = vrsqrt.pop %v4494
    %v4496 = vmul.f32 %v4484, %v4495
    %v4497 = vlaneseq
    %v4498 = vshrl.u32 %v4497, 7
    %v4499 = vsub.s32 4, %v4498
    %v4500 = vrot.slane %v4412, %v4499
    %4502 = vrot.lane.b32.xlu0 %v4500, 64
    %v4503 = vpop.permute.xlu0 %4502
    %v4505 = vmul.f32 %v4496, %v4503
    %v4506 = vlaneseq
    %v4507 = vshrl.u32 %v4506, 7
    %v4508 = vsub.s32 5, %v4507
    %v4509 = vrot.slane %v4412, %v4508
    %4511 = vrot.lane.b32.xlu0 %v4509, 64
    %v4512 = vpop.permute.xlu0 %4511
    %v4514 = vadd.f32 %v4505, %v4512
    %v4515 = vmax.f32 %v4514, 0.0
    %v4516 = vsel %vm3919, %v4436, %v4476
    %v4517 = vsel %vm587, %v4516, %v4515
    %v4518 = vld [vmem:[%s5 + $0x190] sm:$0xff]
    %v4519 = vld [vmem:[%s5 + $0x198] sm:$0xff]
    %v4520 = vld [vmem:[%s5 + $0x1a0] sm:$0xff]
    %v4521 = vld [vmem:[%s5 + $0x1a8] sm:$0xff]
    %v4522 = vld [vmem:[%s5 + $0x1b0] sm:$0xff]
    %v4523 = vld [vmem:[%s5 + $0x1b8] sm:$0xff]
    %v4524 = vld [vmem:[%s5 + $0x1c0] sm:$0xff]
    %v4525 = vld [vmem:[%s5 + $0x1c8] sm:$0xff]
    %v4526 = vld [vmem:[%s5 + $0x1d0] sm:$0xff]
    %v4527 = vld [vmem:[%s5 + $0x1d8] sm:$0xff]
    %v4528 = vld [vmem:[%s5 + $0x1e0] sm:$0xff]
    %v4529 = vld [vmem:[%s5 + $0x1e8] sm:$0xff]
    %v4530 = vld [vmem:[%s5 + $0x1f0] sm:$0x1]
    %v4531 = vlaneseq
    %v4532 = vshrl.u32 %v4531, 7
    %v4533 = vsub.s32 0, %v4532
    %v4534 = vrot.slane %v4530, %v4533
    %v4536 = vsel %vm4247, %v4517, 0
    %4538 = vmatprep.subr.mxu0 0.0
    %4539 = vmatpush1.msra.mxu0 %v4518
    %4540 = vmatprep.subr.mxu0 0.0
    %4541 = vmatpush1.msra.mxu0 %v4519
    %4542 = vmatprep.subr.mxu0 0.0
    %4543 = vmatpush1.msra.mxu0 %v4520
    %4544 = vmatprep.subr.mxu0 0.0
    %4545 = vmatpush1.msra.mxu0 %v4521
    %4546 = vmatprep.subr.mxu0 0.0
    %4547 = vmatpush1.msra.mxu0 %v4522
    %4548 = vmatprep.subr.mxu0 0.0
    %4549 = vmatpush1.msra.mxu0 %v4523
    %4550 = vmatprep.subr.mxu0 0.0
    %4551 = vmatpush1.msra.mxu0 %v4524
    %4552 = vmatprep.subr.mxu0 0.0
    %4553 = vmatpush1.msra.mxu0 %v4525
    %4554 = vmatprep.subr.mxu0 0.0
    %4555 = vmatpush1.msra.mxu0 %v4526
    %4556 = vmatprep.subr.mxu0 0.0
    %4557 = vmatpush1.msra.mxu0 %v4527
    %4558 = vmatprep.subr.mxu0 0.0
    %4559 = vmatpush1.msra.mxu0 %v4528
    %4560 = vmatprep.subr.mxu0 0.0
    %4561 = vmatpush1.msra.mxu0 %v4529
    %4562 = vmatprep.subr.mxu0 0.0
    %4563 = vmatpush1.msra.mxu0 0.0
    %4564 = vmatprep.subr.mxu0 0.0
    %4565 = vmatpush1.msra.mxu0 0.0
    %4566 = vmatprep.subr.mxu0 0.0
    %4567 = vmatpush1.msra.mxu0 0.0
    %4568 = vmatprep.subr.mxu0 0.0
    %4569 = vmatpush1.msra.mxu0 0.0
    %4570 = vmatprep.subr.mxu0 0.0
    %4571 = vmatpush1.msra.mxu0 0.0
    %4572 = vmatprep.subr.mxu0 0.0
    %4573 = vmatpush1.msra.mxu0 0.0
    %4574 = vmatprep.subr.mxu0 0.0
    %4575 = vmatpush1.msra.mxu0 0.0
    %4576 = vmatprep.subr.mxu0 0.0
    %4577 = vmatpush1.msra.mxu0 0.0
    %4578 = vmatprep.subr.mxu0 0.0
    %4579 = vmatpush1.msra.mxu0 0.0
    %4580 = vmatprep.subr.mxu0 0.0
    %4581 = vmatpush1.msra.mxu0 0.0
    %4582 = vmatprep.subr.mxu0 0.0
    %4583 = vmatpush1.msra.mxu0 0.0
    %4584 = vmatprep.subr.mxu0 0.0
    %4585 = vmatpush1.msra.mxu0 0.0
    %4586 = vmatprep.subr.mxu0 0.0
    %4587 = vmatpush1.msra.mxu0 0.0
    %4588 = vmatprep.subr.mxu0 0.0
    %4589 = vmatpush1.msra.mxu0 0.0
    %4590 = vmatprep.subr.mxu0 0.0
    %4591 = vmatpush1.msra.mxu0 0.0
    %4592 = vmatprep.subr.mxu0 0.0
    %4593 = vmatpush1.msra.mxu0 0.0
    %4594 = vmatprep.subr.mxu0 0.0
    %4595 = vmatpush1.msra.mxu0 0.0
    %4596 = vmatprep.subr.mxu0 0.0
    %4597 = vmatpush1.msra.mxu0 0.0
    %4598 = vmatprep.subr.mxu0 0.0
    %4599 = vmatpush1.msra.mxu0 0.0
    %4600 = vmatprep.subr.mxu0 0.0
    %4601 = vmatpush1.msra.mxu0 0.0
    %4602 = vmatprep.mubr.f32.mxu0 0.0
    %4603 = vmatmul.mubr.f32.gmra.mrb[0].mxu0 %v4536
    %v4604 = vpop.f32.mrb[0].mxu0
    %v4605 = vadd.f32 %v4534, %v4604
    %v4606 = vpop.f32.mrb[0].mxu0
    %4607 = vdwg.mxu0
    %v4608 = vld [vmem:[%s5 + $0x1f8] sm:$0xff]
    %v4609 = vld [vmem:[%s5 + $0x200] sm:$0xff]
    %v4610 = vld [vmem:[%s5 + $0x208] sm:$0xff]
    %v4611 = vld [vmem:[%s5 + $0x210] sm:$0xff]
    %v4612 = vld [vmem:[%s5 + $0x218] sm:$0xff]
    %v4613 = vld [vmem:[%s5 + $0x220] sm:$0xff]
    %v4614 = vld [vmem:[%s5 + $0x228] sm:$0xff]
    %v4615 = vld [vmem:[%s5 + $0x230] sm:$0xff]
    %v4616 = vld [vmem:[%s5 + $0x238] sm:$0xff]
    %v4617 = vld [vmem:[%s5 + $0x240] sm:$0xff]
    %v4618 = vld [vmem:[%s5 + $0x248] sm:$0xff]
    %v4619 = vld [vmem:[%s5 + $0x250] sm:$0xff]
    %v4620 = vld [vmem:[%s5 + $0x258] sm:$0x1]
    %v4621 = vlaneseq
    %v4622 = vshrl.u32 %v4621, 7
    %v4623 = vsub.s32 0, %v4622
    %v4624 = vrot.slane %v4620, %v4623
    %v4625 = vsel %vm4247, %v4409, 0
    %4627 = vmatprep.subr.mxu0 0.0
    %4628 = vmatpush1.msra.mxu0 %v4608
    %4629 = vmatprep.subr.mxu0 0.0
    %4630 = vmatpush1.msra.mxu0 %v4609
    %4631 = vmatprep.subr.mxu0 0.0
    %4632 = vmatpush1.msra.mxu0 %v4610
    %4633 = vmatprep.subr.mxu0 0.0
    %4634 = vmatpush1.msra.mxu0 %v4611
    %4635 = vmatprep.subr.mxu0 0.0
    %4636 = vmatpush1.msra.mxu0 %v4612
    %4637 = vmatprep.subr.mxu0 0.0
    %4638 = vmatpush1.msra.mxu0 %v4613
    %4639 = vmatprep.subr.mxu0 0.0
    %4640 = vmatpush1.msra.mxu0 %v4614
    %4641 = vmatprep.subr.mxu0 0.0
    %4642 = vmatpush1.msra.mxu0 %v4615
    %4643 = vmatprep.subr.mxu0 0.0
    %4644 = vmatpush1.msra.mxu0 %v4616
    %4645 = vmatprep.subr.mxu0 0.0
    %4646 = vmatpush1.msra.mxu0 %v4617
    %4647 = vmatprep.subr.mxu0 0.0
    %4648 = vmatpush1.msra.mxu0 %v4618
    %4649 = vmatprep.subr.mxu0 0.0
    %4650 = vmatpush1.msra.mxu0 %v4619
    %4651 = vmatprep.subr.mxu0 0.0
    %4652 = vmatpush1.msra.mxu0 0.0
    %4653 = vmatprep.subr.mxu0 0.0
    %4654 = vmatpush1.msra.mxu0 0.0
    %4655 = vmatprep.subr.mxu0 0.0
    %4656 = vmatpush1.msra.mxu0 0.0
    %4657 = vmatprep.subr.mxu0 0.0
    %4658 = vmatpush1.msra.mxu0 0.0
    %4659 = vmatprep.subr.mxu0 0.0
    %4660 = vmatpush1.msra.mxu0 0.0
    %4661 = vmatprep.subr.mxu0 0.0
    %4662 = vmatpush1.msra.mxu0 0.0
    %4663 = vmatprep.subr.mxu0 0.0
    %4664 = vmatpush1.msra.mxu0 0.0
    %4665 = vmatprep.subr.mxu0 0.0
    %4666 = vmatpush1.msra.mxu0 0.0
    %4667 = vmatprep.subr.mxu0 0.0
    %4668 = vmatpush1.msra.mxu0 0.0
    %4669 = vmatprep.subr.mxu0 0.0
    %4670 = vmatpush1.msra.mxu0 0.0
    %4671 = vmatprep.subr.mxu0 0.0
    %4672 = vmatpush1.msra.mxu0 0.0
    %4673 = vmatprep.subr.mxu0 0.0
    %4674 = vmatpush1.msra.mxu0 0.0
    %4675 = vmatprep.subr.mxu0 0.0
    %4676 = vmatpush1.msra.mxu0 0.0
    %4677 = vmatprep.subr.mxu0 0.0
    %4678 = vmatpush1.msra.mxu0 0.0
    %4679 = vmatprep.subr.mxu0 0.0
    %4680 = vmatpush1.msra.mxu0 0.0
    %4681 = vmatprep.subr.mxu0 0.0
    %4682 = vmatpush1.msra.mxu0 0.0
    %4683 = vmatprep.subr.mxu0 0.0
    %4684 = vmatpush1.msra.mxu0 0.0
    %4685 = vmatprep.subr.mxu0 0.0
    %4686 = vmatpush1.msra.mxu0 0.0
    %4687 = vmatprep.subr.mxu0 0.0
    %4688 = vmatpush1.msra.mxu0 0.0
    %4689 = vmatprep.subr.mxu0 0.0
    %4690 = vmatpush1.msra.mxu0 0.0
    %4691 = vmatprep.mubr.f32.mxu0 0.0
    %4692 = vmatmul.mubr.f32.gmra.mrb[0].mxu0 %v4625
    %v4693 = vpop.f32.mrb[0].mxu0
    %v4694 = vadd.f32 %v4624, %v4693
    %v4695 = vpop.f32.mrb[0].mxu0
    %4696 = vdwg.mxu0
    %v4697 = vld [vmem:[%s5 + $0x260] sm:$0xf]
    %v4698 = vlaneseq
    %v4699 = vshrl.u32 %v4698, 7
    %v4700 = vsub.s32 2, %v4699
    %v4701 = vrot.slane %v4697, %v4700
    %v4702 = vsub.f32 %v4694, %v4701
    %v4703 = vadd.f32 %v4697, 1e-05
    %v4704 = vrsqrt.pop %v4703
    %v4705 = vlaneseq
    %v4706 = vshrl.u32 %v4705, 7
    %v4707 = vsub.s32 3, %v4706
    %v4708 = vrot.slane %v4704, %v4707
    %v4709 = vmul.f32 %v4702, %v4708
    %v4710 = vlaneseq
    %v4711 = vshrl.u32 %v4710, 7
    %v4712 = vsub.s32 0, %v4711
    %v4713 = vrot.slane %v4697, %v4712
    %v4714 = vmul.f32 %v4709, %v4713
    %v4715 = vlaneseq
    %v4716 = vshrl.u32 %v4715, 7
    %v4717 = vsub.s32 1, %v4716
    %v4718 = vrot.slane %v4697, %v4717
    %v4719 = vadd.f32 %v4714, %v4718
    %v4720 = vmax.f32 %v4719, 0.0
    %v4721 = vld [vmem:[%s5 + $0x268] sm:$0xff]
    %v4722 = vld [vmem:[%s5 + $0x270] sm:$0xff]
    %v4723 = vld [vmem:[%s5 + $0x278] sm:$0xff]
    %v4724 = vld [vmem:[%s5 + $0x280] sm:$0xff]
    %v4725 = vld [vmem:[%s5 + $0x288] sm:$0x1]
    %v4726 = vlaneseq
    %v4727 = vshrl.u32 %v4726, 7
    %v4728 = vsub.s32 0, %v4727
    %v4729 = vrot.slane %v4725, %v4728
    %v4731 = vsel %vm3919, %v4720, 0
    %4733 = vmatprep.subr.mxu0 0.0
    %4734 = vmatpush1.msra.mxu0 %v4721
    %4735 = vmatprep.subr.mxu0 0.0
    %4736 = vmatpush1.msra.mxu0 %v4722
    %4737 = vmatprep.subr.mxu0 0.0
    %4738 = vmatpush1.msra.mxu0 %v4723
    %4739 = vmatprep.subr.mxu0 0.0
    %4740 = vmatpush1.msra.mxu0 %v4724
    %4741 = vmatprep.subr.mxu0 0.0
    %4742 = vmatpush1.msra.mxu0 0.0
    %4743 = vmatprep.subr.mxu0 0.0
    %4744 = vmatpush1.msra.mxu0 0.0
    %4745 = vmatprep.subr.mxu0 0.0
    %4746 = vmatpush1.msra.mxu0 0.0
    %4747 = vmatprep.subr.mxu0 0.0
    %4748 = vmatpush1.msra.mxu0 0.0
    %4749 = vmatprep.subr.mxu0 0.0
    %4750 = vmatpush1.msra.mxu0 0.0
    %4751 = vmatprep.subr.mxu0 0.0
    %4752 = vmatpush1.msra.mxu0 0.0
    %4753 = vmatprep.subr.mxu0 0.0
    %4754 = vmatpush1.msra.mxu0 0.0
    %4755 = vmatprep.subr.mxu0 0.0
    %4756 = vmatpush1.msra.mxu0 0.0
    %4757 = vmatprep.subr.mxu0 0.0
    %4758 = vmatpush1.msra.mxu0 0.0
    %4759 = vmatprep.subr.mxu0 0.0
    %4760 = vmatpush1.msra.mxu0 0.0
    %4761 = vmatprep.subr.mxu0 0.0
    %4762 = vmatpush1.msra.mxu0 0.0
    %4763 = vmatprep.subr.mxu0 0.0
    %4764 = vmatpush1.msra.mxu0 0.0
    %4765 = vmatprep.subr.mxu0 0.0
    %4766 = vmatpush1.msra.mxu0 0.0
    %4767 = vmatprep.subr.mxu0 0.0
    %4768 = vmatpush1.msra.mxu0 0.0
    %4769 = vmatprep.subr.mxu0 0.0
    %4770 = vmatpush1.msra.mxu0 0.0
    %4771 = vmatprep.subr.mxu0 0.0
    %4772 = vmatpush1.msra.mxu0 0.0
    %4773 = vmatprep.subr.mxu0 0.0
    %4774 = vmatpush1.msra.mxu0 0.0
    %4775 = vmatprep.subr.mxu0 0.0
    %4776 = vmatpush1.msra.mxu0 0.0
    %4777 = vmatprep.subr.mxu0 0.0
    %4778 = vmatpush1.msra.mxu0 0.0
    %4779 = vmatprep.subr.mxu0 0.0
    %4780 = vmatpush1.msra.mxu0 0.0
    %4781 = vmatprep.subr.mxu0 0.0
    %4782 = vmatpush1.msra.mxu0 0.0
    %4783 = vmatprep.subr.mxu0 0.0
    %4784 = vmatpush1.msra.mxu0 0.0
    %4785 = vmatprep.subr.mxu0 0.0
    %4786 = vmatpush1.msra.mxu0 0.0
    %4787 = vmatprep.subr.mxu0 0.0
    %4788 = vmatpush1.msra.mxu0 0.0
    %4789 = vmatprep.subr.mxu0 0.0
    %4790 = vmatpush1.msra.mxu0 0.0
    %4791 = vmatprep.subr.mxu0 0.0
    %4792 = vmatpush1.msra.mxu0 0.0
    %4793 = vmatprep.subr.mxu0 0.0
    %4794 = vmatpush1.msra.mxu0 0.0
    %4795 = vmatprep.subr.mxu0 0.0
    %4796 = vmatpush1.msra.mxu0 0.0
    %4797 = vmatprep.mubr.f32.mxu0 0.0
    %4798 = vmatmul.mubr.f32.gmra.mrb[0].mxu0 %v4731
    %v4799 = vpop.f32.mrb[0].mxu0
    %v4800 = vadd.f32 %v4729, %v4799
    %v4801 = vpop.f32.mrb[0].mxu0
    %4802 = vdwg.mxu0
    %v4803 = vld [vmem:[%s3] sm:$0xff]
    %v4804 = vld [vmem:[%s5 + $0x290] sm:$0x7f]
    %v4805 = vlaneseq
    %v4806 = vshrl.u32 %v4805, 7
    %v4807 = vsub.s32 6, %v4806
    %v4808 = vrot.slane %v4804, %v4807
    %vm4809 = vcmask 48128
    %v4811 = vsel %vm4809, %v4803, 0
    %vm4813 = vcmask 1045504
    %v4815 = vsel %vm4813, %v4804, 0
    %4817 = vmatprep.subr.mxu0 0.0
    %4818 = vmatpush1.msra.mxu0 %v4815
    %4819 = vmatprep.subr.mxu0 0.0
    %4820 = vmatpush1.msra.mxu0 0.0
    %4821 = vmatprep.subr.mxu0 0.0
    %4822 = vmatpush1.msra.mxu0 0.0
    %4823 = vmatprep.subr.mxu0 0.0
    %4824 = vmatpush1.msra.mxu0 0.0
    %4825 = vmatprep.subr.mxu0 0.0
    %4826 = vmatpush1.msra.mxu0 0.0
    %4827 = vmatprep.subr.mxu0 0.0
    %4828 = vmatpush1.msra.mxu0 0.0
    %4829 = vmatprep.subr.mxu0 0.0
    %4830 = vmatpush1.msra.mxu0 0.0
    %4831 = vmatprep.subr.mxu0 0.0
    %4832 = vmatpush1.msra.mxu0 0.0
    %4833 = vmatprep.subr.mxu0 0.0
    %4834 = vmatpush1.msra.mxu0 0.0
    %4835 = vmatprep.subr.mxu0 0.0
    %4836 = vmatpush1.msra.mxu0 0.0
    %4837 = vmatprep.subr.mxu0 0.0
    %4838 = vmatpush1.msra.mxu0 0.0
    %4839 = vmatprep.subr.mxu0 0.0
    %4840 = vmatpush1.msra.mxu0 0.0
    %4841 = vmatprep.subr.mxu0 0.0
    %4842 = vmatpush1.msra.mxu0 0.0
    %4843 = vmatprep.subr.mxu0 0.0
    %4844 = vmatpush1.msra.mxu0 0.0
    %4845 = vmatprep.subr.mxu0 0.0
    %4846 = vmatpush1.msra.mxu0 0.0
    %4847 = vmatprep.subr.mxu0 0.0
    %4848 = vmatpush1.msra.mxu0 0.0
    %4849 = vmatprep.subr.mxu0 0.0
    %4850 = vmatpush1.msra.mxu0 0.0
    %4851 = vmatprep.subr.mxu0 0.0
    %4852 = vmatpush1.msra.mxu0 0.0
    %4853 = vmatprep.subr.mxu0 0.0
    %4854 = vmatpush1.msra.mxu0 0.0
    %4855 = vmatprep.subr.mxu0 0.0
    %4856 = vmatpush1.msra.mxu0 0.0
    %4857 = vmatprep.subr.mxu0 0.0
    %4858 = vmatpush1.msra.mxu0 0.0
    %4859 = vmatprep.subr.mxu0 0.0
    %4860 = vmatpush1.msra.mxu0 0.0
    %4861 = vmatprep.subr.mxu0 0.0
    %4862 = vmatpush1.msra.mxu0 0.0
    %4863 = vmatprep.subr.mxu0 0.0
    %4864 = vmatpush1.msra.mxu0 0.0
    %4865 = vmatprep.subr.mxu0 0.0
    %4866 = vmatpush1.msra.mxu0 0.0
    %4867 = vmatprep.subr.mxu0 0.0
    %4868 = vmatpush1.msra.mxu0 0.0
    %4869 = vmatprep.subr.mxu0 0.0
    %4870 = vmatpush1.msra.mxu0 0.0
    %4871 = vmatprep.subr.mxu0 0.0
    %4872 = vmatpush1.msra.mxu0 0.0
    %4873 = vmatprep.subr.mxu0 0.0
    %4874 = vmatpush1.msra.mxu0 0.0
    %4875 = vmatprep.subr.mxu0 0.0
    %4876 = vmatpush1.msra.mxu0 0.0
    %4877 = vmatprep.subr.mxu0 0.0
    %4878 = vmatpush1.msra.mxu0 0.0
    %4879 = vmatprep.subr.mxu0 0.0
    %4880 = vmatpush1.msra.mxu0 0.0
    %4881 = vmatprep.mubr.f32.mxu0 0.0
    %4882 = vmatmul.mubr.f32.gmra.mrb[0].mxu0 %v4811
    %v4883 = vpop.f32.mrb[0].mxu0
    %v4884 = vadd.f32 %v4808, %v4883
    %v4885 = vpop.f32.mrb[0].mxu0
    %4886 = vdwg.mxu0
    %4888 = vrot.lane.b32.xlu0 %v3899, 64
    %v4889 = vpop.permute.xlu0 %4888
    %v4891 = vsel %vm587, %v4884, %v4889
    %v4892 = vld [vmem:[%s5 + $0x298] sm:$0xf]
    %v4893 = vlaneseq
    %v4894 = vshrl.u32 %v4893, 7
    %v4895 = vsub.s32 2, %v4894
    %v4896 = vrot.slane %v4892, %v4895
    %v4897 = vsub.f32 %v4891, %v4896
    %v4898 = vadd.f32 %v4892, 1e-05
    %v4899 = vrsqrt.pop %v4898
    %v4900 = vlaneseq
    %v4901 = vshrl.u32 %v4900, 7
    %v4902 = vsub.s32 3, %v4901
    %v4903 = vrot.slane %v4899, %v4902
    %v4904 = vmul.f32 %v4897, %v4903
    %v4905 = vlaneseq
    %v4906 = vshrl.u32 %v4905, 7
    %v4907 = vsub.s32 0, %v4906
    %v4908 = vrot.slane %v4892, %v4907
    %v4909 = vmul.f32 %v4904, %v4908
    %v4910 = vlaneseq
    %v4911 = vshrl.u32 %v4910, 7
    %v4912 = vsub.s32 1, %v4911
    %v4913 = vrot.slane %v4892, %v4912
    %v4914 = vadd.f32 %v4909, %v4913
    %v4915 = vmax.f32 %v4914, 0.0
    %v4916 = vld [vmem:[%s5 + $0x2a0] sm:$0xff]
    %v4917 = vld [vmem:[%s5 + $0x2a8] sm:$0xff]
    %v4918 = vld [vmem:[%s5 + $0x2b0] sm:$0xff]
    %v4919 = vld [vmem:[%s5 + $0x2b8] sm:$0xff]
    %v4920 = vld [vmem:[%s5 + $0x2c0] sm:$0xff]
    %v4921 = vld [vmem:[%s5 + $0x2c8] sm:$0xff]
    %v4922 = vld [vmem:[%s5 + $0x2d0] sm:$0xff]
    %v4923 = vld [vmem:[%s5 + $0x2d8] sm:$0xff]
    %v4924 = vld [vmem:[%s5 + $0x2e0] sm:$0xff]
    %v4925 = vld [vmem:[%s5 + $0x2e8] sm:$0xff]
    %v4926 = vld [vmem:[%s5 + $0x2f0] sm:$0xff]
    %v4927 = vld [vmem:[%s5 + $0x2f8] sm:$0xff]
    %v4928 = vld [vmem:[%s5 + $0x300] sm:$0x1]
    %v4929 = vlaneseq
    %v4930 = vshrl.u32 %v4929, 7
    %v4931 = vsub.s32 0, %v4930
    %v4932 = vrot.slane %v4928, %v4931
    %v4934 = vsel %vm4247, %v4915, 0
    %4936 = vmatprep.subr.mxu0 0.0
    %4937 = vmatpush1.msra.mxu0 %v4916
    %4938 = vmatprep.subr.mxu0 0.0
    %4939 = vmatpush1.msra.mxu0 %v4917
    %4940 = vmatprep.subr.mxu0 0.0
    %4941 = vmatpush1.msra.mxu0 %v4918
    %4942 = vmatprep.subr.mxu0 0.0
    %4943 = vmatpush1.msra.mxu0 %v4919
    %4944 = vmatprep.subr.mxu0 0.0
    %4945 = vmatpush1.msra.mxu0 %v4920
    %4946 = vmatprep.subr.mxu0 0.0
    %4947 = vmatpush1.msra.mxu0 %v4921
    %4948 = vmatprep.subr.mxu0 0.0
    %4949 = vmatpush1.msra.mxu0 %v4922
    %4950 = vmatprep.subr.mxu0 0.0
    %4951 = vmatpush1.msra.mxu0 %v4923
    %4952 = vmatprep.subr.mxu0 0.0
    %4953 = vmatpush1.msra.mxu0 %v4924
    %4954 = vmatprep.subr.mxu0 0.0
    %4955 = vmatpush1.msra.mxu0 %v4925
    %4956 = vmatprep.subr.mxu0 0.0
    %4957 = vmatpush1.msra.mxu0 %v4926
    %4958 = vmatprep.subr.mxu0 0.0
    %4959 = vmatpush1.msra.mxu0 %v4927
    %4960 = vmatprep.subr.mxu0 0.0
    %4961 = vmatpush1.msra.mxu0 0.0
    %4962 = vmatprep.subr.mxu0 0.0
    %4963 = vmatpush1.msra.mxu0 0.0
    %4964 = vmatprep.subr.mxu0 0.0
    %4965 = vmatpush1.msra.mxu0 0.0
    %4966 = vmatprep.subr.mxu0 0.0
    %4967 = vmatpush1.msra.mxu0 0.0
    %4968 = vmatprep.subr.mxu0 0.0
    %4969 = vmatpush1.msra.mxu0 0.0
    %4970 = vmatprep.subr.mxu0 0.0
    %4971 = vmatpush1.msra.mxu0 0.0
    %4972 = vmatprep.subr.mxu0 0.0
    %4973 = vmatpush1.msra.mxu0 0.0
    %4974 = vmatprep.subr.mxu0 0.0
    %4975 = vmatpush1.msra.mxu0 0.0
    %4976 = vmatprep.subr.mxu0 0.0
    %4977 = vmatpush1.msra.mxu0 0.0
    %4978 = vmatprep.subr.mxu0 0.0
    %4979 = vmatpush1.msra.mxu0 0.0
    %4980 = vmatprep.subr.mxu0 0.0
    %4981 = vmatpush1.msra.mxu0 0.0
    %4982 = vmatprep.subr.mxu0 0.0
    %4983 = vmatpush1.msra.mxu0 0.0
    %4984 = vmatprep.subr.mxu0 0.0
    %4985 = vmatpush1.msra.mxu0 0.0
    %4986 = vmatprep.subr.mxu0 0.0
    %4987 = vmatpush1.msra.mxu0 0.0
    %4988 = vmatprep.subr.mxu0 0.0
    %4989 = vmatpush1.msra.mxu0 0.0
    %4990 = vmatprep.subr.mxu0 0.0
    %4991 = vmatpush1.msra.mxu0 0.0
    %4992 = vmatprep.subr.mxu0 0.0
    %4993 = vmatpush1.msra.mxu0 0.0
    %4994 = vmatprep.subr.mxu0 0.0
    %4995 = vmatpush1.msra.mxu0 0.0
    %4996 = vmatprep.subr.mxu0 0.0
    %4997 = vmatpush1.msra.mxu0 0.0
    %4998 = vmatprep.subr.mxu0 0.0
    %4999 = vmatpush1.msra.mxu0 0.0
    %5000 = vmatprep.mubr.f32.mxu0 0.0
    %5001 = vmatmul.mubr.f32.gmra.mrb[0].mxu0 %v4934
    %v5002 = vpop.f32.mrb[0].mxu0
    %v5003 = vadd.f32 %v4932, %v5002
    %v5004 = vpop.f32.mrb[0].mxu0
    %5005 = vdwg.mxu0
    %v5006 = vld [vmem:[%s5 + $0x308] sm:$0xff]
    %v5007 = vld [vmem:[%s5 + $0x310] sm:$0xff]
    %v5008 = vld [vmem:[%s5 + $0x318] sm:$0xff]
    %v5009 = vld [vmem:[%s5 + $0x320] sm:$0xff]
    %v5010 = vld [vmem:[%s5 + $0x328] sm:$0xff]
    %v5011 = vld [vmem:[%s5 + $0x330] sm:$0xff]
    %v5012 = vld [vmem:[%s5 + $0x338] sm:$0x1]
    %v5013 = vlaneseq
    %v5014 = vshrl.u32 %v5013, 7
    %v5015 = vsub.s32 0, %v5014
    %v5016 = vrot.slane %v5012, %v5015
    %vm5017 = vcmask 392192
    %v5019 = vsel %vm5017, %v5003, 0
    %5021 = vmatprep.subr.mxu0 0.0
    %5022 = vmatpush1.msra.mxu0 %v5006
    %5023 = vmatprep.subr.mxu0 0.0
    %5024 = vmatpush1.msra.mxu0 %v5007
    %5025 = vmatprep.subr.mxu0 0.0
    %5026 = vmatpush1.msra.mxu0 %v5008
    %5027 = vmatprep.subr.mxu0 0.0
    %5028 = vmatpush1.msra.mxu0 %v5009
    %5029 = vmatprep.subr.mxu0 0.0
    %5030 = vmatpush1.msra.mxu0 %v5010
    %5031 = vmatprep.subr.mxu0 0.0
    %5032 = vmatpush1.msra.mxu0 %v5011
    %5033 = vmatprep.subr.mxu0 0.0
    %5034 = vmatpush1.msra.mxu0 0.0
    %5035 = vmatprep.subr.mxu0 0.0
    %5036 = vmatpush1.msra.mxu0 0.0
    %5037 = vmatprep.subr.mxu0 0.0
    %5038 = vmatpush1.msra.mxu0 0.0
    %5039 = vmatprep.subr.mxu0 0.0
    %5040 = vmatpush1.msra.mxu0 0.0
    %5041 = vmatprep.subr.mxu0 0.0
    %5042 = vmatpush1.msra.mxu0 0.0
    %5043 = vmatprep.subr.mxu0 0.0
    %5044 = vmatpush1.msra.mxu0 0.0
    %5045 = vmatprep.subr.mxu0 0.0
    %5046 = vmatpush1.msra.mxu0 0.0
    %5047 = vmatprep.subr.mxu0 0.0
    %5048 = vmatpush1.msra.mxu0 0.0
    %5049 = vmatprep.subr.mxu0 0.0
    %5050 = vmatpush1.msra.mxu0 0.0
    %5051 = vmatprep.subr.mxu0 0.0
    %5052 = vmatpush1.msra.mxu0 0.0
    %5053 = vmatprep.subr.mxu0 0.0
    %5054 = vmatpush1.msra.mxu0 0.0
    %5055 = vmatprep.subr.mxu0 0.0
    %5056 = vmatpush1.msra.mxu0 0.0
    %5057 = vmatprep.subr.mxu0 0.0
    %5058 = vmatpush1.msra.mxu0 0.0
    %5059 = vmatprep.subr.mxu0 0.0
    %5060 = vmatpush1.msra.mxu0 0.0
    %5061 = vmatprep.subr.mxu0 0.0
    %5062 = vmatpush1.msra.mxu0 0.0
    %5063 = vmatprep.subr.mxu0 0.0
    %5064 = vmatpush1.msra.mxu0 0.0
    %5065 = vmatprep.subr.mxu0 0.0
    %5066 = vmatpush1.msra.mxu0 0.0
    %5067 = vmatprep.subr.mxu0 0.0
    %5068 = vmatpush1.msra.mxu0 0.0
    %5069 = vmatprep.subr.mxu0 0.0
    %5070 = vmatpush1.msra.mxu0 0.0
    %5071 = vmatprep.subr.mxu0 0.0
    %5072 = vmatpush1.msra.mxu0 0.0
    %5073 = vmatprep.subr.mxu0 0.0
    %5074 = vmatpush1.msra.mxu0 0.0
    %5075 = vmatprep.subr.mxu0 0.0
    %5076 = vmatpush1.msra.mxu0 0.0
    %5077 = vmatprep.subr.mxu0 0.0
    %5078 = vmatpush1.msra.mxu0 0.0
    %5079 = vmatprep.subr.mxu0 0.0
    %5080 = vmatpush1.msra.mxu0 0.0
    %5081 = vmatprep.subr.mxu0 0.0
    %5082 = vmatpush1.msra.mxu0 0.0
    %5083 = vmatprep.subr.mxu0 0.0
    %5084 = vmatpush1.msra.mxu0 0.0
    %5085 = vmatprep.mubr.f32.mxu0 0.0
    %5086 = vmatmul.mubr.f32.gmra.mrb[0].mxu0 %v5019
    %v5087 = vpop.f32.mrb[0].mxu0
    %v5088 = vadd.f32 %v5016, %v5087
    %v5089 = vpop.f32.mrb[0].mxu0
    %5090 = vdwg.mxu0
    %v5091 = vld [vmem:[%s5 + $0x340] sm:$0xf]
    %v5092 = vlaneseq
    %v5093 = vshrl.u32 %v5092, 7
    %v5094 = vsub.s32 2, %v5093
    %v5095 = vrot.slane %v5091, %v5094
    %v5096 = vsub.f32 %v5088, %v5095
    %v5097 = vadd.f32 %v5091, 1e-05
    %v5098 = vrsqrt.pop %v5097
    %v5099 = vlaneseq
    %v5100 = vshrl.u32 %v5099, 7
    %v5101 = vsub.s32 3, %v5100
    %v5102 = vrot.slane %v5098, %v5101
    %v5103 = vmul.f32 %v5096, %v5102
    %v5104 = vlaneseq
    %v5105 = vshrl.u32 %v5104, 7
    %v5106 = vsub.s32 0, %v5105
    %v5107 = vrot.slane %v5091, %v5106
    %v5108 = vmul.f32 %v5103, %v5107
    %v5109 = vlaneseq
    %v5110 = vshrl.u32 %v5109, 7
    %v5111 = vsub.s32 1, %v5110
    %v5112 = vrot.slane %v5091, %v5111
    %v5113 = vadd.f32 %v5108, %v5112
    %v5114 = vmax.f32 %v5113, 0.0
    %v5115 = vld [vmem:[%s5 + $0x348] sm:$0xff]
    %v5116 = vld [vmem:[%s5 + $0x350] sm:$0xff]
    %v5117 = vld [vmem:[%s5 + $0x358] sm:$0xff]
    %v5118 = vld [vmem:[%s5 + $0x360] sm:$0xff]
    %v5119 = vld [vmem:[%s5 + $0x368] sm:$0x1]
    %v5120 = vlaneseq
    %v5121 = vshrl.u32 %v5120, 7
    %v5122 = vsub.s32 0, %v5121
    %v5123 = vrot.slane %v5119, %v5122
    %v5125 = vsel %vm3919, %v5114, 0
    %5127 = vmatprep.subr.mxu0 0.0
    %5128 = vmatpush1.msra.mxu0 %v5115
    %5129 = vmatprep.subr.mxu0 0.0
    %5130 = vmatpush1.msra.mxu0 %v5116
    %5131 = vmatprep.subr.mxu0 0.0
    %5132 = vmatpush1.msra.mxu0 %v5117
    %5133 = vmatprep.subr.mxu0 0.0
    %5134 = vmatpush1.msra.mxu0 %v5118
    %5135 = vmatprep.subr.mxu0 0.0
    %5136 = vmatpush1.msra.mxu0 0.0
    %5137 = vmatprep.subr.mxu0 0.0
    %5138 = vmatpush1.msra.mxu0 0.0
    %5139 = vmatprep.subr.mxu0 0.0
    %5140 = vmatpush1.msra.mxu0 0.0
    %5141 = vmatprep.subr.mxu0 0.0
    %5142 = vmatpush1.msra.mxu0 0.0
    %5143 = vmatprep.subr.mxu0 0.0
    %5144 = vmatpush1.msra.mxu0 0.0
    %5145 = vmatprep.subr.mxu0 0.0
    %5146 = vmatpush1.msra.mxu0 0.0
    %5147 = vmatprep.subr.mxu0 0.0
    %5148 = vmatpush1.msra.mxu0 0.0
    %5149 = vmatprep.subr.mxu0 0.0
    %5150 = vmatpush1.msra.mxu0 0.0
    %5151 = vmatprep.subr.mxu0 0.0
    %5152 = vmatpush1.msra.mxu0 0.0
    %5153 = vmatprep.subr.mxu0 0.0
    %5154 = vmatpush1.msra.mxu0 0.0
    %5155 = vmatprep.subr.mxu0 0.0
    %5156 = vmatpush1.msra.mxu0 0.0
    %5157 = vmatprep.subr.mxu0 0.0
    %5158 = vmatpush1.msra.mxu0 0.0
    %5159 = vmatprep.subr.mxu0 0.0
    %5160 = vmatpush1.msra.mxu0 0.0
    %5161 = vmatprep.subr.mxu0 0.0
    %5162 = vmatpush1.msra.mxu0 0.0
    %5163 = vmatprep.subr.mxu0 0.0
    %5164 = vmatpush1.msra.mxu0 0.0
    %5165 = vmatprep.subr.mxu0 0.0
    %5166 = vmatpush1.msra.mxu0 0.0
    %5167 = vmatprep.subr.mxu0 0.0
    %5168 = vmatpush1.msra.mxu0 0.0
    %5169 = vmatprep.subr.mxu0 0.0
    %5170 = vmatpush1.msra.mxu0 0.0
    %5171 = vmatprep.subr.mxu0 0.0
    %5172 = vmatpush1.msra.mxu0 0.0
    %5173 = vmatprep.subr.mxu0 0.0
    %5174 = vmatpush1.msra.mxu0 0.0
    %5175 = vmatprep.subr.mxu0 0.0
    %5176 = vmatpush1.msra.mxu0 0.0
    %5177 = vmatprep.subr.mxu0 0.0
    %5178 = vmatpush1.msra.mxu0 0.0
    %5179 = vmatprep.subr.mxu0 0.0
    %5180 = vmatpush1.msra.mxu0 0.0
    %5181 = vmatprep.subr.mxu0 0.0
    %5182 = vmatpush1.msra.mxu0 0.0
    %5183 = vmatprep.subr.mxu0 0.0
    %5184 = vmatpush1.msra.mxu0 0.0
    %5185 = vmatprep.subr.mxu0 0.0
    %5186 = vmatpush1.msra.mxu0 0.0
    %5187 = vmatprep.subr.mxu0 0.0
    %5188 = vmatpush1.msra.mxu0 0.0
    %5189 = vmatprep.subr.mxu0 0.0
    %5190 = vmatpush1.msra.mxu0 0.0
    %5191 = vmatprep.mubr.f32.mxu0 0.0
    %5192 = vmatmul.mubr.f32.gmra.mrb[0].mxu0 %v5125
    %v5193 = vpop.f32.mrb[0].mxu0
    %v5194 = vadd.f32 %v5123, %v5193
    %v5195 = vpop.f32.mrb[0].mxu0
    %5196 = vdwg.mxu0
    %v5197 = vld [vmem:[%s5 + $0x370] sm:$0xff]
    %v5198 = vld [vmem:[%s5 + $0x378] sm:$0xff]
    %v5199 = vld [vmem:[%s5 + $0x380] sm:$0xff]
    %v5200 = vld [vmem:[%s5 + $0x388] sm:$0xff]
    %v5201 = vld [vmem:[%s5 + $0x390] sm:$0xff]
    %v5202 = vld [vmem:[%s5 + $0x398] sm:$0xff]
    %v5203 = vld [vmem:[%s5 + $0x3a0] sm:$0xff]
    %v5204 = vld [vmem:[%s5 + $0x3a8] sm:$0xff]
    %v5205 = vld [vmem:[%s5 + $0x3b0] sm:$0xff]
    %v5206 = vld [vmem:[%s5 + $0x3b8] sm:$0xff]
    %v5207 = vld [vmem:[%s5 + $0x3c0] sm:$0xff]
    %v5208 = vld [vmem:[%s5 + $0x3c8] sm:$0xff]
    %v5209 = vld [vmem:[%s5 + $0x3d0] sm:$0x1]
    %v5210 = vlaneseq
    %v5211 = vshrl.u32 %v5210, 7
    %v5212 = vsub.s32 0, %v5211
    %v5213 = vrot.slane %v5209, %v5212
    %v5215 = vsel %vm4247, %v4891, 0
    %5217 = vmatprep.subr.mxu0 0.0
    %5218 = vmatpush1.msra.mxu0 %v5197
    %5219 = vmatprep.subr.mxu0 0.0
    %5220 = vmatpush1.msra.mxu0 %v5198
    %5221 = vmatprep.subr.mxu0 0.0
    %5222 = vmatpush1.msra.mxu0 %v5199
    %5223 = vmatprep.subr.mxu0 0.0
    %5224 = vmatpush1.msra.mxu0 %v5200
    %5225 = vmatprep.subr.mxu0 0.0
    %5226 = vmatpush1.msra.mxu0 %v5201
    %5227 = vmatprep.subr.mxu0 0.0
    %5228 = vmatpush1.msra.mxu0 %v5202
    %5229 = vmatprep.subr.mxu0 0.0
    %5230 = vmatpush1.msra.mxu0 %v5203
    %5231 = vmatprep.subr.mxu0 0.0
    %5232 = vmatpush1.msra.mxu0 %v5204
    %5233 = vmatprep.subr.mxu0 0.0
    %5234 = vmatpush1.msra.mxu0 %v5205
    %5235 = vmatprep.subr.mxu0 0.0
    %5236 = vmatpush1.msra.mxu0 %v5206
    %5237 = vmatprep.subr.mxu0 0.0
    %5238 = vmatpush1.msra.mxu0 %v5207
    %5239 = vmatprep.subr.mxu0 0.0
    %5240 = vmatpush1.msra.mxu0 %v5208
    %5241 = vmatprep.subr.mxu0 0.0
    %5242 = vmatpush1.msra.mxu0 0.0
    %5243 = vmatprep.subr.mxu0 0.0
    %5244 = vmatpush1.msra.mxu0 0.0
    %5245 = vmatprep.subr.mxu0 0.0
    %5246 = vmatpush1.msra.mxu0 0.0
    %5247 = vmatprep.subr.mxu0 0.0
    %5248 = vmatpush1.msra.mxu0 0.0
    %5249 = vmatprep.subr.mxu0 0.0
    %5250 = vmatpush1.msra.mxu0 0.0
    %5251 = vmatprep.subr.mxu0 0.0
    %5252 = vmatpush1.msra.mxu0 0.0
    %5253 = vmatprep.subr.mxu0 0.0
    %5254 = vmatpush1.msra.mxu0 0.0
    %5255 = vmatprep.subr.mxu0 0.0
    %5256 = vmatpush1.msra.mxu0 0.0
    %5257 = vmatprep.subr.mxu0 0.0
    %5258 = vmatpush1.msra.mxu0 0.0
    %5259 = vmatprep.subr.mxu0 0.0
    %5260 = vmatpush1.msra.mxu0 0.0
    %5261 = vmatprep.subr.mxu0 0.0
    %5262 = vmatpush1.msra.mxu0 0.0
    %5263 = vmatprep.subr.mxu0 0.0
    %5264 = vmatpush1.msra.mxu0 0.0
    %5265 = vmatprep.subr.mxu0 0.0
    %5266 = vmatpush1.msra.mxu0 0.0
    %5267 = vmatprep.subr.mxu0 0.0
    %5268 = vmatpush1.msra.mxu0 0.0
    %5269 = vmatprep.subr.mxu0 0.0
    %5270 = vmatpush1.msra.mxu0 0.0
    %5271 = vmatprep.subr.mxu0 0.0
    %5272 = vmatpush1.msra.mxu0 0.0
    %5273 = vmatprep.subr.mxu0 0.0
    %5274 = vmatpush1.msra.mxu0 0.0
    %5275 = vmatprep.subr.mxu0 0.0
    %5276 = vmatpush1.msra.mxu0 0.0
    %5277 = vmatprep.subr.mxu0 0.0
    %5278 = vmatpush1.msra.mxu0 0.0
    %5279 = vmatprep.subr.mxu0 0.0
    %5280 = vmatpush1.msra.mxu0 0.0
    %5281 = vmatprep.mubr.f32.mxu0 0.0
    %5282 = vmatmul.mubr.f32.gmra.mrb[0].mxu0 %v5215
    %v5283 = vpop.f32.mrb[0].mxu0
    %v5284 = vadd.f32 %v5213, %v5283
    %v5285 = vpop.f32.mrb[0].mxu0
    %5286 = vdwg.mxu0
    %v5287 = vld [vmem:[%s5 + $0x3d8] sm:$0xf]
    %v5288 = vlaneseq
    %v5289 = vshrl.u32 %v5288, 7
    %v5290 = vsub.s32 2, %v5289
    %v5291 = vrot.slane %v5287, %v5290
    %v5292 = vsub.f32 %v5284, %v5291
    %v5293 = vadd.f32 %v5287, 1e-05
    %v5294 = vrsqrt.pop %v5293
    %v5295 = vlaneseq
    %v5296 = vshrl.u32 %v5295, 7
    %v5297 = vsub.s32 3, %v5296
    %v5298 = vrot.slane %v5294, %v5297
    %v5299 = vmul.f32 %v5292, %v5298
    %v5300 = vlaneseq
    %v5301 = vshrl.u32 %v5300, 7
    %v5302 = vsub.s32 0, %v5301
    %v5303 = vrot.slane %v5287, %v5302
    %v5304 = vmul.f32 %v5299, %v5303
    %v5305 = vlaneseq
    %v5306 = vshrl.u32 %v5305, 7
    %v5307 = vsub.s32 1, %v5306
    %v5308 = vrot.slane %v5287, %v5307
    %v5309 = vadd.f32 %v5304, %v5308
    %v5310 = vmax.f32 %v5309, 0.0
    %v5311 = vld [vmem:[%s5 + $0x3e0] sm:$0xff]
    %v5312 = vld [vmem:[%s5 + $0x3e8] sm:$0xff]
    %v5313 = vld [vmem:[%s5 + $0x3f0] sm:$0xff]
    %v5314 = vld [vmem:[%s5 + $0x3f8] sm:$0xff]
    %v5315 = vld [vmem:[%s5 + $0x400] sm:$0xff]
    %v5316 = vld [vmem:[%s5 + $0x408] sm:$0xff]
    %v5317 = vld [vmem:[%s5 + $0x410] sm:$0xff]
    %v5318 = vld [vmem:[%s5 + $0x418] sm:$0xff]
    %v5319 = vld [vmem:[%s5 + $0x420] sm:$0xff]
    %v5320 = vld [vmem:[%s5 + $0x428] sm:$0xff]
    %v5321 = vld [vmem:[%s5 + $0x430] sm:$0xff]
    %v5322 = vld [vmem:[%s5 + $0x438] sm:$0xff]
    %v5323 = vld [vmem:[%s5 + $0x440] sm:$0x1]
    %v5324 = vlaneseq
    %v5325 = vshrl.u32 %v5324, 7
    %v5326 = vsub.s32 0, %v5325
    %v5327 = vrot.slane %v5323, %v5326
    %v5329 = vsel %vm4247, %v5310, 0
    %5331 = vmatprep.subr.mxu0 0.0
    %5332 = vmatpush1.msra.mxu0 %v5311
    %5333 = vmatprep.subr.mxu0 0.0
    %5334 = vmatpush1.msra.mxu0 %v5312
    %5335 = vmatprep.subr.mxu0 0.0
    %5336 = vmatpush1.msra.mxu0 %v5313
    %5337 = vmatprep.subr.mxu0 0.0
    %5338 = vmatpush1.msra.mxu0 %v5314
    %5339 = vmatprep.subr.mxu0 0.0
    %5340 = vmatpush1.msra.mxu0 %v5315
    %5341 = vmatprep.subr.mxu0 0.0
    %5342 = vmatpush1.msra.mxu0 %v5316
    %5343 = vmatprep.subr.mxu0 0.0
    %5344 = vmatpush1.msra.mxu0 %v5317
    %5345 = vmatprep.subr.mxu0 0.0
    %5346 = vmatpush1.msra.mxu0 %v5318
    %5347 = vmatprep.subr.mxu0 0.0
    %5348 = vmatpush1.msra.mxu0 %v5319
    %5349 = vmatprep.subr.mxu0 0.0
    %5350 = vmatpush1.msra.mxu0 %v5320
    %5351 = vmatprep.subr.mxu0 0.0
    %5352 = vmatpush1.msra.mxu0 %v5321
    %5353 = vmatprep.subr.mxu0 0.0
    %5354 = vmatpush1.msra.mxu0 %v5322
    %5355 = vmatprep.subr.mxu0 0.0
    %5356 = vmatpush1.msra.mxu0 0.0
    %5357 = vmatprep.subr.mxu0 0.0
    %5358 = vmatpush1.msra.mxu0 0.0
    %5359 = vmatprep.subr.mxu0 0.0
    %5360 = vmatpush1.msra.mxu0 0.0
    %5361 = vmatprep.subr.mxu0 0.0
    %5362 = vmatpush1.msra.mxu0 0.0
    %5363 = vmatprep.subr.mxu0 0.0
    %5364 = vmatpush1.msra.mxu0 0.0
    %5365 = vmatprep.subr.mxu0 0.0
    %5366 = vmatpush1.msra.mxu0 0.0
    %5367 = vmatprep.subr.mxu0 0.0
    %5368 = vmatpush1.msra.mxu0 0.0
    %5369 = vmatprep.subr.mxu0 0.0
    %5370 = vmatpush1.msra.mxu0 0.0
    %5371 = vmatprep.subr.mxu0 0.0
    %5372 = vmatpush1.msra.mxu0 0.0
    %5373 = vmatprep.subr.mxu0 0.0
    %5374 = vmatpush1.msra.mxu0 0.0
    %5375 = vmatprep.subr.mxu0 0.0
    %5376 = vmatpush1.msra.mxu0 0.0
    %5377 = vmatprep.subr.mxu0 0.0
    %5378 = vmatpush1.msra.mxu0 0.0
    %5379 = vmatprep.subr.mxu0 0.0
    %5380 = vmatpush1.msra.mxu0 0.0
    %5381 = vmatprep.subr.mxu0 0.0
    %5382 = vmatpush1.msra.mxu0 0.0
    %5383 = vmatprep.subr.mxu0 0.0
    %5384 = vmatpush1.msra.mxu0 0.0
    %5385 = vmatprep.subr.mxu0 0.0
    %5386 = vmatpush1.msra.mxu0 0.0
    %5387 = vmatprep.subr.mxu0 0.0
    %5388 = vmatpush1.msra.mxu0 0.0
    %5389 = vmatprep.subr.mxu0 0.0
    %5390 = vmatpush1.msra.mxu0 0.0
    %5391 = vmatprep.subr.mxu0 0.0
    %5392 = vmatpush1.msra.mxu0 0.0
    %5393 = vmatprep.subr.mxu0 0.0
    %5394 = vmatpush1.msra.mxu0 0.0
    %5395 = vmatprep.mubr.f32.mxu0 0.0
    %5396 = vmatmul.mubr.f32.gmra.mrb[0].mxu0 %v5329
    %v5397 = vpop.f32.mrb[0].mxu0
    %v5398 = vadd.f32 %v5327, %v5397
    %v5399 = vpop.f32.mrb[0].mxu0
    %5400 = vdwg.mxu0
    %v5401 = vld [vmem:[%s5 + $0x448] sm:$0xff]
    %v5402 = vld [vmem:[%s5 + $0x450] sm:$0xff]
    %v5403 = vld [vmem:[%s5 + $0x458] sm:$0xff]
    %v5404 = vld [vmem:[%s5 + $0x460] sm:$0xff]
    %v5405 = vld [vmem:[%s5 + $0x468] sm:$0x1]
    %v5406 = vlaneseq
    %v5407 = vshrl.u32 %v5406, 7
    %v5408 = vsub.s32 0, %v5407
    %v5409 = vrot.slane %v5405, %v5408
    %v5411 = vsel %vm3919, %v4800, 0
    %v5414 = vsel %vm3919, %v5194, 0
    %5416 = vmatprep.subr.mxu0 0.0
    %5417 = vmatpush1.msra.mxu0 %v5401
    %5418 = vmatprep.subr.mxu0 0.0
    %5419 = vmatpush1.msra.mxu0 %v5402
    %5420 = vmatprep.subr.mxu0 0.0
    %5421 = vmatpush1.msra.mxu0 %v5403
    %5422 = vmatprep.subr.mxu0 0.0
    %5423 = vmatpush1.msra.mxu0 %v5404
    %5424 = vmatprep.subr.mxu0 0.0
    %5425 = vmatpush1.msra.mxu0 0.0
    %5426 = vmatprep.subr.mxu0 0.0
    %5427 = vmatpush1.msra.mxu0 0.0
    %5428 = vmatprep.subr.mxu0 0.0
    %5429 = vmatpush1.msra.mxu0 0.0
    %5430 = vmatprep.subr.mxu0 0.0
    %5431 = vmatpush1.msra.mxu0 0.0
    %5432 = vmatprep.subr.mxu0 0.0
    %5433 = vmatpush1.msra.mxu0 0.0
    %5434 = vmatprep.subr.mxu0 0.0
    %5435 = vmatpush1.msra.mxu0 0.0
    %5436 = vmatprep.subr.mxu0 0.0
    %5437 = vmatpush1.msra.mxu0 0.0
    %5438 = vmatprep.subr.mxu0 0.0
    %5439 = vmatpush1.msra.mxu0 0.0
    %5440 = vmatprep.subr.mxu0 0.0
    %5441 = vmatpush1.msra.mxu0 0.0
    %5442 = vmatprep.subr.mxu0 0.0
    %5443 = vmatpush1.msra.mxu0 0.0
    %5444 = vmatprep.subr.mxu0 0.0
    %5445 = vmatpush1.msra.mxu0 0.0
    %5446 = vmatprep.subr.mxu0 0.0
    %5447 = vmatpush1.msra.mxu0 0.0
    %5448 = vmatprep.subr.mxu0 0.0
    %5449 = vmatpush1.msra.mxu0 0.0
    %5450 = vmatprep.subr.mxu0 0.0
    %5451 = vmatpush1.msra.mxu0 0.0
    %5452 = vmatprep.subr.mxu0 0.0
    %5453 = vmatpush1.msra.mxu0 0.0
    %5454 = vmatprep.subr.mxu0 0.0
    %5455 = vmatpush1.msra.mxu0 0.0
    %5456 = vmatprep.subr.mxu0 0.0
    %5457 = vmatpush1.msra.mxu0 0.0
    %5458 = vmatprep.subr.mxu0 0.0
    %5459 = vmatpush1.msra.mxu0 0.0
    %5460 = vmatprep.subr.mxu0 0.0
    %5461 = vmatpush1.msra.mxu0 0.0
    %5462 = vmatprep.subr.mxu0 0.0
    %5463 = vmatpush1.msra.mxu0 0.0
    %5464 = vmatprep.subr.mxu0 0.0
    %5465 = vmatpush1.msra.mxu0 0.0
    %5466 = vmatprep.subr.mxu0 0.0
    %5467 = vmatpush1.msra.mxu0 0.0
    %5468 = vmatprep.subr.mxu0 0.0
    %5469 = vmatpush1.msra.mxu0 0.0
    %5470 = vmatprep.subr.mxu0 0.0
    %5471 = vmatpush1.msra.mxu0 0.0
    %5472 = vmatprep.subr.mxu0 0.0
    %5473 = vmatpush1.msra.mxu0 0.0
    %5474 = vmatprep.subr.mxu0 0.0
    %5475 = vmatpush1.msra.mxu0 0.0
    %5476 = vmatprep.subr.mxu0 0.0
    %5477 = vmatpush1.msra.mxu0 0.0
    %5478 = vmatprep.subr.mxu0 0.0
    %5479 = vmatpush1.msra.mxu0 0.0
    %5480 = vmatprep.mubr.f32.mxu0 0.0
    %5481 = vmatmul.mubr.f32.gmra.mrb[0].mxu0 %v5411
    %v5482 = vpop.f32.mrb[0].mxu0
    %v5483 = vadd.f32 %v5409, %v5482
    %v5484 = vpop.f32.mrb[0].mxu0
    %5485 = vmatprep.mubr.f32.mxu0 0.0
    %5486 = vmatmul.mubr.f32.gmra.mrb[0].mxu0 %v5414
    %v5487 = vpop.f32.mrb[0].mxu0
    %v5488 = vadd.f32 %v5409, %v5487
    %v5489 = vpop.f32.mrb[0].mxu0
    %5490 = vdwg.mxu0
    %v5491 = vld [vmem:[%s5 + $0x470] sm:$0xf]
    %v5492 = vlaneseq
    %v5493 = vshrl.u32 %v5492, 7
    %v5494 = vsub.s32 2, %v5493
    %v5495 = vrot.slane %v5491, %v5494
    %v5496 = vsub.f32 %v5483, %v5495
    %v5497 = vsub.f32 %v5488, %v5495
    %v5498 = vadd.f32 %v5491, 1e-05
    %v5499 = vrsqrt.pop %v5498
    %v5500 = vlaneseq
    %v5501 = vshrl.u32 %v5500, 7
    %v5502 = vsub.s32 3, %v5501
    %v5503 = vrot.slane %v5499, %v5502
    %v5504 = vmul.f32 %v5496, %v5503
    %v5505 = vmul.f32 %v5497, %v5503
    %v5506 = vlaneseq
    %v5507 = vshrl.u32 %v5506, 7
    %v5508 = vsub.s32 0, %v5507
    %v5509 = vrot.slane %v5491, %v5508
    %v5510 = vmul.f32 %v5504, %v5509
    %v5511 = vmul.f32 %v5505, %v5509
    %v5512 = vlaneseq
    %v5513 = vshrl.u32 %v5512, 7
    %v5514 = vsub.s32 1, %v5513
    %v5515 = vrot.slane %v5491, %v5514
    %v5516 = vadd.f32 %v5510, %v5515
    %v5517 = vadd.f32 %v5511, %v5515
    %v5518 = vmax.f32 %v5516, 0.0
    %v5519 = vmax.f32 %v5517, 0.0
    %v5520 = vld [vmem:[%s5 + $0x478] sm:$0xff]
    %v5521 = vld [vmem:[%s5 + $0x480] sm:$0xff]
    %v5522 = vld [vmem:[%s5 + $0x488] sm:$0xff]
    %v5523 = vld [vmem:[%s5 + $0x490] sm:$0xff]
    %v5524 = vld [vmem:[%s5 + $0x498] sm:$0x1]
    %v5525 = vlaneseq
    %v5526 = vshrl.u32 %v5525, 7
    %v5527 = vsub.s32 0, %v5526
    %v5528 = vrot.slane %v5524, %v5527
    %v5530 = vsel %vm3919, %v5518, 0
    %v5533 = vsel %vm3919, %v5519, 0
    %5535 = vmatprep.subr.mxu0 0.0
    %5536 = vmatpush1.msra.mxu0 %v5520
    %5537 = vmatprep.subr.mxu0 0.0
    %5538 = vmatpush1.msra.mxu0 %v5521
    %5539 = vmatprep.subr.mxu0 0.0
    %5540 = vmatpush1.msra.mxu0 %v5522
    %5541 = vmatprep.subr.mxu0 0.0
    %5542 = vmatpush1.msra.mxu0 %v5523
    %5543 = vmatprep.subr.mxu0 0.0
    %5544 = vmatpush1.msra.mxu0 0.0
    %5545 = vmatprep.subr.mxu0 0.0
    %5546 = vmatpush1.msra.mxu0 0.0
    %5547 = vmatprep.subr.mxu0 0.0
    %5548 = vmatpush1.msra.mxu0 0.0
    %5549 = vmatprep.subr.mxu0 0.0
    %5550 = vmatpush1.msra.mxu0 0.0
    %5551 = vmatprep.subr.mxu0 0.0
    %5552 = vmatpush1.msra.mxu0 0.0
    %5553 = vmatprep.subr.mxu0 0.0
    %5554 = vmatpush1.msra.mxu0 0.0
    %5555 = vmatprep.subr.mxu0 0.0
    %5556 = vmatpush1.msra.mxu0 0.0
    %5557 = vmatprep.subr.mxu0 0.0
    %5558 = vmatpush1.msra.mxu0 0.0
    %5559 = vmatprep.subr.mxu0 0.0
    %5560 = vmatpush1.msra.mxu0 0.0
    %5561 = vmatprep.subr.mxu0 0.0
    %5562 = vmatpush1.msra.mxu0 0.0
    %5563 = vmatprep.subr.mxu0 0.0
    %5564 = vmatpush1.msra.mxu0 0.0
    %5565 = vmatprep.subr.mxu0 0.0
    %5566 = vmatpush1.msra.mxu0 0.0
    %5567 = vmatprep.subr.mxu0 0.0
    %5568 = vmatpush1.msra.mxu0 0.0
    %5569 = vmatprep.subr.mxu0 0.0
    %5570 = vmatpush1.msra.mxu0 0.0
    %5571 = vmatprep.subr.mxu0 0.0
    %5572 = vmatpush1.msra.mxu0 0.0
    %5573 = vmatprep.subr.mxu0 0.0
    %5574 = vmatpush1.msra.mxu0 0.0
    %5575 = vmatprep.subr.mxu0 0.0
    %5576 = vmatpush1.msra.mxu0 0.0
    %5577 = vmatprep.subr.mxu0 0.0
    %5578 = vmatpush1.msra.mxu0 0.0
    %5579 = vmatprep.subr.mxu0 0.0
    %5580 = vmatpush1.msra.mxu0 0.0
    %5581 = vmatprep.subr.mxu0 0.0
    %5582 = vmatpush1.msra.mxu0 0.0
    %5583 = vmatprep.subr.mxu0 0.0
    %5584 = vmatpush1.msra.mxu0 0.0
    %5585 = vmatprep.subr.mxu0 0.0
    %5586 = vmatpush1.msra.mxu0 0.0
    %5587 = vmatprep.subr.mxu0 0.0
    %5588 = vmatpush1.msra.mxu0 0.0
    %5589 = vmatprep.subr.mxu0 0.0
    %5590 = vmatpush1.msra.mxu0 0.0
    %5591 = vmatprep.subr.mxu0 0.0
    %5592 = vmatpush1.msra.mxu0 0.0
    %5593 = vmatprep.subr.mxu0 0.0
    %5594 = vmatpush1.msra.mxu0 0.0
    %5595 = vmatprep.subr.mxu0 0.0
    %5596 = vmatpush1.msra.mxu0 0.0
    %5597 = vmatprep.subr.mxu0 0.0
    %5598 = vmatpush1.msra.mxu0 0.0
    %5599 = vmatprep.mubr.f32.mxu0 0.0
    %5600 = vmatmul.mubr.f32.gmra.mrb[0].mxu0 %v5530
    %v5601 = vpop.f32.mrb[0].mxu0
    %v5602 = vadd.f32 %v5528, %v5601
    %v5603 = vpop.f32.mrb[0].mxu0
    %5604 = vmatprep.mubr.f32.mxu0 0.0
    %5605 = vmatmul.mubr.f32.gmra.mrb[0].mxu0 %v5533
    %v5606 = vpop.f32.mrb[0].mxu0
    %v5607 = vadd.f32 %v5528, %v5606
    %v5608 = vpop.f32.mrb[0].mxu0
    %5609 = vdwg.mxu0
    %v5610 = vmul.f32 %v4605, %v4605
    %vm5611 = vcmask 130048
    %v5612 = vsel %vm5611, %v5610, 0.0
    %5613 = vadd.xlane.f32.xlu0 %v5612
    %v5614 = vpop.xlane.xlu0 %5613
    %v5615 = vmax.f32 %v5614, 1e-24
    %v5616 = vrsqrt.pop %v5615
    %v5617 = vmul.f32 %v4605, %v5616
    %5619 = vrot.lane.b32.xlu0 %v5610, 112
    %v5620 = vpop.permute.xlu0 %5619
    %v5622 = vsel %vm5611, %v5620, 0.0
    %5623 = vadd.xlane.f32.xlu0 %v5622
    %v5624 = vpop.xlane.xlu0 %5623
    %v5625 = vmax.f32 %v5624, 1e-24
    %v5626 = vrsqrt.pop %v5625
    %v5627 = vmul.f32 %v4605, %v5626
    %5628 = vrot.lane.b32.xlu0 %v5610, 96
    %v5629 = vpop.permute.xlu0 %5628
    %v5631 = vsel %vm5611, %v5629, 0.0
    %5632 = vadd.xlane.f32.xlu0 %v5631
    %v5633 = vpop.xlane.xlu0 %5632
    %v5634 = vmax.f32 %v5633, 1e-24
    %v5635 = vrsqrt.pop %v5634
    %v5636 = vmul.f32 %v4605, %v5635
    %v5637 = vmul.f32 %v4800, %v4800
    %v5638 = vsel %vm3919, %v5637, 0.0
    %5639 = vadd.xlane.f32.xlu0 %v5638
    %v5640 = vpop.xlane.xlu0 %5639
    %v5641 = vmax.f32 %v5640, 1e-24
    %v5642 = vrsqrt.pop %v5641
    %v5643 = vmul.f32 %v4800, %v5642
    %v5644 = vmul.f32 %v5003, %v5003
    %v5645 = vsel %vm5611, %v5644, 0.0
    %5646 = vadd.xlane.f32.xlu0 %v5645
    %v5647 = vpop.xlane.xlu0 %5646
    %v5648 = vmax.f32 %v5647, 1e-24
    %v5649 = vrsqrt.pop %v5648
    %v5650 = vmul.f32 %v5003, %v5649
    %5652 = vrot.lane.b32.xlu0 %v5644, 112
    %v5653 = vpop.permute.xlu0 %5652
    %v5655 = vsel %vm5611, %v5653, 0.0
    %5656 = vadd.xlane.f32.xlu0 %v5655
    %v5657 = vpop.xlane.xlu0 %5656
    %v5658 = vmax.f32 %v5657, 1e-24
    %v5659 = vrsqrt.pop %v5658
    %v5660 = vmul.f32 %v5003, %v5659
    %5661 = vrot.lane.b32.xlu0 %v5644, 96
    %v5662 = vpop.permute.xlu0 %5661
    %v5664 = vsel %vm5611, %v5662, 0.0
    %5665 = vadd.xlane.f32.xlu0 %v5664
    %v5666 = vpop.xlane.xlu0 %5665
    %v5667 = vmax.f32 %v5666, 1e-24
    %v5668 = vrsqrt.pop %v5667
    %v5669 = vmul.f32 %v5003, %v5668
    %v5670 = vmul.f32 %v5194, %v5194
    %v5671 = vsel %vm3919, %v5670, 0.0
    %5672 = vadd.xlane.f32.xlu0 %v5671
    %v5673 = vpop.xlane.xlu0 %5672
    %v5674 = vmax.f32 %v5673, 1e-24
    %v5675 = vrsqrt.pop %v5674
    %v5676 = vmul.f32 %v5194, %v5675
    %5678 = vrot.lane.b32.xlu0 %v5643, 48
    %v5679 = vpop.permute.xlu0 %5678
    %5682 = vrot.lane.b32.xlu0 %v5676, 48
    %v5683 = vpop.permute.xlu0 %5682
    %5686 = vrot.lane.b32.xlu0 %v5398, 80
    %v5687 = vpop.permute.xlu0 %5686
    %5690 = vrot.lane.b32.xlu0 %v5602, 104
    %v5691 = vpop.permute.xlu0 %5690
    %5694 = vrot.lane.b32.xlu0 %v5607, 112
    %v5695 = vpop.permute.xlu0 %5694
    %v5697 = vsel %vm5611, %v5617, %v5627
    %v5698 = vsel %vm3919, %v5697, %v5636
    %v5699 = vsel %vm5017, %v5698, %v5679
    %vm5700 = vcmask 654336
    %v5701 = vsel %vm5700, %v5699, 0.0
    %v5702 = vsel %vm5611, %v5650, %v5660
    %v5703 = vsel %vm3919, %v5702, %v5669
    %v5704 = vsel %vm5017, %v5703, %v5683
    %v5705 = vsel %vm5700, %v5704, %v5687
    %vm5706 = vcmask 850944
    %v5707 = vsel %vm5706, %v5705, %v5691
    %vm5708 = vcmask 916480
    %v5709 = vsel %vm5708, %v5707, %v5695
    %vm5710 = vcmask 982016
    %v5711 = vsel %vm5710, %v5709, 0.0
    %5712 = vst [vmem:[%s6] sm:$0xff] %v5701
    %5713 = vst [vmem:[%s6 + $0x8] sm:$0xff] %v5711
    // Predicated region
    $region30: #{forward.1} parent=1 // pred_check
      _
    $region31: #{forward.1} parent=1 // pred_check_branch
      %5715 = sbr.rel (0) target = $region33
    $region32: #{forward.1} parent=1 // pred_region
      _
    $region33: #{forward.1} parent=1 // pred_fallthru
      _
    // Predicated region
    $region34: #{forward.1} parent=1 // pred_check
      _
    $region35: #{forward.1} parent=1 // pred_check_branch
      %5717 = sbr.rel (0) target = $region37
    $region36: #{forward.1} parent=1 // pred_region
      _
    $region37: #{forward.1} parent=1 // pred_fallthru
      _
    %5718 = vsyncpa [#allocation4], 1

</llo_original>
